<compile_context>
chip_gen: v7x
topology: tpu7x:2x2x1
jax: 0.10.0
libtpu: 0.0.40
codegen_flags: <defaults>
</compile_context>

<pallas_src>
import math
import numpy as np
import jax
import jax.numpy as jnp
from jax.experimental import pallas as pl
from jax.experimental.pallas import tpu as pltpu

# ----------------------------------------------------------------------------- constants
LAMBERT_SH_K = [3.1415926535897927, 2.0943951023931957, 0.7853981633974483, 0.0,
                -0.13089969389957473, 0.0, 0.04908738521234052, 0.0,
                -0.024543692606170262, 0.0, 0.014317154020265985]
LMAX = 10
SH_DIM = (LMAX + 1) ** 2                 # 121 rows stored in ref_SH
SH_LMAX_USED = 2                         # ref_SH is zero past l=2 -> truncation is exact
SH_DIM_USED = (SH_LMAX_USED + 1) ** 2    # 9
SKIP_IN = (2,)                           # ImplicitNetwork skip connection
INV_SQRT2 = 1.0 / math.sqrt(2.0)
IMPL_DIMS = [3, 64, 64, 64, 1 + 1 + 9 + 3 + 3]   # d_in=3, dims=[64,64,64], last=17
NUM_FEATURE = 9

# Fused output slab layout (per row): [sdf(1) | grad(3) | rgb_c(3) | albedo_c(3) | diffuse_c(3)
#                                      | spec_c(3) | light(3) | irradiance(3)]
OUT_COLS = 22

# Max row tile.  >=2 grid steps are always forced (v7x 2-TC sharding); 1024 rows amortize the
# ~0.35us per-grid-step overhead on v5e/v6e while staying comfortably inside v7x's 64 MiB VMEM.
MAX_TILE = 1024
VMEM_LIMIT_BYTES = 32 * 1024 * 1024      # raise v5e's 16 MiB scoped default; safe on v7x

_COMPILER_PARAMS = pltpu.CompilerParams(
    dimension_semantics=("parallel",),   # shard the row grid across v7x's 2 TensorCores
    vmem_limit_bytes=VMEM_LIMIT_BYTES)

# Real-SH l<=2 normalization constants (column order matches _sh9_cols) and Lambert coefficients.
# TODO(synk): e3nn o3.spherical_harmonics phase/ordering is not reproduced bit-for-bit (e3nn
# unavailable here); standard real-SH 'integral' normalization is used instead.
_SH_C9 = np.array([0.28209479177387814,
                   0.48860251190291992, 0.48860251190291992, 0.48860251190291992,
                   1.09254843059207907, 1.09254843059207907,
                   0.31539156525252005,
                   1.09254843059207907, 0.54627421529603959], np.float32)
_LAM9 = np.array([LAMBERT_SH_K[0]] + [LAMBERT_SH_K[1]] * 3 + [LAMBERT_SH_K[2]] * 5, np.float32)


# ----------------------------------------------------------------------------- small math (f32)
def _sigmoid(x):
    return 1.0 / (1.0 + jnp.exp(-x))


def _softplus1(x):                          # torch.nn.Softplus() default (beta=1, threshold=20)
    return jnp.where(x > 20.0, x, jnp.log(1.0 + jnp.exp(jnp.minimum(x, 20.0))))


def _softplus100(x):                        # torch.nn.Softplus(beta=100)
    t = 100.0 * x
    return jnp.where(t > 20.0, x, jnp.log(1.0 + jnp.exp(jnp.minimum(t, 20.0))) * 0.01)


def _softplus100_grad(x):
    t = 100.0 * x
    return jnp.where(t > 20.0, 1.0, _sigmoid(t))


def _round_up(n, m):
    return ((n + m - 1) // m) * m


def _choose_tile(n_rows, max_tile=MAX_TILE):
    """Pick a row tile with >=2 grid steps (v7x 2-TC sharding), multiple of 8, <= max_tile."""
    np8 = _round_up(max(n_rows, 1), 8)
    n_steps = max(2, pl.cdiv(np8, max_tile))
    tile = _round_up(pl.cdiv(np8, n_steps), 8)
    return tile, tile * n_steps, n_steps


def _const_spec(arr):
    """Full-array block with a constant index_map: stays VMEM-resident across grid steps."""
    nd = arr.ndim
    return pl.BlockSpec(arr.shape, lambda i: (0,) * nd)
    # TODO(synk): on v7x, pipeline_mode=pl.Buffered(1) would halve the constant-operand VMEM
    # footprint; left at the default for lowering robustness.


def _sh9_cols(d):
    """Raw l<=2 real-SH monomial columns (normalization folded into the host-side SH matrices).

    Follows e3_SH's component permutation d -> d[..., [1, 2, 0]]; exact for unit-length d.
    Column order: [1, x, y, z, xz, xy, 3y^2-1, yz, z^2-x^2] in the permuted frame.
    """
    xp = d[:, 1:2]
    yp = d[:, 2:3]
    zp = d[:, 0:1]
    return [jnp.ones_like(xp), xp, yp, zp, xp * zp, xp * yp,
            3.0 * yp * yp - 1.0, yp * zp, zp * zp - xp * xp]


# ----------------------------------------------------------------------------- fused kernel
def fused_idr_kernel(pts_ref, rdir_ref,
                     iw0, ib0, iw1, ib1, iw2, ib2, iw3, ib3,
                     vw0, vb0, vw1, vb1, vw2, vb2, vw3, vb3, wc, bc,
                     m_irr_ref, m_light_ref, a12_ref, out_ref):
    f32 = jnp.float32
    bf16 = jnp.bfloat16

    # ---------------- ImplicitNetwork forward + analytic d(sdf)/dx --------------------------
    x = pts_ref[...]                                       # (T, 3) f32
    T = x.shape[0]
    col = jax.lax.broadcasted_iota(jnp.int32, (T, 3), 1)
    e = [(col == r).astype(f32) for r in range(3)]         # one-hot basis rows (d x / d x_r)

    h = x
    J = list(e)                                            # three separate Jacobian chains
    impl_layers = [(iw0, ib0), (iw1, ib1), (iw2, ib2)]
    for l, (w_ref, b_ref) in enumerate(impl_layers):
        if l in SKIP_IN:                                   # skip connection (l == 2)
            h = jnp.concatenate([h, x], axis=-1) * INV_SQRT2
            J = [jnp.concatenate([J[r], e[r]], axis=-1) * INV_SQRT2 for r in range(3)]
        W = w_ref[...]                                     # bf16 weights, f32 accumulation
        b = b_ref[...]
        h_pre = jnp.dot(h.astype(bf16), W, preferred_element_type=f32) + b   # bias: h only
        d = _softplus100_grad(h_pre)
        h = _softplus100(h_pre)
        J = [jnp.dot(J[r].astype(bf16), W, preferred_element_type=f32) * d for r in range(3)]

    # last layer (f32 for sdf / normal accuracy); Jacobian only needs column 0 of w3.
    W3 = iw3[...]
    out17 = jnp.dot(h, W3, preferred_element_type=f32) + ib3[...]            # (T, 17)
    w3c = W3[:, 0:1]
    grad = jnp.concatenate(
        [jnp.dot(J[r], w3c, preferred_element_type=f32) for r in range(3)], axis=-1)  # (T, 3)

    sdf = out17[:, 0:1]
    feat = out17[:, 1:]                                    # (T, 16)

    # ---------------- BrdfNetwork + color calibration ---------------------------------------
    w0v = -rdir_ref[...]                                   # view dirs = -ray_dirs
    # F.normalize(grad, dim=-1) with eps=1e-12
    inv_n = jax.lax.rsqrt(jnp.maximum(jnp.sum(grad * grad, axis=-1, keepdims=True), 1e-24))
    n = grad * inv_n

    rough = _softplus1(feat[:, 0:1])
    coe = feat[:, 1:NUM_FEATURE + 1]                                         # (T, 9)
    albedo = _sigmoid(feat[:, NUM_FEATURE + 1:NUM_FEATURE + 4])
    spec = _sigmoid(feat[:, NUM_FEATURE + 4:NUM_FEATURE + 7])

    ndotw = jnp.sum(n * w0v, axis=-1, keepdims=True)
    wr = 2.0 * n * ndotw - w0v

    # SH irradiance / light as two (T,9)@(9,3) dots; constants folded on the host,
    # exp(-l(l+1)/2 * rho) decay folded into the Y(wr) columns.
    y_n = jnp.concatenate(_sh9_cols(n), axis=-1)                             # (T, 9)
    cw = _sh9_cols(wr)
    e1 = jnp.exp(-rough)                                    # l = 1 decay
    e3 = e1 * e1 * e1                                       # l = 2 decay  exp(-3*rho)
    y_wr = jnp.concatenate([cw[0], cw[1] * e1, cw[2] * e1, cw[3] * e1,
                            cw[4] * e3, cw[5] * e3, cw[6] * e3, cw[7] * e3, cw[8] * e3],
                           axis=-1)                                          # (T, 9)
    irr = jnp.maximum(jnp.dot(y_n, m_irr_ref[...], preferred_element_type=f32), 0.0)
    light = jnp.maximum(jnp.dot(y_wr, m_light_ref[...], preferred_element_type=f32), 0.0)
    diffuse = albedo * irr

    # 4x512 view MLP: bf16 operands, f32 accumulation; elementwise math stays f32 (v5e-safe).
    xv = jnp.concatenate([ndotw, w0v, n, rough], axis=-1)                    # (T, 8)
    for w_ref, b_ref in ((vw0, vb0), (vw1, vb1), (vw2, vb2), (vw3, vb3)):
        xv = jnp.maximum(jnp.dot(xv.astype(bf16), w_ref[...],
                                 preferred_element_type=f32) + b_ref[...], 0.0)
    cs = jnp.dot(xv.astype(bf16), wc[...], preferred_element_type=f32) + bc[...]   # (T, 27)
    rr = jnp.sum(cs[:, 0:9] * coe, axis=-1, keepdims=True)
    gg = jnp.sum(cs[:, 9:18] * coe, axis=-1, keepdims=True)
    bb = jnp.sum(cs[:, 18:27] * coe, axis=-1, keepdims=True)
    cs3 = jnp.concatenate([rr, gg, bb], axis=-1)

    spec_term = spec * light * _sigmoid(cs3)
    rgb = diffuse + spec_term

    # Calibration epilogue: one (T,12)@(12,12) block-diag affine (pi-scale folded into the
    # albedo block on the host), then a single clamp.
    stacked12 = jnp.concatenate([rgb, albedo, diffuse, spec_term], axis=-1)  # (T, 12)
    out12 = jnp.clip(jnp.dot(stacked12, a12_ref[...], preferred_element_type=f32), 0.0, 1.0)

    # Single coalesced output slab (22 columns).
    out_ref[...] = jnp.concatenate([sdf, grad, out12, light, irr], axis=-1)


def run_idr_fused(points, ray_dirs, impl_Ws, impl_bs, brdf_p, affine, sh9, max_tile=MAX_TILE):
    """One pallas_call: ImplicitNetwork fwd + gradient + BrdfNetwork + calibration epilogue."""
    Ws_v, bs_v, Wc, bc = brdf_p
    N = points.shape[0]
    T, Np, _ = _choose_tile(N, max_tile)
    if Np != N:                                    # only pads when the tile doesn't divide N
        points = jnp.pad(points, ((0, Np - N), (0, 0)))
        ray_dirs = jnp.pad(ray_dirs, ((0, Np - N), (0, 0)))

    # Host-side folds (tiny traced ops): SH normalization + Lambert coeffs into (9,3) matrices,
    # pi-scale + 3x3 affine into a (12,12) block-diagonal matrix.
    m_irr = jnp.asarray(_SH_C9 * _LAM9, jnp.float32)[:, None] * sh9          # (9, 3)
    m_light = jnp.asarray(_SH_C9, jnp.float32)[:, None] * sh9                # (9, 3)
    Z = jnp.zeros((3, 3), jnp.float32)
    a12 = jnp.concatenate([
        jnp.concatenate([affine, Z, Z, Z], axis=1),
        jnp.concatenate([Z, affine * 3.1415926, Z, Z], axis=1),
        jnp.concatenate([Z, Z, affine, Z], axis=1),
        jnp.concatenate([Z, Z, Z, affine], axis=1)], axis=0)                 # (12, 12)

    args = [points, ray_dirs]
    in_specs = [pl.BlockSpec((T, 3), lambda i: (i, 0)),
                pl.BlockSpec((T, 3), lambda i: (i, 0))]
    for W, b in zip(impl_Ws, impl_bs):
        args += [W, b]
        in_specs += [_const_spec(W), _const_spec(b)]
    for W, b in zip(Ws_v, bs_v):
        args += [W, b]
        in_specs += [_const_spec(W), _const_spec(b)]
    args += [Wc, bc, m_irr, m_light, a12]
    in_specs += [_const_spec(Wc), _const_spec(bc), _const_spec(m_irr),
                 _const_spec(m_light), _const_spec(a12)]

    out = pl.pallas_call(
        fused_idr_kernel,
        grid=(Np // T,),
        out_shape=jax.ShapeDtypeStruct((Np, OUT_COLS), jnp.float32),
        in_specs=in_specs,
        out_specs=pl.BlockSpec((T, OUT_COLS), lambda i: (i, 0)),
        compiler_params=_COMPILER_PARAMS,
    )(*args)
    return out[:N]


# ----------------------------------------------------------------------------- calibration MLP
def run_calib(tex_latent, calib_p):
    # Single row of work: a pallas_call launch + DMA setup costs more than the compute.
    W0, b0, W1, b1 = calib_p
    h = jnp.maximum(tex_latent @ W0 + b0, 0.0)
    return h @ W1 + b1                                   # (1, 9)


# ----------------------------------------------------------------------------- parameter init
def _xavier_uniform(key, fan_in, fan_out):
    bound = math.sqrt(6.0 / (fan_in + fan_out))
    return jax.random.uniform(key, (fan_in, fan_out), jnp.float32, -bound, bound)


def _torch_bias(key, fan_in, fan_out):
    bound = 1.0 / math.sqrt(fan_in)
    return jax.random.uniform(key, (1, fan_out), jnp.float32, -bound, bound)


def init_implicit(key, bias=1.0):
    # weight_norm at fresh init is the identity re-parameterization (g=||w||, v=w) -> folded away.
    dims = IMPL_DIMS
    n_lin = len(dims) - 1
    Ws, bs = [], []
    for l in range(n_lin):
        out_dim = dims[l + 1] - dims[0] if (l + 1) in SKIP_IN else dims[l + 1]
        in_dim = dims[l]
        key, k1 = jax.random.split(key)
        if l == n_lin - 1:   # geometric init, last layer (kept f32 in-kernel)
            W = (jax.random.normal(k1, (in_dim, out_dim), jnp.float32) * 1e-4
                 + math.sqrt(math.pi) / math.sqrt(in_dim))
            b = jnp.full((1, out_dim), -bias, jnp.float32)
        else:
            W = (jax.random.normal(k1, (in_dim, out_dim), jnp.float32)
                 * (math.sqrt(2.0) / math.sqrt(out_dim))).astype(jnp.bfloat16)  # bf16 operands
            b = jnp.zeros((1, out_dim), jnp.float32)
        Ws.append(W)
        bs.append(b)
    return Ws, bs


def init_brdf(key):
    shapes = [(1 + 1 + 6, 512), (512, 512), (512, 512), (512, 512)]
    Ws, bs = [], []
    for fi, fo in shapes:
        key, k1, k2 = jax.random.split(key, 3)
        Ws.append(_xavier_uniform(k1, fi, fo).astype(jnp.bfloat16))  # MXU operands in bf16
        bs.append(_torch_bias(k2, fi, fo))                           # biases / accumulation f32
    key, k1, k2 = jax.random.split(key, 3)
    Wc = _xavier_uniform(k1, 512, 27).astype(jnp.bfloat16)
    bc = _torch_bias(k2, 512, 27)
    # TODO(synk): fp8 (e4m3) weight storage for the 512x512 layers would further help v7x only;
    # not adopted here to keep one code path across v5e/v6e/v7x.
    return Ws, bs, Wc, bc


def init_calib(key):
    k1, k2, k3, k4 = jax.random.split(key, 4)
    W0 = _xavier_uniform(k1, 50, 128)
    b0 = _torch_bias(k2, 50, 128)
    W1 = _xavier_uniform(k3, 128, 9)
    b1 = _torch_bias(k4, 128, 9)
    return W0, b0, W1, b1


def build_ref_sh():
    default_l = np.array([[2.9861, 3.4646, 3.9559],
                          [0.10013, -0.067589, -0.31161],
                          [-0.8252, -0.52738, -0.097385],
                          [0.0022311, 0.0043553, 0.0049501],
                          [-0.0064355, 0.0097476, -0.023863],
                          [0.11078, -0.060607, -0.19541],
                          [0.79123, 0.76916, 0.56288],
                          [0.065793, 0.04327, -0.17002],
                          [-0.072674, 0.045177, 0.22858]], np.float32)
    ref_sh = np.concatenate([default_l, np.zeros((SH_DIM - 9, 3), np.float32)], axis=0)
    # The l<=2 in-kernel SH truncation is exact only while rows 9..120 stay zero.
    assert np.allclose(ref_sh[SH_DIM_USED:], 0.0)
    return jnp.asarray(ref_sh)                             # (121, 3)


# ----------------------------------------------------------------------------- full forward
def idr_forward(params, inputs):
    # TODO(synk): rend_util.get_camera_params, RayTracing and SampleNetwork are external modules
    # not provided with this source; cam_loc / ray_dirs / dists / network_object_mask are inputs.
    cam_loc = inputs['cam_loc']                            # (B, 3)
    ray_dirs = inputs['ray_dirs']                          # (B, P, 3), unit
    dists = inputs['dists']                                # (B, P)
    surface_mask = inputs['network_object_mask']           # (B*P,) bool  (eval path of forward)

    B, P, _ = ray_dirs.shape
    points = (cam_loc[:, None, :] + dists[..., None] * ray_dirs).reshape(-1, 3)
    ray_dirs_f = ray_dirs.reshape(-1, 3)

    # calibration MLP (plain JAX) -> 3x3 affine fused into the kernel's (12,12) epilogue.
    exposure = run_calib(inputs['tex_latent'], params['calib'])
    affine = exposure[0, :9].reshape(3, 3)

    # SH truncation to l<=2 is exact because ref_SH rows 9..120 are zero (see build_ref_sh).
    # TODO(synk): if ref_SH becomes trainable with l>2 content, extend _sh9_cols accordingly.
    sh9 = params['ref_SH'][:SH_DIM_USED]                   # (9, 3)

    # single fused kernel: implicit fwd + grad + BRDF + calibration, for every ray (static
    # shapes); masked afterwards (eval path of forward).
    out = run_idr_fused(points, ray_dirs_f, params['impl_Ws'], params['impl_bs'],
                        params['brdf'], affine, sh9)
    sdf_output = out[:, 0:1]
    s_normals = out[:, 1:4]                                # unnormalized, as in torch g[:, 0, :]
    rgb_c = out[:, 4:7]
    alb_c = out[:, 7:10]
    dif_c = out[:, 10:13]
    spc_c = out[:, 13:16]
    light = out[:, 16:19]
    irr = out[:, 19:22]

    m = surface_mask[:, None]
    zeros = jnp.zeros_like(points)
    rgb_values = jnp.where(m, rgb_c, zeros)
    albedo_values = jnp.where(m, alb_c, zeros)
    diffuse_values = jnp.where(m, dif_c, zeros)
    spec_values = jnp.where(m, spc_c, zeros)

    # TODO(synk): torch builds sh_light over dynamically-gathered surface points only; here it is
    # computed for all rays to keep static shapes (boolean gather has no static-shape equivalent).
    sh_light = jnp.concatenate([light, irr], axis=0)

    return {
        'points': points,
        'rgb_values': rgb_values,
        'sdf_output': sdf_output,
        'network_object_mask': surface_mask,
        'object_mask': inputs['object_mask'],
        'grad_theta': None,                # eval path (self.training == False)
        'normals': s_normals,
        'sh_light': sh_light,
        'spec_energy': None,
        'albedo_values': albedo_values,
        'diffuse_values': diffuse_values,
        'spec_values': spec_values,
    }


# ----------------------------------------------------------------------------- main
if __name__ == "__main__":
    key = jax.random.PRNGKey(0)
    keys = jax.random.split(key, 10)

    impl_Ws, impl_bs = init_implicit(keys[0])
    params = {
        'impl_Ws': impl_Ws, 'impl_bs': impl_bs,
        'brdf': init_brdf(keys[1]),
        'calib': init_calib(keys[2]),
        'ref_SH': build_ref_sh(),
    }

    B, P = 1, 64
    N = B * P
    tex_latent = jax.random.normal(keys[3], (1, 50), jnp.float32) * 0.1
    cam_loc = jax.random.normal(keys[4], (B, 3), jnp.float32)
    rd = jax.random.normal(keys[5], (B, P, 3), jnp.float32)
    ray_dirs = rd / jnp.linalg.norm(rd, axis=-1, keepdims=True)
    dists = jax.random.uniform(keys[6], (B, P), jnp.float32, 0.5, 2.0)
    network_object_mask = (jnp.arange(N) % 4) != 3
    object_mask = jnp.ones((N,), bool)

    inputs = {
        'tex_latent': tex_latent,
        'cam_loc': cam_loc,
        'ray_dirs': ray_dirs,
        'dists': dists,
        'network_object_mask': network_object_mask,
        'object_mask': object_mask,
    }

    out = idr_forward(params, inputs)
    for k, v in out.items():
        if isinstance(v, jax.Array):
            jax.block_until_ready(v)
    print("KERNEL_OK")
</pallas_src>

<mosaic_0001>
module attributes {stable_mosaic.version = 11 : i64} {
  func.func @fused_idr_kernel(%arg0: i32, %arg1: memref<32x3xf32, #tpu.memory_space<vmem>>, %arg2: memref<32x3xf32, #tpu.memory_space<vmem>>, %arg3: memref<3x64xbf16, #tpu.memory_space<vmem>>, %arg4: memref<1x64xf32, #tpu.memory_space<vmem>>, %arg5: memref<64x61xbf16, #tpu.memory_space<vmem>>, %arg6: memref<1x61xf32, #tpu.memory_space<vmem>>, %arg7: memref<64x64xbf16, #tpu.memory_space<vmem>>, %arg8: memref<1x64xf32, #tpu.memory_space<vmem>>, %arg9: memref<64x17xf32, #tpu.memory_space<vmem>>, %arg10: memref<1x17xf32, #tpu.memory_space<vmem>>, %arg11: memref<8x512xbf16, #tpu.memory_space<vmem>>, %arg12: memref<1x512xf32, #tpu.memory_space<vmem>>, %arg13: memref<512x512xbf16, #tpu.memory_space<vmem>>, %arg14: memref<1x512xf32, #tpu.memory_space<vmem>>, %arg15: memref<512x512xbf16, #tpu.memory_space<vmem>>, %arg16: memref<1x512xf32, #tpu.memory_space<vmem>>, %arg17: memref<512x512xbf16, #tpu.memory_space<vmem>>, %arg18: memref<1x512xf32, #tpu.memory_space<vmem>>, %arg19: memref<512x27xbf16, #tpu.memory_space<vmem>>, %arg20: memref<1x27xf32, #tpu.memory_space<vmem>>, %arg21: memref<9x3xf32, #tpu.memory_space<vmem>>, %arg22: memref<9x3xf32, #tpu.memory_space<vmem>>, %arg23: memref<12x12xf32, #tpu.memory_space<vmem>>, %arg24: memref<32x22xf32, #tpu.memory_space<vmem>>) attributes {dimension_semantics = [#tpu.dimension_semantics<parallel>], iteration_bounds = array<i64: 2>, scalar_prefetch = 0 : i64, scratch_operands = 0 : i64, tpu.core_type = #tpu.core_type<tc>, window_params = [{transform_indices = @transform_0, window_bounds = array<i64: 32, 3>}, {transform_indices = @transform_1, window_bounds = array<i64: 32, 3>}, {pipeline_mode = #tpu.pipeline_mode<synchronous>, transform_indices = @transform_2, window_bounds = array<i64: 3, 64>}, {pipeline_mode = #tpu.pipeline_mode<synchronous>, transform_indices = @transform_3, window_bounds = array<i64: 1, 64>}, {pipeline_mode = #tpu.pipeline_mode<synchronous>, transform_indices = @transform_4, window_bounds = array<i64: 64, 61>}, {pipeline_mode = #tpu.pipeline_mode<synchronous>, transform_indices = @transform_5, window_bounds = array<i64: 1, 61>}, {pipeline_mode = #tpu.pipeline_mode<synchronous>, transform_indices = @transform_6, window_bounds = array<i64: 64, 64>}, {pipeline_mode = #tpu.pipeline_mode<synchronous>, transform_indices = @transform_7, window_bounds = array<i64: 1, 64>}, {pipeline_mode = #tpu.pipeline_mode<synchronous>, transform_indices = @transform_8, window_bounds = array<i64: 64, 17>}, {pipeline_mode = #tpu.pipeline_mode<synchronous>, transform_indices = @transform_9, window_bounds = array<i64: 1, 17>}, {pipeline_mode = #tpu.pipeline_mode<synchronous>, transform_indices = @transform_10, window_bounds = array<i64: 8, 512>}, {pipeline_mode = #tpu.pipeline_mode<synchronous>, transform_indices = @transform_11, window_bounds = array<i64: 1, 512>}, {pipeline_mode = #tpu.pipeline_mode<synchronous>, transform_indices = @transform_12, window_bounds = array<i64: 512, 512>}, {pipeline_mode = #tpu.pipeline_mode<synchronous>, transform_indices = @transform_13, window_bounds = array<i64: 1, 512>}, {pipeline_mode = #tpu.pipeline_mode<synchronous>, transform_indices = @transform_14, window_bounds = array<i64: 512, 512>}, {pipeline_mode = #tpu.pipeline_mode<synchronous>, transform_indices = @transform_15, window_bounds = array<i64: 1, 512>}, {pipeline_mode = #tpu.pipeline_mode<synchronous>, transform_indices = @transform_16, window_bounds = array<i64: 512, 512>}, {pipeline_mode = #tpu.pipeline_mode<synchronous>, transform_indices = @transform_17, window_bounds = array<i64: 1, 512>}, {pipeline_mode = #tpu.pipeline_mode<synchronous>, transform_indices = @transform_18, window_bounds = array<i64: 512, 27>}, {pipeline_mode = #tpu.pipeline_mode<synchronous>, transform_indices = @transform_19, window_bounds = array<i64: 1, 27>}, {pipeline_mode = #tpu.pipeline_mode<synchronous>, transform_indices = @transform_20, window_bounds = array<i64: 9, 3>}, {pipeline_mode = #tpu.pipeline_mode<synchronous>, transform_indices = @transform_21, window_bounds = array<i64: 9, 3>}, {pipeline_mode = #tpu.pipeline_mode<synchronous>, transform_indices = @transform_22, window_bounds = array<i64: 12, 12>}, {transform_indices = @transform_23, window_bounds = array<i64: 32, 22>}]} {
    %c0 = arith.constant 0 : index
    %c0_0 = arith.constant 0 : index
    %0 = vector.load %arg1[%c0, %c0_0] : memref<32x3xf32, #tpu.memory_space<vmem>>, vector<32x3xf32>
    %1 = tpu.iota {dimensions = array<i32: 1>} : vector<32x3xi32>
    %c0_i32 = arith.constant 0 : i32
    %2 = vector.broadcast %c0_i32 : i32 to vector<32x3xi32>
    %3 = arith.cmpi eq, %1, %2 : vector<32x3xi32>
    %4 = arith.extui %3 : vector<32x3xi1> to vector<32x3xi32>
    %5 = arith.sitofp %4 : vector<32x3xi32> to vector<32x3xf32>
    %c1_i32 = arith.constant 1 : i32
    %6 = vector.broadcast %c1_i32 : i32 to vector<32x3xi32>
    %7 = arith.cmpi eq, %1, %6 : vector<32x3xi32>
    %8 = arith.extui %7 : vector<32x3xi1> to vector<32x3xi32>
    %9 = arith.sitofp %8 : vector<32x3xi32> to vector<32x3xf32>
    %c2_i32 = arith.constant 2 : i32
    %10 = vector.broadcast %c2_i32 : i32 to vector<32x3xi32>
    %11 = arith.cmpi eq, %1, %10 : vector<32x3xi32>
    %12 = arith.extui %11 : vector<32x3xi1> to vector<32x3xi32>
    %13 = arith.sitofp %12 : vector<32x3xi32> to vector<32x3xf32>
    %c0_1 = arith.constant 0 : index
    %c0_2 = arith.constant 0 : index
    %14 = vector.load %arg3[%c0_1, %c0_2] : memref<3x64xbf16, #tpu.memory_space<vmem>>, vector<3x64xbf16>
    %c0_3 = arith.constant 0 : index
    %c0_4 = arith.constant 0 : index
    %15 = vector.load %arg4[%c0_3, %c0_4] : memref<1x64xf32, #tpu.memory_space<vmem>>, vector<1x64xf32>
    %16 = arith.truncf %0 : vector<32x3xf32> to vector<32x3xbf16>
    %cst = arith.constant dense<0.000000e+00> : vector<32x64xf32>
    %17 = tpu.matmul %16, %14, %cst {dimension_numbers = #tpu.dot_dimension_numbers<[1], [0], [0], [1], [0, 0, 1, 1], [], []>} : vector<32x3xbf16>, vector<3x64xbf16>, vector<32x64xf32> -> vector<32x64xf32>
    %18 = vector.broadcast %15 : vector<1x64xf32> to vector<32x64xf32>
    %19 = arith.addf %17, %18 : vector<32x64xf32>
    %cst_5 = arith.constant 1.000000e+02 : f32
    %20 = vector.broadcast %cst_5 : f32 to vector<32x64xf32>
    %21 = arith.mulf %20, %19 : vector<32x64xf32>
    %cst_6 = arith.constant 2.000000e+01 : f32
    %22 = vector.broadcast %cst_6 : f32 to vector<32x64xf32>
    %23 = arith.cmpf ogt, %21, %22 : vector<32x64xf32>
    %cst_7 = arith.constant 0.000000e+00 : f32
    %24 = vector.broadcast %cst_7 : f32 to vector<32x64xf32>
    %25 = arith.subf %24, %21 : vector<32x64xf32>
    %26 = math.exp %25 : vector<32x64xf32>
    %cst_8 = arith.constant 1.000000e+00 : f32
    %27 = vector.broadcast %cst_8 : f32 to vector<32x64xf32>
    %28 = arith.addf %27, %26 : vector<32x64xf32>
    %cst_9 = arith.constant 1.000000e+00 : f32
    %29 = vector.broadcast %cst_9 : f32 to vector<32x64xf32>
    %30 = arith.divf %29, %28 : vector<32x64xf32>
    %cst_10 = arith.constant 1.000000e+00 : f32
    %31 = vector.broadcast %cst_10 : f32 to vector<32x64xf32>
    %32 = arith.select %23, %31, %30 : vector<32x64xi1>, vector<32x64xf32>
    %cst_11 = arith.constant 1.000000e+02 : f32
    %33 = vector.broadcast %cst_11 : f32 to vector<32x64xf32>
    %34 = arith.mulf %33, %19 : vector<32x64xf32>
    %cst_12 = arith.constant 2.000000e+01 : f32
    %35 = vector.broadcast %cst_12 : f32 to vector<32x64xf32>
    %36 = arith.cmpf ogt, %34, %35 : vector<32x64xf32>
    %cst_13 = arith.constant 2.000000e+01 : f32
    %37 = vector.broadcast %cst_13 : f32 to vector<32x64xf32>
    %38 = arith.minimumf %34, %37 : vector<32x64xf32>
    %39 = math.exp %38 : vector<32x64xf32>
    %cst_14 = arith.constant 1.000000e+00 : f32
    %40 = vector.broadcast %cst_14 : f32 to vector<32x64xf32>
    %41 = arith.addf %40, %39 : vector<32x64xf32>
    %42 = math.log %41 : vector<32x64xf32>
    %cst_15 = arith.constant 0.00999999977 : f32
    %43 = vector.broadcast %cst_15 : f32 to vector<32x64xf32>
    %44 = arith.mulf %42, %43 : vector<32x64xf32>
    %45 = arith.select %36, %19, %44 : vector<32x64xi1>, vector<32x64xf32>
    %46 = arith.truncf %5 : vector<32x3xf32> to vector<32x3xbf16>
    %cst_16 = arith.constant dense<0.000000e+00> : vector<32x64xf32>
    %47 = tpu.matmul %46, %14, %cst_16 {dimension_numbers = #tpu.dot_dimension_numbers<[1], [0], [0], [1], [0, 0, 1, 1], [], []>} : vector<32x3xbf16>, vector<3x64xbf16>, vector<32x64xf32> -> vector<32x64xf32>
    %48 = arith.mulf %47, %32 : vector<32x64xf32>
    %49 = arith.truncf %9 : vector<32x3xf32> to vector<32x3xbf16>
    %cst_17 = arith.constant dense<0.000000e+00> : vector<32x64xf32>
    %50 = tpu.matmul %49, %14, %cst_17 {dimension_numbers = #tpu.dot_dimension_numbers<[1], [0], [0], [1], [0, 0, 1, 1], [], []>} : vector<32x3xbf16>, vector<3x64xbf16>, vector<32x64xf32> -> vector<32x64xf32>
    %51 = arith.mulf %50, %32 : vector<32x64xf32>
    %52 = arith.truncf %13 : vector<32x3xf32> to vector<32x3xbf16>
    %cst_18 = arith.constant dense<0.000000e+00> : vector<32x64xf32>
    %53 = tpu.matmul %52, %14, %cst_18 {dimension_numbers = #tpu.dot_dimension_numbers<[1], [0], [0], [1], [0, 0, 1, 1], [], []>} : vector<32x3xbf16>, vector<3x64xbf16>, vector<32x64xf32> -> vector<32x64xf32>
    %54 = arith.mulf %53, %32 : vector<32x64xf32>
    %c0_19 = arith.constant 0 : index
    %c0_20 = arith.constant 0 : index
    %55 = vector.load %arg5[%c0_19, %c0_20] : memref<64x61xbf16, #tpu.memory_space<vmem>>, vector<64x61xbf16>
    %c0_21 = arith.constant 0 : index
    %c0_22 = arith.constant 0 : index
    %56 = vector.load %arg6[%c0_21, %c0_22] : memref<1x61xf32, #tpu.memory_space<vmem>>, vector<1x61xf32>
    %57 = arith.truncf %45 : vector<32x64xf32> to vector<32x64xbf16>
    %cst_23 = arith.constant dense<0.000000e+00> : vector<32x61xf32>
    %58 = tpu.matmul %57, %55, %cst_23 {dimension_numbers = #tpu.dot_dimension_numbers<[1], [0], [0], [1], [0, 0, 1, 1], [], []>} : vector<32x64xbf16>, vector<64x61xbf16>, vector<32x61xf32> -> vector<32x61xf32>
    %59 = vector.broadcast %56 : vector<1x61xf32> to vector<32x61xf32>
    %60 = arith.addf %58, %59 : vector<32x61xf32>
    %cst_24 = arith.constant 1.000000e+02 : f32
    %61 = vector.broadcast %cst_24 : f32 to vector<32x61xf32>
    %62 = arith.mulf %61, %60 : vector<32x61xf32>
    %cst_25 = arith.constant 2.000000e+01 : f32
    %63 = vector.broadcast %cst_25 : f32 to vector<32x61xf32>
    %64 = arith.cmpf ogt, %62, %63 : vector<32x61xf32>
    %cst_26 = arith.constant 0.000000e+00 : f32
    %65 = vector.broadcast %cst_26 : f32 to vector<32x61xf32>
    %66 = arith.subf %65, %62 : vector<32x61xf32>
    %67 = math.exp %66 : vector<32x61xf32>
    %cst_27 = arith.constant 1.000000e+00 : f32
    %68 = vector.broadcast %cst_27 : f32 to vector<32x61xf32>
    %69 = arith.addf %68, %67 : vector<32x61xf32>
    %cst_28 = arith.constant 1.000000e+00 : f32
    %70 = vector.broadcast %cst_28 : f32 to vector<32x61xf32>
    %71 = arith.divf %70, %69 : vector<32x61xf32>
    %cst_29 = arith.constant 1.000000e+00 : f32
    %72 = vector.broadcast %cst_29 : f32 to vector<32x61xf32>
    %73 = arith.select %64, %72, %71 : vector<32x61xi1>, vector<32x61xf32>
    %cst_30 = arith.constant 1.000000e+02 : f32
    %74 = vector.broadcast %cst_30 : f32 to vector<32x61xf32>
    %75 = arith.mulf %74, %60 : vector<32x61xf32>
    %cst_31 = arith.constant 2.000000e+01 : f32
    %76 = vector.broadcast %cst_31 : f32 to vector<32x61xf32>
    %77 = arith.cmpf ogt, %75, %76 : vector<32x61xf32>
    %cst_32 = arith.constant 2.000000e+01 : f32
    %78 = vector.broadcast %cst_32 : f32 to vector<32x61xf32>
    %79 = arith.minimumf %75, %78 : vector<32x61xf32>
    %80 = math.exp %79 : vector<32x61xf32>
    %cst_33 = arith.constant 1.000000e+00 : f32
    %81 = vector.broadcast %cst_33 : f32 to vector<32x61xf32>
    %82 = arith.addf %81, %80 : vector<32x61xf32>
    %83 = math.log %82 : vector<32x61xf32>
    %cst_34 = arith.constant 0.00999999977 : f32
    %84 = vector.broadcast %cst_34 : f32 to vector<32x61xf32>
    %85 = arith.mulf %83, %84 : vector<32x61xf32>
    %86 = arith.select %77, %60, %85 : vector<32x61xi1>, vector<32x61xf32>
    %87 = arith.truncf %48 : vector<32x64xf32> to vector<32x64xbf16>
    %cst_35 = arith.constant dense<0.000000e+00> : vector<32x61xf32>
    %88 = tpu.matmul %87, %55, %cst_35 {dimension_numbers = #tpu.dot_dimension_numbers<[1], [0], [0], [1], [0, 0, 1, 1], [], []>} : vector<32x64xbf16>, vector<64x61xbf16>, vector<32x61xf32> -> vector<32x61xf32>
    %89 = arith.mulf %88, %73 : vector<32x61xf32>
    %90 = arith.truncf %51 : vector<32x64xf32> to vector<32x64xbf16>
    %cst_36 = arith.constant dense<0.000000e+00> : vector<32x61xf32>
    %91 = tpu.matmul %90, %55, %cst_36 {dimension_numbers = #tpu.dot_dimension_numbers<[1], [0], [0], [1], [0, 0, 1, 1], [], []>} : vector<32x64xbf16>, vector<64x61xbf16>, vector<32x61xf32> -> vector<32x61xf32>
    %92 = arith.mulf %91, %73 : vector<32x61xf32>
    %93 = arith.truncf %54 : vector<32x64xf32> to vector<32x64xbf16>
    %cst_37 = arith.constant dense<0.000000e+00> : vector<32x61xf32>
    %94 = tpu.matmul %93, %55, %cst_37 {dimension_numbers = #tpu.dot_dimension_numbers<[1], [0], [0], [1], [0, 0, 1, 1], [], []>} : vector<32x64xbf16>, vector<64x61xbf16>, vector<32x61xf32> -> vector<32x61xf32>
    %95 = arith.mulf %94, %73 : vector<32x61xf32>
    %96 = tpu.concatenate %86, %0 in 1 : vector<32x61xf32>, vector<32x3xf32> -> vector<32x64xf32>
    %cst_38 = arith.constant 0.707106769 : f32
    %97 = vector.broadcast %cst_38 : f32 to vector<32x64xf32>
    %98 = arith.mulf %96, %97 : vector<32x64xf32>
    %99 = tpu.concatenate %89, %5 in 1 : vector<32x61xf32>, vector<32x3xf32> -> vector<32x64xf32>
    %cst_39 = arith.constant 0.707106769 : f32
    %100 = vector.broadcast %cst_39 : f32 to vector<32x64xf32>
    %101 = arith.mulf %99, %100 : vector<32x64xf32>
    %102 = tpu.concatenate %92, %9 in 1 : vector<32x61xf32>, vector<32x3xf32> -> vector<32x64xf32>
    %cst_40 = arith.constant 0.707106769 : f32
    %103 = vector.broadcast %cst_40 : f32 to vector<32x64xf32>
    %104 = arith.mulf %102, %103 : vector<32x64xf32>
    %105 = tpu.concatenate %95, %13 in 1 : vector<32x61xf32>, vector<32x3xf32> -> vector<32x64xf32>
    %cst_41 = arith.constant 0.707106769 : f32
    %106 = vector.broadcast %cst_41 : f32 to vector<32x64xf32>
    %107 = arith.mulf %105, %106 : vector<32x64xf32>
    %c0_42 = arith.constant 0 : index
    %c0_43 = arith.constant 0 : index
    %108 = vector.load %arg7[%c0_42, %c0_43] : memref<64x64xbf16, #tpu.memory_space<vmem>>, vector<64x64xbf16>
    %c0_44 = arith.constant 0 : index
    %c0_45 = arith.constant 0 : index
    %109 = vector.load %arg8[%c0_44, %c0_45] : memref<1x64xf32, #tpu.memory_space<vmem>>, vector<1x64xf32>
    %110 = arith.truncf %98 : vector<32x64xf32> to vector<32x64xbf16>
    %cst_46 = arith.constant dense<0.000000e+00> : vector<32x64xf32>
    %111 = tpu.matmul %110, %108, %cst_46 {dimension_numbers = #tpu.dot_dimension_numbers<[1], [0], [0], [1], [0, 0, 1, 1], [], []>} : vector<32x64xbf16>, vector<64x64xbf16>, vector<32x64xf32> -> vector<32x64xf32>
    %112 = vector.broadcast %109 : vector<1x64xf32> to vector<32x64xf32>
    %113 = arith.addf %111, %112 : vector<32x64xf32>
    %cst_47 = arith.constant 1.000000e+02 : f32
    %114 = vector.broadcast %cst_47 : f32 to vector<32x64xf32>
    %115 = arith.mulf %114, %113 : vector<32x64xf32>
    %cst_48 = arith.constant 2.000000e+01 : f32
    %116 = vector.broadcast %cst_48 : f32 to vector<32x64xf32>
    %117 = arith.cmpf ogt, %115, %116 : vector<32x64xf32>
    %cst_49 = arith.constant 0.000000e+00 : f32
    %118 = vector.broadcast %cst_49 : f32 to vector<32x64xf32>
    %119 = arith.subf %118, %115 : vector<32x64xf32>
    %120 = math.exp %119 : vector<32x64xf32>
    %cst_50 = arith.constant 1.000000e+00 : f32
    %121 = vector.broadcast %cst_50 : f32 to vector<32x64xf32>
    %122 = arith.addf %121, %120 : vector<32x64xf32>
    %cst_51 = arith.constant 1.000000e+00 : f32
    %123 = vector.broadcast %cst_51 : f32 to vector<32x64xf32>
    %124 = arith.divf %123, %122 : vector<32x64xf32>
    %cst_52 = arith.constant 1.000000e+00 : f32
    %125 = vector.broadcast %cst_52 : f32 to vector<32x64xf32>
    %126 = arith.select %117, %125, %124 : vector<32x64xi1>, vector<32x64xf32>
    %cst_53 = arith.constant 1.000000e+02 : f32
    %127 = vector.broadcast %cst_53 : f32 to vector<32x64xf32>
    %128 = arith.mulf %127, %113 : vector<32x64xf32>
    %cst_54 = arith.constant 2.000000e+01 : f32
    %129 = vector.broadcast %cst_54 : f32 to vector<32x64xf32>
    %130 = arith.cmpf ogt, %128, %129 : vector<32x64xf32>
    %cst_55 = arith.constant 2.000000e+01 : f32
    %131 = vector.broadcast %cst_55 : f32 to vector<32x64xf32>
    %132 = arith.minimumf %128, %131 : vector<32x64xf32>
    %133 = math.exp %132 : vector<32x64xf32>
    %cst_56 = arith.constant 1.000000e+00 : f32
    %134 = vector.broadcast %cst_56 : f32 to vector<32x64xf32>
    %135 = arith.addf %134, %133 : vector<32x64xf32>
    %136 = math.log %135 : vector<32x64xf32>
    %cst_57 = arith.constant 0.00999999977 : f32
    %137 = vector.broadcast %cst_57 : f32 to vector<32x64xf32>
    %138 = arith.mulf %136, %137 : vector<32x64xf32>
    %139 = arith.select %130, %113, %138 : vector<32x64xi1>, vector<32x64xf32>
    %140 = arith.truncf %101 : vector<32x64xf32> to vector<32x64xbf16>
    %cst_58 = arith.constant dense<0.000000e+00> : vector<32x64xf32>
    %141 = tpu.matmul %140, %108, %cst_58 {dimension_numbers = #tpu.dot_dimension_numbers<[1], [0], [0], [1], [0, 0, 1, 1], [], []>} : vector<32x64xbf16>, vector<64x64xbf16>, vector<32x64xf32> -> vector<32x64xf32>
    %142 = arith.mulf %141, %126 : vector<32x64xf32>
    %143 = arith.truncf %104 : vector<32x64xf32> to vector<32x64xbf16>
    %cst_59 = arith.constant dense<0.000000e+00> : vector<32x64xf32>
    %144 = tpu.matmul %143, %108, %cst_59 {dimension_numbers = #tpu.dot_dimension_numbers<[1], [0], [0], [1], [0, 0, 1, 1], [], []>} : vector<32x64xbf16>, vector<64x64xbf16>, vector<32x64xf32> -> vector<32x64xf32>
    %145 = arith.mulf %144, %126 : vector<32x64xf32>
    %146 = arith.truncf %107 : vector<32x64xf32> to vector<32x64xbf16>
    %cst_60 = arith.constant dense<0.000000e+00> : vector<32x64xf32>
    %147 = tpu.matmul %146, %108, %cst_60 {dimension_numbers = #tpu.dot_dimension_numbers<[1], [0], [0], [1], [0, 0, 1, 1], [], []>} : vector<32x64xbf16>, vector<64x64xbf16>, vector<32x64xf32> -> vector<32x64xf32>
    %148 = arith.mulf %147, %126 : vector<32x64xf32>
    %c0_61 = arith.constant 0 : index
    %c0_62 = arith.constant 0 : index
    %149 = vector.load %arg9[%c0_61, %c0_62] : memref<64x17xf32, #tpu.memory_space<vmem>>, vector<64x17xf32>
    %cst_63 = arith.constant dense<0.000000e+00> : vector<32x17xf32>
    %150 = tpu.matmul %139, %149, %cst_63 {dimension_numbers = #tpu.dot_dimension_numbers<[1], [0], [0], [1], [0, 0, 1, 1], [], []>} : vector<32x64xf32>, vector<64x17xf32>, vector<32x17xf32> -> vector<32x17xf32>
    %c0_64 = arith.constant 0 : index
    %c0_65 = arith.constant 0 : index
    %151 = vector.load %arg10[%c0_64, %c0_65] : memref<1x17xf32, #tpu.memory_space<vmem>>, vector<1x17xf32>
    %152 = vector.broadcast %151 : vector<1x17xf32> to vector<32x17xf32>
    %153 = arith.addf %150, %152 : vector<32x17xf32>
    %154 = vector.extract_strided_slice %149 {offsets = [0, 0], sizes = [64, 1], strides = [1, 1]} : vector<64x17xf32> to vector<64x1xf32>
    %cst_66 = arith.constant dense<0.000000e+00> : vector<32x1xf32>
    %155 = tpu.matmul %142, %154, %cst_66 {dimension_numbers = #tpu.dot_dimension_numbers<[1], [0], [0], [1], [0, 0, 1, 1], [], []>} : vector<32x64xf32>, vector<64x1xf32>, vector<32x1xf32> -> vector<32x1xf32>
    %cst_67 = arith.constant dense<0.000000e+00> : vector<32x1xf32>
    %156 = tpu.matmul %145, %154, %cst_67 {dimension_numbers = #tpu.dot_dimension_numbers<[1], [0], [0], [1], [0, 0, 1, 1], [], []>} : vector<32x64xf32>, vector<64x1xf32>, vector<32x1xf32> -> vector<32x1xf32>
    %cst_68 = arith.constant dense<0.000000e+00> : vector<32x1xf32>
    %157 = tpu.matmul %148, %154, %cst_68 {dimension_numbers = #tpu.dot_dimension_numbers<[1], [0], [0], [1], [0, 0, 1, 1], [], []>} : vector<32x64xf32>, vector<64x1xf32>, vector<32x1xf32> -> vector<32x1xf32>
    %158 = tpu.concatenate %155, %156, %157 in 1 : vector<32x1xf32>, vector<32x1xf32>, vector<32x1xf32> -> vector<32x3xf32>
    %159 = vector.extract_strided_slice %153 {offsets = [0, 0], sizes = [32, 1], strides = [1, 1]} : vector<32x17xf32> to vector<32x1xf32>
    %160 = vector.extract_strided_slice %153 {offsets = [0, 1], sizes = [32, 16], strides = [1, 1]} : vector<32x17xf32> to vector<32x16xf32>
    %c0_69 = arith.constant 0 : index
    %c0_70 = arith.constant 0 : index
    %161 = vector.load %arg2[%c0_69, %c0_70] : memref<32x3xf32, #tpu.memory_space<vmem>>, vector<32x3xf32>
    %cst_71 = arith.constant 0.000000e+00 : f32
    %162 = vector.broadcast %cst_71 : f32 to vector<32x3xf32>
    %163 = arith.subf %162, %161 : vector<32x3xf32>
    %164 = arith.mulf %158, %158 : vector<32x3xf32>
    %cst_72 = arith.constant dense<0.000000e+00> : vector<32xf32>
    %165 = vector.multi_reduction <add>, %164, %cst_72 [1] : vector<32x3xf32> to vector<32xf32>
    %166 = vector.shape_cast %165 : vector<32xf32> to vector<32x1xf32>
    %cst_73 = arith.constant 1.000000e-24 : f32
    %167 = vector.broadcast %cst_73 : f32 to vector<32x1xf32>
    %168 = arith.maximumf %166, %167 : vector<32x1xf32>
    %169 = math.rsqrt %168 : vector<32x1xf32>
    %170 = vector.broadcast %169 : vector<32x1xf32> to vector<32x3xf32>
    %171 = arith.mulf %158, %170 : vector<32x3xf32>
    %172 = vector.extract_strided_slice %160 {offsets = [0, 0], sizes = [32, 1], strides = [1, 1]} : vector<32x16xf32> to vector<32x1xf32>
    %cst_74 = arith.constant 2.000000e+01 : f32
    %173 = vector.broadcast %cst_74 : f32 to vector<32x1xf32>
    %174 = arith.cmpf ogt, %172, %173 : vector<32x1xf32>
    %cst_75 = arith.constant 2.000000e+01 : f32
    %175 = vector.broadcast %cst_75 : f32 to vector<32x1xf32>
    %176 = arith.minimumf %172, %175 : vector<32x1xf32>
    %177 = math.exp %176 : vector<32x1xf32>
    %cst_76 = arith.constant 1.000000e+00 : f32
    %178 = vector.broadcast %cst_76 : f32 to vector<32x1xf32>
    %179 = arith.addf %178, %177 : vector<32x1xf32>
    %180 = math.log %179 : vector<32x1xf32>
    %181 = arith.select %174, %172, %180 : vector<32x1xi1>, vector<32x1xf32>
    %182 = vector.extract_strided_slice %160 {offsets = [0, 1], sizes = [32, 9], strides = [1, 1]} : vector<32x16xf32> to vector<32x9xf32>
    %183 = vector.extract_strided_slice %160 {offsets = [0, 10], sizes = [32, 3], strides = [1, 1]} : vector<32x16xf32> to vector<32x3xf32>
    %cst_77 = arith.constant 0.000000e+00 : f32
    %184 = vector.broadcast %cst_77 : f32 to vector<32x3xf32>
    %185 = arith.subf %184, %183 : vector<32x3xf32>
    %186 = math.exp %185 : vector<32x3xf32>
    %cst_78 = arith.constant 1.000000e+00 : f32
    %187 = vector.broadcast %cst_78 : f32 to vector<32x3xf32>
    %188 = arith.addf %187, %186 : vector<32x3xf32>
    %cst_79 = arith.constant 1.000000e+00 : f32
    %189 = vector.broadcast %cst_79 : f32 to vector<32x3xf32>
    %190 = arith.divf %189, %188 : vector<32x3xf32>
    %191 = vector.extract_strided_slice %160 {offsets = [0, 13], sizes = [32, 3], strides = [1, 1]} : vector<32x16xf32> to vector<32x3xf32>
    %cst_80 = arith.constant 0.000000e+00 : f32
    %192 = vector.broadcast %cst_80 : f32 to vector<32x3xf32>
    %193 = arith.subf %192, %191 : vector<32x3xf32>
    %194 = math.exp %193 : vector<32x3xf32>
    %cst_81 = arith.constant 1.000000e+00 : f32
    %195 = vector.broadcast %cst_81 : f32 to vector<32x3xf32>
    %196 = arith.addf %195, %194 : vector<32x3xf32>
    %cst_82 = arith.constant 1.000000e+00 : f32
    %197 = vector.broadcast %cst_82 : f32 to vector<32x3xf32>
    %198 = arith.divf %197, %196 : vector<32x3xf32>
    %199 = arith.mulf %171, %163 : vector<32x3xf32>
    %cst_83 = arith.constant dense<0.000000e+00> : vector<32xf32>
    %200 = vector.multi_reduction <add>, %199, %cst_83 [1] : vector<32x3xf32> to vector<32xf32>
    %201 = vector.shape_cast %200 : vector<32xf32> to vector<32x1xf32>
    %cst_84 = arith.constant 2.000000e+00 : f32
    %202 = vector.broadcast %cst_84 : f32 to vector<32x3xf32>
    %203 = arith.mulf %202, %171 : vector<32x3xf32>
    %204 = vector.broadcast %201 : vector<32x1xf32> to vector<32x3xf32>
    %205 = arith.mulf %203, %204 : vector<32x3xf32>
    %206 = arith.subf %205, %163 : vector<32x3xf32>
    %207 = vector.extract_strided_slice %171 {offsets = [0, 1], sizes = [32, 1], strides = [1, 1]} : vector<32x3xf32> to vector<32x1xf32>
    %208 = vector.extract_strided_slice %171 {offsets = [0, 2], sizes = [32, 1], strides = [1, 1]} : vector<32x3xf32> to vector<32x1xf32>
    %209 = vector.extract_strided_slice %171 {offsets = [0, 0], sizes = [32, 1], strides = [1, 1]} : vector<32x3xf32> to vector<32x1xf32>
    %cst_85 = arith.constant 1.000000e+00 : f32
    %210 = vector.broadcast %cst_85 : f32 to vector<32x1xf32>
    %211 = arith.mulf %207, %209 : vector<32x1xf32>
    %212 = arith.mulf %207, %208 : vector<32x1xf32>
    %cst_86 = arith.constant 3.000000e+00 : f32
    %213 = vector.broadcast %cst_86 : f32 to vector<32x1xf32>
    %214 = arith.mulf %213, %208 : vector<32x1xf32>
    %215 = arith.mulf %214, %208 : vector<32x1xf32>
    %cst_87 = arith.constant 1.000000e+00 : f32
    %216 = vector.broadcast %cst_87 : f32 to vector<32x1xf32>
    %217 = arith.subf %215, %216 : vector<32x1xf32>
    %218 = arith.mulf %208, %209 : vector<32x1xf32>
    %219 = arith.mulf %209, %209 : vector<32x1xf32>
    %220 = arith.mulf %207, %207 : vector<32x1xf32>
    %221 = arith.subf %219, %220 : vector<32x1xf32>
    %222 = tpu.concatenate %210, %207, %208, %209, %211, %212, %217, %218, %221 in 1 : vector<32x1xf32>, vector<32x1xf32>, vector<32x1xf32>, vector<32x1xf32>, vector<32x1xf32>, vector<32x1xf32>, vector<32x1xf32>, vector<32x1xf32>, vector<32x1xf32> -> vector<32x9xf32>
    %223 = vector.extract_strided_slice %206 {offsets = [0, 1], sizes = [32, 1], strides = [1, 1]} : vector<32x3xf32> to vector<32x1xf32>
    %224 = vector.extract_strided_slice %206 {offsets = [0, 2], sizes = [32, 1], strides = [1, 1]} : vector<32x3xf32> to vector<32x1xf32>
    %225 = vector.extract_strided_slice %206 {offsets = [0, 0], sizes = [32, 1], strides = [1, 1]} : vector<32x3xf32> to vector<32x1xf32>
    %cst_88 = arith.constant 1.000000e+00 : f32
    %226 = vector.broadcast %cst_88 : f32 to vector<32x1xf32>
    %227 = arith.mulf %223, %225 : vector<32x1xf32>
    %228 = arith.mulf %223, %224 : vector<32x1xf32>
    %cst_89 = arith.constant 3.000000e+00 : f32
    %229 = vector.broadcast %cst_89 : f32 to vector<32x1xf32>
    %230 = arith.mulf %229, %224 : vector<32x1xf32>
    %231 = arith.mulf %230, %224 : vector<32x1xf32>
    %cst_90 = arith.constant 1.000000e+00 : f32
    %232 = vector.broadcast %cst_90 : f32 to vector<32x1xf32>
    %233 = arith.subf %231, %232 : vector<32x1xf32>
    %234 = arith.mulf %224, %225 : vector<32x1xf32>
    %235 = arith.mulf %225, %225 : vector<32x1xf32>
    %236 = arith.mulf %223, %223 : vector<32x1xf32>
    %237 = arith.subf %235, %236 : vector<32x1xf32>
    %cst_91 = arith.constant 0.000000e+00 : f32
    %238 = vector.broadcast %cst_91 : f32 to vector<32x1xf32>
    %239 = arith.subf %238, %181 : vector<32x1xf32>
    %240 = math.exp %239 : vector<32x1xf32>
    %241 = arith.mulf %240, %240 : vector<32x1xf32>
    %242 = arith.mulf %241, %240 : vector<32x1xf32>
    %243 = arith.mulf %223, %240 : vector<32x1xf32>
    %244 = arith.mulf %224, %240 : vector<32x1xf32>
    %245 = arith.mulf %225, %240 : vector<32x1xf32>
    %246 = arith.mulf %227, %242 : vector<32x1xf32>
    %247 = arith.mulf %228, %242 : vector<32x1xf32>
    %248 = arith.mulf %233, %242 : vector<32x1xf32>
    %249 = arith.mulf %234, %242 : vector<32x1xf32>
    %250 = arith.mulf %237, %242 : vector<32x1xf32>
    %251 = tpu.concatenate %226, %243, %244, %245, %246, %247, %248, %249, %250 in 1 : vector<32x1xf32>, vector<32x1xf32>, vector<32x1xf32>, vector<32x1xf32>, vector<32x1xf32>, vector<32x1xf32>, vector<32x1xf32>, vector<32x1xf32>, vector<32x1xf32> -> vector<32x9xf32>
    %c0_92 = arith.constant 0 : index
    %c0_93 = arith.constant 0 : index
    %252 = vector.load %arg21[%c0_92, %c0_93] : memref<9x3xf32, #tpu.memory_space<vmem>>, vector<9x3xf32>
    %cst_94 = arith.constant dense<0.000000e+00> : vector<32x3xf32>
    %253 = tpu.matmul %222, %252, %cst_94 {dimension_numbers = #tpu.dot_dimension_numbers<[1], [0], [0], [1], [0, 0, 1, 1], [], []>} : vector<32x9xf32>, vector<9x3xf32>, vector<32x3xf32> -> vector<32x3xf32>
    %cst_95 = arith.constant 0.000000e+00 : f32
    %254 = vector.broadcast %cst_95 : f32 to vector<32x3xf32>
    %255 = arith.maximumf %253, %254 : vector<32x3xf32>
    %c0_96 = arith.constant 0 : index
    %c0_97 = arith.constant 0 : index
    %256 = vector.load %arg22[%c0_96, %c0_97] : memref<9x3xf32, #tpu.memory_space<vmem>>, vector<9x3xf32>
    %cst_98 = arith.constant dense<0.000000e+00> : vector<32x3xf32>
    %257 = tpu.matmul %251, %256, %cst_98 {dimension_numbers = #tpu.dot_dimension_numbers<[1], [0], [0], [1], [0, 0, 1, 1], [], []>} : vector<32x9xf32>, vector<9x3xf32>, vector<32x3xf32> -> vector<32x3xf32>
    %cst_99 = arith.constant 0.000000e+00 : f32
    %258 = vector.broadcast %cst_99 : f32 to vector<32x3xf32>
    %259 = arith.maximumf %257, %258 : vector<32x3xf32>
    %260 = arith.mulf %190, %255 : vector<32x3xf32>
    %261 = tpu.concatenate %201, %163, %171, %181 in 1 : vector<32x1xf32>, vector<32x3xf32>, vector<32x3xf32>, vector<32x1xf32> -> vector<32x8xf32>
    %262 = arith.truncf %261 : vector<32x8xf32> to vector<32x8xbf16>
    %c0_100 = arith.constant 0 : index
    %c0_101 = arith.constant 0 : index
    %263 = vector.load %arg11[%c0_100, %c0_101] : memref<8x512xbf16, #tpu.memory_space<vmem>>, vector<8x512xbf16>
    %cst_102 = arith.constant dense<0.000000e+00> : vector<32x512xf32>
    %264 = tpu.matmul %262, %263, %cst_102 {dimension_numbers = #tpu.dot_dimension_numbers<[1], [0], [0], [1], [0, 0, 1, 1], [], []>} : vector<32x8xbf16>, vector<8x512xbf16>, vector<32x512xf32> -> vector<32x512xf32>
    %c0_103 = arith.constant 0 : index
    %c0_104 = arith.constant 0 : index
    %265 = vector.load %arg12[%c0_103, %c0_104] : memref<1x512xf32, #tpu.memory_space<vmem>>, vector<1x512xf32>
    %266 = vector.broadcast %265 : vector<1x512xf32> to vector<32x512xf32>
    %267 = arith.addf %264, %266 : vector<32x512xf32>
    %cst_105 = arith.constant 0.000000e+00 : f32
    %268 = vector.broadcast %cst_105 : f32 to vector<32x512xf32>
    %269 = arith.maximumf %267, %268 : vector<32x512xf32>
    %270 = arith.truncf %269 : vector<32x512xf32> to vector<32x512xbf16>
    %c0_106 = arith.constant 0 : index
    %c0_107 = arith.constant 0 : index
    %271 = vector.load %arg13[%c0_106, %c0_107] : memref<512x512xbf16, #tpu.memory_space<vmem>>, vector<512x512xbf16>
    %cst_108 = arith.constant dense<0.000000e+00> : vector<32x512xf32>
    %272 = tpu.matmul %270, %271, %cst_108 {dimension_numbers = #tpu.dot_dimension_numbers<[1], [0], [0], [1], [0, 0, 1, 1], [], []>} : vector<32x512xbf16>, vector<512x512xbf16>, vector<32x512xf32> -> vector<32x512xf32>
    %c0_109 = arith.constant 0 : index
    %c0_110 = arith.constant 0 : index
    %273 = vector.load %arg14[%c0_109, %c0_110] : memref<1x512xf32, #tpu.memory_space<vmem>>, vector<1x512xf32>
    %274 = vector.broadcast %273 : vector<1x512xf32> to vector<32x512xf32>
    %275 = arith.addf %272, %274 : vector<32x512xf32>
    %cst_111 = arith.constant 0.000000e+00 : f32
    %276 = vector.broadcast %cst_111 : f32 to vector<32x512xf32>
    %277 = arith.maximumf %275, %276 : vector<32x512xf32>
    %278 = arith.truncf %277 : vector<32x512xf32> to vector<32x512xbf16>
    %c0_112 = arith.constant 0 : index
    %c0_113 = arith.constant 0 : index
    %279 = vector.load %arg15[%c0_112, %c0_113] : memref<512x512xbf16, #tpu.memory_space<vmem>>, vector<512x512xbf16>
    %cst_114 = arith.constant dense<0.000000e+00> : vector<32x512xf32>
    %280 = tpu.matmul %278, %279, %cst_114 {dimension_numbers = #tpu.dot_dimension_numbers<[1], [0], [0], [1], [0, 0, 1, 1], [], []>} : vector<32x512xbf16>, vector<512x512xbf16>, vector<32x512xf32> -> vector<32x512xf32>
    %c0_115 = arith.constant 0 : index
    %c0_116 = arith.constant 0 : index
    %281 = vector.load %arg16[%c0_115, %c0_116] : memref<1x512xf32, #tpu.memory_space<vmem>>, vector<1x512xf32>
    %282 = vector.broadcast %281 : vector<1x512xf32> to vector<32x512xf32>
    %283 = arith.addf %280, %282 : vector<32x512xf32>
    %cst_117 = arith.constant 0.000000e+00 : f32
    %284 = vector.broadcast %cst_117 : f32 to vector<32x512xf32>
    %285 = arith.maximumf %283, %284 : vector<32x512xf32>
    %286 = arith.truncf %285 : vector<32x512xf32> to vector<32x512xbf16>
    %c0_118 = arith.constant 0 : index
    %c0_119 = arith.constant 0 : index
    %287 = vector.load %arg17[%c0_118, %c0_119] : memref<512x512xbf16, #tpu.memory_space<vmem>>, vector<512x512xbf16>
    %cst_120 = arith.constant dense<0.000000e+00> : vector<32x512xf32>
    %288 = tpu.matmul %286, %287, %cst_120 {dimension_numbers = #tpu.dot_dimension_numbers<[1], [0], [0], [1], [0, 0, 1, 1], [], []>} : vector<32x512xbf16>, vector<512x512xbf16>, vector<32x512xf32> -> vector<32x512xf32>
    %c0_121 = arith.constant 0 : index
    %c0_122 = arith.constant 0 : index
    %289 = vector.load %arg18[%c0_121, %c0_122] : memref<1x512xf32, #tpu.memory_space<vmem>>, vector<1x512xf32>
    %290 = vector.broadcast %289 : vector<1x512xf32> to vector<32x512xf32>
    %291 = arith.addf %288, %290 : vector<32x512xf32>
    %cst_123 = arith.constant 0.000000e+00 : f32
    %292 = vector.broadcast %cst_123 : f32 to vector<32x512xf32>
    %293 = arith.maximumf %291, %292 : vector<32x512xf32>
    %294 = arith.truncf %293 : vector<32x512xf32> to vector<32x512xbf16>
    %c0_124 = arith.constant 0 : index
    %c0_125 = arith.constant 0 : index
    %295 = vector.load %arg19[%c0_124, %c0_125] : memref<512x27xbf16, #tpu.memory_space<vmem>>, vector<512x27xbf16>
    %cst_126 = arith.constant dense<0.000000e+00> : vector<32x27xf32>
    %296 = tpu.matmul %294, %295, %cst_126 {dimension_numbers = #tpu.dot_dimension_numbers<[1], [0], [0], [1], [0, 0, 1, 1], [], []>} : vector<32x512xbf16>, vector<512x27xbf16>, vector<32x27xf32> -> vector<32x27xf32>
    %c0_127 = arith.constant 0 : index
    %c0_128 = arith.constant 0 : index
    %297 = vector.load %arg20[%c0_127, %c0_128] : memref<1x27xf32, #tpu.memory_space<vmem>>, vector<1x27xf32>
    %298 = vector.broadcast %297 : vector<1x27xf32> to vector<32x27xf32>
    %299 = arith.addf %296, %298 : vector<32x27xf32>
    %300 = vector.extract_strided_slice %299 {offsets = [0, 0], sizes = [32, 9], strides = [1, 1]} : vector<32x27xf32> to vector<32x9xf32>
    %301 = arith.mulf %300, %182 : vector<32x9xf32>
    %cst_129 = arith.constant dense<0.000000e+00> : vector<32xf32>
    %302 = vector.multi_reduction <add>, %301, %cst_129 [1] : vector<32x9xf32> to vector<32xf32>
    %303 = vector.shape_cast %302 : vector<32xf32> to vector<32x1xf32>
    %304 = vector.extract_strided_slice %299 {offsets = [0, 9], sizes = [32, 9], strides = [1, 1]} : vector<32x27xf32> to vector<32x9xf32>
    %305 = arith.mulf %304, %182 : vector<32x9xf32>
    %cst_130 = arith.constant dense<0.000000e+00> : vector<32xf32>
    %306 = vector.multi_reduction <add>, %305, %cst_130 [1] : vector<32x9xf32> to vector<32xf32>
    %307 = vector.shape_cast %306 : vector<32xf32> to vector<32x1xf32>
    %308 = vector.extract_strided_slice %299 {offsets = [0, 18], sizes = [32, 9], strides = [1, 1]} : vector<32x27xf32> to vector<32x9xf32>
    %309 = arith.mulf %308, %182 : vector<32x9xf32>
    %cst_131 = arith.constant dense<0.000000e+00> : vector<32xf32>
    %310 = vector.multi_reduction <add>, %309, %cst_131 [1] : vector<32x9xf32> to vector<32xf32>
    %311 = vector.shape_cast %310 : vector<32xf32> to vector<32x1xf32>
    %312 = tpu.concatenate %303, %307, %311 in 1 : vector<32x1xf32>, vector<32x1xf32>, vector<32x1xf32> -> vector<32x3xf32>
    %313 = arith.mulf %198, %259 : vector<32x3xf32>
    %cst_132 = arith.constant 0.000000e+00 : f32
    %314 = vector.broadcast %cst_132 : f32 to vector<32x3xf32>
    %315 = arith.subf %314, %312 : vector<32x3xf32>
    %316 = math.exp %315 : vector<32x3xf32>
    %cst_133 = arith.constant 1.000000e+00 : f32
    %317 = vector.broadcast %cst_133 : f32 to vector<32x3xf32>
    %318 = arith.addf %317, %316 : vector<32x3xf32>
    %cst_134 = arith.constant 1.000000e+00 : f32
    %319 = vector.broadcast %cst_134 : f32 to vector<32x3xf32>
    %320 = arith.divf %319, %318 : vector<32x3xf32>
    %321 = arith.mulf %313, %320 : vector<32x3xf32>
    %322 = arith.addf %260, %321 : vector<32x3xf32>
    %323 = tpu.concatenate %322, %190, %260, %321 in 1 : vector<32x3xf32>, vector<32x3xf32>, vector<32x3xf32>, vector<32x3xf32> -> vector<32x12xf32>
    %c0_135 = arith.constant 0 : index
    %c0_136 = arith.constant 0 : index
    %324 = vector.load %arg23[%c0_135, %c0_136] : memref<12x12xf32, #tpu.memory_space<vmem>>, vector<12x12xf32>
    %cst_137 = arith.constant dense<0.000000e+00> : vector<32x12xf32>
    %325 = tpu.matmul %323, %324, %cst_137 {dimension_numbers = #tpu.dot_dimension_numbers<[1], [0], [0], [1], [0, 0, 1, 1], [], []>} : vector<32x12xf32>, vector<12x12xf32>, vector<32x12xf32> -> vector<32x12xf32>
    %cst_138 = arith.constant 0.000000e+00 : f32
    %cst_139 = arith.constant 1.000000e+00 : f32
    %326 = vector.broadcast %cst_138 : f32 to vector<32x12xf32>
    %327 = arith.maximumf %326, %325 : vector<32x12xf32>
    %328 = vector.broadcast %cst_139 : f32 to vector<32x12xf32>
    %329 = arith.minimumf %328, %327 : vector<32x12xf32>
    %330 = tpu.concatenate %159, %158, %329, %259, %255 in 1 : vector<32x1xf32>, vector<32x3xf32>, vector<32x12xf32>, vector<32x3xf32>, vector<32x3xf32> -> vector<32x22xf32>
    %c0_140 = arith.constant 0 : index
    %c0_141 = arith.constant 0 : index
    %331 = vector.load %arg24[%c0_140, %c0_141] : memref<32x22xf32, #tpu.memory_space<vmem>>, vector<32x22xf32>
    tpu.vector_store %arg24[%c0_140, %c0_141], %330 {strides = array<i32>} : memref<32x22xf32, #tpu.memory_space<vmem>>, vector<32x22xf32>,
    return
  }
  func.func @transform_0(%arg0: i32) -> (i32, i32) {
    %c0_i32 = arith.constant 0 : i32
    %c0_i32_0 = arith.constant 0 : i32
    return %arg0, %c0_i32 : i32, i32
  }
  func.func @transform_1(%arg0: i32) -> (i32, i32) {
    %c0_i32 = arith.constant 0 : i32
    %c0_i32_0 = arith.constant 0 : i32
    return %arg0, %c0_i32 : i32, i32
  }
  func.func @transform_2(%arg0: i32) -> (i32, i32) {
    %c0_i32 = arith.constant 0 : i32
    %c0_i32_0 = arith.constant 0 : i32
    %c0_i32_1 = arith.constant 0 : i32
    return %c0_i32, %c0_i32_0 : i32, i32
  }
  func.func @transform_3(%arg0: i32) -> (i32, i32) {
    %c0_i32 = arith.constant 0 : i32
    %c0_i32_0 = arith.constant 0 : i32
    %c0_i32_1 = arith.constant 0 : i32
    return %c0_i32, %c0_i32_0 : i32, i32
  }
  func.func @transform_4(%arg0: i32) -> (i32, i32) {
    %c0_i32 = arith.constant 0 : i32
    %c0_i32_0 = arith.constant 0 : i32
    %c0_i32_1 = arith.constant 0 : i32
    return %c0_i32, %c0_i32_0 : i32, i32
  }
  func.func @transform_5(%arg0: i32) -> (i32, i32) {
    %c0_i32 = arith.constant 0 : i32
    %c0_i32_0 = arith.constant 0 : i32
    %c0_i32_1 = arith.constant 0 : i32
    return %c0_i32, %c0_i32_0 : i32, i32
  }
  func.func @transform_6(%arg0: i32) -> (i32, i32) {
    %c0_i32 = arith.constant 0 : i32
    %c0_i32_0 = arith.constant 0 : i32
    %c0_i32_1 = arith.constant 0 : i32
    return %c0_i32, %c0_i32_0 : i32, i32
  }
  func.func @transform_7(%arg0: i32) -> (i32, i32) {
    %c0_i32 = arith.constant 0 : i32
    %c0_i32_0 = arith.constant 0 : i32
    %c0_i32_1 = arith.constant 0 : i32
    return %c0_i32, %c0_i32_0 : i32, i32
  }
  func.func @transform_8(%arg0: i32) -> (i32, i32) {
    %c0_i32 = arith.constant 0 : i32
    %c0_i32_0 = arith.constant 0 : i32
    %c0_i32_1 = arith.constant 0 : i32
    return %c0_i32, %c0_i32_0 : i32, i32
  }
  func.func @transform_9(%arg0: i32) -> (i32, i32) {
    %c0_i32 = arith.constant 0 : i32
    %c0_i32_0 = arith.constant 0 : i32
    %c0_i32_1 = arith.constant 0 : i32
    return %c0_i32, %c0_i32_0 : i32, i32
  }
  func.func @transform_10(%arg0: i32) -> (i32, i32) {
    %c0_i32 = arith.constant 0 : i32
    %c0_i32_0 = arith.constant 0 : i32
    %c0_i32_1 = arith.constant 0 : i32
    return %c0_i32, %c0_i32_0 : i32, i32
  }
  func.func @transform_11(%arg0: i32) -> (i32, i32) {
    %c0_i32 = arith.constant 0 : i32
    %c0_i32_0 = arith.constant 0 : i32
    %c0_i32_1 = arith.constant 0 : i32
    return %c0_i32, %c0_i32_0 : i32, i32
  }
  func.func @transform_12(%arg0: i32) -> (i32, i32) {
    %c0_i32 = arith.constant 0 : i32
    %c0_i32_0 = arith.constant 0 : i32
    %c0_i32_1 = arith.constant 0 : i32
    return %c0_i32, %c0_i32_0 : i32, i32
  }
  func.func @transform_13(%arg0: i32) -> (i32, i32) {
    %c0_i32 = arith.constant 0 : i32
    %c0_i32_0 = arith.constant 0 : i32
    %c0_i32_1 = arith.constant 0 : i32
    return %c0_i32, %c0_i32_0 : i32, i32
  }
  func.func @transform_14(%arg0: i32) -> (i32, i32) {
    %c0_i32 = arith.constant 0 : i32
    %c0_i32_0 = arith.constant 0 : i32
    %c0_i32_1 = arith.constant 0 : i32
    return %c0_i32, %c0_i32_0 : i32, i32
  }
  func.func @transform_15(%arg0: i32) -> (i32, i32) {
    %c0_i32 = arith.constant 0 : i32
    %c0_i32_0 = arith.constant 0 : i32
    %c0_i32_1 = arith.constant 0 : i32
    return %c0_i32, %c0_i32_0 : i32, i32
  }
  func.func @transform_16(%arg0: i32) -> (i32, i32) {
    %c0_i32 = arith.constant 0 : i32
    %c0_i32_0 = arith.constant 0 : i32
    %c0_i32_1 = arith.constant 0 : i32
    return %c0_i32, %c0_i32_0 : i32, i32
  }
  func.func @transform_17(%arg0: i32) -> (i32, i32) {
    %c0_i32 = arith.constant 0 : i32
    %c0_i32_0 = arith.constant 0 : i32
    %c0_i32_1 = arith.constant 0 : i32
    return %c0_i32, %c0_i32_0 : i32, i32
  }
  func.func @transform_18(%arg0: i32) -> (i32, i32) {
    %c0_i32 = arith.constant 0 : i32
    %c0_i32_0 = arith.constant 0 : i32
    %c0_i32_1 = arith.constant 0 : i32
    return %c0_i32, %c0_i32_0 : i32, i32
  }
  func.func @transform_19(%arg0: i32) -> (i32, i32) {
    %c0_i32 = arith.constant 0 : i32
    %c0_i32_0 = arith.constant 0 : i32
    %c0_i32_1 = arith.constant 0 : i32
    return %c0_i32, %c0_i32_0 : i32, i32
  }
  func.func @transform_20(%arg0: i32) -> (i32, i32) {
    %c0_i32 = arith.constant 0 : i32
    %c0_i32_0 = arith.constant 0 : i32
    %c0_i32_1 = arith.constant 0 : i32
    return %c0_i32, %c0_i32_0 : i32, i32
  }
  func.func @transform_21(%arg0: i32) -> (i32, i32) {
    %c0_i32 = arith.constant 0 : i32
    %c0_i32_0 = arith.constant 0 : i32
    %c0_i32_1 = arith.constant 0 : i32
    return %c0_i32, %c0_i32_0 : i32, i32
  }
  func.func @transform_22(%arg0: i32) -> (i32, i32) {
    %c0_i32 = arith.constant 0 : i32
    %c0_i32_0 = arith.constant 0 : i32
    %c0_i32_1 = arith.constant 0 : i32
    return %c0_i32, %c0_i32_0 : i32, i32
  }
  func.func @transform_23(%arg0: i32) -> (i32, i32) {
    %c0_i32 = arith.constant 0 : i32
    %c0_i32_0 = arith.constant 0 : i32
    return %arg0, %c0_i32 : i32, i32
  }
}

</mosaic_0001>

<llo_original>
// kernel: tpu_custom_call.1
$region0: #{tpu_custom_call.1}
  #allocation0 [shape = 'u32[]', space=smem, size = 0x4, offset = 0x4, fixed_abs, tag = 'smem constant byte address 0x4 - core index']
  #allocation1 [shape = 'u32[144,128]{1,0:T(1,128)}', space=vmem, size = 0x12000, scoped, tag = 'internal scratch']
  %s0 = inlined_call_operand.vmem [shape: f32[64,3], index: 0, kind: input, shape index: {}]
  %s1 = inlined_call_operand.vmem [shape: f32[64,3], index: 1, kind: input, shape index: {}]
  %s2 = inlined_call_operand.vmem [shape: bf16[3,64], index: 2, kind: input, shape index: {}]
  %s3 = inlined_call_operand.vmem [shape: f32[1,64], index: 3, kind: input, shape index: {}]
  %s4 = inlined_call_operand.vmem [shape: bf16[64,61], index: 4, kind: input, shape index: {}]
  %s5 = inlined_call_operand.vmem [shape: f32[1,61], index: 5, kind: input, shape index: {}]
  %s6 = inlined_call_operand.vmem [shape: bf16[64,64], index: 6, kind: input, shape index: {}]
  %s7 = inlined_call_operand.vmem [shape: f32[1,64], index: 7, kind: input, shape index: {}]
  %s8 = inlined_call_operand.vmem [shape: f32[64,17], index: 8, kind: input, shape index: {}]
  %s9 = inlined_call_operand.vmem [shape: f32[1,17], index: 9, kind: input, shape index: {}]
  %s10 = inlined_call_operand.vmem [shape: bf16[8,512], index: 10, kind: input, shape index: {}]
  %s11 = inlined_call_operand.vmem [shape: f32[1,512], index: 11, kind: input, shape index: {}]
  %s12 = inlined_call_operand.hbm [shape: bf16[512,512], index: 12, kind: input, shape index: {}]
  %s13 = inlined_call_operand.vmem [shape: f32[1,512], index: 13, kind: input, shape index: {}]
  %s14 = inlined_call_operand.hbm [shape: bf16[512,512], index: 14, kind: input, shape index: {}]
  %s15 = inlined_call_operand.vmem [shape: f32[1,512], index: 15, kind: input, shape index: {}]
  %s16 = inlined_call_operand.hbm [shape: bf16[512,512], index: 16, kind: input, shape index: {}]
  %s17 = inlined_call_operand.vmem [shape: f32[1,512], index: 17, kind: input, shape index: {}]
  %s18 = inlined_call_operand.vmem [shape: bf16[512,27], index: 18, kind: input, shape index: {}]
  %s19 = inlined_call_operand.vmem [shape: f32[1,27], index: 19, kind: input, shape index: {}]
  %s20 = inlined_call_operand.vmem [shape: f32[9,3], index: 20, kind: input, shape index: {}]
  %s21 = inlined_call_operand.vmem [shape: f32[9,3], index: 21, kind: input, shape index: {}]
  %s22 = inlined_call_operand.vmem [shape: f32[12,12], index: 22, kind: input, shape index: {}]
  %s23 = inlined_call_operand.vmem [shape: f32[64,22], index: 23, kind: output, shape index: {}]
  %s24 = sld [smem:[#allocation0]]
  $region137: #{tpu_custom_call.1} parent=0
    _
  %s26 = ssub.s32 1, %s24
  %s27 = scalar_select 0, %s26, %s24
  $region1: #{tpu_custom_call.1} parent=0
    #allocation2 [shape = 'u8[524288]{0}', space=vmem, size = 0x80000, scoped, tag = 'input window, operand 12, single buffered']
    #allocation3 [shape = 's32[2]{0}', space=sflag, size = 0x8, scoped, tag = 'scoped memory for tpu_custom_call.1']
    #allocation4 [shape = 'u8[524288]{0}', space=vmem, size = 0x80000, scoped, tag = 'input window, operand 14, single buffered']
    #allocation5 [shape = 's32[1]{0}', space=sflag, size = 0x4, scoped, tag = 'scoped memory for tpu_custom_call.1']
    #allocation6 [shape = 'u8[524288]{0}', space=vmem, size = 0x80000, scoped, tag = 'input window, operand 16, single buffered']
    %28 = vsyncpa [#allocation3], 0
    %29 = vsyncpa [#allocation5], 0
    loop: start=0, step=1, limit=4
    $region2: #{tpu_custom_call.1} parent=1 // loop_pre_header
      _
    $region3: #{tpu_custom_call.1} parent=1 // loop_header
      %s31 = sphi 0, %s35
      %p32 = scmp.ge.s32.totalorder %s31, 4
      %s41 = sphi 0, %s43
      %s44 = sphi 0, %s41
      %s45 = sphi 0, %s44
      %s61 = sphi 0, %s45
      %s67 = sphi 0, %s69
      %s70 = sphi 0, %s67
      %s71 = sphi 0, %s70
      %s87 = sphi 0, %s71
      %s91 = sphi 0, %s91
      %s93 = sphi 0, %s91
      %s94 = sphi 0, %s93
      %s108 = sphi 0, %s94
      %s112 = sphi 0, %s112
      %s114 = sphi 0, %s112
      %s115 = sphi 0, %s114
      %s129 = sphi 0, %s115
      %s133 = sphi 0, %s133
      %s135 = sphi 0, %s133
      %s136 = sphi 0, %s135
      %s150 = sphi 0, %s136
      %s154 = sphi 0, %s154
      %s156 = sphi 0, %s154
      %s157 = sphi 0, %s156
      %s171 = sphi 0, %s157
      %s175 = sphi 0, %s175
      %s177 = sphi 0, %s175
      %s178 = sphi 0, %s177
      %s192 = sphi 0, %s178
      %s196 = sphi 0, %s196
      %s198 = sphi 0, %s196
      %s199 = sphi 0, %s198
      %s213 = sphi 0, %s199
      %s217 = sphi 0, %s217
      %s219 = sphi 0, %s217
      %s220 = sphi 0, %s219
      %s234 = sphi 0, %s220
      %s238 = sphi 0, %s238
      %s240 = sphi 0, %s238
      %s241 = sphi 0, %s240
      %s255 = sphi 0, %s241
      %s259 = sphi 0, %s259
      %s261 = sphi 0, %s259
      %s262 = sphi 0, %s261
      %s276 = sphi 0, %s262
      %s280 = sphi 0, %s280
      %s282 = sphi 0, %s280
      %s283 = sphi 0, %s282
      %s297 = sphi 0, %s283
      %s301 = sphi 0, %s301
      %s303 = sphi 0, %s301
      %s304 = sphi 0, %s303
      %s318 = sphi 0, %s304
      %s322 = sphi 0, %s322
      %s324 = sphi 0, %s322
      %s325 = sphi 0, %s324
      %s339 = sphi 0, %s325
      %s343 = sphi 0, %s343
      %s345 = sphi 0, %s343
      %s346 = sphi 0, %s345
      %s360 = sphi 0, %s346
      %s364 = sphi 0, %s364
      %s366 = sphi 0, %s364
      %s367 = sphi 0, %s366
      %s381 = sphi 0, %s367
      %s385 = sphi 0, %s385
      %s387 = sphi 0, %s385
      %s388 = sphi 0, %s387
      %s402 = sphi 0, %s388
      %s406 = sphi 0, %s406
      %s408 = sphi 0, %s406
      %s409 = sphi 0, %s408
      %s423 = sphi 0, %s409
      %s427 = sphi 0, %s427
      %s429 = sphi 0, %s427
      %s430 = sphi 0, %s429
      %s444 = sphi 0, %s430
      %s448 = sphi 0, %s448
      %s450 = sphi 0, %s448
      %s451 = sphi 0, %s450
      %s465 = sphi 0, %s451
      %s469 = sphi 0, %s469
      %s471 = sphi 0, %s469
      %s472 = sphi 0, %s471
      %s486 = sphi 0, %s472
      %s490 = sphi 0, %s490
      %s492 = sphi 0, %s490
      %s493 = sphi 0, %s492
      %s507 = sphi 0, %s493
      %s511 = sphi 0, %s511
      %s513 = sphi 0, %s511
      %s514 = sphi 0, %s513
      %s528 = sphi 0, %s514
      %s534 = sphi 0, %s536
      %s537 = sphi 0, %s534
      %s538 = sphi 0, %s537
      %s554 = sphi 0, %s538
    $region4: #{tpu_custom_call.1} parent=1 // loop_header_branch
      %34 = sbr.rel (%p32) target = $region8
    $region5: #{tpu_custom_call.1} parent=1 // loop_body
      %s36 = ssub.s32 %s31, 1
      %s37 = ssub.s32 %s31, 2
      %s38 = sadd.s32 %s31, 1
      %s39 = ssub.s32 %s31, %s38
      %p40 = scmp.eq.s32.totalorder %s39, 0
      %s42 = sadd.s32 %s41, 1
      %s43 = scalar_select %p40, %s41, %s42
      %p46 = pneg %p40
      %p47 = scmp.eq.s32.totalorder %s31, 1
      %p48 = por %p46, %p47
      %p49 = scmp.ne.s32.totalorder %s41, %s44
      %p50 = scmp.eq.s32.totalorder %s31, 0
      %p51 = por %p49, %p50
      %p52 = scmp.ne.s32.totalorder %s41, %s44
      %p53 = scmp.eq.s32.totalorder %s36, 1
      %p54 = por %p52, %p53
      %p55 = scmp.ne.s32.totalorder %s44, %s45
      %p56 = scmp.eq.s32.totalorder %s36, 0
      %p57 = por %p55, %p56
      %p58 = scmp.ne.s32.totalorder %s44, %s45
      %p59 = scmp.eq.s32.totalorder %s37, 1
      %p60 = por %p58, %p59
      %p62 = scmp.ne.s32.totalorder %s45, %s61
      %p63 = scmp.eq.s32.totalorder %s37, 0
      %p64 = por %p62, %p63
      %s65 = ssub.s32 %s31, %s38
      %p66 = scmp.eq.s32.totalorder %s65, 0
      %s68 = sadd.s32 %s67, 1
      %s69 = scalar_select %p66, %s67, %s68
      %p72 = pneg %p66
      %p73 = scmp.eq.s32.totalorder %s31, 1
      %p74 = por %p72, %p73
      %p75 = scmp.ne.s32.totalorder %s67, %s70
      %p76 = scmp.eq.s32.totalorder %s31, 0
      %p77 = por %p75, %p76
      %p78 = scmp.ne.s32.totalorder %s67, %s70
      %p79 = scmp.eq.s32.totalorder %s36, 1
      %p80 = por %p78, %p79
      %p81 = scmp.ne.s32.totalorder %s70, %s71
      %p82 = scmp.eq.s32.totalorder %s36, 0
      %p83 = por %p81, %p82
      %p84 = scmp.ne.s32.totalorder %s70, %s71
      %p85 = scmp.eq.s32.totalorder %s37, 1
      %p86 = por %p84, %p85
      %p88 = scmp.ne.s32.totalorder %s71, %s87
      %p89 = scmp.eq.s32.totalorder %s37, 0
      %p90 = por %p88, %p89
      %s92 = sadd.s32 %s91, 1
      %p95 = scmp.eq.s32.totalorder %s31, 1
      %p96 = scmp.ne.s32.totalorder %s91, %s93
      %p97 = scmp.eq.s32.totalorder %s31, 0
      %p98 = por %p96, %p97
      %p99 = scmp.ne.s32.totalorder %s91, %s93
      %p100 = scmp.eq.s32.totalorder %s36, 1
      %p101 = por %p99, %p100
      %p102 = scmp.ne.s32.totalorder %s93, %s94
      %p103 = scmp.eq.s32.totalorder %s36, 0
      %p104 = por %p102, %p103
      %p105 = scmp.ne.s32.totalorder %s93, %s94
      %p106 = scmp.eq.s32.totalorder %s37, 1
      %p107 = por %p105, %p106
      %p109 = scmp.ne.s32.totalorder %s94, %s108
      %p110 = scmp.eq.s32.totalorder %s37, 0
      %p111 = por %p109, %p110
      %s113 = sadd.s32 %s112, 1
      %p116 = scmp.eq.s32.totalorder %s31, 1
      %p117 = scmp.ne.s32.totalorder %s112, %s114
      %p118 = scmp.eq.s32.totalorder %s31, 0
      %p119 = por %p117, %p118
      %p120 = scmp.ne.s32.totalorder %s112, %s114
      %p121 = scmp.eq.s32.totalorder %s36, 1
      %p122 = por %p120, %p121
      %p123 = scmp.ne.s32.totalorder %s114, %s115
      %p124 = scmp.eq.s32.totalorder %s36, 0
      %p125 = por %p123, %p124
      %p126 = scmp.ne.s32.totalorder %s114, %s115
      %p127 = scmp.eq.s32.totalorder %s37, 1
      %p128 = por %p126, %p127
      %p130 = scmp.ne.s32.totalorder %s115, %s129
      %p131 = scmp.eq.s32.totalorder %s37, 0
      %p132 = por %p130, %p131
      %s134 = sadd.s32 %s133, 1
      %p137 = scmp.eq.s32.totalorder %s31, 1
      %p138 = scmp.ne.s32.totalorder %s133, %s135
      %p139 = scmp.eq.s32.totalorder %s31, 0
      %p140 = por %p138, %p139
      %p141 = scmp.ne.s32.totalorder %s133, %s135
      %p142 = scmp.eq.s32.totalorder %s36, 1
      %p143 = por %p141, %p142
      %p144 = scmp.ne.s32.totalorder %s135, %s136
      %p145 = scmp.eq.s32.totalorder %s36, 0
      %p146 = por %p144, %p145
      %p147 = scmp.ne.s32.totalorder %s135, %s136
      %p148 = scmp.eq.s32.totalorder %s37, 1
      %p149 = por %p147, %p148
      %p151 = scmp.ne.s32.totalorder %s136, %s150
      %p152 = scmp.eq.s32.totalorder %s37, 0
      %p153 = por %p151, %p152
      %s155 = sadd.s32 %s154, 1
      %p158 = scmp.eq.s32.totalorder %s31, 1
      %p159 = scmp.ne.s32.totalorder %s154, %s156
      %p160 = scmp.eq.s32.totalorder %s31, 0
      %p161 = por %p159, %p160
      %p162 = scmp.ne.s32.totalorder %s154, %s156
      %p163 = scmp.eq.s32.totalorder %s36, 1
      %p164 = por %p162, %p163
      %p165 = scmp.ne.s32.totalorder %s156, %s157
      %p166 = scmp.eq.s32.totalorder %s36, 0
      %p167 = por %p165, %p166
      %p168 = scmp.ne.s32.totalorder %s156, %s157
      %p169 = scmp.eq.s32.totalorder %s37, 1
      %p170 = por %p168, %p169
      %p172 = scmp.ne.s32.totalorder %s157, %s171
      %p173 = scmp.eq.s32.totalorder %s37, 0
      %p174 = por %p172, %p173
      %s176 = sadd.s32 %s175, 1
      %p179 = scmp.eq.s32.totalorder %s31, 1
      %p180 = scmp.ne.s32.totalorder %s175, %s177
      %p181 = scmp.eq.s32.totalorder %s31, 0
      %p182 = por %p180, %p181
      %p183 = scmp.ne.s32.totalorder %s175, %s177
      %p184 = scmp.eq.s32.totalorder %s36, 1
      %p185 = por %p183, %p184
      %p186 = scmp.ne.s32.totalorder %s177, %s178
      %p187 = scmp.eq.s32.totalorder %s36, 0
      %p188 = por %p186, %p187
      %p189 = scmp.ne.s32.totalorder %s177, %s178
      %p190 = scmp.eq.s32.totalorder %s37, 1
      %p191 = por %p189, %p190
      %p193 = scmp.ne.s32.totalorder %s178, %s192
      %p194 = scmp.eq.s32.totalorder %s37, 0
      %p195 = por %p193, %p194
      %s197 = sadd.s32 %s196, 1
      %p200 = scmp.eq.s32.totalorder %s31, 1
      %p201 = scmp.ne.s32.totalorder %s196, %s198
      %p202 = scmp.eq.s32.totalorder %s31, 0
      %p203 = por %p201, %p202
      %p204 = scmp.ne.s32.totalorder %s196, %s198
      %p205 = scmp.eq.s32.totalorder %s36, 1
      %p206 = por %p204, %p205
      %p207 = scmp.ne.s32.totalorder %s198, %s199
      %p208 = scmp.eq.s32.totalorder %s36, 0
      %p209 = por %p207, %p208
      %p210 = scmp.ne.s32.totalorder %s198, %s199
      %p211 = scmp.eq.s32.totalorder %s37, 1
      %p212 = por %p210, %p211
      %p214 = scmp.ne.s32.totalorder %s199, %s213
      %p215 = scmp.eq.s32.totalorder %s37, 0
      %p216 = por %p214, %p215
      %s218 = sadd.s32 %s217, 1
      %p221 = scmp.eq.s32.totalorder %s31, 1
      %p222 = scmp.ne.s32.totalorder %s217, %s219
      %p223 = scmp.eq.s32.totalorder %s31, 0
      %p224 = por %p222, %p223
      %p225 = scmp.ne.s32.totalorder %s217, %s219
      %p226 = scmp.eq.s32.totalorder %s36, 1
      %p227 = por %p225, %p226
      %p228 = scmp.ne.s32.totalorder %s219, %s220
      %p229 = scmp.eq.s32.totalorder %s36, 0
      %p230 = por %p228, %p229
      %p231 = scmp.ne.s32.totalorder %s219, %s220
      %p232 = scmp.eq.s32.totalorder %s37, 1
      %p233 = por %p231, %p232
      %p235 = scmp.ne.s32.totalorder %s220, %s234
      %p236 = scmp.eq.s32.totalorder %s37, 0
      %p237 = por %p235, %p236
      %s239 = sadd.s32 %s238, 1
      %p242 = scmp.eq.s32.totalorder %s31, 1
      %p243 = scmp.ne.s32.totalorder %s238, %s240
      %p244 = scmp.eq.s32.totalorder %s31, 0
      %p245 = por %p243, %p244
      %p246 = scmp.ne.s32.totalorder %s238, %s240
      %p247 = scmp.eq.s32.totalorder %s36, 1
      %p248 = por %p246, %p247
      %p249 = scmp.ne.s32.totalorder %s240, %s241
      %p250 = scmp.eq.s32.totalorder %s36, 0
      %p251 = por %p249, %p250
      %p252 = scmp.ne.s32.totalorder %s240, %s241
      %p253 = scmp.eq.s32.totalorder %s37, 1
      %p254 = por %p252, %p253
      %p256 = scmp.ne.s32.totalorder %s241, %s255
      %p257 = scmp.eq.s32.totalorder %s37, 0
      %p258 = por %p256, %p257
      %s260 = sadd.s32 %s259, 1
      %p263 = scmp.eq.s32.totalorder %s31, 1
      %p264 = scmp.ne.s32.totalorder %s259, %s261
      %p265 = scmp.eq.s32.totalorder %s31, 0
      %p266 = por %p264, %p265
      %p267 = scmp.ne.s32.totalorder %s259, %s261
      %p268 = scmp.eq.s32.totalorder %s36, 1
      %p269 = por %p267, %p268
      %p270 = scmp.ne.s32.totalorder %s261, %s262
      %p271 = scmp.eq.s32.totalorder %s36, 0
      %p272 = por %p270, %p271
      %p273 = scmp.ne.s32.totalorder %s261, %s262
      %p274 = scmp.eq.s32.totalorder %s37, 1
      %p275 = por %p273, %p274
      %p277 = scmp.ne.s32.totalorder %s262, %s276
      %p278 = scmp.eq.s32.totalorder %s37, 0
      %p279 = por %p277, %p278
      %s281 = sadd.s32 %s280, 1
      %p284 = scmp.eq.s32.totalorder %s31, 1
      %p285 = scmp.ne.s32.totalorder %s280, %s282
      %p286 = scmp.eq.s32.totalorder %s31, 0
      %p287 = por %p285, %p286
      %p288 = scmp.ne.s32.totalorder %s280, %s282
      %p289 = scmp.eq.s32.totalorder %s36, 1
      %p290 = por %p288, %p289
      %p291 = scmp.ne.s32.totalorder %s282, %s283
      %p292 = scmp.eq.s32.totalorder %s36, 0
      %p293 = por %p291, %p292
      %p294 = scmp.ne.s32.totalorder %s282, %s283
      %p295 = scmp.eq.s32.totalorder %s37, 1
      %p296 = por %p294, %p295
      %p298 = scmp.ne.s32.totalorder %s283, %s297
      %p299 = scmp.eq.s32.totalorder %s37, 0
      %p300 = por %p298, %p299
      %s302 = sadd.s32 %s301, 1
      %p305 = scmp.eq.s32.totalorder %s31, 1
      %p306 = scmp.ne.s32.totalorder %s301, %s303
      %p307 = scmp.eq.s32.totalorder %s31, 0
      %p308 = por %p306, %p307
      %p309 = scmp.ne.s32.totalorder %s301, %s303
      %p310 = scmp.eq.s32.totalorder %s36, 1
      %p311 = por %p309, %p310
      %p312 = scmp.ne.s32.totalorder %s303, %s304
      %p313 = scmp.eq.s32.totalorder %s36, 0
      %p314 = por %p312, %p313
      %p315 = scmp.ne.s32.totalorder %s303, %s304
      %p316 = scmp.eq.s32.totalorder %s37, 1
      %p317 = por %p315, %p316
      %p319 = scmp.ne.s32.totalorder %s304, %s318
      %p320 = scmp.eq.s32.totalorder %s37, 0
      %p321 = por %p319, %p320
      %s323 = sadd.s32 %s322, 1
      %p326 = scmp.eq.s32.totalorder %s31, 1
      %p327 = scmp.ne.s32.totalorder %s322, %s324
      %p328 = scmp.eq.s32.totalorder %s31, 0
      %p329 = por %p327, %p328
      %p330 = scmp.ne.s32.totalorder %s322, %s324
      %p331 = scmp.eq.s32.totalorder %s36, 1
      %p332 = por %p330, %p331
      %p333 = scmp.ne.s32.totalorder %s324, %s325
      %p334 = scmp.eq.s32.totalorder %s36, 0
      %p335 = por %p333, %p334
      %p336 = scmp.ne.s32.totalorder %s324, %s325
      %p337 = scmp.eq.s32.totalorder %s37, 1
      %p338 = por %p336, %p337
      %p340 = scmp.ne.s32.totalorder %s325, %s339
      %p341 = scmp.eq.s32.totalorder %s37, 0
      %p342 = por %p340, %p341
      %s344 = sadd.s32 %s343, 1
      %p347 = scmp.eq.s32.totalorder %s31, 1
      %p348 = scmp.ne.s32.totalorder %s343, %s345
      %p349 = scmp.eq.s32.totalorder %s31, 0
      %p350 = por %p348, %p349
      %p351 = scmp.ne.s32.totalorder %s343, %s345
      %p352 = scmp.eq.s32.totalorder %s36, 1
      %p353 = por %p351, %p352
      %p354 = scmp.ne.s32.totalorder %s345, %s346
      %p355 = scmp.eq.s32.totalorder %s36, 0
      %p356 = por %p354, %p355
      %p357 = scmp.ne.s32.totalorder %s345, %s346
      %p358 = scmp.eq.s32.totalorder %s37, 1
      %p359 = por %p357, %p358
      %p361 = scmp.ne.s32.totalorder %s346, %s360
      %p362 = scmp.eq.s32.totalorder %s37, 0
      %p363 = por %p361, %p362
      %s365 = sadd.s32 %s364, 1
      %p368 = scmp.eq.s32.totalorder %s31, 1
      %p369 = scmp.ne.s32.totalorder %s364, %s366
      %p370 = scmp.eq.s32.totalorder %s31, 0
      %p371 = por %p369, %p370
      %p372 = scmp.ne.s32.totalorder %s364, %s366
      %p373 = scmp.eq.s32.totalorder %s36, 1
      %p374 = por %p372, %p373
      %p375 = scmp.ne.s32.totalorder %s366, %s367
      %p376 = scmp.eq.s32.totalorder %s36, 0
      %p377 = por %p375, %p376
      %p378 = scmp.ne.s32.totalorder %s366, %s367
      %p379 = scmp.eq.s32.totalorder %s37, 1
      %p380 = por %p378, %p379
      %p382 = scmp.ne.s32.totalorder %s367, %s381
      %p383 = scmp.eq.s32.totalorder %s37, 0
      %p384 = por %p382, %p383
      %s386 = sadd.s32 %s385, 1
      %p389 = scmp.eq.s32.totalorder %s31, 1
      %p390 = scmp.ne.s32.totalorder %s385, %s387
      %p391 = scmp.eq.s32.totalorder %s31, 0
      %p392 = por %p390, %p391
      %p393 = scmp.ne.s32.totalorder %s385, %s387
      %p394 = scmp.eq.s32.totalorder %s36, 1
      %p395 = por %p393, %p394
      %p396 = scmp.ne.s32.totalorder %s387, %s388
      %p397 = scmp.eq.s32.totalorder %s36, 0
      %p398 = por %p396, %p397
      %p399 = scmp.ne.s32.totalorder %s387, %s388
      %p400 = scmp.eq.s32.totalorder %s37, 1
      %p401 = por %p399, %p400
      %p403 = scmp.ne.s32.totalorder %s388, %s402
      %p404 = scmp.eq.s32.totalorder %s37, 0
      %p405 = por %p403, %p404
      %s407 = sadd.s32 %s406, 1
      %p410 = scmp.eq.s32.totalorder %s31, 1
      %p411 = scmp.ne.s32.totalorder %s406, %s408
      %p412 = scmp.eq.s32.totalorder %s31, 0
      %p413 = por %p411, %p412
      %p414 = scmp.ne.s32.totalorder %s406, %s408
      %p415 = scmp.eq.s32.totalorder %s36, 1
      %p416 = por %p414, %p415
      %p417 = scmp.ne.s32.totalorder %s408, %s409
      %p418 = scmp.eq.s32.totalorder %s36, 0
      %p419 = por %p417, %p418
      %p420 = scmp.ne.s32.totalorder %s408, %s409
      %p421 = scmp.eq.s32.totalorder %s37, 1
      %p422 = por %p420, %p421
      %p424 = scmp.ne.s32.totalorder %s409, %s423
      %p425 = scmp.eq.s32.totalorder %s37, 0
      %p426 = por %p424, %p425
      %s428 = sadd.s32 %s427, 1
      %p431 = scmp.eq.s32.totalorder %s31, 1
      %p432 = scmp.ne.s32.totalorder %s427, %s429
      %p433 = scmp.eq.s32.totalorder %s31, 0
      %p434 = por %p432, %p433
      %p435 = scmp.ne.s32.totalorder %s427, %s429
      %p436 = scmp.eq.s32.totalorder %s36, 1
      %p437 = por %p435, %p436
      %p438 = scmp.ne.s32.totalorder %s429, %s430
      %p439 = scmp.eq.s32.totalorder %s36, 0
      %p440 = por %p438, %p439
      %p441 = scmp.ne.s32.totalorder %s429, %s430
      %p442 = scmp.eq.s32.totalorder %s37, 1
      %p443 = por %p441, %p442
      %p445 = scmp.ne.s32.totalorder %s430, %s444
      %p446 = scmp.eq.s32.totalorder %s37, 0
      %p447 = por %p445, %p446
      %s449 = sadd.s32 %s448, 1
      %p452 = scmp.eq.s32.totalorder %s31, 1
      %p453 = scmp.ne.s32.totalorder %s448, %s450
      %p454 = scmp.eq.s32.totalorder %s31, 0
      %p455 = por %p453, %p454
      %p456 = scmp.ne.s32.totalorder %s448, %s450
      %p457 = scmp.eq.s32.totalorder %s36, 1
      %p458 = por %p456, %p457
      %p459 = scmp.ne.s32.totalorder %s450, %s451
      %p460 = scmp.eq.s32.totalorder %s36, 0
      %p461 = por %p459, %p460
      %p462 = scmp.ne.s32.totalorder %s450, %s451
      %p463 = scmp.eq.s32.totalorder %s37, 1
      %p464 = por %p462, %p463
      %p466 = scmp.ne.s32.totalorder %s451, %s465
      %p467 = scmp.eq.s32.totalorder %s37, 0
      %p468 = por %p466, %p467
      %s470 = sadd.s32 %s469, 1
      %p473 = scmp.eq.s32.totalorder %s31, 1
      %p474 = scmp.ne.s32.totalorder %s469, %s471
      %p475 = scmp.eq.s32.totalorder %s31, 0
      %p476 = por %p474, %p475
      %p477 = scmp.ne.s32.totalorder %s469, %s471
      %p478 = scmp.eq.s32.totalorder %s36, 1
      %p479 = por %p477, %p478
      %p480 = scmp.ne.s32.totalorder %s471, %s472
      %p481 = scmp.eq.s32.totalorder %s36, 0
      %p482 = por %p480, %p481
      %p483 = scmp.ne.s32.totalorder %s471, %s472
      %p484 = scmp.eq.s32.totalorder %s37, 1
      %p485 = por %p483, %p484
      %p487 = scmp.ne.s32.totalorder %s472, %s486
      %p488 = scmp.eq.s32.totalorder %s37, 0
      %p489 = por %p487, %p488
      %s491 = sadd.s32 %s490, 1
      %p494 = scmp.eq.s32.totalorder %s31, 1
      %p495 = scmp.ne.s32.totalorder %s490, %s492
      %p496 = scmp.eq.s32.totalorder %s31, 0
      %p497 = por %p495, %p496
      %p498 = scmp.ne.s32.totalorder %s490, %s492
      %p499 = scmp.eq.s32.totalorder %s36, 1
      %p500 = por %p498, %p499
      %p501 = scmp.ne.s32.totalorder %s492, %s493
      %p502 = scmp.eq.s32.totalorder %s36, 0
      %p503 = por %p501, %p502
      %p504 = scmp.ne.s32.totalorder %s492, %s493
      %p505 = scmp.eq.s32.totalorder %s37, 1
      %p506 = por %p504, %p505
      %p508 = scmp.ne.s32.totalorder %s493, %s507
      %p509 = scmp.eq.s32.totalorder %s37, 0
      %p510 = por %p508, %p509
      %s512 = sadd.s32 %s511, 1
      %p515 = scmp.eq.s32.totalorder %s31, 1
      %p516 = scmp.ne.s32.totalorder %s511, %s513
      %p517 = scmp.eq.s32.totalorder %s31, 0
      %p518 = por %p516, %p517
      %p519 = scmp.ne.s32.totalorder %s511, %s513
      %p520 = scmp.eq.s32.totalorder %s36, 1
      %p521 = por %p519, %p520
      %p522 = scmp.ne.s32.totalorder %s513, %s514
      %p523 = scmp.eq.s32.totalorder %s36, 0
      %p524 = por %p522, %p523
      %p525 = scmp.ne.s32.totalorder %s513, %s514
      %p526 = scmp.eq.s32.totalorder %s37, 1
      %p527 = por %p525, %p526
      %p529 = scmp.ne.s32.totalorder %s514, %s528
      %p530 = scmp.eq.s32.totalorder %s37, 0
      %p531 = por %p529, %p530
      %s532 = ssub.s32 %s31, %s38
      %p533 = scmp.eq.s32.totalorder %s532, 0
      %s535 = sadd.s32 %s534, 1
      %s536 = scalar_select %p533, %s534, %s535
      %p539 = pneg %p533
      %p540 = scmp.eq.s32.totalorder %s31, 1
      %p541 = por %p539, %p540
      %p542 = scmp.ne.s32.totalorder %s534, %s537
      %p543 = scmp.eq.s32.totalorder %s31, 0
      %p544 = por %p542, %p543
      %p545 = scmp.ne.s32.totalorder %s534, %s537
      %p546 = scmp.eq.s32.totalorder %s36, 1
      %p547 = por %p545, %p546
      %p548 = scmp.ne.s32.totalorder %s537, %s538
      %p549 = scmp.eq.s32.totalorder %s36, 0
      %p550 = por %p548, %p549
      %p551 = scmp.ne.s32.totalorder %s537, %s538
      %p552 = scmp.eq.s32.totalorder %s37, 1
      %p553 = por %p551, %p552
      %p555 = scmp.ne.s32.totalorder %s538, %s554
      %p556 = scmp.eq.s32.totalorder %s37, 0
      %p557 = por %p555, %p556
      %p558 = scmp.le.s32.totalorder 1, %s31
      %p559 = scmp.lt.s32.totalorder %s31, 3
      %p560 = pnand %p558, %p559
      %p561 = pneg %p560
      // Predicated region
      $region9: #{tpu_custom_call.1} parent=5 // pred_check
        _
      $region10: #{tpu_custom_call.1} parent=5 // pred_check_branch
        %563 = sbr.rel (%p560) target = $region12
      $region11: #{tpu_custom_call.1} parent=5 // pred_region
        %s564 = ssub.s32 %s31, 1
        // Predicated region
        $region13: #{tpu_custom_call.1} parent=11 // pred_check
          %p565 = pneg %p104
        $region14: #{tpu_custom_call.1} parent=11 // pred_check_branch
          %567 = sbr.rel (%p565) target = $region16
        $region15: #{tpu_custom_call.1} parent=11 // pred_region
          _
        $region16: #{tpu_custom_call.1} parent=11 // pred_fallthru
          _
        // Predicated region
        $region17: #{tpu_custom_call.1} parent=11 // pred_check
          %p568 = pneg %p125
        $region18: #{tpu_custom_call.1} parent=11 // pred_check_branch
          %570 = sbr.rel (%p568) target = $region20
        $region19: #{tpu_custom_call.1} parent=11 // pred_region
          _
        $region20: #{tpu_custom_call.1} parent=11 // pred_fallthru
          _
        // Predicated region
        $region21: #{tpu_custom_call.1} parent=11 // pred_check
          %p571 = pneg %p146
        $region22: #{tpu_custom_call.1} parent=11 // pred_check_branch
          %573 = sbr.rel (%p571) target = $region24
        $region23: #{tpu_custom_call.1} parent=11 // pred_region
          _
        $region24: #{tpu_custom_call.1} parent=11 // pred_fallthru
          _
        // Predicated region
        $region25: #{tpu_custom_call.1} parent=11 // pred_check
          %p574 = pneg %p167
        $region26: #{tpu_custom_call.1} parent=11 // pred_check_branch
          %576 = sbr.rel (%p574) target = $region28
        $region27: #{tpu_custom_call.1} parent=11 // pred_region
          _
        $region28: #{tpu_custom_call.1} parent=11 // pred_fallthru
          _
        // Predicated region
        $region29: #{tpu_custom_call.1} parent=11 // pred_check
          %p577 = pneg %p188
        $region30: #{tpu_custom_call.1} parent=11 // pred_check_branch
          %579 = sbr.rel (%p577) target = $region32
        $region31: #{tpu_custom_call.1} parent=11 // pred_region
          _
        $region32: #{tpu_custom_call.1} parent=11 // pred_fallthru
          _
        // Predicated region
        $region33: #{tpu_custom_call.1} parent=11 // pred_check
          %p580 = pneg %p209
        $region34: #{tpu_custom_call.1} parent=11 // pred_check_branch
          %582 = sbr.rel (%p580) target = $region36
        $region35: #{tpu_custom_call.1} parent=11 // pred_region
          _
        $region36: #{tpu_custom_call.1} parent=11 // pred_fallthru
          _
        // Predicated region
        $region37: #{tpu_custom_call.1} parent=11 // pred_check
          %p583 = pneg %p230
        $region38: #{tpu_custom_call.1} parent=11 // pred_check_branch
          %585 = sbr.rel (%p583) target = $region40
        $region39: #{tpu_custom_call.1} parent=11 // pred_region
          _
        $region40: #{tpu_custom_call.1} parent=11 // pred_fallthru
          _
        // Predicated region
        $region41: #{tpu_custom_call.1} parent=11 // pred_check
          %p586 = pneg %p251
        $region42: #{tpu_custom_call.1} parent=11 // pred_check_branch
          %588 = sbr.rel (%p586) target = $region44
        $region43: #{tpu_custom_call.1} parent=11 // pred_region
          _
        $region44: #{tpu_custom_call.1} parent=11 // pred_fallthru
          _
        // Predicated region
        $region45: #{tpu_custom_call.1} parent=11 // pred_check
          %p589 = pneg %p272
        $region46: #{tpu_custom_call.1} parent=11 // pred_check_branch
          %591 = sbr.rel (%p589) target = $region48
        $region47: #{tpu_custom_call.1} parent=11 // pred_region
          _
        $region48: #{tpu_custom_call.1} parent=11 // pred_fallthru
          _
        // Predicated region
        $region49: #{tpu_custom_call.1} parent=11 // pred_check
          %p592 = pneg %p293
        $region50: #{tpu_custom_call.1} parent=11 // pred_check_branch
          %594 = sbr.rel (%p592) target = $region52
        $region51: #{tpu_custom_call.1} parent=11 // pred_region
          _
        $region52: #{tpu_custom_call.1} parent=11 // pred_fallthru
          _
        // Predicated region
        $region53: #{tpu_custom_call.1} parent=11 // pred_check
          %p595 = pneg %p314
        $region54: #{tpu_custom_call.1} parent=11 // pred_check_branch
          %597 = sbr.rel (%p595) target = $region56
        $region55: #{tpu_custom_call.1} parent=11 // pred_region
          %s599 = ssub.s32 16384, 16384
          %600 = vsyncadd [#allocation3], %s599
          %s601 = sshll.u32 [#allocation2], 4
          %s602 = int_to_ptr.vmem [resolvable:$true] %s601
          %607 = dma.hbm_to_vmem [thread:$0]  %s12, 16384, %s602, [#allocation3], 256, 256, 16
        $region56: #{tpu_custom_call.1} parent=11 // pred_fallthru
          _
        // Predicated region
        $region57: #{tpu_custom_call.1} parent=11 // pred_check
          %p608 = pneg %p335
        $region58: #{tpu_custom_call.1} parent=11 // pred_check_branch
          %610 = sbr.rel (%p608) target = $region60
        $region59: #{tpu_custom_call.1} parent=11 // pred_region
          _
        $region60: #{tpu_custom_call.1} parent=11 // pred_fallthru
          _
        // Predicated region
        $region61: #{tpu_custom_call.1} parent=11 // pred_check
          %p611 = pneg %p356
        $region62: #{tpu_custom_call.1} parent=11 // pred_check_branch
          %613 = sbr.rel (%p611) target = $region64
        $region63: #{tpu_custom_call.1} parent=11 // pred_region
          %s615 = ssub.s32 16384, 16384
          %616 = vsyncadd [#allocation5], %s615
          %s617 = sshll.u32 [#allocation4], 4
          %s618 = int_to_ptr.vmem [resolvable:$true] %s617
          %623 = dma.hbm_to_vmem [thread:$0]  %s14, 16384, %s618, [#allocation5], 256, 256, 16
        $region64: #{tpu_custom_call.1} parent=11 // pred_fallthru
          _
        // Predicated region
        $region65: #{tpu_custom_call.1} parent=11 // pred_check
          %p624 = pneg %p377
        $region66: #{tpu_custom_call.1} parent=11 // pred_check_branch
          %626 = sbr.rel (%p624) target = $region68
        $region67: #{tpu_custom_call.1} parent=11 // pred_region
          _
        $region68: #{tpu_custom_call.1} parent=11 // pred_fallthru
          _
        // Predicated region
        $region69: #{tpu_custom_call.1} parent=11 // pred_check
          %p627 = pneg %p398
        $region70: #{tpu_custom_call.1} parent=11 // pred_check_branch
          %629 = sbr.rel (%p627) target = $region72
        $region71: #{tpu_custom_call.1} parent=11 // pred_region
          %s631 = ssub.s32 16384, 16384
          %632 = vsyncadd [#allocation5], %s631
          %s633 = sshll.u32 [#allocation6], 4
          %s634 = int_to_ptr.vmem [resolvable:$true] %s633
          %639 = dma.hbm_to_vmem [thread:$0]  %s16, 16384, %s634, [#allocation5], 256, 256, 16
        $region72: #{tpu_custom_call.1} parent=11 // pred_fallthru
          _
        // Predicated region
        $region73: #{tpu_custom_call.1} parent=11 // pred_check
          %p640 = pneg %p419
        $region74: #{tpu_custom_call.1} parent=11 // pred_check_branch
          %642 = sbr.rel (%p640) target = $region76
        $region75: #{tpu_custom_call.1} parent=11 // pred_region
          _
        $region76: #{tpu_custom_call.1} parent=11 // pred_fallthru
          _
        // Predicated region
        $region77: #{tpu_custom_call.1} parent=11 // pred_check
          %p643 = pneg %p440
        $region78: #{tpu_custom_call.1} parent=11 // pred_check_branch
          %645 = sbr.rel (%p643) target = $region80
        $region79: #{tpu_custom_call.1} parent=11 // pred_region
          _
        $region80: #{tpu_custom_call.1} parent=11 // pred_fallthru
          _
        // Predicated region
        $region81: #{tpu_custom_call.1} parent=11 // pred_check
          %p646 = pneg %p461
        $region82: #{tpu_custom_call.1} parent=11 // pred_check_branch
          %648 = sbr.rel (%p646) target = $region84
        $region83: #{tpu_custom_call.1} parent=11 // pred_region
          _
        $region84: #{tpu_custom_call.1} parent=11 // pred_fallthru
          _
        // Predicated region
        $region85: #{tpu_custom_call.1} parent=11 // pred_check
          %p649 = pneg %p482
        $region86: #{tpu_custom_call.1} parent=11 // pred_check_branch
          %651 = sbr.rel (%p649) target = $region88
        $region87: #{tpu_custom_call.1} parent=11 // pred_region
          _
        $region88: #{tpu_custom_call.1} parent=11 // pred_fallthru
          _
        // Predicated region
        $region89: #{tpu_custom_call.1} parent=11 // pred_check
          %p652 = pneg %p503
        $region90: #{tpu_custom_call.1} parent=11 // pred_check_branch
          %654 = sbr.rel (%p652) target = $region92
        $region91: #{tpu_custom_call.1} parent=11 // pred_region
          _
        $region92: #{tpu_custom_call.1} parent=11 // pred_fallthru
          _
        // Predicated region
        $region93: #{tpu_custom_call.1} parent=11 // pred_check
          %p655 = pneg %p524
        $region94: #{tpu_custom_call.1} parent=11 // pred_check_branch
          %657 = sbr.rel (%p655) target = $region96
        $region95: #{tpu_custom_call.1} parent=11 // pred_region
          _
        $region96: #{tpu_custom_call.1} parent=11 // pred_fallthru
          _
      $region12: #{tpu_custom_call.1} parent=5 // pred_fallthru
        _
      %p658 = scmp.lt.s32.totalorder %s31, 2
      // Predicated region
      $region97: #{tpu_custom_call.1} parent=5 // pred_check
        %p659 = pneg %p658
      $region98: #{tpu_custom_call.1} parent=5 // pred_check_branch
        %661 = sbr.rel (%p659) target = $region100
      $region99: #{tpu_custom_call.1} parent=5 // pred_region
        // Predicated region
        $region101: #{tpu_custom_call.1} parent=99 // pred_check
          %p662 = pneg %p51
        $region102: #{tpu_custom_call.1} parent=99 // pred_check_branch
          %664 = sbr.rel (%p662) target = $region104
        $region103: #{tpu_custom_call.1} parent=99 // pred_region
          %s665 = smul.u32 4, %s31
          %p666 = scmp.lt.s32.totalorder %s665, 7
          %s667 = scalar_select %p666, %s665, 7
          %s668 = smul.addr %s667, 8
          %s669 = scalar_lea.vmem %s0, %s668
          %s670 = smul.u32 4, %s31
        $region104: #{tpu_custom_call.1} parent=99 // pred_fallthru
          _
        // Predicated region
        $region105: #{tpu_custom_call.1} parent=99 // pred_check
          %p671 = pneg %p77
        $region106: #{tpu_custom_call.1} parent=99 // pred_check_branch
          %673 = sbr.rel (%p671) target = $region108
        $region107: #{tpu_custom_call.1} parent=99 // pred_region
          %s674 = smul.u32 4, %s31
          %p675 = scmp.lt.s32.totalorder %s674, 7
          %s676 = scalar_select %p675, %s674, 7
          %s677 = smul.addr %s676, 8
          %s678 = scalar_lea.vmem %s1, %s677
          %s679 = smul.u32 4, %s31
        $region108: #{tpu_custom_call.1} parent=99 // pred_fallthru
          _
      $region100: #{tpu_custom_call.1} parent=5 // pred_fallthru
        _
      %p680 = scmp.le.s32.totalorder 1, %s31
      %p681 = scmp.lt.s32.totalorder %s31, 3
      %p682 = pnand %p680, %p681
      %p683 = pneg %p682
      // Predicated region
      $region109: #{tpu_custom_call.1} parent=5 // pred_check
        _
      $region110: #{tpu_custom_call.1} parent=5 // pred_check_branch
        %685 = sbr.rel (%p682) target = $region112
      $region111: #{tpu_custom_call.1} parent=5 // pred_region
        %s686 = ssub.s32 %s31, 1
        // Predicated region
        $region113: #{tpu_custom_call.1} parent=111 // pred_check
          %p687 = pneg %p314
        $region114: #{tpu_custom_call.1} parent=111 // pred_check_branch
          %689 = sbr.rel (%p687) target = $region116
        $region115: #{tpu_custom_call.1} parent=111 // pred_region
          %690 = dma.done [#allocation3], 16384
        $region116: #{tpu_custom_call.1} parent=111 // pred_fallthru
          _
        // Predicated region
        $region117: #{tpu_custom_call.1} parent=111 // pred_check
          %p691 = pneg %p356
        $region118: #{tpu_custom_call.1} parent=111 // pred_check_branch
          %693 = sbr.rel (%p691) target = $region120
        $region119: #{tpu_custom_call.1} parent=111 // pred_region
          %694 = dma.done [#allocation5], 16384
        $region120: #{tpu_custom_call.1} parent=111 // pred_fallthru
          _
        // Predicated region
        $region121: #{tpu_custom_call.1} parent=111 // pred_check
          %p695 = pneg %p398
        $region122: #{tpu_custom_call.1} parent=111 // pred_check_branch
          %697 = sbr.rel (%p695) target = $region124
        $region123: #{tpu_custom_call.1} parent=111 // pred_region
          %698 = dma.done [#allocation5], 16384
        $region124: #{tpu_custom_call.1} parent=111 // pred_fallthru
          _
        %s699 = smul.u32 4, %s36
        %p700 = scmp.lt.s32.totalorder %s699, 7
        %s701 = scalar_select %p700, %s699, 7
        %s702 = smul.addr %s701, 8
        %s703 = scalar_lea.vmem %s0, %s702
        %p704 = pneg %p57
        %p705 = pneg %p54
        %s706 = smul.u32 4, %s36
        %p707 = scmp.lt.s32.totalorder %s706, 7
        %s708 = scalar_select %p707, %s706, 7
        %s709 = smul.addr %s708, 8
        %s710 = scalar_lea.vmem %s1, %s709
        %p711 = pneg %p83
        %p712 = pneg %p80
        %p713 = pneg %p104
        %p714 = pneg %p101
        %p715 = pneg %p125
        %p716 = pneg %p122
        %p717 = pneg %p146
        %p718 = pneg %p143
        %p719 = pneg %p167
        %p720 = pneg %p164
        %p721 = pneg %p188
        %p722 = pneg %p185
        %p723 = pneg %p209
        %p724 = pneg %p206
        %p725 = pneg %p230
        %p726 = pneg %p227
        %p727 = pneg %p251
        %p728 = pneg %p248
        %p729 = pneg %p272
        %p730 = pneg %p269
        %p731 = pneg %p293
        %p732 = pneg %p290
        %p733 = pneg %p314
        %p734 = pneg %p311
        %p735 = pneg %p335
        %p736 = pneg %p332
        %p737 = pneg %p356
        %p738 = pneg %p353
        %p739 = pneg %p377
        %p740 = pneg %p374
        %p741 = pneg %p398
        %p742 = pneg %p395
        %p743 = pneg %p419
        %p744 = pneg %p416
        %p745 = pneg %p440
        %p746 = pneg %p437
        %p747 = pneg %p461
        %p748 = pneg %p458
        %p749 = pneg %p482
        %p750 = pneg %p479
        %p751 = pneg %p503
        %p752 = pneg %p500
        %p753 = pneg %p524
        %p754 = pneg %p521
        %p755 = pneg %p550
        %p756 = pneg %p547
        %s757 = smul.u32 4, %s36
        %p758 = scmp.lt.s32.totalorder %s757, 7
        %s759 = scalar_select %p758, %s757, 7
        %s760 = smul.addr %s759, 8
        %s761 = scalar_lea.vmem %s23, %s760
        %s762 = smul.u32 4, %s36
        %p763 = scmp.lt.s32.totalorder %s762, 7
        %s764 = scalar_select %p763, %s762, 7
        %s765 = smul.addr %s764, 8
        %s766 = scalar_lea.vmem %s0, %s765
        %s767 = smul.u32 4, %s36
        %s768 = smul.u32 4, %s36
        %p769 = scmp.lt.s32.totalorder %s768, 7
        %s770 = scalar_select %p769, %s768, 7
        %s771 = smul.addr %s770, 8
        %s772 = scalar_lea.vmem %s1, %s771
        %s773 = smul.u32 4, %s36
        %s774 = smul.u32 4, %s36
        %p775 = scmp.lt.s32.totalorder %s774, 7
        %s776 = scalar_select %p775, %s774, 7
        %s777 = smul.addr %s776, 8
        %s778 = scalar_lea.vmem %s23, %s777
        %s779 = smul.u32 4, %s36
        %v781 = vld [vmem:[%s766] sm:$0xff]
        %v782 = vld [vmem:[%s766 + $0x8] sm:$0xff]
        %v783 = vld [vmem:[%s766 + $0x10] sm:$0xff]
        %v784 = vld [vmem:[%s766 + $0x18] sm:$0xff]
        %v785 = vlaneseq
        %v786 = vand.u32 %v785, 127
        %vm787 = vcmp.eq.s32.totalorder %v786, 0
        %v788 = vsel %vm787, 1, 0
        %v789 = vcvt.s32.f32 %v788
        %vm790 = vcmp.eq.s32.totalorder %v786, 1
        %v791 = vsel %vm790, 1, 0
        %v792 = vcvt.s32.f32 %v791
        %vm793 = vcmp.eq.s32.totalorder %v786, 2
        %v794 = vsel %vm793, 1, 0
        %v795 = vcvt.s32.f32 %v794
        %v796 = vld [vmem:[%s2] sm:$0x3]
        %v797 = vld [vmem:[%s3] sm:$0x1]
        %v798 = vpack.c.bf16 %v782, %v781
        %v799 = vpack.c.bf16 %v784, %v783
        %v801 = vlaneseq
        %v802 = vshrl.u32 %v801, 7
        %v803 = vsub.s32 0, %v802
        %v804 = vrot.slane %v797, %v803
        %vm806 = vcmask 23552
        %v808 = vsel %vm806, %v798, 0
        %v811 = vsel %vm806, %v799, 0
        %vm813 = vcmask 1040384
        %vm814 = vcmask 1041408
        %v815 = vsel %vm813, 4294967295, 65535
        %v816 = vsel %vm814, %v815, 0
        %v818 = vand.u32 %v796, %v816
        %820 = vmatprep.subr.bf16.mxu0 0
        %821 = vmatpush1.bf16.msra.mxu0 %v818
        %822 = vmatprep.subr.bf16.mxu0 0
        %823 = vmatpush1.bf16.msra.mxu0 0
        %824 = vmatprep.subr.bf16.mxu0 0
        %825 = vmatpush1.bf16.msra.mxu0 0
        %826 = vmatprep.subr.bf16.mxu0 0
        %827 = vmatpush1.bf16.msra.mxu0 0
        %828 = vmatprep.subr.bf16.mxu0 0
        %829 = vmatpush1.bf16.msra.mxu0 0
        %830 = vmatprep.subr.bf16.mxu0 0
        %831 = vmatpush1.bf16.msra.mxu0 0
        %832 = vmatprep.subr.bf16.mxu0 0
        %833 = vmatpush1.bf16.msra.mxu0 0
        %834 = vmatprep.subr.bf16.mxu0 0
        %835 = vmatpush1.bf16.msra.mxu0 0
        %836 = vmatprep.subr.bf16.mxu0 0
        %837 = vmatpush1.bf16.msra.mxu0 0
        %838 = vmatprep.subr.bf16.mxu0 0
        %839 = vmatpush1.bf16.msra.mxu0 0
        %840 = vmatprep.subr.bf16.mxu0 0
        %841 = vmatpush1.bf16.msra.mxu0 0
        %842 = vmatprep.subr.bf16.mxu0 0
        %843 = vmatpush1.bf16.msra.mxu0 0
        %844 = vmatprep.subr.bf16.mxu0 0
        %845 = vmatpush1.bf16.msra.mxu0 0
        %846 = vmatprep.subr.bf16.mxu0 0
        %847 = vmatpush1.bf16.msra.mxu0 0
        %848 = vmatprep.subr.bf16.mxu0 0
        %849 = vmatpush1.bf16.msra.mxu0 0
        %850 = vmatprep.subr.bf16.mxu0 0
        %851 = vmatpush1.bf16.msra.mxu0 0
        %852 = vmatprep.mubr.bf16.mxu0 0
        %853 = vmatmul.mubr.bf16.gmra.mrb[0].mxu0 %v808
        %v854 = vpop.f32.mrb[0].mxu0
        %v855 = vadd.f32 %v804, %v854
        %v856 = vpop.f32.mrb[0].mxu0
        %v857 = vpop.f32.mrb[0].mxu0
        %v858 = vadd.f32 %v804, %v857
        %v859 = vpop.f32.mrb[0].mxu0
        %860 = vmatprep.mubr.bf16.mxu0 0
        %861 = vmatmul.mubr.bf16.gmra.mrb[0].mxu0 %v811
        %v862 = vpop.f32.mrb[0].mxu0
        %v863 = vadd.f32 %v804, %v862
        %v864 = vpop.f32.mrb[0].mxu0
        %v865 = vpop.f32.mrb[0].mxu0
        %v866 = vadd.f32 %v804, %v865
        %v867 = vpop.f32.mrb[0].mxu0
        %868 = vdwg.mxu0
        %v869 = vmul.f32 %v855, 100.0
        %v870 = vmul.f32 %v858, 100.0
        %v871 = vmul.f32 %v863, 100.0
        %v872 = vmul.f32 %v866, 100.0
        %vm873 = vcmp.gt.f32.partialorder %v869, 20.0
        %vm874 = vcmp.gt.f32.partialorder %v870, 20.0
        %vm875 = vcmp.gt.f32.partialorder %v871, 20.0
        %vm876 = vcmp.gt.f32.partialorder %v872, 20.0
        %v877 = vsub.f32 0.0, %v869
        %v878 = vsub.f32 0.0, %v870
        %v879 = vsub.f32 0.0, %v871
        %v880 = vsub.f32 0.0, %v872
        %v881 = vmul.f32 %v877, 1.442695
        %v882 = vpow.pop %v881
        %v883 = vmul.f32 %v878, 1.442695
        %v884 = vpow.pop %v883
        %v885 = vmul.f32 %v879, 1.442695
        %v886 = vpow.pop %v885
        %v887 = vmul.f32 %v880, 1.442695
        %v888 = vpow.pop %v887
        %v889 = vadd.f32 %v882, 1.0
        %v890 = vadd.f32 %v884, 1.0
        %v891 = vadd.f32 %v886, 1.0
        %v892 = vadd.f32 %v888, 1.0
        %v893 = vrcp.pop %v889
        %v894 = vmul.f32 1.0, %v893
        %v895 = vrcp.pop %v890
        %v896 = vmul.f32 1.0, %v895
        %v897 = vrcp.pop %v891
        %v898 = vmul.f32 1.0, %v897
        %v899 = vrcp.pop %v892
        %v900 = vmul.f32 1.0, %v899
        %v901 = vsel %vm873, 1.0, %v894
        %v902 = vsel %vm874, 1.0, %v896
        %v903 = vsel %vm875, 1.0, %v898
        %v904 = vsel %vm876, 1.0, %v900
        %v905 = vmin.f32 %v869, 20.0
        %v906 = vmin.f32 %v870, 20.0
        %v907 = vmin.f32 %v871, 20.0
        %v908 = vmin.f32 %v872, 20.0
        %v909 = vmul.f32 %v905, 1.442695
        %v910 = vpow.pop %v909
        %v911 = vmul.f32 %v906, 1.442695
        %v912 = vpow.pop %v911
        %v913 = vmul.f32 %v907, 1.442695
        %v914 = vpow.pop %v913
        %v915 = vmul.f32 %v908, 1.442695
        %v916 = vpow.pop %v915
        %v917 = vadd.f32 %v910, 1.0
        %v918 = vadd.f32 %v912, 1.0
        %v919 = vadd.f32 %v914, 1.0
        %v920 = vadd.f32 %v916, 1.0
        %v921 = vlog2.pop %v917
        %v922 = vmul.f32 %v921, 0.6931472
        %v923 = vlog2.pop %v918
        %v924 = vmul.f32 %v923, 0.6931472
        %v925 = vlog2.pop %v919
        %v926 = vmul.f32 %v925, 0.6931472
        %v927 = vlog2.pop %v920
        %v928 = vmul.f32 %v927, 0.6931472
        %v929 = vmul.f32 %v922, 0.01
        %v930 = vmul.f32 %v924, 0.01
        %v931 = vmul.f32 %v926, 0.01
        %v932 = vmul.f32 %v928, 0.01
        %v933 = vsel %vm873, %v855, %v929
        %v934 = vsel %vm874, %v858, %v930
        %v935 = vsel %vm875, %v863, %v931
        %v936 = vsel %vm876, %v866, %v932
        %v937 = vpack.c.bf16 %v789, %v789
        %v939 = vsel %vm806, %v937, 0
        %941 = vmatprep.subr.bf16.mxu0 0
        %942 = vmatpush1.bf16.msra.mxu0 %v818
        %943 = vmatprep.subr.bf16.mxu0 0
        %944 = vmatpush1.bf16.msra.mxu0 0
        %945 = vmatprep.subr.bf16.mxu0 0
        %946 = vmatpush1.bf16.msra.mxu0 0
        %947 = vmatprep.subr.bf16.mxu0 0
        %948 = vmatpush1.bf16.msra.mxu0 0
        %949 = vmatprep.subr.bf16.mxu0 0
        %950 = vmatpush1.bf16.msra.mxu0 0
        %951 = vmatprep.subr.bf16.mxu0 0
        %952 = vmatpush1.bf16.msra.mxu0 0
        %953 = vmatprep.subr.bf16.mxu0 0
        %954 = vmatpush1.bf16.msra.mxu0 0
        %955 = vmatprep.subr.bf16.mxu0 0
        %956 = vmatpush1.bf16.msra.mxu0 0
        %957 = vmatprep.subr.bf16.mxu0 0
        %958 = vmatpush1.bf16.msra.mxu0 0
        %959 = vmatprep.subr.bf16.mxu0 0
        %960 = vmatpush1.bf16.msra.mxu0 0
        %961 = vmatprep.subr.bf16.mxu0 0
        %962 = vmatpush1.bf16.msra.mxu0 0
        %963 = vmatprep.subr.bf16.mxu0 0
        %964 = vmatpush1.bf16.msra.mxu0 0
        %965 = vmatprep.subr.bf16.mxu0 0
        %966 = vmatpush1.bf16.msra.mxu0 0
        %967 = vmatprep.subr.bf16.mxu0 0
        %968 = vmatpush1.bf16.msra.mxu0 0
        %969 = vmatprep.subr.bf16.mxu0 0
        %970 = vmatpush1.bf16.msra.mxu0 0
        %971 = vmatprep.subr.bf16.mxu0 0
        %972 = vmatpush1.bf16.msra.mxu0 0
        %973 = vmatprep.mubr.bf16.mxu0 0
        %974 = vmatmul.mubr.bf16.gmra.mrb[0].mxu0 %v939
        %v975 = vpop.f32.mrb[0].mxu0
        %v976 = vadd.f32 0.0, %v975
        %v977 = vpop.f32.mrb[0].mxu0
        %v978 = vpop.f32.mrb[0].mxu0
        %v979 = vadd.f32 0.0, %v978
        %v980 = vpop.f32.mrb[0].mxu0
        %981 = vmatprep.mubr.bf16.mxu0 0
        %982 = vmatmul.mubr.bf16.gmra.mrb[0].mxu0 %v939
        %v983 = vpop.f32.mrb[0].mxu0
        %v984 = vadd.f32 0.0, %v983
        %v985 = vpop.f32.mrb[0].mxu0
        %v986 = vpop.f32.mrb[0].mxu0
        %v987 = vadd.f32 0.0, %v986
        %v988 = vpop.f32.mrb[0].mxu0
        %989 = vdwg.mxu0
        %v990 = vmul.f32 %v976, %v901
        %v991 = vmul.f32 %v979, %v902
        %v992 = vmul.f32 %v984, %v903
        %v993 = vmul.f32 %v987, %v904
        %v994 = vpack.c.bf16 %v792, %v792
        %v996 = vsel %vm806, %v994, 0
        %998 = vmatprep.subr.bf16.mxu0 0
        %999 = vmatpush1.bf16.msra.mxu0 %v818
        %1000 = vmatprep.subr.bf16.mxu0 0
        %1001 = vmatpush1.bf16.msra.mxu0 0
        %1002 = vmatprep.subr.bf16.mxu0 0
        %1003 = vmatpush1.bf16.msra.mxu0 0
        %1004 = vmatprep.subr.bf16.mxu0 0
        %1005 = vmatpush1.bf16.msra.mxu0 0
        %1006 = vmatprep.subr.bf16.mxu0 0
        %1007 = vmatpush1.bf16.msra.mxu0 0
        %1008 = vmatprep.subr.bf16.mxu0 0
        %1009 = vmatpush1.bf16.msra.mxu0 0
        %1010 = vmatprep.subr.bf16.mxu0 0
        %1011 = vmatpush1.bf16.msra.mxu0 0
        %1012 = vmatprep.subr.bf16.mxu0 0
        %1013 = vmatpush1.bf16.msra.mxu0 0
        %1014 = vmatprep.subr.bf16.mxu0 0
        %1015 = vmatpush1.bf16.msra.mxu0 0
        %1016 = vmatprep.subr.bf16.mxu0 0
        %1017 = vmatpush1.bf16.msra.mxu0 0
        %1018 = vmatprep.subr.bf16.mxu0 0
        %1019 = vmatpush1.bf16.msra.mxu0 0
        %1020 = vmatprep.subr.bf16.mxu0 0
        %1021 = vmatpush1.bf16.msra.mxu0 0
        %1022 = vmatprep.subr.bf16.mxu0 0
        %1023 = vmatpush1.bf16.msra.mxu0 0
        %1024 = vmatprep.subr.bf16.mxu0 0
        %1025 = vmatpush1.bf16.msra.mxu0 0
        %1026 = vmatprep.subr.bf16.mxu0 0
        %1027 = vmatpush1.bf16.msra.mxu0 0
        %1028 = vmatprep.subr.bf16.mxu0 0
        %1029 = vmatpush1.bf16.msra.mxu0 0
        %1030 = vmatprep.mubr.bf16.mxu0 0
        %1031 = vmatmul.mubr.bf16.gmra.mrb[0].mxu0 %v996
        %v1032 = vpop.f32.mrb[0].mxu0
        %v1033 = vadd.f32 0.0, %v1032
        %v1034 = vpop.f32.mrb[0].mxu0
        %v1035 = vpop.f32.mrb[0].mxu0
        %v1036 = vadd.f32 0.0, %v1035
        %v1037 = vpop.f32.mrb[0].mxu0
        %1038 = vmatprep.mubr.bf16.mxu0 0
        %1039 = vmatmul.mubr.bf16.gmra.mrb[0].mxu0 %v996
        %v1040 = vpop.f32.mrb[0].mxu0
        %v1041 = vadd.f32 0.0, %v1040
        %v1042 = vpop.f32.mrb[0].mxu0
        %v1043 = vpop.f32.mrb[0].mxu0
        %v1044 = vadd.f32 0.0, %v1043
        %v1045 = vpop.f32.mrb[0].mxu0
        %1046 = vdwg.mxu0
        %v1047 = vmul.f32 %v1033, %v901
        %v1048 = vmul.f32 %v1036, %v902
        %v1049 = vmul.f32 %v1041, %v903
        %v1050 = vmul.f32 %v1044, %v904
        %v1051 = vpack.c.bf16 %v795, %v795
        %v1053 = vsel %vm806, %v1051, 0
        %1055 = vmatprep.subr.bf16.mxu0 0
        %1056 = vmatpush1.bf16.msra.mxu0 %v818
        %1057 = vmatprep.subr.bf16.mxu0 0
        %1058 = vmatpush1.bf16.msra.mxu0 0
        %1059 = vmatprep.subr.bf16.mxu0 0
        %1060 = vmatpush1.bf16.msra.mxu0 0
        %1061 = vmatprep.subr.bf16.mxu0 0
        %1062 = vmatpush1.bf16.msra.mxu0 0
        %1063 = vmatprep.subr.bf16.mxu0 0
        %1064 = vmatpush1.bf16.msra.mxu0 0
        %1065 = vmatprep.subr.bf16.mxu0 0
        %1066 = vmatpush1.bf16.msra.mxu0 0
        %1067 = vmatprep.subr.bf16.mxu0 0
        %1068 = vmatpush1.bf16.msra.mxu0 0
        %1069 = vmatprep.subr.bf16.mxu0 0
        %1070 = vmatpush1.bf16.msra.mxu0 0
        %1071 = vmatprep.subr.bf16.mxu0 0
        %1072 = vmatpush1.bf16.msra.mxu0 0
        %1073 = vmatprep.subr.bf16.mxu0 0
        %1074 = vmatpush1.bf16.msra.mxu0 0
        %1075 = vmatprep.subr.bf16.mxu0 0
        %1076 = vmatpush1.bf16.msra.mxu0 0
        %1077 = vmatprep.subr.bf16.mxu0 0
        %1078 = vmatpush1.bf16.msra.mxu0 0
        %1079 = vmatprep.subr.bf16.mxu0 0
        %1080 = vmatpush1.bf16.msra.mxu0 0
        %1081 = vmatprep.subr.bf16.mxu0 0
        %1082 = vmatpush1.bf16.msra.mxu0 0
        %1083 = vmatprep.subr.bf16.mxu0 0
        %1084 = vmatpush1.bf16.msra.mxu0 0
        %1085 = vmatprep.subr.bf16.mxu0 0
        %1086 = vmatpush1.bf16.msra.mxu0 0
        %1087 = vmatprep.mubr.bf16.mxu0 0
        %1088 = vmatmul.mubr.bf16.gmra.mrb[0].mxu0 %v1053
        %v1089 = vpop.f32.mrb[0].mxu0
        %v1090 = vadd.f32 0.0, %v1089
        %v1091 = vpop.f32.mrb[0].mxu0
        %v1092 = vpop.f32.mrb[0].mxu0
        %v1093 = vadd.f32 0.0, %v1092
        %v1094 = vpop.f32.mrb[0].mxu0
        %1095 = vmatprep.mubr.bf16.mxu0 0
        %1096 = vmatmul.mubr.bf16.gmra.mrb[0].mxu0 %v1053
        %v1097 = vpop.f32.mrb[0].mxu0
        %v1098 = vadd.f32 0.0, %v1097
        %v1099 = vpop.f32.mrb[0].mxu0
        %v1100 = vpop.f32.mrb[0].mxu0
        %v1101 = vadd.f32 0.0, %v1100
        %v1102 = vpop.f32.mrb[0].mxu0
        %1103 = vdwg.mxu0
        %v1104 = vmul.f32 %v1090, %v901
        %v1105 = vmul.f32 %v1093, %v902
        %v1106 = vmul.f32 %v1098, %v903
        %v1107 = vmul.f32 %v1101, %v904
        %v1108 = vld [vmem:[%s4] sm:$0xf]
        %v1109 = vld [vmem:[%s4 + $0x4] sm:$0xf]
        %v1110 = vld [vmem:[%s4 + $0x8] sm:$0xf]
        %v1111 = vld [vmem:[%s4 + $0xc] sm:$0xf]
        %v1112 = vld [vmem:[%s4 + $0x10] sm:$0xf]
        %v1113 = vld [vmem:[%s4 + $0x14] sm:$0xf]
        %v1114 = vld [vmem:[%s4 + $0x18] sm:$0xf]
        %v1115 = vld [vmem:[%s4 + $0x1c] sm:$0xf]
        %v1116 = vld [vmem:[%s5] sm:$0x1]
        %v1117 = vpack.c.bf16 %v934, %v933
        %v1118 = vpack.c.bf16 %v936, %v935
        %v1120 = vlaneseq
        %v1121 = vshrl.u32 %v1120, 7
        %v1122 = vsub.s32 0, %v1121
        %v1123 = vrot.slane %v1116, %v1122
        %v1133 = vunpack.c.l.b16 %v1108
        %v1134 = vunpack.c.l.b16 %v1109
        %v1135 = vunpack.c.l.b16 %v1110
        %v1136 = vunpack.c.l.b16 %v1111
        %v1137 = vunpack.c.l.b16 %v1112
        %v1138 = vunpack.c.l.b16 %v1113
        %v1139 = vunpack.c.l.b16 %v1114
        %v1140 = vunpack.c.l.b16 %v1115
        %v1141 = vpack.c.b16 %v1134, %v1133
        %v1142 = vpack.c.b16 %v1136, %v1135
        %v1143 = vpack.c.b16 %v1138, %v1137
        %v1144 = vpack.c.b16 %v1140, %v1139
        %vm1149 = vcmask 523264
        %v1151 = vsel %vm1149, %v1117, 0
        %v1154 = vsel %vm1149, %v1118, 0
        %1156 = vmatprep.subr.bf16.mxu0 0
        %1157 = vmatpush1.bf16.msra.mxu0 %v1141
        %1158 = vmatprep.subr.bf16.mxu0 0
        %1159 = vmatpush1.bf16.msra.mxu0 %v1142
        %1160 = vmatprep.subr.bf16.mxu0 0
        %1161 = vmatpush1.bf16.msra.mxu0 %v1143
        %1162 = vmatprep.subr.bf16.mxu0 0
        %1163 = vmatpush1.bf16.msra.mxu0 %v1144
        %1164 = vmatprep.subr.bf16.mxu0 0
        %1165 = vmatpush1.bf16.msra.mxu0 0
        %1166 = vmatprep.subr.bf16.mxu0 0
        %1167 = vmatpush1.bf16.msra.mxu0 0
        %1168 = vmatprep.subr.bf16.mxu0 0
        %1169 = vmatpush1.bf16.msra.mxu0 0
        %1170 = vmatprep.subr.bf16.mxu0 0
        %1171 = vmatpush1.bf16.msra.mxu0 0
        %1172 = vmatprep.subr.bf16.mxu0 0
        %1173 = vmatpush1.bf16.msra.mxu0 0
        %1174 = vmatprep.subr.bf16.mxu0 0
        %1175 = vmatpush1.bf16.msra.mxu0 0
        %1176 = vmatprep.subr.bf16.mxu0 0
        %1177 = vmatpush1.bf16.msra.mxu0 0
        %1178 = vmatprep.subr.bf16.mxu0 0
        %1179 = vmatpush1.bf16.msra.mxu0 0
        %1180 = vmatprep.subr.bf16.mxu0 0
        %1181 = vmatpush1.bf16.msra.mxu0 0
        %1182 = vmatprep.subr.bf16.mxu0 0
        %1183 = vmatpush1.bf16.msra.mxu0 0
        %1184 = vmatprep.subr.bf16.mxu0 0
        %1185 = vmatpush1.bf16.msra.mxu0 0
        %1186 = vmatprep.subr.bf16.mxu0 0
        %1187 = vmatpush1.bf16.msra.mxu0 0
        %1188 = vmatprep.mubr.bf16.mxu0 0
        %1189 = vmatmul.mubr.bf16.gmra.mrb[0].mxu0 %v1151
        %v1190 = vpop.f32.mrb[0].mxu0
        %v1191 = vadd.f32 %v1123, %v1190
        %v1192 = vpop.f32.mrb[0].mxu0
        %v1193 = vpop.f32.mrb[0].mxu0
        %v1194 = vadd.f32 %v1123, %v1193
        %v1195 = vpop.f32.mrb[0].mxu0
        %1196 = vmatprep.mubr.bf16.mxu0 0
        %1197 = vmatmul.mubr.bf16.gmra.mrb[0].mxu0 %v1154
        %v1198 = vpop.f32.mrb[0].mxu0
        %v1199 = vadd.f32 %v1123, %v1198
        %v1200 = vpop.f32.mrb[0].mxu0
        %v1201 = vpop.f32.mrb[0].mxu0
        %v1202 = vadd.f32 %v1123, %v1201
        %v1203 = vpop.f32.mrb[0].mxu0
        %1204 = vdwg.mxu0
        %v1205 = vmul.f32 %v1191, 100.0
        %v1206 = vmul.f32 %v1194, 100.0
        %v1207 = vmul.f32 %v1199, 100.0
        %v1208 = vmul.f32 %v1202, 100.0
        %vm1209 = vcmp.gt.f32.partialorder %v1205, 20.0
        %vm1210 = vcmp.gt.f32.partialorder %v1206, 20.0
        %vm1211 = vcmp.gt.f32.partialorder %v1207, 20.0
        %vm1212 = vcmp.gt.f32.partialorder %v1208, 20.0
        %v1213 = vsub.f32 0.0, %v1205
        %v1214 = vsub.f32 0.0, %v1206
        %v1215 = vsub.f32 0.0, %v1207
        %v1216 = vsub.f32 0.0, %v1208
        %v1217 = vmul.f32 %v1213, 1.442695
        %v1218 = vpow.pop %v1217
        %v1219 = vmul.f32 %v1214, 1.442695
        %v1220 = vpow.pop %v1219
        %v1221 = vmul.f32 %v1215, 1.442695
        %v1222 = vpow.pop %v1221
        %v1223 = vmul.f32 %v1216, 1.442695
        %v1224 = vpow.pop %v1223
        %v1225 = vadd.f32 %v1218, 1.0
        %v1226 = vadd.f32 %v1220, 1.0
        %v1227 = vadd.f32 %v1222, 1.0
        %v1228 = vadd.f32 %v1224, 1.0
        %v1229 = vrcp.pop %v1225
        %v1230 = vmul.f32 1.0, %v1229
        %v1231 = vrcp.pop %v1226
        %v1232 = vmul.f32 1.0, %v1231
        %v1233 = vrcp.pop %v1227
        %v1234 = vmul.f32 1.0, %v1233
        %v1235 = vrcp.pop %v1228
        %v1236 = vmul.f32 1.0, %v1235
        %v1237 = vsel %vm1209, 1.0, %v1230
        %v1238 = vsel %vm1210, 1.0, %v1232
        %v1239 = vsel %vm1211, 1.0, %v1234
        %v1240 = vsel %vm1212, 1.0, %v1236
        %v1241 = vmin.f32 %v1205, 20.0
        %v1242 = vmin.f32 %v1206, 20.0
        %v1243 = vmin.f32 %v1207, 20.0
        %v1244 = vmin.f32 %v1208, 20.0
        %v1245 = vmul.f32 %v1241, 1.442695
        %v1246 = vpow.pop %v1245
        %v1247 = vmul.f32 %v1242, 1.442695
        %v1248 = vpow.pop %v1247
        %v1249 = vmul.f32 %v1243, 1.442695
        %v1250 = vpow.pop %v1249
        %v1251 = vmul.f32 %v1244, 1.442695
        %v1252 = vpow.pop %v1251
        %v1253 = vadd.f32 %v1246, 1.0
        %v1254 = vadd.f32 %v1248, 1.0
        %v1255 = vadd.f32 %v1250, 1.0
        %v1256 = vadd.f32 %v1252, 1.0
        %v1257 = vlog2.pop %v1253
        %v1258 = vmul.f32 %v1257, 0.6931472
        %v1259 = vlog2.pop %v1254
        %v1260 = vmul.f32 %v1259, 0.6931472
        %v1261 = vlog2.pop %v1255
        %v1262 = vmul.f32 %v1261, 0.6931472
        %v1263 = vlog2.pop %v1256
        %v1264 = vmul.f32 %v1263, 0.6931472
        %v1265 = vmul.f32 %v1258, 0.01
        %v1266 = vmul.f32 %v1260, 0.01
        %v1267 = vmul.f32 %v1262, 0.01
        %v1268 = vmul.f32 %v1264, 0.01
        %v1269 = vsel %vm1209, %v1191, %v1265
        %v1270 = vsel %vm1210, %v1194, %v1266
        %v1271 = vsel %vm1211, %v1199, %v1267
        %v1272 = vsel %vm1212, %v1202, %v1268
        %v1273 = vpack.c.bf16 %v991, %v990
        %v1274 = vpack.c.bf16 %v993, %v992
        %v1276 = vsel %vm1149, %v1273, 0
        %v1279 = vsel %vm1149, %v1274, 0
        %1281 = vmatprep.subr.bf16.mxu0 0
        %1282 = vmatpush1.bf16.msra.mxu0 %v1141
        %1283 = vmatprep.subr.bf16.mxu0 0
        %1284 = vmatpush1.bf16.msra.mxu0 %v1142
        %1285 = vmatprep.subr.bf16.mxu0 0
        %1286 = vmatpush1.bf16.msra.mxu0 %v1143
        %1287 = vmatprep.subr.bf16.mxu0 0
        %1288 = vmatpush1.bf16.msra.mxu0 %v1144
        %1289 = vmatprep.subr.bf16.mxu0 0
        %1290 = vmatpush1.bf16.msra.mxu0 0
        %1291 = vmatprep.subr.bf16.mxu0 0
        %1292 = vmatpush1.bf16.msra.mxu0 0
        %1293 = vmatprep.subr.bf16.mxu0 0
        %1294 = vmatpush1.bf16.msra.mxu0 0
        %1295 = vmatprep.subr.bf16.mxu0 0
        %1296 = vmatpush1.bf16.msra.mxu0 0
        %1297 = vmatprep.subr.bf16.mxu0 0
        %1298 = vmatpush1.bf16.msra.mxu0 0
        %1299 = vmatprep.subr.bf16.mxu0 0
        %1300 = vmatpush1.bf16.msra.mxu0 0
        %1301 = vmatprep.subr.bf16.mxu0 0
        %1302 = vmatpush1.bf16.msra.mxu0 0
        %1303 = vmatprep.subr.bf16.mxu0 0
        %1304 = vmatpush1.bf16.msra.mxu0 0
        %1305 = vmatprep.subr.bf16.mxu0 0
        %1306 = vmatpush1.bf16.msra.mxu0 0
        %1307 = vmatprep.subr.bf16.mxu0 0
        %1308 = vmatpush1.bf16.msra.mxu0 0
        %1309 = vmatprep.subr.bf16.mxu0 0
        %1310 = vmatpush1.bf16.msra.mxu0 0
        %1311 = vmatprep.subr.bf16.mxu0 0
        %1312 = vmatpush1.bf16.msra.mxu0 0
        %1313 = vmatprep.mubr.bf16.mxu0 0
        %1314 = vmatmul.mubr.bf16.gmra.mrb[0].mxu0 %v1276
        %v1315 = vpop.f32.mrb[0].mxu0
        %v1316 = vadd.f32 0.0, %v1315
        %v1317 = vpop.f32.mrb[0].mxu0
        %v1318 = vpop.f32.mrb[0].mxu0
        %v1319 = vadd.f32 0.0, %v1318
        %v1320 = vpop.f32.mrb[0].mxu0
        %1321 = vmatprep.mubr.bf16.mxu0 0
        %1322 = vmatmul.mubr.bf16.gmra.mrb[0].mxu0 %v1279
        %v1323 = vpop.f32.mrb[0].mxu0
        %v1324 = vadd.f32 0.0, %v1323
        %v1325 = vpop.f32.mrb[0].mxu0
        %v1326 = vpop.f32.mrb[0].mxu0
        %v1327 = vadd.f32 0.0, %v1326
        %v1328 = vpop.f32.mrb[0].mxu0
        %1329 = vdwg.mxu0
        %v1330 = vmul.f32 %v1316, %v1237
        %v1331 = vmul.f32 %v1319, %v1238
        %v1332 = vmul.f32 %v1324, %v1239
        %v1333 = vmul.f32 %v1327, %v1240
        %v1334 = vpack.c.bf16 %v1048, %v1047
        %v1335 = vpack.c.bf16 %v1050, %v1049
        %v1337 = vsel %vm1149, %v1334, 0
        %v1340 = vsel %vm1149, %v1335, 0
        %1342 = vmatprep.subr.bf16.mxu0 0
        %1343 = vmatpush1.bf16.msra.mxu0 %v1141
        %1344 = vmatprep.subr.bf16.mxu0 0
        %1345 = vmatpush1.bf16.msra.mxu0 %v1142
        %1346 = vmatprep.subr.bf16.mxu0 0
        %1347 = vmatpush1.bf16.msra.mxu0 %v1143
        %1348 = vmatprep.subr.bf16.mxu0 0
        %1349 = vmatpush1.bf16.msra.mxu0 %v1144
        %1350 = vmatprep.subr.bf16.mxu0 0
        %1351 = vmatpush1.bf16.msra.mxu0 0
        %1352 = vmatprep.subr.bf16.mxu0 0
        %1353 = vmatpush1.bf16.msra.mxu0 0
        %1354 = vmatprep.subr.bf16.mxu0 0
        %1355 = vmatpush1.bf16.msra.mxu0 0
        %1356 = vmatprep.subr.bf16.mxu0 0
        %1357 = vmatpush1.bf16.msra.mxu0 0
        %1358 = vmatprep.subr.bf16.mxu0 0
        %1359 = vmatpush1.bf16.msra.mxu0 0
        %1360 = vmatprep.subr.bf16.mxu0 0
        %1361 = vmatpush1.bf16.msra.mxu0 0
        %1362 = vmatprep.subr.bf16.mxu0 0
        %1363 = vmatpush1.bf16.msra.mxu0 0
        %1364 = vmatprep.subr.bf16.mxu0 0
        %1365 = vmatpush1.bf16.msra.mxu0 0
        %1366 = vmatprep.subr.bf16.mxu0 0
        %1367 = vmatpush1.bf16.msra.mxu0 0
        %1368 = vmatprep.subr.bf16.mxu0 0
        %1369 = vmatpush1.bf16.msra.mxu0 0
        %1370 = vmatprep.subr.bf16.mxu0 0
        %1371 = vmatpush1.bf16.msra.mxu0 0
        %1372 = vmatprep.subr.bf16.mxu0 0
        %1373 = vmatpush1.bf16.msra.mxu0 0
        %1374 = vmatprep.mubr.bf16.mxu0 0
        %1375 = vmatmul.mubr.bf16.gmra.mrb[0].mxu0 %v1337
        %v1376 = vpop.f32.mrb[0].mxu0
        %v1377 = vadd.f32 0.0, %v1376
        %v1378 = vpop.f32.mrb[0].mxu0
        %v1379 = vpop.f32.mrb[0].mxu0
        %v1380 = vadd.f32 0.0, %v1379
        %v1381 = vpop.f32.mrb[0].mxu0
        %1382 = vmatprep.mubr.bf16.mxu0 0
        %1383 = vmatmul.mubr.bf16.gmra.mrb[0].mxu0 %v1340
        %v1384 = vpop.f32.mrb[0].mxu0
        %v1385 = vadd.f32 0.0, %v1384
        %v1386 = vpop.f32.mrb[0].mxu0
        %v1387 = vpop.f32.mrb[0].mxu0
        %v1388 = vadd.f32 0.0, %v1387
        %v1389 = vpop.f32.mrb[0].mxu0
        %1390 = vdwg.mxu0
        %v1391 = vmul.f32 %v1377, %v1237
        %v1392 = vmul.f32 %v1380, %v1238
        %v1393 = vmul.f32 %v1385, %v1239
        %v1394 = vmul.f32 %v1388, %v1240
        %v1395 = vpack.c.bf16 %v1105, %v1104
        %v1396 = vpack.c.bf16 %v1107, %v1106
        %v1398 = vsel %vm1149, %v1395, 0
        %v1401 = vsel %vm1149, %v1396, 0
        %1403 = vmatprep.subr.bf16.mxu0 0
        %1404 = vmatpush1.bf16.msra.mxu0 %v1141
        %1405 = vmatprep.subr.bf16.mxu0 0
        %1406 = vmatpush1.bf16.msra.mxu0 %v1142
        %1407 = vmatprep.subr.bf16.mxu0 0
        %1408 = vmatpush1.bf16.msra.mxu0 %v1143
        %1409 = vmatprep.subr.bf16.mxu0 0
        %1410 = vmatpush1.bf16.msra.mxu0 %v1144
        %1411 = vmatprep.subr.bf16.mxu0 0
        %1412 = vmatpush1.bf16.msra.mxu0 0
        %1413 = vmatprep.subr.bf16.mxu0 0
        %1414 = vmatpush1.bf16.msra.mxu0 0
        %1415 = vmatprep.subr.bf16.mxu0 0
        %1416 = vmatpush1.bf16.msra.mxu0 0
        %1417 = vmatprep.subr.bf16.mxu0 0
        %1418 = vmatpush1.bf16.msra.mxu0 0
        %1419 = vmatprep.subr.bf16.mxu0 0
        %1420 = vmatpush1.bf16.msra.mxu0 0
        %1421 = vmatprep.subr.bf16.mxu0 0
        %1422 = vmatpush1.bf16.msra.mxu0 0
        %1423 = vmatprep.subr.bf16.mxu0 0
        %1424 = vmatpush1.bf16.msra.mxu0 0
        %1425 = vmatprep.subr.bf16.mxu0 0
        %1426 = vmatpush1.bf16.msra.mxu0 0
        %1427 = vmatprep.subr.bf16.mxu0 0
        %1428 = vmatpush1.bf16.msra.mxu0 0
        %1429 = vmatprep.subr.bf16.mxu0 0
        %1430 = vmatpush1.bf16.msra.mxu0 0
        %1431 = vmatprep.subr.bf16.mxu0 0
        %1432 = vmatpush1.bf16.msra.mxu0 0
        %1433 = vmatprep.subr.bf16.mxu0 0
        %1434 = vmatpush1.bf16.msra.mxu0 0
        %1435 = vmatprep.mubr.bf16.mxu0 0
        %1436 = vmatmul.mubr.bf16.gmra.mrb[0].mxu0 %v1398
        %v1437 = vpop.f32.mrb[0].mxu0
        %v1438 = vadd.f32 0.0, %v1437
        %v1439 = vpop.f32.mrb[0].mxu0
        %v1440 = vpop.f32.mrb[0].mxu0
        %v1441 = vadd.f32 0.0, %v1440
        %v1442 = vpop.f32.mrb[0].mxu0
        %1443 = vmatprep.mubr.bf16.mxu0 0
        %1444 = vmatmul.mubr.bf16.gmra.mrb[0].mxu0 %v1401
        %v1445 = vpop.f32.mrb[0].mxu0
        %v1446 = vadd.f32 0.0, %v1445
        %v1447 = vpop.f32.mrb[0].mxu0
        %v1448 = vpop.f32.mrb[0].mxu0
        %v1449 = vadd.f32 0.0, %v1448
        %v1450 = vpop.f32.mrb[0].mxu0
        %1451 = vdwg.mxu0
        %v1452 = vmul.f32 %v1438, %v1237
        %v1453 = vmul.f32 %v1441, %v1238
        %v1454 = vmul.f32 %v1446, %v1239
        %v1455 = vmul.f32 %v1449, %v1240
        %1460 = vrot.lane.b32.xlu0 %v781, 61
        %v1461 = vpop.permute.xlu0 %1460
        %1462 = vrot.lane.b32.xlu0 %v782, 61
        %v1463 = vpop.permute.xlu0 %1462
        %1464 = vrot.lane.b32.xlu0 %v783, 61
        %v1465 = vpop.permute.xlu0 %1464
        %1466 = vrot.lane.b32.xlu0 %v784, 61
        %v1467 = vpop.permute.xlu0 %1466
        %vm1472 = vcmask 498688
        %v1473 = vsel %vm1472, %v1269, %v1461
        %v1474 = vsel %vm1472, %v1270, %v1463
        %v1475 = vsel %vm1472, %v1271, %v1465
        %v1476 = vsel %vm1472, %v1272, %v1467
        %v1477 = vmul.f32 %v1473, 0.70710677
        %v1478 = vmul.f32 %v1474, 0.70710677
        %v1479 = vmul.f32 %v1475, 0.70710677
        %v1480 = vmul.f32 %v1476, 0.70710677
        %1482 = vrot.lane.b32.xlu0 %v789, 61
        %v1483 = vpop.permute.xlu0 %1482
        %v1485 = vsel %vm1472, %v1330, %v1483
        %v1486 = vsel %vm1472, %v1331, %v1483
        %v1487 = vsel %vm1472, %v1332, %v1483
        %v1488 = vsel %vm1472, %v1333, %v1483
        %v1489 = vmul.f32 %v1485, 0.70710677
        %v1490 = vmul.f32 %v1486, 0.70710677
        %v1491 = vmul.f32 %v1487, 0.70710677
        %v1492 = vmul.f32 %v1488, 0.70710677
        %1494 = vrot.lane.b32.xlu0 %v792, 61
        %v1495 = vpop.permute.xlu0 %1494
        %v1497 = vsel %vm1472, %v1391, %v1495
        %v1498 = vsel %vm1472, %v1392, %v1495
        %v1499 = vsel %vm1472, %v1393, %v1495
        %v1500 = vsel %vm1472, %v1394, %v1495
        %v1501 = vmul.f32 %v1497, 0.70710677
        %v1502 = vmul.f32 %v1498, 0.70710677
        %v1503 = vmul.f32 %v1499, 0.70710677
        %v1504 = vmul.f32 %v1500, 0.70710677
        %1506 = vrot.lane.b32.xlu0 %v795, 61
        %v1507 = vpop.permute.xlu0 %1506
        %v1509 = vsel %vm1472, %v1452, %v1507
        %v1510 = vsel %vm1472, %v1453, %v1507
        %v1511 = vsel %vm1472, %v1454, %v1507
        %v1512 = vsel %vm1472, %v1455, %v1507
        %v1513 = vmul.f32 %v1509, 0.70710677
        %v1514 = vmul.f32 %v1510, 0.70710677
        %v1515 = vmul.f32 %v1511, 0.70710677
        %v1516 = vmul.f32 %v1512, 0.70710677
        %v1517 = vld [vmem:[%s6] sm:$0xf]
        %v1518 = vld [vmem:[%s6 + $0x4] sm:$0xf]
        %v1519 = vld [vmem:[%s6 + $0x8] sm:$0xf]
        %v1520 = vld [vmem:[%s6 + $0xc] sm:$0xf]
        %v1521 = vld [vmem:[%s6 + $0x10] sm:$0xf]
        %v1522 = vld [vmem:[%s6 + $0x14] sm:$0xf]
        %v1523 = vld [vmem:[%s6 + $0x18] sm:$0xf]
        %v1524 = vld [vmem:[%s6 + $0x1c] sm:$0xf]
        %v1525 = vld [vmem:[%s7] sm:$0x1]
        %v1526 = vpack.c.bf16 %v1478, %v1477
        %v1527 = vpack.c.bf16 %v1480, %v1479
        %v1529 = vlaneseq
        %v1530 = vshrl.u32 %v1529, 7
        %v1531 = vsub.s32 0, %v1530
        %v1532 = vrot.slane %v1525, %v1531
        %v1542 = vunpack.c.l.b16 %v1517
        %v1543 = vunpack.c.l.b16 %v1518
        %v1544 = vunpack.c.l.b16 %v1519
        %v1545 = vunpack.c.l.b16 %v1520
        %v1546 = vunpack.c.l.b16 %v1521
        %v1547 = vunpack.c.l.b16 %v1522
        %v1548 = vunpack.c.l.b16 %v1523
        %v1549 = vunpack.c.l.b16 %v1524
        %v1550 = vpack.c.b16 %v1543, %v1542
        %v1551 = vpack.c.b16 %v1545, %v1544
        %v1552 = vpack.c.b16 %v1547, %v1546
        %v1553 = vpack.c.b16 %v1549, %v1548
        %v1559 = vsel %vm1149, %v1526, 0
        %v1562 = vsel %vm1149, %v1527, 0
        %1564 = vmatprep.subr.bf16.mxu0 0
        %1565 = vmatpush1.bf16.msra.mxu0 %v1550
        %1566 = vmatprep.subr.bf16.mxu0 0
        %1567 = vmatpush1.bf16.msra.mxu0 %v1551
        %1568 = vmatprep.subr.bf16.mxu0 0
        %1569 = vmatpush1.bf16.msra.mxu0 %v1552
        %1570 = vmatprep.subr.bf16.mxu0 0
        %1571 = vmatpush1.bf16.msra.mxu0 %v1553
        %1572 = vmatprep.subr.bf16.mxu0 0
        %1573 = vmatpush1.bf16.msra.mxu0 0
        %1574 = vmatprep.subr.bf16.mxu0 0
        %1575 = vmatpush1.bf16.msra.mxu0 0
        %1576 = vmatprep.subr.bf16.mxu0 0
        %1577 = vmatpush1.bf16.msra.mxu0 0
        %1578 = vmatprep.subr.bf16.mxu0 0
        %1579 = vmatpush1.bf16.msra.mxu0 0
        %1580 = vmatprep.subr.bf16.mxu0 0
        %1581 = vmatpush1.bf16.msra.mxu0 0
        %1582 = vmatprep.subr.bf16.mxu0 0
        %1583 = vmatpush1.bf16.msra.mxu0 0
        %1584 = vmatprep.subr.bf16.mxu0 0
        %1585 = vmatpush1.bf16.msra.mxu0 0
        %1586 = vmatprep.subr.bf16.mxu0 0
        %1587 = vmatpush1.bf16.msra.mxu0 0
        %1588 = vmatprep.subr.bf16.mxu0 0
        %1589 = vmatpush1.bf16.msra.mxu0 0
        %1590 = vmatprep.subr.bf16.mxu0 0
        %1591 = vmatpush1.bf16.msra.mxu0 0
        %1592 = vmatprep.subr.bf16.mxu0 0
        %1593 = vmatpush1.bf16.msra.mxu0 0
        %1594 = vmatprep.subr.bf16.mxu0 0
        %1595 = vmatpush1.bf16.msra.mxu0 0
        %1596 = vmatprep.mubr.bf16.mxu0 0
        %1597 = vmatmul.mubr.bf16.gmra.mrb[0].mxu0 %v1559
        %v1598 = vpop.f32.mrb[0].mxu0
        %v1599 = vadd.f32 %v1532, %v1598
        %v1600 = vpop.f32.mrb[0].mxu0
        %v1601 = vpop.f32.mrb[0].mxu0
        %v1602 = vadd.f32 %v1532, %v1601
        %v1603 = vpop.f32.mrb[0].mxu0
        %1604 = vmatprep.mubr.bf16.mxu0 0
        %1605 = vmatmul.mubr.bf16.gmra.mrb[0].mxu0 %v1562
        %v1606 = vpop.f32.mrb[0].mxu0
        %v1607 = vadd.f32 %v1532, %v1606
        %v1608 = vpop.f32.mrb[0].mxu0
        %v1609 = vpop.f32.mrb[0].mxu0
        %v1610 = vadd.f32 %v1532, %v1609
        %v1611 = vpop.f32.mrb[0].mxu0
        %1612 = vdwg.mxu0
        %v1613 = vmul.f32 %v1599, 100.0
        %v1614 = vmul.f32 %v1602, 100.0
        %v1615 = vmul.f32 %v1607, 100.0
        %v1616 = vmul.f32 %v1610, 100.0
        %vm1617 = vcmp.gt.f32.partialorder %v1613, 20.0
        %vm1618 = vcmp.gt.f32.partialorder %v1614, 20.0
        %vm1619 = vcmp.gt.f32.partialorder %v1615, 20.0
        %vm1620 = vcmp.gt.f32.partialorder %v1616, 20.0
        %v1621 = vsub.f32 0.0, %v1613
        %v1622 = vsub.f32 0.0, %v1614
        %v1623 = vsub.f32 0.0, %v1615
        %v1624 = vsub.f32 0.0, %v1616
        %v1625 = vmul.f32 %v1621, 1.442695
        %v1626 = vpow.pop %v1625
        %v1627 = vmul.f32 %v1622, 1.442695
        %v1628 = vpow.pop %v1627
        %v1629 = vmul.f32 %v1623, 1.442695
        %v1630 = vpow.pop %v1629
        %v1631 = vmul.f32 %v1624, 1.442695
        %v1632 = vpow.pop %v1631
        %v1633 = vadd.f32 %v1626, 1.0
        %v1634 = vadd.f32 %v1628, 1.0
        %v1635 = vadd.f32 %v1630, 1.0
        %v1636 = vadd.f32 %v1632, 1.0
        %v1637 = vrcp.pop %v1633
        %v1638 = vmul.f32 1.0, %v1637
        %v1639 = vrcp.pop %v1634
        %v1640 = vmul.f32 1.0, %v1639
        %v1641 = vrcp.pop %v1635
        %v1642 = vmul.f32 1.0, %v1641
        %v1643 = vrcp.pop %v1636
        %v1644 = vmul.f32 1.0, %v1643
        %v1645 = vsel %vm1617, 1.0, %v1638
        %v1646 = vsel %vm1618, 1.0, %v1640
        %v1647 = vsel %vm1619, 1.0, %v1642
        %v1648 = vsel %vm1620, 1.0, %v1644
        %v1649 = vmin.f32 %v1613, 20.0
        %v1650 = vmin.f32 %v1614, 20.0
        %v1651 = vmin.f32 %v1615, 20.0
        %v1652 = vmin.f32 %v1616, 20.0
        %v1653 = vmul.f32 %v1649, 1.442695
        %v1654 = vpow.pop %v1653
        %v1655 = vmul.f32 %v1650, 1.442695
        %v1656 = vpow.pop %v1655
        %v1657 = vmul.f32 %v1651, 1.442695
        %v1658 = vpow.pop %v1657
        %v1659 = vmul.f32 %v1652, 1.442695
        %v1660 = vpow.pop %v1659
        %v1661 = vadd.f32 %v1654, 1.0
        %v1662 = vadd.f32 %v1656, 1.0
        %v1663 = vadd.f32 %v1658, 1.0
        %v1664 = vadd.f32 %v1660, 1.0
        %v1665 = vlog2.pop %v1661
        %v1666 = vmul.f32 %v1665, 0.6931472
        %v1667 = vlog2.pop %v1662
        %v1668 = vmul.f32 %v1667, 0.6931472
        %v1669 = vlog2.pop %v1663
        %v1670 = vmul.f32 %v1669, 0.6931472
        %v1671 = vlog2.pop %v1664
        %v1672 = vmul.f32 %v1671, 0.6931472
        %v1673 = vmul.f32 %v1666, 0.01
        %v1674 = vmul.f32 %v1668, 0.01
        %v1675 = vmul.f32 %v1670, 0.01
        %v1676 = vmul.f32 %v1672, 0.01
        %v1677 = vsel %vm1617, %v1599, %v1673
        %v1678 = vsel %vm1618, %v1602, %v1674
        %v1679 = vsel %vm1619, %v1607, %v1675
        %v1680 = vsel %vm1620, %v1610, %v1676
        %v1681 = vpack.c.bf16 %v1490, %v1489
        %v1682 = vpack.c.bf16 %v1492, %v1491
        %v1684 = vsel %vm1149, %v1681, 0
        %v1687 = vsel %vm1149, %v1682, 0
        %1689 = vmatprep.subr.bf16.mxu0 0
        %1690 = vmatpush1.bf16.msra.mxu0 %v1550
        %1691 = vmatprep.subr.bf16.mxu0 0
        %1692 = vmatpush1.bf16.msra.mxu0 %v1551
        %1693 = vmatprep.subr.bf16.mxu0 0
        %1694 = vmatpush1.bf16.msra.mxu0 %v1552
        %1695 = vmatprep.subr.bf16.mxu0 0
        %1696 = vmatpush1.bf16.msra.mxu0 %v1553
        %1697 = vmatprep.subr.bf16.mxu0 0
        %1698 = vmatpush1.bf16.msra.mxu0 0
        %1699 = vmatprep.subr.bf16.mxu0 0
        %1700 = vmatpush1.bf16.msra.mxu0 0
        %1701 = vmatprep.subr.bf16.mxu0 0
        %1702 = vmatpush1.bf16.msra.mxu0 0
        %1703 = vmatprep.subr.bf16.mxu0 0
        %1704 = vmatpush1.bf16.msra.mxu0 0
        %1705 = vmatprep.subr.bf16.mxu0 0
        %1706 = vmatpush1.bf16.msra.mxu0 0
        %1707 = vmatprep.subr.bf16.mxu0 0
        %1708 = vmatpush1.bf16.msra.mxu0 0
        %1709 = vmatprep.subr.bf16.mxu0 0
        %1710 = vmatpush1.bf16.msra.mxu0 0
        %1711 = vmatprep.subr.bf16.mxu0 0
        %1712 = vmatpush1.bf16.msra.mxu0 0
        %1713 = vmatprep.subr.bf16.mxu0 0
        %1714 = vmatpush1.bf16.msra.mxu0 0
        %1715 = vmatprep.subr.bf16.mxu0 0
        %1716 = vmatpush1.bf16.msra.mxu0 0
        %1717 = vmatprep.subr.bf16.mxu0 0
        %1718 = vmatpush1.bf16.msra.mxu0 0
        %1719 = vmatprep.subr.bf16.mxu0 0
        %1720 = vmatpush1.bf16.msra.mxu0 0
        %1721 = vmatprep.mubr.bf16.mxu0 0
        %1722 = vmatmul.mubr.bf16.gmra.mrb[0].mxu0 %v1684
        %v1723 = vpop.f32.mrb[0].mxu0
        %v1724 = vadd.f32 0.0, %v1723
        %v1725 = vpop.f32.mrb[0].mxu0
        %v1726 = vpop.f32.mrb[0].mxu0
        %v1727 = vadd.f32 0.0, %v1726
        %v1728 = vpop.f32.mrb[0].mxu0
        %1729 = vmatprep.mubr.bf16.mxu0 0
        %1730 = vmatmul.mubr.bf16.gmra.mrb[0].mxu0 %v1687
        %v1731 = vpop.f32.mrb[0].mxu0
        %v1732 = vadd.f32 0.0, %v1731
        %v1733 = vpop.f32.mrb[0].mxu0
        %v1734 = vpop.f32.mrb[0].mxu0
        %v1735 = vadd.f32 0.0, %v1734
        %v1736 = vpop.f32.mrb[0].mxu0
        %1737 = vdwg.mxu0
        %v1738 = vmul.f32 %v1724, %v1645
        %v1739 = vmul.f32 %v1727, %v1646
        %v1740 = vmul.f32 %v1732, %v1647
        %v1741 = vmul.f32 %v1735, %v1648
        %v1742 = vpack.c.bf16 %v1502, %v1501
        %v1743 = vpack.c.bf16 %v1504, %v1503
        %v1745 = vsel %vm1149, %v1742, 0
        %v1748 = vsel %vm1149, %v1743, 0
        %1750 = vmatprep.subr.bf16.mxu0 0
        %1751 = vmatpush1.bf16.msra.mxu0 %v1550
        %1752 = vmatprep.subr.bf16.mxu0 0
        %1753 = vmatpush1.bf16.msra.mxu0 %v1551
        %1754 = vmatprep.subr.bf16.mxu0 0
        %1755 = vmatpush1.bf16.msra.mxu0 %v1552
        %1756 = vmatprep.subr.bf16.mxu0 0
        %1757 = vmatpush1.bf16.msra.mxu0 %v1553
        %1758 = vmatprep.subr.bf16.mxu0 0
        %1759 = vmatpush1.bf16.msra.mxu0 0
        %1760 = vmatprep.subr.bf16.mxu0 0
        %1761 = vmatpush1.bf16.msra.mxu0 0
        %1762 = vmatprep.subr.bf16.mxu0 0
        %1763 = vmatpush1.bf16.msra.mxu0 0
        %1764 = vmatprep.subr.bf16.mxu0 0
        %1765 = vmatpush1.bf16.msra.mxu0 0
        %1766 = vmatprep.subr.bf16.mxu0 0
        %1767 = vmatpush1.bf16.msra.mxu0 0
        %1768 = vmatprep.subr.bf16.mxu0 0
        %1769 = vmatpush1.bf16.msra.mxu0 0
        %1770 = vmatprep.subr.bf16.mxu0 0
        %1771 = vmatpush1.bf16.msra.mxu0 0
        %1772 = vmatprep.subr.bf16.mxu0 0
        %1773 = vmatpush1.bf16.msra.mxu0 0
        %1774 = vmatprep.subr.bf16.mxu0 0
        %1775 = vmatpush1.bf16.msra.mxu0 0
        %1776 = vmatprep.subr.bf16.mxu0 0
        %1777 = vmatpush1.bf16.msra.mxu0 0
        %1778 = vmatprep.subr.bf16.mxu0 0
        %1779 = vmatpush1.bf16.msra.mxu0 0
        %1780 = vmatprep.subr.bf16.mxu0 0
        %1781 = vmatpush1.bf16.msra.mxu0 0
        %1782 = vmatprep.mubr.bf16.mxu0 0
        %1783 = vmatmul.mubr.bf16.gmra.mrb[0].mxu0 %v1745
        %v1784 = vpop.f32.mrb[0].mxu0
        %v1785 = vadd.f32 0.0, %v1784
        %v1786 = vpop.f32.mrb[0].mxu0
        %v1787 = vpop.f32.mrb[0].mxu0
        %v1788 = vadd.f32 0.0, %v1787
        %v1789 = vpop.f32.mrb[0].mxu0
        %1790 = vmatprep.mubr.bf16.mxu0 0
        %1791 = vmatmul.mubr.bf16.gmra.mrb[0].mxu0 %v1748
        %v1792 = vpop.f32.mrb[0].mxu0
        %v1793 = vadd.f32 0.0, %v1792
        %v1794 = vpop.f32.mrb[0].mxu0
        %v1795 = vpop.f32.mrb[0].mxu0
        %v1796 = vadd.f32 0.0, %v1795
        %v1797 = vpop.f32.mrb[0].mxu0
        %1798 = vdwg.mxu0
        %v1799 = vmul.f32 %v1785, %v1645
        %v1800 = vmul.f32 %v1788, %v1646
        %v1801 = vmul.f32 %v1793, %v1647
        %v1802 = vmul.f32 %v1796, %v1648
        %v1803 = vpack.c.bf16 %v1514, %v1513
        %v1804 = vpack.c.bf16 %v1516, %v1515
        %v1806 = vsel %vm1149, %v1803, 0
        %v1809 = vsel %vm1149, %v1804, 0
        %1811 = vmatprep.subr.bf16.mxu0 0
        %1812 = vmatpush1.bf16.msra.mxu0 %v1550
        %1813 = vmatprep.subr.bf16.mxu0 0
        %1814 = vmatpush1.bf16.msra.mxu0 %v1551
        %1815 = vmatprep.subr.bf16.mxu0 0
        %1816 = vmatpush1.bf16.msra.mxu0 %v1552
        %1817 = vmatprep.subr.bf16.mxu0 0
        %1818 = vmatpush1.bf16.msra.mxu0 %v1553
        %1819 = vmatprep.subr.bf16.mxu0 0
        %1820 = vmatpush1.bf16.msra.mxu0 0
        %1821 = vmatprep.subr.bf16.mxu0 0
        %1822 = vmatpush1.bf16.msra.mxu0 0
        %1823 = vmatprep.subr.bf16.mxu0 0
        %1824 = vmatpush1.bf16.msra.mxu0 0
        %1825 = vmatprep.subr.bf16.mxu0 0
        %1826 = vmatpush1.bf16.msra.mxu0 0
        %1827 = vmatprep.subr.bf16.mxu0 0
        %1828 = vmatpush1.bf16.msra.mxu0 0
        %1829 = vmatprep.subr.bf16.mxu0 0
        %1830 = vmatpush1.bf16.msra.mxu0 0
        %1831 = vmatprep.subr.bf16.mxu0 0
        %1832 = vmatpush1.bf16.msra.mxu0 0
        %1833 = vmatprep.subr.bf16.mxu0 0
        %1834 = vmatpush1.bf16.msra.mxu0 0
        %1835 = vmatprep.subr.bf16.mxu0 0
        %1836 = vmatpush1.bf16.msra.mxu0 0
        %1837 = vmatprep.subr.bf16.mxu0 0
        %1838 = vmatpush1.bf16.msra.mxu0 0
        %1839 = vmatprep.subr.bf16.mxu0 0
        %1840 = vmatpush1.bf16.msra.mxu0 0
        %1841 = vmatprep.subr.bf16.mxu0 0
        %1842 = vmatpush1.bf16.msra.mxu0 0
        %1843 = vmatprep.mubr.bf16.mxu0 0
        %1844 = vmatmul.mubr.bf16.gmra.mrb[0].mxu0 %v1806
        %v1845 = vpop.f32.mrb[0].mxu0
        %v1846 = vadd.f32 0.0, %v1845
        %v1847 = vpop.f32.mrb[0].mxu0
        %v1848 = vpop.f32.mrb[0].mxu0
        %v1849 = vadd.f32 0.0, %v1848
        %v1850 = vpop.f32.mrb[0].mxu0
        %1851 = vmatprep.mubr.bf16.mxu0 0
        %1852 = vmatmul.mubr.bf16.gmra.mrb[0].mxu0 %v1809
        %v1853 = vpop.f32.mrb[0].mxu0
        %v1854 = vadd.f32 0.0, %v1853
        %v1855 = vpop.f32.mrb[0].mxu0
        %v1856 = vpop.f32.mrb[0].mxu0
        %v1857 = vadd.f32 0.0, %v1856
        %v1858 = vpop.f32.mrb[0].mxu0
        %1859 = vdwg.mxu0
        %v1860 = vmul.f32 %v1846, %v1645
        %v1861 = vmul.f32 %v1849, %v1646
        %v1862 = vmul.f32 %v1854, %v1647
        %v1863 = vmul.f32 %v1857, %v1648
        %v1864 = vld [vmem:[%s8] sm:$0xff]
        %v1865 = vld [vmem:[%s8 + $0x8] sm:$0xff]
        %v1866 = vld [vmem:[%s8 + $0x10] sm:$0xff]
        %v1867 = vld [vmem:[%s8 + $0x18] sm:$0xff]
        %v1868 = vld [vmem:[%s8 + $0x20] sm:$0xff]
        %v1869 = vld [vmem:[%s8 + $0x28] sm:$0xff]
        %v1870 = vld [vmem:[%s8 + $0x30] sm:$0xff]
        %v1871 = vld [vmem:[%s8 + $0x38] sm:$0xff]
        %v1872 = vld [vmem:[%s9] sm:$0x1]
        %v1874 = vlaneseq
        %v1875 = vshrl.u32 %v1874, 7
        %v1876 = vsub.s32 0, %v1875
        %v1877 = vrot.slane %v1872, %v1876
        %v1880 = vsel %vm1149, %v1677, 0
        %v1883 = vsel %vm1149, %v1678, 0
        %v1886 = vsel %vm1149, %v1679, 0
        %v1889 = vsel %vm1149, %v1680, 0
        %1891 = vmatprep.subr.mxu0 0.0
        %1892 = vmatpush1.msra.mxu0 %v1864
        %1893 = vmatprep.subr.mxu0 0.0
        %1894 = vmatpush1.msra.mxu0 %v1865
        %1895 = vmatprep.subr.mxu0 0.0
        %1896 = vmatpush1.msra.mxu0 %v1866
        %1897 = vmatprep.subr.mxu0 0.0
        %1898 = vmatpush1.msra.mxu0 %v1867
        %1899 = vmatprep.subr.mxu0 0.0
        %1900 = vmatpush1.msra.mxu0 %v1868
        %1901 = vmatprep.subr.mxu0 0.0
        %1902 = vmatpush1.msra.mxu0 %v1869
        %1903 = vmatprep.subr.mxu0 0.0
        %1904 = vmatpush1.msra.mxu0 %v1870
        %1905 = vmatprep.subr.mxu0 0.0
        %1906 = vmatpush1.msra.mxu0 %v1871
        %1907 = vmatprep.subr.mxu0 0.0
        %1908 = vmatpush1.msra.mxu0 0.0
        %1909 = vmatprep.subr.mxu0 0.0
        %1910 = vmatpush1.msra.mxu0 0.0
        %1911 = vmatprep.subr.mxu0 0.0
        %1912 = vmatpush1.msra.mxu0 0.0
        %1913 = vmatprep.subr.mxu0 0.0
        %1914 = vmatpush1.msra.mxu0 0.0
        %1915 = vmatprep.subr.mxu0 0.0
        %1916 = vmatpush1.msra.mxu0 0.0
        %1917 = vmatprep.subr.mxu0 0.0
        %1918 = vmatpush1.msra.mxu0 0.0
        %1919 = vmatprep.subr.mxu0 0.0
        %1920 = vmatpush1.msra.mxu0 0.0
        %1921 = vmatprep.subr.mxu0 0.0
        %1922 = vmatpush1.msra.mxu0 0.0
        %1923 = vmatprep.subr.mxu0 0.0
        %1924 = vmatpush1.msra.mxu0 0.0
        %1925 = vmatprep.subr.mxu0 0.0
        %1926 = vmatpush1.msra.mxu0 0.0
        %1927 = vmatprep.subr.mxu0 0.0
        %1928 = vmatpush1.msra.mxu0 0.0
        %1929 = vmatprep.subr.mxu0 0.0
        %1930 = vmatpush1.msra.mxu0 0.0
        %1931 = vmatprep.subr.mxu0 0.0
        %1932 = vmatpush1.msra.mxu0 0.0
        %1933 = vmatprep.subr.mxu0 0.0
        %1934 = vmatpush1.msra.mxu0 0.0
        %1935 = vmatprep.subr.mxu0 0.0
        %1936 = vmatpush1.msra.mxu0 0.0
        %1937 = vmatprep.subr.mxu0 0.0
        %1938 = vmatpush1.msra.mxu0 0.0
        %1939 = vmatprep.subr.mxu0 0.0
        %1940 = vmatpush1.msra.mxu0 0.0
        %1941 = vmatprep.subr.mxu0 0.0
        %1942 = vmatpush1.msra.mxu0 0.0
        %1943 = vmatprep.subr.mxu0 0.0
        %1944 = vmatpush1.msra.mxu0 0.0
        %1945 = vmatprep.subr.mxu0 0.0
        %1946 = vmatpush1.msra.mxu0 0.0
        %1947 = vmatprep.subr.mxu0 0.0
        %1948 = vmatpush1.msra.mxu0 0.0
        %1949 = vmatprep.subr.mxu0 0.0
        %1950 = vmatpush1.msra.mxu0 0.0
        %1951 = vmatprep.subr.mxu0 0.0
        %1952 = vmatpush1.msra.mxu0 0.0
        %1953 = vmatprep.subr.mxu0 0.0
        %1954 = vmatpush1.msra.mxu0 0.0
        %1955 = vmatprep.mubr.f32.mxu0 0.0
        %1956 = vmatmul.mubr.f32.gmra.mrb[0].mxu0 %v1880
        %v1957 = vpop.f32.mrb[0].mxu0
        %v1958 = vadd.f32 %v1877, %v1957
        %v1959 = vpop.f32.mrb[0].mxu0
        %1960 = vmatprep.mubr.f32.mxu0 0.0
        %1961 = vmatmul.mubr.f32.gmra.mrb[0].mxu0 %v1883
        %v1962 = vpop.f32.mrb[0].mxu0
        %v1963 = vadd.f32 %v1877, %v1962
        %v1964 = vpop.f32.mrb[0].mxu0
        %1965 = vmatprep.mubr.f32.mxu0 0.0
        %1966 = vmatmul.mubr.f32.gmra.mrb[0].mxu0 %v1886
        %v1967 = vpop.f32.mrb[0].mxu0
        %v1968 = vadd.f32 %v1877, %v1967
        %v1969 = vpop.f32.mrb[0].mxu0
        %1970 = vmatprep.mubr.f32.mxu0 0.0
        %1971 = vmatmul.mubr.f32.gmra.mrb[0].mxu0 %v1889
        %v1972 = vpop.f32.mrb[0].mxu0
        %v1973 = vadd.f32 %v1877, %v1972
        %v1974 = vpop.f32.mrb[0].mxu0
        %1975 = vdwg.mxu0
        %v1977 = vsel %vm1149, %v1738, 0
        %v1980 = vsel %vm1149, %v1739, 0
        %v1983 = vsel %vm1149, %v1740, 0
        %v1986 = vsel %vm1149, %v1741, 0
        %1988 = vmatprep.subr.mxu0 0.0
        %1989 = vmatpush1.msra.mxu0 %v1864
        %1990 = vmatprep.subr.mxu0 0.0
        %1991 = vmatpush1.msra.mxu0 %v1865
        %1992 = vmatprep.subr.mxu0 0.0
        %1993 = vmatpush1.msra.mxu0 %v1866
        %1994 = vmatprep.subr.mxu0 0.0
        %1995 = vmatpush1.msra.mxu0 %v1867
        %1996 = vmatprep.subr.mxu0 0.0
        %1997 = vmatpush1.msra.mxu0 %v1868
        %1998 = vmatprep.subr.mxu0 0.0
        %1999 = vmatpush1.msra.mxu0 %v1869
        %2000 = vmatprep.subr.mxu0 0.0
        %2001 = vmatpush1.msra.mxu0 %v1870
        %2002 = vmatprep.subr.mxu0 0.0
        %2003 = vmatpush1.msra.mxu0 %v1871
        %2004 = vmatprep.subr.mxu0 0.0
        %2005 = vmatpush1.msra.mxu0 0.0
        %2006 = vmatprep.subr.mxu0 0.0
        %2007 = vmatpush1.msra.mxu0 0.0
        %2008 = vmatprep.subr.mxu0 0.0
        %2009 = vmatpush1.msra.mxu0 0.0
        %2010 = vmatprep.subr.mxu0 0.0
        %2011 = vmatpush1.msra.mxu0 0.0
        %2012 = vmatprep.subr.mxu0 0.0
        %2013 = vmatpush1.msra.mxu0 0.0
        %2014 = vmatprep.subr.mxu0 0.0
        %2015 = vmatpush1.msra.mxu0 0.0
        %2016 = vmatprep.subr.mxu0 0.0
        %2017 = vmatpush1.msra.mxu0 0.0
        %2018 = vmatprep.subr.mxu0 0.0
        %2019 = vmatpush1.msra.mxu0 0.0
        %2020 = vmatprep.subr.mxu0 0.0
        %2021 = vmatpush1.msra.mxu0 0.0
        %2022 = vmatprep.subr.mxu0 0.0
        %2023 = vmatpush1.msra.mxu0 0.0
        %2024 = vmatprep.subr.mxu0 0.0
        %2025 = vmatpush1.msra.mxu0 0.0
        %2026 = vmatprep.subr.mxu0 0.0
        %2027 = vmatpush1.msra.mxu0 0.0
        %2028 = vmatprep.subr.mxu0 0.0
        %2029 = vmatpush1.msra.mxu0 0.0
        %2030 = vmatprep.subr.mxu0 0.0
        %2031 = vmatpush1.msra.mxu0 0.0
        %2032 = vmatprep.subr.mxu0 0.0
        %2033 = vmatpush1.msra.mxu0 0.0
        %2034 = vmatprep.subr.mxu0 0.0
        %2035 = vmatpush1.msra.mxu0 0.0
        %2036 = vmatprep.subr.mxu0 0.0
        %2037 = vmatpush1.msra.mxu0 0.0
        %2038 = vmatprep.subr.mxu0 0.0
        %2039 = vmatpush1.msra.mxu0 0.0
        %2040 = vmatprep.subr.mxu0 0.0
        %2041 = vmatpush1.msra.mxu0 0.0
        %2042 = vmatprep.subr.mxu0 0.0
        %2043 = vmatpush1.msra.mxu0 0.0
        %2044 = vmatprep.subr.mxu0 0.0
        %2045 = vmatpush1.msra.mxu0 0.0
        %2046 = vmatprep.subr.mxu0 0.0
        %2047 = vmatpush1.msra.mxu0 0.0
        %2048 = vmatprep.subr.mxu0 0.0
        %2049 = vmatpush1.msra.mxu0 0.0
        %2050 = vmatprep.subr.mxu0 0.0
        %2051 = vmatpush1.msra.mxu0 0.0
        %2052 = vmatprep.mubr.f32.mxu0 0.0
        %2053 = vmatmul.mubr.f32.gmra.mrb[0].mxu0 %v1977
        %v2054 = vpop.f32.mrb[0].mxu0
        %v2055 = vadd.f32 0.0, %v2054
        %v2056 = vpop.f32.mrb[0].mxu0
        %2057 = vmatprep.mubr.f32.mxu0 0.0
        %2058 = vmatmul.mubr.f32.gmra.mrb[0].mxu0 %v1980
        %v2059 = vpop.f32.mrb[0].mxu0
        %v2060 = vadd.f32 0.0, %v2059
        %v2061 = vpop.f32.mrb[0].mxu0
        %2062 = vmatprep.mubr.f32.mxu0 0.0
        %2063 = vmatmul.mubr.f32.gmra.mrb[0].mxu0 %v1983
        %v2064 = vpop.f32.mrb[0].mxu0
        %v2065 = vadd.f32 0.0, %v2064
        %v2066 = vpop.f32.mrb[0].mxu0
        %2067 = vmatprep.mubr.f32.mxu0 0.0
        %2068 = vmatmul.mubr.f32.gmra.mrb[0].mxu0 %v1986
        %v2069 = vpop.f32.mrb[0].mxu0
        %v2070 = vadd.f32 0.0, %v2069
        %v2071 = vpop.f32.mrb[0].mxu0
        %2072 = vdwg.mxu0
        %v2074 = vsel %vm1149, %v1799, 0
        %v2077 = vsel %vm1149, %v1800, 0
        %v2080 = vsel %vm1149, %v1801, 0
        %v2083 = vsel %vm1149, %v1802, 0
        %2085 = vmatprep.subr.mxu0 0.0
        %2086 = vmatpush1.msra.mxu0 %v1864
        %2087 = vmatprep.subr.mxu0 0.0
        %2088 = vmatpush1.msra.mxu0 %v1865
        %2089 = vmatprep.subr.mxu0 0.0
        %2090 = vmatpush1.msra.mxu0 %v1866
        %2091 = vmatprep.subr.mxu0 0.0
        %2092 = vmatpush1.msra.mxu0 %v1867
        %2093 = vmatprep.subr.mxu0 0.0
        %2094 = vmatpush1.msra.mxu0 %v1868
        %2095 = vmatprep.subr.mxu0 0.0
        %2096 = vmatpush1.msra.mxu0 %v1869
        %2097 = vmatprep.subr.mxu0 0.0
        %2098 = vmatpush1.msra.mxu0 %v1870
        %2099 = vmatprep.subr.mxu0 0.0
        %2100 = vmatpush1.msra.mxu0 %v1871
        %2101 = vmatprep.subr.mxu0 0.0
        %2102 = vmatpush1.msra.mxu0 0.0
        %2103 = vmatprep.subr.mxu0 0.0
        %2104 = vmatpush1.msra.mxu0 0.0
        %2105 = vmatprep.subr.mxu0 0.0
        %2106 = vmatpush1.msra.mxu0 0.0
        %2107 = vmatprep.subr.mxu0 0.0
        %2108 = vmatpush1.msra.mxu0 0.0
        %2109 = vmatprep.subr.mxu0 0.0
        %2110 = vmatpush1.msra.mxu0 0.0
        %2111 = vmatprep.subr.mxu0 0.0
        %2112 = vmatpush1.msra.mxu0 0.0
        %2113 = vmatprep.subr.mxu0 0.0
        %2114 = vmatpush1.msra.mxu0 0.0
        %2115 = vmatprep.subr.mxu0 0.0
        %2116 = vmatpush1.msra.mxu0 0.0
        %2117 = vmatprep.subr.mxu0 0.0
        %2118 = vmatpush1.msra.mxu0 0.0
        %2119 = vmatprep.subr.mxu0 0.0
        %2120 = vmatpush1.msra.mxu0 0.0
        %2121 = vmatprep.subr.mxu0 0.0
        %2122 = vmatpush1.msra.mxu0 0.0
        %2123 = vmatprep.subr.mxu0 0.0
        %2124 = vmatpush1.msra.mxu0 0.0
        %2125 = vmatprep.subr.mxu0 0.0
        %2126 = vmatpush1.msra.mxu0 0.0
        %2127 = vmatprep.subr.mxu0 0.0
        %2128 = vmatpush1.msra.mxu0 0.0
        %2129 = vmatprep.subr.mxu0 0.0
        %2130 = vmatpush1.msra.mxu0 0.0
        %2131 = vmatprep.subr.mxu0 0.0
        %2132 = vmatpush1.msra.mxu0 0.0
        %2133 = vmatprep.subr.mxu0 0.0
        %2134 = vmatpush1.msra.mxu0 0.0
        %2135 = vmatprep.subr.mxu0 0.0
        %2136 = vmatpush1.msra.mxu0 0.0
        %2137 = vmatprep.subr.mxu0 0.0
        %2138 = vmatpush1.msra.mxu0 0.0
        %2139 = vmatprep.subr.mxu0 0.0
        %2140 = vmatpush1.msra.mxu0 0.0
        %2141 = vmatprep.subr.mxu0 0.0
        %2142 = vmatpush1.msra.mxu0 0.0
        %2143 = vmatprep.subr.mxu0 0.0
        %2144 = vmatpush1.msra.mxu0 0.0
        %2145 = vmatprep.subr.mxu0 0.0
        %2146 = vmatpush1.msra.mxu0 0.0
        %2147 = vmatprep.subr.mxu0 0.0
        %2148 = vmatpush1.msra.mxu0 0.0
        %2149 = vmatprep.mubr.f32.mxu0 0.0
        %2150 = vmatmul.mubr.f32.gmra.mrb[0].mxu0 %v2074
        %v2151 = vpop.f32.mrb[0].mxu0
        %v2152 = vadd.f32 0.0, %v2151
        %v2153 = vpop.f32.mrb[0].mxu0
        %2154 = vmatprep.mubr.f32.mxu0 0.0
        %2155 = vmatmul.mubr.f32.gmra.mrb[0].mxu0 %v2077
        %v2156 = vpop.f32.mrb[0].mxu0
        %v2157 = vadd.f32 0.0, %v2156
        %v2158 = vpop.f32.mrb[0].mxu0
        %2159 = vmatprep.mubr.f32.mxu0 0.0
        %2160 = vmatmul.mubr.f32.gmra.mrb[0].mxu0 %v2080
        %v2161 = vpop.f32.mrb[0].mxu0
        %v2162 = vadd.f32 0.0, %v2161
        %v2163 = vpop.f32.mrb[0].mxu0
        %2164 = vmatprep.mubr.f32.mxu0 0.0
        %2165 = vmatmul.mubr.f32.gmra.mrb[0].mxu0 %v2083
        %v2166 = vpop.f32.mrb[0].mxu0
        %v2167 = vadd.f32 0.0, %v2166
        %v2168 = vpop.f32.mrb[0].mxu0
        %2169 = vdwg.mxu0
        %v2171 = vsel %vm1149, %v1860, 0
        %v2174 = vsel %vm1149, %v1861, 0
        %v2177 = vsel %vm1149, %v1862, 0
        %v2180 = vsel %vm1149, %v1863, 0
        %2182 = vmatprep.subr.mxu0 0.0
        %2183 = vmatpush1.msra.mxu0 %v1864
        %2184 = vmatprep.subr.mxu0 0.0
        %2185 = vmatpush1.msra.mxu0 %v1865
        %2186 = vmatprep.subr.mxu0 0.0
        %2187 = vmatpush1.msra.mxu0 %v1866
        %2188 = vmatprep.subr.mxu0 0.0
        %2189 = vmatpush1.msra.mxu0 %v1867
        %2190 = vmatprep.subr.mxu0 0.0
        %2191 = vmatpush1.msra.mxu0 %v1868
        %2192 = vmatprep.subr.mxu0 0.0
        %2193 = vmatpush1.msra.mxu0 %v1869
        %2194 = vmatprep.subr.mxu0 0.0
        %2195 = vmatpush1.msra.mxu0 %v1870
        %2196 = vmatprep.subr.mxu0 0.0
        %2197 = vmatpush1.msra.mxu0 %v1871
        %2198 = vmatprep.subr.mxu0 0.0
        %2199 = vmatpush1.msra.mxu0 0.0
        %2200 = vmatprep.subr.mxu0 0.0
        %2201 = vmatpush1.msra.mxu0 0.0
        %2202 = vmatprep.subr.mxu0 0.0
        %2203 = vmatpush1.msra.mxu0 0.0
        %2204 = vmatprep.subr.mxu0 0.0
        %2205 = vmatpush1.msra.mxu0 0.0
        %2206 = vmatprep.subr.mxu0 0.0
        %2207 = vmatpush1.msra.mxu0 0.0
        %2208 = vmatprep.subr.mxu0 0.0
        %2209 = vmatpush1.msra.mxu0 0.0
        %2210 = vmatprep.subr.mxu0 0.0
        %2211 = vmatpush1.msra.mxu0 0.0
        %2212 = vmatprep.subr.mxu0 0.0
        %2213 = vmatpush1.msra.mxu0 0.0
        %2214 = vmatprep.subr.mxu0 0.0
        %2215 = vmatpush1.msra.mxu0 0.0
        %2216 = vmatprep.subr.mxu0 0.0
        %2217 = vmatpush1.msra.mxu0 0.0
        %2218 = vmatprep.subr.mxu0 0.0
        %2219 = vmatpush1.msra.mxu0 0.0
        %2220 = vmatprep.subr.mxu0 0.0
        %2221 = vmatpush1.msra.mxu0 0.0
        %2222 = vmatprep.subr.mxu0 0.0
        %2223 = vmatpush1.msra.mxu0 0.0
        %2224 = vmatprep.subr.mxu0 0.0
        %2225 = vmatpush1.msra.mxu0 0.0
        %2226 = vmatprep.subr.mxu0 0.0
        %2227 = vmatpush1.msra.mxu0 0.0
        %2228 = vmatprep.subr.mxu0 0.0
        %2229 = vmatpush1.msra.mxu0 0.0
        %2230 = vmatprep.subr.mxu0 0.0
        %2231 = vmatpush1.msra.mxu0 0.0
        %2232 = vmatprep.subr.mxu0 0.0
        %2233 = vmatpush1.msra.mxu0 0.0
        %2234 = vmatprep.subr.mxu0 0.0
        %2235 = vmatpush1.msra.mxu0 0.0
        %2236 = vmatprep.subr.mxu0 0.0
        %2237 = vmatpush1.msra.mxu0 0.0
        %2238 = vmatprep.subr.mxu0 0.0
        %2239 = vmatpush1.msra.mxu0 0.0
        %2240 = vmatprep.subr.mxu0 0.0
        %2241 = vmatpush1.msra.mxu0 0.0
        %2242 = vmatprep.subr.mxu0 0.0
        %2243 = vmatpush1.msra.mxu0 0.0
        %2244 = vmatprep.subr.mxu0 0.0
        %2245 = vmatpush1.msra.mxu0 0.0
        %2246 = vmatprep.mubr.f32.mxu0 0.0
        %2247 = vmatmul.mubr.f32.gmra.mrb[0].mxu0 %v2171
        %v2248 = vpop.f32.mrb[0].mxu0
        %v2249 = vadd.f32 0.0, %v2248
        %v2250 = vpop.f32.mrb[0].mxu0
        %2251 = vmatprep.mubr.f32.mxu0 0.0
        %2252 = vmatmul.mubr.f32.gmra.mrb[0].mxu0 %v2174
        %v2253 = vpop.f32.mrb[0].mxu0
        %v2254 = vadd.f32 0.0, %v2253
        %v2255 = vpop.f32.mrb[0].mxu0
        %2256 = vmatprep.mubr.f32.mxu0 0.0
        %2257 = vmatmul.mubr.f32.gmra.mrb[0].mxu0 %v2177
        %v2258 = vpop.f32.mrb[0].mxu0
        %v2259 = vadd.f32 0.0, %v2258
        %v2260 = vpop.f32.mrb[0].mxu0
        %2261 = vmatprep.mubr.f32.mxu0 0.0
        %2262 = vmatmul.mubr.f32.gmra.mrb[0].mxu0 %v2180
        %v2263 = vpop.f32.mrb[0].mxu0
        %v2264 = vadd.f32 0.0, %v2263
        %v2265 = vpop.f32.mrb[0].mxu0
        %2266 = vdwg.mxu0
        %2271 = vrot.lane.b32.xlu0 %v2152, 1
        %v2272 = vpop.permute.xlu0 %2271
        %2273 = vrot.lane.b32.xlu0 %v2157, 1
        %v2274 = vpop.permute.xlu0 %2273
        %2275 = vrot.lane.b32.xlu0 %v2162, 1
        %v2276 = vpop.permute.xlu0 %2275
        %2277 = vrot.lane.b32.xlu0 %v2167, 1
        %v2278 = vpop.permute.xlu0 %2277
        %2287 = vrot.lane.b32.xlu0 %v2249, 2
        %v2288 = vpop.permute.xlu0 %2287
        %2289 = vrot.lane.b32.xlu0 %v2254, 2
        %v2290 = vpop.permute.xlu0 %2289
        %2291 = vrot.lane.b32.xlu0 %v2259, 2
        %v2292 = vpop.permute.xlu0 %2291
        %2293 = vrot.lane.b32.xlu0 %v2264, 2
        %v2294 = vpop.permute.xlu0 %2293
        %vm2299 = vcmask 7168
        %v2300 = vsel %vm2299, %v2055, %v2272
        %v2301 = vsel %vm2299, %v2060, %v2274
        %v2302 = vsel %vm2299, %v2065, %v2276
        %v2303 = vsel %vm2299, %v2070, %v2278
        %vm2304 = vcmask 15360
        %v2305 = vsel %vm2304, %v2300, %v2288
        %v2306 = vsel %vm2304, %v2301, %v2290
        %v2307 = vsel %vm2304, %v2302, %v2292
        %v2308 = vsel %vm2304, %v2303, %v2294
        %v2309 = vld [vmem:[%s772] sm:$0xff]
        %v2310 = vld [vmem:[%s772 + $0x8] sm:$0xff]
        %v2311 = vld [vmem:[%s772 + $0x10] sm:$0xff]
        %v2312 = vld [vmem:[%s772 + $0x18] sm:$0xff]
        %v2313 = vsub.f32 0.0, %v2309
        %v2314 = vsub.f32 0.0, %v2310
        %v2315 = vsub.f32 0.0, %v2311
        %v2316 = vsub.f32 0.0, %v2312
        %v2317 = vmul.f32 %v2305, %v2305
        %v2318 = vmul.f32 %v2306, %v2306
        %v2319 = vmul.f32 %v2307, %v2307
        %v2320 = vmul.f32 %v2308, %v2308
        %v2321 = vsel %vm806, %v2317, 0.0
        %2322 = vadd.xlane.f32.xlu0 %v2321
        %v2323 = vpop.xlane.xlu0 %2322
        %v2324 = vsel %vm806, %v2318, 0.0
        %2325 = vadd.xlane.f32.xlu0 %v2324
        %v2326 = vpop.xlane.xlu0 %2325
        %v2327 = vsel %vm806, %v2319, 0.0
        %2328 = vadd.xlane.f32.xlu0 %v2327
        %v2329 = vpop.xlane.xlu0 %2328
        %v2330 = vsel %vm806, %v2320, 0.0
        %2331 = vadd.xlane.f32.xlu0 %v2330
        %v2332 = vpop.xlane.xlu0 %2331
        %v2333 = vmax.f32 %v2323, 1e-24
        %v2334 = vmax.f32 %v2326, 1e-24
        %v2335 = vmax.f32 %v2329, 1e-24
        %v2336 = vmax.f32 %v2332, 1e-24
        %v2337 = vrsqrt.pop %v2333
        %v2338 = vrsqrt.pop %v2334
        %v2339 = vrsqrt.pop %v2335
        %v2340 = vrsqrt.pop %v2336
        %v2341 = vmul.f32 %v2305, %v2337
        %v2342 = vmul.f32 %v2306, %v2338
        %v2343 = vmul.f32 %v2307, %v2339
        %v2344 = vmul.f32 %v2308, %v2340
        %vm2345 = vcmp.gt.f32.partialorder %v1958, 20.0
        %vm2346 = vcmp.gt.f32.partialorder %v1963, 20.0
        %vm2347 = vcmp.gt.f32.partialorder %v1968, 20.0
        %vm2348 = vcmp.gt.f32.partialorder %v1973, 20.0
        %v2349 = vmin.f32 %v1958, 20.0
        %v2350 = vmin.f32 %v1963, 20.0
        %v2351 = vmin.f32 %v1968, 20.0
        %v2352 = vmin.f32 %v1973, 20.0
        %v2353 = vmul.f32 %v2349, 1.442695
        %v2354 = vpow.pop %v2353
        %v2355 = vmul.f32 %v2350, 1.442695
        %v2356 = vpow.pop %v2355
        %v2357 = vmul.f32 %v2351, 1.442695
        %v2358 = vpow.pop %v2357
        %v2359 = vmul.f32 %v2352, 1.442695
        %v2360 = vpow.pop %v2359
        %v2361 = vadd.f32 %v2354, 1.0
        %v2362 = vadd.f32 %v2356, 1.0
        %v2363 = vadd.f32 %v2358, 1.0
        %v2364 = vadd.f32 %v2360, 1.0
        %v2365 = vlog2.pop %v2361
        %v2366 = vmul.f32 %v2365, 0.6931472
        %v2367 = vlog2.pop %v2362
        %v2368 = vmul.f32 %v2367, 0.6931472
        %v2369 = vlog2.pop %v2363
        %v2370 = vmul.f32 %v2369, 0.6931472
        %v2371 = vlog2.pop %v2364
        %v2372 = vmul.f32 %v2371, 0.6931472
        %v2373 = vsel %vm2345, %v1958, %v2366
        %v2374 = vsel %vm2346, %v1963, %v2368
        %v2375 = vsel %vm2347, %v1968, %v2370
        %v2376 = vsel %vm2348, %v1973, %v2372
        %v2377 = vsub.f32 0.0, %v1958
        %v2378 = vsub.f32 0.0, %v1963
        %v2379 = vsub.f32 0.0, %v1968
        %v2380 = vsub.f32 0.0, %v1973
        %v2381 = vmul.f32 %v2377, 1.442695
        %v2382 = vpow.pop %v2381
        %v2383 = vmul.f32 %v2378, 1.442695
        %v2384 = vpow.pop %v2383
        %v2385 = vmul.f32 %v2379, 1.442695
        %v2386 = vpow.pop %v2385
        %v2387 = vmul.f32 %v2380, 1.442695
        %v2388 = vpow.pop %v2387
        %v2389 = vadd.f32 %v2382, 1.0
        %v2390 = vadd.f32 %v2384, 1.0
        %v2391 = vadd.f32 %v2386, 1.0
        %v2392 = vadd.f32 %v2388, 1.0
        %v2393 = vrcp.pop %v2389
        %v2394 = vmul.f32 1.0, %v2393
        %v2395 = vrcp.pop %v2390
        %v2396 = vmul.f32 1.0, %v2395
        %v2397 = vrcp.pop %v2391
        %v2398 = vmul.f32 1.0, %v2397
        %v2399 = vrcp.pop %v2392
        %v2400 = vmul.f32 1.0, %v2399
        %v2401 = vmul.f32 %v2341, %v2313
        %v2402 = vmul.f32 %v2342, %v2314
        %v2403 = vmul.f32 %v2343, %v2315
        %v2404 = vmul.f32 %v2344, %v2316
        %v2405 = vsel %vm806, %v2401, 0.0
        %2406 = vadd.xlane.f32.xlu0 %v2405
        %v2407 = vpop.xlane.xlu0 %2406
        %v2408 = vsel %vm806, %v2402, 0.0
        %2409 = vadd.xlane.f32.xlu0 %v2408
        %v2410 = vpop.xlane.xlu0 %2409
        %v2411 = vsel %vm806, %v2403, 0.0
        %2412 = vadd.xlane.f32.xlu0 %v2411
        %v2413 = vpop.xlane.xlu0 %2412
        %v2414 = vsel %vm806, %v2404, 0.0
        %2415 = vadd.xlane.f32.xlu0 %v2414
        %v2416 = vpop.xlane.xlu0 %2415
        %v2417 = vmul.f32 %v2341, 2.0
        %v2418 = vmul.f32 %v2342, 2.0
        %v2419 = vmul.f32 %v2343, 2.0
        %v2420 = vmul.f32 %v2344, 2.0
        %v2421 = vmul.f32 %v2417, %v2407
        %v2422 = vmul.f32 %v2418, %v2410
        %v2423 = vmul.f32 %v2419, %v2413
        %v2424 = vmul.f32 %v2420, %v2416
        %v2425 = vsub.f32 %v2421, %v2313
        %v2426 = vsub.f32 %v2422, %v2314
        %v2427 = vsub.f32 %v2423, %v2315
        %v2428 = vsub.f32 %v2424, %v2316
        %2433 = vrot.lane.b32.xlu0 %v2341, 1
        %v2434 = vpop.permute.xlu0 %2433
        %2435 = vrot.lane.b32.xlu0 %v2342, 1
        %v2436 = vpop.permute.xlu0 %2435
        %2437 = vrot.lane.b32.xlu0 %v2343, 1
        %v2438 = vpop.permute.xlu0 %2437
        %2439 = vrot.lane.b32.xlu0 %v2344, 1
        %v2440 = vpop.permute.xlu0 %2439
        %v2445 = vmul.f32 %v2341, %v2434
        %v2446 = vmul.f32 %v2342, %v2436
        %v2447 = vmul.f32 %v2343, %v2438
        %v2448 = vmul.f32 %v2344, %v2440
        %2449 = vrot.lane.b32.xlu0 %v2341, 127
        %v2450 = vpop.permute.xlu0 %2449
        %2451 = vrot.lane.b32.xlu0 %v2342, 127
        %v2452 = vpop.permute.xlu0 %2451
        %2453 = vrot.lane.b32.xlu0 %v2343, 127
        %v2454 = vpop.permute.xlu0 %2453
        %2455 = vrot.lane.b32.xlu0 %v2344, 127
        %v2456 = vpop.permute.xlu0 %2455
        %v2461 = vmul.f32 %v2341, %v2450
        %v2462 = vmul.f32 %v2342, %v2452
        %v2463 = vmul.f32 %v2343, %v2454
        %v2464 = vmul.f32 %v2344, %v2456
        %v2465 = vmul.f32 %v2341, 3.0
        %v2466 = vmul.f32 %v2342, 3.0
        %v2467 = vmul.f32 %v2343, 3.0
        %v2468 = vmul.f32 %v2344, 3.0
        %v2469 = vmul.f32 %v2465, %v2341
        %v2470 = vmul.f32 %v2466, %v2342
        %v2471 = vmul.f32 %v2467, %v2343
        %v2472 = vmul.f32 %v2468, %v2344
        %v2473 = vsub.f32 %v2469, 1.0
        %v2474 = vsub.f32 %v2470, 1.0
        %v2475 = vsub.f32 %v2471, 1.0
        %v2476 = vsub.f32 %v2472, 1.0
        %2477 = vrot.lane.b32.xlu0 %v2341, 2
        %v2478 = vpop.permute.xlu0 %2477
        %2479 = vrot.lane.b32.xlu0 %v2342, 2
        %v2480 = vpop.permute.xlu0 %2479
        %2481 = vrot.lane.b32.xlu0 %v2343, 2
        %v2482 = vpop.permute.xlu0 %2481
        %2483 = vrot.lane.b32.xlu0 %v2344, 2
        %v2484 = vpop.permute.xlu0 %2483
        %v2489 = vmul.f32 %v2341, %v2478
        %v2490 = vmul.f32 %v2342, %v2480
        %v2491 = vmul.f32 %v2343, %v2482
        %v2492 = vmul.f32 %v2344, %v2484
        %v2493 = vmul.f32 %v2341, %v2341
        %v2494 = vmul.f32 %v2342, %v2342
        %v2495 = vmul.f32 %v2343, %v2343
        %v2496 = vmul.f32 %v2344, %v2344
        %2501 = vrot.lane.b32.xlu0 %v2493, 127
        %v2502 = vpop.permute.xlu0 %2501
        %2503 = vrot.lane.b32.xlu0 %v2494, 127
        %v2504 = vpop.permute.xlu0 %2503
        %2505 = vrot.lane.b32.xlu0 %v2495, 127
        %v2506 = vpop.permute.xlu0 %2505
        %2507 = vrot.lane.b32.xlu0 %v2496, 127
        %v2508 = vpop.permute.xlu0 %2507
        %v2513 = vsub.f32 %v2493, %v2502
        %v2514 = vsub.f32 %v2494, %v2504
        %v2515 = vsub.f32 %v2495, %v2506
        %v2516 = vsub.f32 %v2496, %v2508
        %2517 = vrot.lane.b32.xlu0 %v2341, 3
        %v2518 = vpop.permute.xlu0 %2517
        %2519 = vrot.lane.b32.xlu0 %v2342, 3
        %v2520 = vpop.permute.xlu0 %2519
        %2521 = vrot.lane.b32.xlu0 %v2343, 3
        %v2522 = vpop.permute.xlu0 %2521
        %2523 = vrot.lane.b32.xlu0 %v2344, 3
        %v2524 = vpop.permute.xlu0 %2523
        %2533 = vrot.lane.b32.xlu0 %v2445, 3
        %v2534 = vpop.permute.xlu0 %2533
        %2535 = vrot.lane.b32.xlu0 %v2446, 3
        %v2536 = vpop.permute.xlu0 %2535
        %2537 = vrot.lane.b32.xlu0 %v2447, 3
        %v2538 = vpop.permute.xlu0 %2537
        %2539 = vrot.lane.b32.xlu0 %v2448, 3
        %v2540 = vpop.permute.xlu0 %2539
        %2549 = vrot.lane.b32.xlu0 %v2461, 4
        %v2550 = vpop.permute.xlu0 %2549
        %2551 = vrot.lane.b32.xlu0 %v2462, 4
        %v2552 = vpop.permute.xlu0 %2551
        %2553 = vrot.lane.b32.xlu0 %v2463, 4
        %v2554 = vpop.permute.xlu0 %2553
        %2555 = vrot.lane.b32.xlu0 %v2464, 4
        %v2556 = vpop.permute.xlu0 %2555
        %2565 = vrot.lane.b32.xlu0 %v2473, 4
        %v2566 = vpop.permute.xlu0 %2565
        %2567 = vrot.lane.b32.xlu0 %v2474, 4
        %v2568 = vpop.permute.xlu0 %2567
        %2569 = vrot.lane.b32.xlu0 %v2475, 4
        %v2570 = vpop.permute.xlu0 %2569
        %2571 = vrot.lane.b32.xlu0 %v2476, 4
        %v2572 = vpop.permute.xlu0 %2571
        %2581 = vrot.lane.b32.xlu0 %v2489, 5
        %v2582 = vpop.permute.xlu0 %2581
        %2583 = vrot.lane.b32.xlu0 %v2490, 5
        %v2584 = vpop.permute.xlu0 %2583
        %2585 = vrot.lane.b32.xlu0 %v2491, 5
        %v2586 = vpop.permute.xlu0 %2585
        %2587 = vrot.lane.b32.xlu0 %v2492, 5
        %v2588 = vpop.permute.xlu0 %2587
        %2597 = vrot.lane.b32.xlu0 %v2513, 8
        %v2598 = vpop.permute.xlu0 %2597
        %2599 = vrot.lane.b32.xlu0 %v2514, 8
        %v2600 = vpop.permute.xlu0 %2599
        %2601 = vrot.lane.b32.xlu0 %v2515, 8
        %v2602 = vpop.permute.xlu0 %2601
        %2603 = vrot.lane.b32.xlu0 %v2516, 8
        %v2604 = vpop.permute.xlu0 %2603
        %v2609 = vsel %vm2299, 1.0, %v2341
        %v2610 = vsel %vm2299, 1.0, %v2342
        %v2611 = vsel %vm2299, 1.0, %v2343
        %v2612 = vsel %vm2299, 1.0, %v2344
        %v2613 = vsel %vm2304, %v2609, %v2341
        %v2614 = vsel %vm2304, %v2610, %v2342
        %v2615 = vsel %vm2304, %v2611, %v2343
        %v2616 = vsel %vm2304, %v2612, %v2344
        %v2617 = vsel %vm806, %v2613, %v2518
        %v2618 = vsel %vm806, %v2614, %v2520
        %v2619 = vsel %vm806, %v2615, %v2522
        %v2620 = vsel %vm806, %v2616, %v2524
        %vm2621 = vcmask 31744
        %v2622 = vsel %vm2621, %v2617, %v2534
        %v2623 = vsel %vm2621, %v2618, %v2536
        %v2624 = vsel %vm2621, %v2619, %v2538
        %v2625 = vsel %vm2621, %v2620, %v2540
        %vm2626 = vcmask 39936
        %v2627 = vsel %vm2626, %v2622, %v2550
        %v2628 = vsel %vm2626, %v2623, %v2552
        %v2629 = vsel %vm2626, %v2624, %v2554
        %v2630 = vsel %vm2626, %v2625, %v2556
        %vm2631 = vcmask 48128
        %v2632 = vsel %vm2631, %v2627, %v2566
        %v2633 = vsel %vm2631, %v2628, %v2568
        %v2634 = vsel %vm2631, %v2629, %v2570
        %v2635 = vsel %vm2631, %v2630, %v2572
        %vm2636 = vcmask 56320
        %v2637 = vsel %vm2636, %v2632, %v2582
        %v2638 = vsel %vm2636, %v2633, %v2584
        %v2639 = vsel %vm2636, %v2634, %v2586
        %v2640 = vsel %vm2636, %v2635, %v2588
        %vm2641 = vcmask 64512
        %v2642 = vsel %vm2641, %v2637, %v2598
        %v2643 = vsel %vm2641, %v2638, %v2600
        %v2644 = vsel %vm2641, %v2639, %v2602
        %v2645 = vsel %vm2641, %v2640, %v2604
        %2650 = vrot.lane.b32.xlu0 %v2425, 1
        %v2651 = vpop.permute.xlu0 %2650
        %2652 = vrot.lane.b32.xlu0 %v2426, 1
        %v2653 = vpop.permute.xlu0 %2652
        %2654 = vrot.lane.b32.xlu0 %v2427, 1
        %v2655 = vpop.permute.xlu0 %2654
        %2656 = vrot.lane.b32.xlu0 %v2428, 1
        %v2657 = vpop.permute.xlu0 %2656
        %v2662 = vmul.f32 %v2425, %v2651
        %v2663 = vmul.f32 %v2426, %v2653
        %v2664 = vmul.f32 %v2427, %v2655
        %v2665 = vmul.f32 %v2428, %v2657
        %2666 = vrot.lane.b32.xlu0 %v2425, 127
        %v2667 = vpop.permute.xlu0 %2666
        %2668 = vrot.lane.b32.xlu0 %v2426, 127
        %v2669 = vpop.permute.xlu0 %2668
        %2670 = vrot.lane.b32.xlu0 %v2427, 127
        %v2671 = vpop.permute.xlu0 %2670
        %2672 = vrot.lane.b32.xlu0 %v2428, 127
        %v2673 = vpop.permute.xlu0 %2672
        %v2678 = vmul.f32 %v2425, %v2667
        %v2679 = vmul.f32 %v2426, %v2669
        %v2680 = vmul.f32 %v2427, %v2671
        %v2681 = vmul.f32 %v2428, %v2673
        %v2682 = vmul.f32 %v2425, 3.0
        %v2683 = vmul.f32 %v2426, 3.0
        %v2684 = vmul.f32 %v2427, 3.0
        %v2685 = vmul.f32 %v2428, 3.0
        %v2686 = vmul.f32 %v2682, %v2425
        %v2687 = vmul.f32 %v2683, %v2426
        %v2688 = vmul.f32 %v2684, %v2427
        %v2689 = vmul.f32 %v2685, %v2428
        %v2690 = vsub.f32 %v2686, 1.0
        %v2691 = vsub.f32 %v2687, 1.0
        %v2692 = vsub.f32 %v2688, 1.0
        %v2693 = vsub.f32 %v2689, 1.0
        %2694 = vrot.lane.b32.xlu0 %v2425, 2
        %v2695 = vpop.permute.xlu0 %2694
        %2696 = vrot.lane.b32.xlu0 %v2426, 2
        %v2697 = vpop.permute.xlu0 %2696
        %2698 = vrot.lane.b32.xlu0 %v2427, 2
        %v2699 = vpop.permute.xlu0 %2698
        %2700 = vrot.lane.b32.xlu0 %v2428, 2
        %v2701 = vpop.permute.xlu0 %2700
        %v2706 = vmul.f32 %v2425, %v2695
        %v2707 = vmul.f32 %v2426, %v2697
        %v2708 = vmul.f32 %v2427, %v2699
        %v2709 = vmul.f32 %v2428, %v2701
        %v2710 = vmul.f32 %v2425, %v2425
        %v2711 = vmul.f32 %v2426, %v2426
        %v2712 = vmul.f32 %v2427, %v2427
        %v2713 = vmul.f32 %v2428, %v2428
        %2718 = vrot.lane.b32.xlu0 %v2710, 127
        %v2719 = vpop.permute.xlu0 %2718
        %2720 = vrot.lane.b32.xlu0 %v2711, 127
        %v2721 = vpop.permute.xlu0 %2720
        %2722 = vrot.lane.b32.xlu0 %v2712, 127
        %v2723 = vpop.permute.xlu0 %2722
        %2724 = vrot.lane.b32.xlu0 %v2713, 127
        %v2725 = vpop.permute.xlu0 %2724
        %v2730 = vsub.f32 %v2710, %v2719
        %v2731 = vsub.f32 %v2711, %v2721
        %v2732 = vsub.f32 %v2712, %v2723
        %v2733 = vsub.f32 %v2713, %v2725
        %v2734 = vsub.f32 0.0, %v2373
        %v2735 = vsub.f32 0.0, %v2374
        %v2736 = vsub.f32 0.0, %v2375
        %v2737 = vsub.f32 0.0, %v2376
        %v2738 = vmul.f32 %v2734, 1.442695
        %v2739 = vpow.pop %v2738
        %v2740 = vmul.f32 %v2735, 1.442695
        %v2741 = vpow.pop %v2740
        %v2742 = vmul.f32 %v2736, 1.442695
        %v2743 = vpow.pop %v2742
        %v2744 = vmul.f32 %v2737, 1.442695
        %v2745 = vpow.pop %v2744
        %v2746 = vmul.f32 %v2739, %v2739
        %v2747 = vmul.f32 %v2741, %v2741
        %v2748 = vmul.f32 %v2743, %v2743
        %v2749 = vmul.f32 %v2745, %v2745
        %v2750 = vmul.f32 %v2746, %v2739
        %v2751 = vmul.f32 %v2747, %v2741
        %v2752 = vmul.f32 %v2748, %v2743
        %v2753 = vmul.f32 %v2749, %v2745
        %v2754 = vmul.f32 %v2425, %v2739
        %v2755 = vmul.f32 %v2426, %v2741
        %v2756 = vmul.f32 %v2427, %v2743
        %v2757 = vmul.f32 %v2428, %v2745
        %2762 = vrot.lane.b32.xlu0 %v2739, 1
        %v2763 = vpop.permute.xlu0 %2762
        %2764 = vrot.lane.b32.xlu0 %v2741, 1
        %v2765 = vpop.permute.xlu0 %2764
        %2766 = vrot.lane.b32.xlu0 %v2743, 1
        %v2767 = vpop.permute.xlu0 %2766
        %2768 = vrot.lane.b32.xlu0 %v2745, 1
        %v2769 = vpop.permute.xlu0 %2768
        %v2774 = vmul.f32 %v2425, %v2763
        %v2775 = vmul.f32 %v2426, %v2765
        %v2776 = vmul.f32 %v2427, %v2767
        %v2777 = vmul.f32 %v2428, %v2769
        %2778 = vrot.lane.b32.xlu0 %v2739, 127
        %v2779 = vpop.permute.xlu0 %2778
        %2780 = vrot.lane.b32.xlu0 %v2741, 127
        %v2781 = vpop.permute.xlu0 %2780
        %2782 = vrot.lane.b32.xlu0 %v2743, 127
        %v2783 = vpop.permute.xlu0 %2782
        %2784 = vrot.lane.b32.xlu0 %v2745, 127
        %v2785 = vpop.permute.xlu0 %2784
        %v2790 = vmul.f32 %v2425, %v2779
        %v2791 = vmul.f32 %v2426, %v2781
        %v2792 = vmul.f32 %v2427, %v2783
        %v2793 = vmul.f32 %v2428, %v2785
        %v2794 = vmul.f32 %v2662, %v2750
        %v2795 = vmul.f32 %v2663, %v2751
        %v2796 = vmul.f32 %v2664, %v2752
        %v2797 = vmul.f32 %v2665, %v2753
        %v2798 = vmul.f32 %v2678, %v2750
        %v2799 = vmul.f32 %v2679, %v2751
        %v2800 = vmul.f32 %v2680, %v2752
        %v2801 = vmul.f32 %v2681, %v2753
        %2806 = vrot.lane.b32.xlu0 %v2750, 1
        %v2807 = vpop.permute.xlu0 %2806
        %2808 = vrot.lane.b32.xlu0 %v2751, 1
        %v2809 = vpop.permute.xlu0 %2808
        %2810 = vrot.lane.b32.xlu0 %v2752, 1
        %v2811 = vpop.permute.xlu0 %2810
        %2812 = vrot.lane.b32.xlu0 %v2753, 1
        %v2813 = vpop.permute.xlu0 %2812
        %v2818 = vmul.f32 %v2690, %v2807
        %v2819 = vmul.f32 %v2691, %v2809
        %v2820 = vmul.f32 %v2692, %v2811
        %v2821 = vmul.f32 %v2693, %v2813
        %v2822 = vmul.f32 %v2706, %v2807
        %v2823 = vmul.f32 %v2707, %v2809
        %v2824 = vmul.f32 %v2708, %v2811
        %v2825 = vmul.f32 %v2709, %v2813
        %2826 = vrot.lane.b32.xlu0 %v2750, 127
        %v2827 = vpop.permute.xlu0 %2826
        %2828 = vrot.lane.b32.xlu0 %v2751, 127
        %v2829 = vpop.permute.xlu0 %2828
        %2830 = vrot.lane.b32.xlu0 %v2752, 127
        %v2831 = vpop.permute.xlu0 %2830
        %2832 = vrot.lane.b32.xlu0 %v2753, 127
        %v2833 = vpop.permute.xlu0 %2832
        %v2838 = vmul.f32 %v2730, %v2827
        %v2839 = vmul.f32 %v2731, %v2829
        %v2840 = vmul.f32 %v2732, %v2831
        %v2841 = vmul.f32 %v2733, %v2833
        %2846 = vrot.lane.b32.xlu0 %v2790, 3
        %v2847 = vpop.permute.xlu0 %2846
        %2848 = vrot.lane.b32.xlu0 %v2791, 3
        %v2849 = vpop.permute.xlu0 %2848
        %2850 = vrot.lane.b32.xlu0 %v2792, 3
        %v2851 = vpop.permute.xlu0 %2850
        %2852 = vrot.lane.b32.xlu0 %v2793, 3
        %v2853 = vpop.permute.xlu0 %2852
        %2862 = vrot.lane.b32.xlu0 %v2794, 3
        %v2863 = vpop.permute.xlu0 %2862
        %2864 = vrot.lane.b32.xlu0 %v2795, 3
        %v2865 = vpop.permute.xlu0 %2864
        %2866 = vrot.lane.b32.xlu0 %v2796, 3
        %v2867 = vpop.permute.xlu0 %2866
        %2868 = vrot.lane.b32.xlu0 %v2797, 3
        %v2869 = vpop.permute.xlu0 %2868
        %2878 = vrot.lane.b32.xlu0 %v2798, 4
        %v2879 = vpop.permute.xlu0 %2878
        %2880 = vrot.lane.b32.xlu0 %v2799, 4
        %v2881 = vpop.permute.xlu0 %2880
        %2882 = vrot.lane.b32.xlu0 %v2800, 4
        %v2883 = vpop.permute.xlu0 %2882
        %2884 = vrot.lane.b32.xlu0 %v2801, 4
        %v2885 = vpop.permute.xlu0 %2884
        %2894 = vrot.lane.b32.xlu0 %v2818, 4
        %v2895 = vpop.permute.xlu0 %2894
        %2896 = vrot.lane.b32.xlu0 %v2819, 4
        %v2897 = vpop.permute.xlu0 %2896
        %2898 = vrot.lane.b32.xlu0 %v2820, 4
        %v2899 = vpop.permute.xlu0 %2898
        %2900 = vrot.lane.b32.xlu0 %v2821, 4
        %v2901 = vpop.permute.xlu0 %2900
        %2910 = vrot.lane.b32.xlu0 %v2822, 5
        %v2911 = vpop.permute.xlu0 %2910
        %2912 = vrot.lane.b32.xlu0 %v2823, 5
        %v2913 = vpop.permute.xlu0 %2912
        %2914 = vrot.lane.b32.xlu0 %v2824, 5
        %v2915 = vpop.permute.xlu0 %2914
        %2916 = vrot.lane.b32.xlu0 %v2825, 5
        %v2917 = vpop.permute.xlu0 %2916
        %2926 = vrot.lane.b32.xlu0 %v2838, 8
        %v2927 = vpop.permute.xlu0 %2926
        %2928 = vrot.lane.b32.xlu0 %v2839, 8
        %v2929 = vpop.permute.xlu0 %2928
        %2930 = vrot.lane.b32.xlu0 %v2840, 8
        %v2931 = vpop.permute.xlu0 %2930
        %2932 = vrot.lane.b32.xlu0 %v2841, 8
        %v2933 = vpop.permute.xlu0 %2932
        %v2938 = vsel %vm2299, 1.0, %v2754
        %v2939 = vsel %vm2299, 1.0, %v2755
        %v2940 = vsel %vm2299, 1.0, %v2756
        %v2941 = vsel %vm2299, 1.0, %v2757
        %v2942 = vsel %vm2304, %v2938, %v2774
        %v2943 = vsel %vm2304, %v2939, %v2775
        %v2944 = vsel %vm2304, %v2940, %v2776
        %v2945 = vsel %vm2304, %v2941, %v2777
        %v2946 = vsel %vm806, %v2942, %v2847
        %v2947 = vsel %vm806, %v2943, %v2849
        %v2948 = vsel %vm806, %v2944, %v2851
        %v2949 = vsel %vm806, %v2945, %v2853
        %v2950 = vsel %vm2621, %v2946, %v2863
        %v2951 = vsel %vm2621, %v2947, %v2865
        %v2952 = vsel %vm2621, %v2948, %v2867
        %v2953 = vsel %vm2621, %v2949, %v2869
        %v2954 = vsel %vm2626, %v2950, %v2879
        %v2955 = vsel %vm2626, %v2951, %v2881
        %v2956 = vsel %vm2626, %v2952, %v2883
        %v2957 = vsel %vm2626, %v2953, %v2885
        %v2958 = vsel %vm2631, %v2954, %v2895
        %v2959 = vsel %vm2631, %v2955, %v2897
        %v2960 = vsel %vm2631, %v2956, %v2899
        %v2961 = vsel %vm2631, %v2957, %v2901
        %v2962 = vsel %vm2636, %v2958, %v2911
        %v2963 = vsel %vm2636, %v2959, %v2913
        %v2964 = vsel %vm2636, %v2960, %v2915
        %v2965 = vsel %vm2636, %v2961, %v2917
        %v2966 = vsel %vm2641, %v2962, %v2927
        %v2967 = vsel %vm2641, %v2963, %v2929
        %v2968 = vsel %vm2641, %v2964, %v2931
        %v2969 = vsel %vm2641, %v2965, %v2933
        %v2970 = vld [vmem:[%s20] sm:$0xff]
        %v2971 = vld [vmem:[%s20 + $0x8] sm:$0x1]
        %vm2972 = vcmask 72704
        %v2974 = vsel %vm2972, %v2642, 0
        %v2977 = vsel %vm2972, %v2643, 0
        %v2980 = vsel %vm2972, %v2644, 0
        %v2983 = vsel %vm2972, %v2645, 0
        %v2986 = vsel %vm813, %v2971, 0
        %2988 = vmatprep.subr.mxu0 0.0
        %2989 = vmatpush1.msra.mxu0 %v2970
        %2990 = vmatprep.subr.mxu0 0.0
        %2991 = vmatpush1.msra.mxu0 %v2986
        %2992 = vmatprep.subr.mxu0 0.0
        %2993 = vmatpush1.msra.mxu0 0.0
        %2994 = vmatprep.subr.mxu0 0.0
        %2995 = vmatpush1.msra.mxu0 0.0
        %2996 = vmatprep.subr.mxu0 0.0
        %2997 = vmatpush1.msra.mxu0 0.0
        %2998 = vmatprep.subr.mxu0 0.0
        %2999 = vmatpush1.msra.mxu0 0.0
        %3000 = vmatprep.subr.mxu0 0.0
        %3001 = vmatpush1.msra.mxu0 0.0
        %3002 = vmatprep.subr.mxu0 0.0
        %3003 = vmatpush1.msra.mxu0 0.0
        %3004 = vmatprep.subr.mxu0 0.0
        %3005 = vmatpush1.msra.mxu0 0.0
        %3006 = vmatprep.subr.mxu0 0.0
        %3007 = vmatpush1.msra.mxu0 0.0
        %3008 = vmatprep.subr.mxu0 0.0
        %3009 = vmatpush1.msra.mxu0 0.0
        %3010 = vmatprep.subr.mxu0 0.0
        %3011 = vmatpush1.msra.mxu0 0.0
        %3012 = vmatprep.subr.mxu0 0.0
        %3013 = vmatpush1.msra.mxu0 0.0
        %3014 = vmatprep.subr.mxu0 0.0
        %3015 = vmatpush1.msra.mxu0 0.0
        %3016 = vmatprep.subr.mxu0 0.0
        %3017 = vmatpush1.msra.mxu0 0.0
        %3018 = vmatprep.subr.mxu0 0.0
        %3019 = vmatpush1.msra.mxu0 0.0
        %3020 = vmatprep.subr.mxu0 0.0
        %3021 = vmatpush1.msra.mxu0 0.0
        %3022 = vmatprep.subr.mxu0 0.0
        %3023 = vmatpush1.msra.mxu0 0.0
        %3024 = vmatprep.subr.mxu0 0.0
        %3025 = vmatpush1.msra.mxu0 0.0
        %3026 = vmatprep.subr.mxu0 0.0
        %3027 = vmatpush1.msra.mxu0 0.0
        %3028 = vmatprep.subr.mxu0 0.0
        %3029 = vmatpush1.msra.mxu0 0.0
        %3030 = vmatprep.subr.mxu0 0.0
        %3031 = vmatpush1.msra.mxu0 0.0
        %3032 = vmatprep.subr.mxu0 0.0
        %3033 = vmatpush1.msra.mxu0 0.0
        %3034 = vmatprep.subr.mxu0 0.0
        %3035 = vmatpush1.msra.mxu0 0.0
        %3036 = vmatprep.subr.mxu0 0.0
        %3037 = vmatpush1.msra.mxu0 0.0
        %3038 = vmatprep.subr.mxu0 0.0
        %3039 = vmatpush1.msra.mxu0 0.0
        %3040 = vmatprep.subr.mxu0 0.0
        %3041 = vmatpush1.msra.mxu0 0.0
        %3042 = vmatprep.subr.mxu0 0.0
        %3043 = vmatpush1.msra.mxu0 0.0
        %3044 = vmatprep.subr.mxu0 0.0
        %3045 = vmatpush1.msra.mxu0 0.0
        %3046 = vmatprep.subr.mxu0 0.0
        %3047 = vmatpush1.msra.mxu0 0.0
        %3048 = vmatprep.subr.mxu0 0.0
        %3049 = vmatpush1.msra.mxu0 0.0
        %3050 = vmatprep.subr.mxu0 0.0
        %3051 = vmatpush1.msra.mxu0 0.0
        %3052 = vmatprep.mubr.f32.mxu0 0.0
        %3053 = vmatmul.mubr.f32.gmra.mrb[0].mxu0 %v2974
        %v3054 = vpop.f32.mrb[0].mxu0
        %v3055 = vadd.f32 0.0, %v3054
        %v3056 = vpop.f32.mrb[0].mxu0
        %3057 = vmatprep.mubr.f32.mxu0 0.0
        %3058 = vmatmul.mubr.f32.gmra.mrb[0].mxu0 %v2977
        %v3059 = vpop.f32.mrb[0].mxu0
        %v3060 = vadd.f32 0.0, %v3059
        %v3061 = vpop.f32.mrb[0].mxu0
        %3062 = vmatprep.mubr.f32.mxu0 0.0
        %3063 = vmatmul.mubr.f32.gmra.mrb[0].mxu0 %v2980
        %v3064 = vpop.f32.mrb[0].mxu0
        %v3065 = vadd.f32 0.0, %v3064
        %v3066 = vpop.f32.mrb[0].mxu0
        %3067 = vmatprep.mubr.f32.mxu0 0.0
        %3068 = vmatmul.mubr.f32.gmra.mrb[0].mxu0 %v2983
        %v3069 = vpop.f32.mrb[0].mxu0
        %v3070 = vadd.f32 0.0, %v3069
        %v3071 = vpop.f32.mrb[0].mxu0
        %3072 = vdwg.mxu0
        %v3073 = vmax.f32 %v3055, 0.0
        %v3074 = vmax.f32 %v3060, 0.0
        %v3075 = vmax.f32 %v3065, 0.0
        %v3076 = vmax.f32 %v3070, 0.0
        %v3077 = vld [vmem:[%s21] sm:$0xff]
        %v3078 = vld [vmem:[%s21 + $0x8] sm:$0x1]
        %v3080 = vsel %vm2972, %v2966, 0
        %v3083 = vsel %vm2972, %v2967, 0
        %v3086 = vsel %vm2972, %v2968, 0
        %v3089 = vsel %vm2972, %v2969, 0
        %v3092 = vsel %vm813, %v3078, 0
        %3094 = vmatprep.subr.mxu0 0.0
        %3095 = vmatpush1.msra.mxu0 %v3077
        %3096 = vmatprep.subr.mxu0 0.0
        %3097 = vmatpush1.msra.mxu0 %v3092
        %3098 = vmatprep.subr.mxu0 0.0
        %3099 = vmatpush1.msra.mxu0 0.0
        %3100 = vmatprep.subr.mxu0 0.0
        %3101 = vmatpush1.msra.mxu0 0.0
        %3102 = vmatprep.subr.mxu0 0.0
        %3103 = vmatpush1.msra.mxu0 0.0
        %3104 = vmatprep.subr.mxu0 0.0
        %3105 = vmatpush1.msra.mxu0 0.0
        %3106 = vmatprep.subr.mxu0 0.0
        %3107 = vmatpush1.msra.mxu0 0.0
        %3108 = vmatprep.subr.mxu0 0.0
        %3109 = vmatpush1.msra.mxu0 0.0
        %3110 = vmatprep.subr.mxu0 0.0
        %3111 = vmatpush1.msra.mxu0 0.0
        %3112 = vmatprep.subr.mxu0 0.0
        %3113 = vmatpush1.msra.mxu0 0.0
        %3114 = vmatprep.subr.mxu0 0.0
        %3115 = vmatpush1.msra.mxu0 0.0
        %3116 = vmatprep.subr.mxu0 0.0
        %3117 = vmatpush1.msra.mxu0 0.0
        %3118 = vmatprep.subr.mxu0 0.0
        %3119 = vmatpush1.msra.mxu0 0.0
        %3120 = vmatprep.subr.mxu0 0.0
        %3121 = vmatpush1.msra.mxu0 0.0
        %3122 = vmatprep.subr.mxu0 0.0
        %3123 = vmatpush1.msra.mxu0 0.0
        %3124 = vmatprep.subr.mxu0 0.0
        %3125 = vmatpush1.msra.mxu0 0.0
        %3126 = vmatprep.subr.mxu0 0.0
        %3127 = vmatpush1.msra.mxu0 0.0
        %3128 = vmatprep.subr.mxu0 0.0
        %3129 = vmatpush1.msra.mxu0 0.0
        %3130 = vmatprep.subr.mxu0 0.0
        %3131 = vmatpush1.msra.mxu0 0.0
        %3132 = vmatprep.subr.mxu0 0.0
        %3133 = vmatpush1.msra.mxu0 0.0
        %3134 = vmatprep.subr.mxu0 0.0
        %3135 = vmatpush1.msra.mxu0 0.0
        %3136 = vmatprep.subr.mxu0 0.0
        %3137 = vmatpush1.msra.mxu0 0.0
        %3138 = vmatprep.subr.mxu0 0.0
        %3139 = vmatpush1.msra.mxu0 0.0
        %3140 = vmatprep.subr.mxu0 0.0
        %3141 = vmatpush1.msra.mxu0 0.0
        %3142 = vmatprep.subr.mxu0 0.0
        %3143 = vmatpush1.msra.mxu0 0.0
        %3144 = vmatprep.subr.mxu0 0.0
        %3145 = vmatpush1.msra.mxu0 0.0
        %3146 = vmatprep.subr.mxu0 0.0
        %3147 = vmatpush1.msra.mxu0 0.0
        %3148 = vmatprep.subr.mxu0 0.0
        %3149 = vmatpush1.msra.mxu0 0.0
        %3150 = vmatprep.subr.mxu0 0.0
        %3151 = vmatpush1.msra.mxu0 0.0
        %3152 = vmatprep.subr.mxu0 0.0
        %3153 = vmatpush1.msra.mxu0 0.0
        %3154 = vmatprep.subr.mxu0 0.0
        %3155 = vmatpush1.msra.mxu0 0.0
        %3156 = vmatprep.subr.mxu0 0.0
        %3157 = vmatpush1.msra.mxu0 0.0
        %3158 = vmatprep.mubr.f32.mxu0 0.0
        %3159 = vmatmul.mubr.f32.gmra.mrb[0].mxu0 %v3080
        %v3160 = vpop.f32.mrb[0].mxu0
        %v3161 = vadd.f32 0.0, %v3160
        %v3162 = vpop.f32.mrb[0].mxu0
        %3163 = vmatprep.mubr.f32.mxu0 0.0
        %3164 = vmatmul.mubr.f32.gmra.mrb[0].mxu0 %v3083
        %v3165 = vpop.f32.mrb[0].mxu0
        %v3166 = vadd.f32 0.0, %v3165
        %v3167 = vpop.f32.mrb[0].mxu0
        %3168 = vmatprep.mubr.f32.mxu0 0.0
        %3169 = vmatmul.mubr.f32.gmra.mrb[0].mxu0 %v3086
        %v3170 = vpop.f32.mrb[0].mxu0
        %v3171 = vadd.f32 0.0, %v3170
        %v3172 = vpop.f32.mrb[0].mxu0
        %3173 = vmatprep.mubr.f32.mxu0 0.0
        %3174 = vmatmul.mubr.f32.gmra.mrb[0].mxu0 %v3089
        %v3175 = vpop.f32.mrb[0].mxu0
        %v3176 = vadd.f32 0.0, %v3175
        %v3177 = vpop.f32.mrb[0].mxu0
        %3178 = vdwg.mxu0
        %v3179 = vmax.f32 %v3161, 0.0
        %v3180 = vmax.f32 %v3166, 0.0
        %v3181 = vmax.f32 %v3171, 0.0
        %v3182 = vmax.f32 %v3176, 0.0
        %3187 = vrot.lane.b32.xlu0 %v3073, 11
        %v3188 = vpop.permute.xlu0 %3187
        %3189 = vrot.lane.b32.xlu0 %v3074, 11
        %v3190 = vpop.permute.xlu0 %3189
        %3191 = vrot.lane.b32.xlu0 %v3075, 11
        %v3192 = vpop.permute.xlu0 %3191
        %3193 = vrot.lane.b32.xlu0 %v3076, 11
        %v3194 = vpop.permute.xlu0 %3193
        %v3199 = vmul.f32 %v2394, %v3188
        %v3200 = vmul.f32 %v2396, %v3190
        %v3201 = vmul.f32 %v2398, %v3192
        %v3202 = vmul.f32 %v2400, %v3194
        %3207 = vrot.lane.b32.xlu0 %v2313, 1
        %v3208 = vpop.permute.xlu0 %3207
        %3209 = vrot.lane.b32.xlu0 %v2314, 1
        %v3210 = vpop.permute.xlu0 %3209
        %3211 = vrot.lane.b32.xlu0 %v2315, 1
        %v3212 = vpop.permute.xlu0 %3211
        %3213 = vrot.lane.b32.xlu0 %v2316, 1
        %v3214 = vpop.permute.xlu0 %3213
        %3219 = vrot.lane.b32.xlu0 %v2341, 4
        %v3220 = vpop.permute.xlu0 %3219
        %3221 = vrot.lane.b32.xlu0 %v2342, 4
        %v3222 = vpop.permute.xlu0 %3221
        %3223 = vrot.lane.b32.xlu0 %v2343, 4
        %v3224 = vpop.permute.xlu0 %3223
        %3225 = vrot.lane.b32.xlu0 %v2344, 4
        %v3226 = vpop.permute.xlu0 %3225
        %3235 = vrot.lane.b32.xlu0 %v2373, 6
        %v3236 = vpop.permute.xlu0 %3235
        %3237 = vrot.lane.b32.xlu0 %v2374, 6
        %v3238 = vpop.permute.xlu0 %3237
        %3239 = vrot.lane.b32.xlu0 %v2375, 6
        %v3240 = vpop.permute.xlu0 %3239
        %3241 = vrot.lane.b32.xlu0 %v2376, 6
        %v3242 = vpop.permute.xlu0 %3241
        %v3247 = vsel %vm2299, %v2407, %v3208
        %v3248 = vsel %vm2299, %v2410, %v3210
        %v3249 = vsel %vm2299, %v2413, %v3212
        %v3250 = vsel %vm2299, %v2416, %v3214
        %v3251 = vsel %vm2621, %v3247, %v3220
        %v3252 = vsel %vm2621, %v3248, %v3222
        %v3253 = vsel %vm2621, %v3249, %v3224
        %v3254 = vsel %vm2621, %v3250, %v3226
        %v3255 = vsel %vm2636, %v3251, %v3236
        %v3256 = vsel %vm2636, %v3252, %v3238
        %v3257 = vsel %vm2636, %v3253, %v3240
        %v3258 = vsel %vm2636, %v3254, %v3242
        %v3259 = vpack.c.bf16 %v3256, %v3255
        %v3260 = vpack.c.bf16 %v3258, %v3257
        %v3261 = vld [vmem:[%s10] sm:$0xff]
        %v3262 = vld [vmem:[%s10 + $0x8] sm:$0xff]
        %v3263 = vld [vmem:[%s11] sm:$0xf]
        %v3265 = vlaneseq
        %v3266 = vshrl.u32 %v3265, 7
        %v3267 = vsub.s32 0, %v3266
        %v3268 = vrot.slane %v3263, %v3267
        %v3269 = vlaneseq
        %v3270 = vshrl.u32 %v3269, 7
        %v3271 = vsub.s32 1, %v3270
        %v3272 = vrot.slane %v3263, %v3271
        %v3273 = vlaneseq
        %v3274 = vshrl.u32 %v3273, 7
        %v3275 = vsub.s32 2, %v3274
        %v3276 = vrot.slane %v3263, %v3275
        %v3277 = vlaneseq
        %v3278 = vshrl.u32 %v3277, 7
        %v3279 = vsub.s32 3, %v3278
        %v3280 = vrot.slane %v3263, %v3279
        %v3287 = vunpack.c.l.b16 %v3261
        %v3288 = vunpack.c.h.b16 %v3261
        %v3289 = vunpack.c.l.b16 %v3262
        %v3290 = vunpack.c.h.b16 %v3262
        %v3291 = vpack.c.b16 %v3287, %v3287
        %v3292 = vpack.c.b16 %v3288, %v3288
        %v3293 = vpack.c.b16 %v3289, %v3289
        %v3294 = vpack.c.b16 %v3290, %v3290
        %v3296 = vsel %vm2641, %v3259, 0
        %v3299 = vsel %vm2641, %v3260, 0
        %vm3301 = vcmask 1043456
        %v3303 = vsel %vm3301, %v3291, 0
        %v3306 = vsel %vm3301, %v3292, 0
        %v3309 = vsel %vm3301, %v3293, 0
        %v3312 = vsel %vm3301, %v3294, 0
        %3314 = vmatprep.subr.bf16.mxu0 %v3306
        %3315 = vmatpush1.bf16.msra.mxu0 %v3303
        %3316 = vmatprep.subr.bf16.mxu0 0
        %3317 = vmatpush1.bf16.msra.mxu0 0
        %3318 = vmatprep.subr.bf16.mxu0 0
        %3319 = vmatpush1.bf16.msra.mxu0 0
        %3320 = vmatprep.subr.bf16.mxu0 0
        %3321 = vmatpush1.bf16.msra.mxu0 0
        %3322 = vmatprep.subr.bf16.mxu0 0
        %3323 = vmatpush1.bf16.msra.mxu0 0
        %3324 = vmatprep.subr.bf16.mxu0 0
        %3325 = vmatpush1.bf16.msra.mxu0 0
        %3326 = vmatprep.subr.bf16.mxu0 0
        %3327 = vmatpush1.bf16.msra.mxu0 0
        %3328 = vmatprep.subr.bf16.mxu0 0
        %3329 = vmatpush1.bf16.msra.mxu0 0
        %3330 = vmatprep.subr.bf16.mxu0 0
        %3331 = vmatpush1.bf16.msra.mxu0 0
        %3332 = vmatprep.subr.bf16.mxu0 0
        %3333 = vmatpush1.bf16.msra.mxu0 0
        %3334 = vmatprep.subr.bf16.mxu0 0
        %3335 = vmatpush1.bf16.msra.mxu0 0
        %3336 = vmatprep.subr.bf16.mxu0 0
        %3337 = vmatpush1.bf16.msra.mxu0 0
        %3338 = vmatprep.subr.bf16.mxu0 0
        %3339 = vmatpush1.bf16.msra.mxu0 0
        %3340 = vmatprep.subr.bf16.mxu0 0
        %3341 = vmatpush1.bf16.msra.mxu0 0
        %3342 = vmatprep.subr.bf16.mxu0 0
        %3343 = vmatpush1.bf16.msra.mxu0 0
        %3344 = vmatprep.subr.bf16.mxu0 0
        %3345 = vmatpush1.bf16.msra.mxu0 0
        %3346 = vmatprep.mubr.bf16.mxu0 0
        %3347 = vmatmul.mubr.bf16.gmra.mrb[0].mxu0 %v3296
        %v3348 = vpop.f32.mrb[0].mxu0
        %v3349 = vadd.f32 %v3268, %v3348
        %v3350 = vpop.f32.mrb[0].mxu0
        %v3351 = vadd.f32 %v3272, %v3350
        %v3352 = vpop.f32.mrb[0].mxu0
        %v3353 = vadd.f32 %v3268, %v3352
        %v3354 = vpop.f32.mrb[0].mxu0
        %v3355 = vadd.f32 %v3272, %v3354
        %3356 = vmatprep.mubr.bf16.mxu0 0
        %3357 = vmatmul.mubr.bf16.gmra.mrb[0].mxu0 %v3299
        %v3358 = vpop.f32.mrb[0].mxu0
        %v3359 = vadd.f32 %v3268, %v3358
        %v3360 = vpop.f32.mrb[0].mxu0
        %v3361 = vadd.f32 %v3272, %v3360
        %v3362 = vpop.f32.mrb[0].mxu0
        %v3363 = vadd.f32 %v3268, %v3362
        %v3364 = vpop.f32.mrb[0].mxu0
        %v3365 = vadd.f32 %v3272, %v3364
        %3366 = vdwg.mxu0
        %3367 = vmatprep.subr.bf16.mxu0 %v3312
        %3368 = vmatpush1.bf16.msra.mxu0 %v3309
        %3369 = vmatprep.subr.bf16.mxu0 0
        %3370 = vmatpush1.bf16.msra.mxu0 0
        %3371 = vmatprep.subr.bf16.mxu0 0
        %3372 = vmatpush1.bf16.msra.mxu0 0
        %3373 = vmatprep.subr.bf16.mxu0 0
        %3374 = vmatpush1.bf16.msra.mxu0 0
        %3375 = vmatprep.subr.bf16.mxu0 0
        %3376 = vmatpush1.bf16.msra.mxu0 0
        %3377 = vmatprep.subr.bf16.mxu0 0
        %3378 = vmatpush1.bf16.msra.mxu0 0
        %3379 = vmatprep.subr.bf16.mxu0 0
        %3380 = vmatpush1.bf16.msra.mxu0 0
        %3381 = vmatprep.subr.bf16.mxu0 0
        %3382 = vmatpush1.bf16.msra.mxu0 0
        %3383 = vmatprep.subr.bf16.mxu0 0
        %3384 = vmatpush1.bf16.msra.mxu0 0
        %3385 = vmatprep.subr.bf16.mxu0 0
        %3386 = vmatpush1.bf16.msra.mxu0 0
        %3387 = vmatprep.subr.bf16.mxu0 0
        %3388 = vmatpush1.bf16.msra.mxu0 0
        %3389 = vmatprep.subr.bf16.mxu0 0
        %3390 = vmatpush1.bf16.msra.mxu0 0
        %3391 = vmatprep.subr.bf16.mxu0 0
        %3392 = vmatpush1.bf16.msra.mxu0 0
        %3393 = vmatprep.subr.bf16.mxu0 0
        %3394 = vmatpush1.bf16.msra.mxu0 0
        %3395 = vmatprep.subr.bf16.mxu0 0
        %3396 = vmatpush1.bf16.msra.mxu0 0
        %3397 = vmatprep.subr.bf16.mxu0 0
        %3398 = vmatpush1.bf16.msra.mxu0 0
        %3399 = vmatprep.mubr.bf16.mxu0 0
        %3400 = vmatmul.mubr.bf16.gmra.mrb[0].mxu0 %v3296
        %v3401 = vpop.f32.mrb[0].mxu0
        %v3402 = vadd.f32 %v3276, %v3401
        %v3403 = vpop.f32.mrb[0].mxu0
        %v3404 = vadd.f32 %v3280, %v3403
        %v3405 = vpop.f32.mrb[0].mxu0
        %v3406 = vadd.f32 %v3276, %v3405
        %v3407 = vpop.f32.mrb[0].mxu0
        %v3408 = vadd.f32 %v3280, %v3407
        %3409 = vmatprep.mubr.bf16.mxu0 0
        %3410 = vmatmul.mubr.bf16.gmra.mrb[0].mxu0 %v3299
        %v3411 = vpop.f32.mrb[0].mxu0
        %v3412 = vadd.f32 %v3276, %v3411
        %v3413 = vpop.f32.mrb[0].mxu0
        %v3414 = vadd.f32 %v3280, %v3413
        %v3415 = vpop.f32.mrb[0].mxu0
        %v3416 = vadd.f32 %v3276, %v3415
        %v3417 = vpop.f32.mrb[0].mxu0
        %v3418 = vadd.f32 %v3280, %v3417
        %3419 = vdwg.mxu0
        %v3420 = vmax.f32 %v3349, 0.0
        %v3421 = vmax.f32 %v3351, 0.0
        %v3422 = vmax.f32 %v3402, 0.0
        %v3423 = vmax.f32 %v3404, 0.0
        %v3424 = vmax.f32 %v3353, 0.0
        %v3425 = vmax.f32 %v3355, 0.0
        %v3426 = vmax.f32 %v3406, 0.0
        %v3427 = vmax.f32 %v3408, 0.0
        %v3428 = vmax.f32 %v3359, 0.0
        %v3429 = vmax.f32 %v3361, 0.0
        %v3430 = vmax.f32 %v3412, 0.0
        %v3431 = vmax.f32 %v3414, 0.0
        %v3432 = vmax.f32 %v3363, 0.0
        %v3433 = vmax.f32 %v3365, 0.0
        %v3434 = vmax.f32 %v3416, 0.0
        %v3435 = vmax.f32 %v3418, 0.0
        %v3436 = vpack.c.bf16 %v3424, %v3420
        %v3437 = vpack.c.bf16 %v3425, %v3421
        %v3438 = vpack.c.bf16 %v3426, %v3422
        %v3439 = vpack.c.bf16 %v3427, %v3423
        %v3440 = vpack.c.bf16 %v3432, %v3428
        %v3441 = vpack.c.bf16 %v3433, %v3429
        %v3442 = vpack.c.bf16 %v3434, %v3430
        %v3443 = vpack.c.bf16 %v3435, %v3431
        %v3444 = vld [vmem:[#allocation2] sm:$0xff]
        %v3445 = vld [vmem:[#allocation2 + $0x8] sm:$0xff]
        %v3446 = vld [vmem:[#allocation2 + $0x10] sm:$0xff]
        %v3447 = vld [vmem:[#allocation2 + $0x18] sm:$0xff]
        %v3448 = vld [vmem:[#allocation2 + $0x20] sm:$0xff]
        %v3449 = vld [vmem:[#allocation2 + $0x28] sm:$0xff]
        %v3450 = vld [vmem:[#allocation2 + $0x30] sm:$0xff]
        %v3451 = vld [vmem:[#allocation2 + $0x38] sm:$0xff]
        %v3452 = vld [vmem:[#allocation2 + $0x40] sm:$0xff]
        %v3453 = vld [vmem:[#allocation2 + $0x48] sm:$0xff]
        %v3454 = vld [vmem:[#allocation2 + $0x50] sm:$0xff]
        %v3455 = vld [vmem:[#allocation2 + $0x58] sm:$0xff]
        %v3456 = vld [vmem:[#allocation2 + $0x60] sm:$0xff]
        %v3457 = vld [vmem:[#allocation2 + $0x68] sm:$0xff]
        %v3458 = vld [vmem:[#allocation2 + $0x70] sm:$0xff]
        %v3459 = vld [vmem:[#allocation2 + $0x78] sm:$0xff]
        %v3460 = vld [vmem:[#allocation2 + $0x80] sm:$0xff]
        %v3461 = vld [vmem:[#allocation2 + $0x88] sm:$0xff]
        %v3462 = vld [vmem:[#allocation2 + $0x90] sm:$0xff]
        %v3463 = vld [vmem:[#allocation2 + $0x98] sm:$0xff]
        %v3464 = vld [vmem:[#allocation2 + $0xa0] sm:$0xff]
        %v3465 = vld [vmem:[#allocation2 + $0xa8] sm:$0xff]
        %v3466 = vld [vmem:[#allocation2 + $0xb0] sm:$0xff]
        %v3467 = vld [vmem:[#allocation2 + $0xb8] sm:$0xff]
        %v3468 = vld [vmem:[#allocation2 + $0xc0] sm:$0xff]
        %v3469 = vld [vmem:[#allocation2 + $0xc8] sm:$0xff]
        %v3470 = vld [vmem:[#allocation2 + $0xd0] sm:$0xff]
        %v3471 = vld [vmem:[#allocation2 + $0xd8] sm:$0xff]
        %v3472 = vld [vmem:[#allocation2 + $0xe0] sm:$0xff]
        %v3473 = vld [vmem:[#allocation2 + $0xe8] sm:$0xff]
        %v3474 = vld [vmem:[#allocation2 + $0xf0] sm:$0xff]
        %v3475 = vld [vmem:[#allocation2 + $0xf8] sm:$0xff]
        %v3476 = vld [vmem:[#allocation2 + $0x100] sm:$0xff]
        %v3477 = vld [vmem:[#allocation2 + $0x108] sm:$0xff]
        %v3478 = vld [vmem:[#allocation2 + $0x110] sm:$0xff]
        %v3479 = vld [vmem:[#allocation2 + $0x118] sm:$0xff]
        %v3480 = vld [vmem:[#allocation2 + $0x120] sm:$0xff]
        %v3481 = vld [vmem:[#allocation2 + $0x128] sm:$0xff]
        %v3482 = vld [vmem:[#allocation2 + $0x130] sm:$0xff]
        %v3483 = vld [vmem:[#allocation2 + $0x138] sm:$0xff]
        %v3484 = vld [vmem:[#allocation2 + $0x140] sm:$0xff]
        %v3485 = vld [vmem:[#allocation2 + $0x148] sm:$0xff]
        %v3486 = vld [vmem:[#allocation2 + $0x150] sm:$0xff]
        %v3487 = vld [vmem:[#allocation2 + $0x158] sm:$0xff]
        %v3488 = vld [vmem:[#allocation2 + $0x160] sm:$0xff]
        %v3489 = vld [vmem:[#allocation2 + $0x168] sm:$0xff]
        %v3490 = vld [vmem:[#allocation2 + $0x170] sm:$0xff]
        %v3491 = vld [vmem:[#allocation2 + $0x178] sm:$0xff]
        %v3492 = vld [vmem:[#allocation2 + $0x180] sm:$0xff]
        %v3493 = vld [vmem:[#allocation2 + $0x188] sm:$0xff]
        %v3494 = vld [vmem:[#allocation2 + $0x190] sm:$0xff]
        %v3495 = vld [vmem:[#allocation2 + $0x198] sm:$0xff]
        %v3496 = vld [vmem:[#allocation2 + $0x1a0] sm:$0xff]
        %v3497 = vld [vmem:[#allocation2 + $0x1a8] sm:$0xff]
        %v3498 = vld [vmem:[#allocation2 + $0x1b0] sm:$0xff]
        %v3499 = vld [vmem:[#allocation2 + $0x1b8] sm:$0xff]
        %v3500 = vld [vmem:[#allocation2 + $0x1c0] sm:$0xff]
        %v3501 = vld [vmem:[#allocation2 + $0x1c8] sm:$0xff]
        %v3502 = vld [vmem:[#allocation2 + $0x1d0] sm:$0xff]
        %v3503 = vld [vmem:[#allocation2 + $0x1d8] sm:$0xff]
        %v3504 = vld [vmem:[#allocation2 + $0x1e0] sm:$0xff]
        %v3505 = vld [vmem:[#allocation2 + $0x1e8] sm:$0xff]
        %v3506 = vld [vmem:[#allocation2 + $0x1f0] sm:$0xff]
        %v3507 = vld [vmem:[#allocation2 + $0x1f8] sm:$0xff]
        %v3508 = vld [vmem:[#allocation2 + $0x200] sm:$0xff]
        %v3509 = vld [vmem:[#allocation2 + $0x208] sm:$0xff]
        %v3510 = vld [vmem:[#allocation2 + $0x210] sm:$0xff]
        %v3511 = vld [vmem:[#allocation2 + $0x218] sm:$0xff]
        %v3512 = vld [vmem:[#allocation2 + $0x220] sm:$0xff]
        %v3513 = vld [vmem:[#allocation2 + $0x228] sm:$0xff]
        %v3514 = vld [vmem:[#allocation2 + $0x230] sm:$0xff]
        %v3515 = vld [vmem:[#allocation2 + $0x238] sm:$0xff]
        %v3516 = vld [vmem:[#allocation2 + $0x240] sm:$0xff]
        %v3517 = vld [vmem:[#allocation2 + $0x248] sm:$0xff]
        %v3518 = vld [vmem:[#allocation2 + $0x250] sm:$0xff]
        %v3519 = vld [vmem:[#allocation2 + $0x258] sm:$0xff]
        %v3520 = vld [vmem:[#allocation2 + $0x260] sm:$0xff]
        %v3521 = vld [vmem:[#allocation2 + $0x268] sm:$0xff]
        %v3522 = vld [vmem:[#allocation2 + $0x270] sm:$0xff]
        %v3523 = vld [vmem:[#allocation2 + $0x278] sm:$0xff]
        %v3524 = vld [vmem:[#allocation2 + $0x280] sm:$0xff]
        %v3525 = vld [vmem:[#allocation2 + $0x288] sm:$0xff]
        %v3526 = vld [vmem:[#allocation2 + $0x290] sm:$0xff]
        %v3527 = vld [vmem:[#allocation2 + $0x298] sm:$0xff]
        %v3528 = vld [vmem:[#allocation2 + $0x2a0] sm:$0xff]
        %v3529 = vld [vmem:[#allocation2 + $0x2a8] sm:$0xff]
        %v3530 = vld [vmem:[#allocation2 + $0x2b0] sm:$0xff]
        %v3531 = vld [vmem:[#allocation2 + $0x2b8] sm:$0xff]
        %v3532 = vld [vmem:[#allocation2 + $0x2c0] sm:$0xff]
        %v3533 = vld [vmem:[#allocation2 + $0x2c8] sm:$0xff]
        %v3534 = vld [vmem:[#allocation2 + $0x2d0] sm:$0xff]
        %v3535 = vld [vmem:[#allocation2 + $0x2d8] sm:$0xff]
        %v3536 = vld [vmem:[#allocation2 + $0x2e0] sm:$0xff]
        %v3537 = vld [vmem:[#allocation2 + $0x2e8] sm:$0xff]
        %v3538 = vld [vmem:[#allocation2 + $0x2f0] sm:$0xff]
        %v3539 = vld [vmem:[#allocation2 + $0x2f8] sm:$0xff]
        %v3540 = vld [vmem:[#allocation2 + $0x300] sm:$0xff]
        %v3541 = vld [vmem:[#allocation2 + $0x308] sm:$0xff]
        %v3542 = vld [vmem:[#allocation2 + $0x310] sm:$0xff]
        %v3543 = vld [vmem:[#allocation2 + $0x318] sm:$0xff]
        %v3544 = vld [vmem:[#allocation2 + $0x320] sm:$0xff]
        %v3545 = vld [vmem:[#allocation2 + $0x328] sm:$0xff]
        %v3546 = vld [vmem:[#allocation2 + $0x330] sm:$0xff]
        %v3547 = vld [vmem:[#allocation2 + $0x338] sm:$0xff]
        %v3548 = vld [vmem:[#allocation2 + $0x340] sm:$0xff]
        %v3549 = vld [vmem:[#allocation2 + $0x348] sm:$0xff]
        %v3550 = vld [vmem:[#allocation2 + $0x350] sm:$0xff]
        %v3551 = vld [vmem:[#allocation2 + $0x358] sm:$0xff]
        %v3552 = vld [vmem:[#allocation2 + $0x360] sm:$0xff]
        %v3553 = vld [vmem:[#allocation2 + $0x368] sm:$0xff]
        %v3554 = vld [vmem:[#allocation2 + $0x370] sm:$0xff]
        %v3555 = vld [vmem:[#allocation2 + $0x378] sm:$0xff]
        %v3556 = vld [vmem:[#allocation2 + $0x380] sm:$0xff]
        %v3557 = vld [vmem:[#allocation2 + $0x388] sm:$0xff]
        %v3558 = vld [vmem:[#allocation2 + $0x390] sm:$0xff]
        %v3559 = vld [vmem:[#allocation2 + $0x398] sm:$0xff]
        %v3560 = vld [vmem:[#allocation2 + $0x3a0] sm:$0xff]
        %v3561 = vld [vmem:[#allocation2 + $0x3a8] sm:$0xff]
        %v3562 = vld [vmem:[#allocation2 + $0x3b0] sm:$0xff]
        %v3563 = vld [vmem:[#allocation2 + $0x3b8] sm:$0xff]
        %v3564 = vld [vmem:[#allocation2 + $0x3c0] sm:$0xff]
        %v3565 = vld [vmem:[#allocation2 + $0x3c8] sm:$0xff]
        %v3566 = vld [vmem:[#allocation2 + $0x3d0] sm:$0xff]
        %v3567 = vld [vmem:[#allocation2 + $0x3d8] sm:$0xff]
        %v3568 = vld [vmem:[#allocation2 + $0x3e0] sm:$0xff]
        %v3569 = vld [vmem:[#allocation2 + $0x3e8] sm:$0xff]
        %v3570 = vld [vmem:[#allocation2 + $0x3f0] sm:$0xff]
        %v3571 = vld [vmem:[#allocation2 + $0x3f8] sm:$0xff]
        %v3572 = vld [vmem:[%s13] sm:$0xf]
        %v3574 = vlaneseq
        %v3575 = vshrl.u32 %v3574, 7
        %v3576 = vsub.s32 0, %v3575
        %v3577 = vrot.slane %v3572, %v3576
        %v3578 = vlaneseq
        %v3579 = vshrl.u32 %v3578, 7
        %v3580 = vsub.s32 1, %v3579
        %v3581 = vrot.slane %v3572, %v3580
        %v3582 = vlaneseq
        %v3583 = vshrl.u32 %v3582, 7
        %v3584 = vsub.s32 2, %v3583
        %v3585 = vrot.slane %v3572, %v3584
        %v3586 = vlaneseq
        %v3587 = vshrl.u32 %v3586, 7
        %v3588 = vsub.s32 3, %v3587
        %v3589 = vrot.slane %v3572, %v3588
        %v3722 = vunpack.c.l.b16 %v3444
        %v3723 = vunpack.c.h.b16 %v3444
        %v3724 = vunpack.c.l.b16 %v3445
        %v3725 = vunpack.c.h.b16 %v3445
        %v3726 = vunpack.c.l.b16 %v3446
        %v3727 = vunpack.c.h.b16 %v3446
        %v3728 = vunpack.c.l.b16 %v3447
        %v3729 = vunpack.c.h.b16 %v3447
        %v3730 = vunpack.c.l.b16 %v3448
        %v3731 = vunpack.c.h.b16 %v3448
        %v3732 = vunpack.c.l.b16 %v3449
        %v3733 = vunpack.c.h.b16 %v3449
        %v3734 = vunpack.c.l.b16 %v3450
        %v3735 = vunpack.c.h.b16 %v3450
        %v3736 = vunpack.c.l.b16 %v3451
        %v3737 = vunpack.c.h.b16 %v3451
        %v3738 = vunpack.c.l.b16 %v3452
        %v3739 = vunpack.c.h.b16 %v3452
        %v3740 = vunpack.c.l.b16 %v3453
        %v3741 = vunpack.c.h.b16 %v3453
        %v3742 = vunpack.c.l.b16 %v3454
        %v3743 = vunpack.c.h.b16 %v3454
        %v3744 = vunpack.c.l.b16 %v3455
        %v3745 = vunpack.c.h.b16 %v3455
        %v3746 = vunpack.c.l.b16 %v3456
        %v3747 = vunpack.c.h.b16 %v3456
        %v3748 = vunpack.c.l.b16 %v3457
        %v3749 = vunpack.c.h.b16 %v3457
        %v3750 = vunpack.c.l.b16 %v3458
        %v3751 = vunpack.c.h.b16 %v3458
        %v3752 = vunpack.c.l.b16 %v3459
        %v3753 = vunpack.c.h.b16 %v3459
        %v3754 = vunpack.c.l.b16 %v3460
        %v3755 = vunpack.c.h.b16 %v3460
        %v3756 = vunpack.c.l.b16 %v3461
        %v3757 = vunpack.c.h.b16 %v3461
        %v3758 = vunpack.c.l.b16 %v3462
        %v3759 = vunpack.c.h.b16 %v3462
        %v3760 = vunpack.c.l.b16 %v3463
        %v3761 = vunpack.c.h.b16 %v3463
        %v3762 = vunpack.c.l.b16 %v3464
        %v3763 = vunpack.c.h.b16 %v3464
        %v3764 = vunpack.c.l.b16 %v3465
        %v3765 = vunpack.c.h.b16 %v3465
        %v3766 = vunpack.c.l.b16 %v3466
        %v3767 = vunpack.c.h.b16 %v3466
        %v3768 = vunpack.c.l.b16 %v3467
        %v3769 = vunpack.c.h.b16 %v3467
        %v3770 = vunpack.c.l.b16 %v3468
        %v3771 = vunpack.c.h.b16 %v3468
        %v3772 = vunpack.c.l.b16 %v3469
        %v3773 = vunpack.c.h.b16 %v3469
        %v3774 = vunpack.c.l.b16 %v3470
        %v3775 = vunpack.c.h.b16 %v3470
        %v3776 = vunpack.c.l.b16 %v3471
        %v3777 = vunpack.c.h.b16 %v3471
        %v3778 = vunpack.c.l.b16 %v3472
        %v3779 = vunpack.c.h.b16 %v3472
        %v3780 = vunpack.c.l.b16 %v3473
        %v3781 = vunpack.c.h.b16 %v3473
        %v3782 = vunpack.c.l.b16 %v3474
        %v3783 = vunpack.c.h.b16 %v3474
        %v3784 = vunpack.c.l.b16 %v3475
        %v3785 = vunpack.c.h.b16 %v3475
        %v3786 = vunpack.c.l.b16 %v3476
        %v3787 = vunpack.c.h.b16 %v3476
        %v3788 = vunpack.c.l.b16 %v3477
        %v3789 = vunpack.c.h.b16 %v3477
        %v3790 = vunpack.c.l.b16 %v3478
        %v3791 = vunpack.c.h.b16 %v3478
        %v3792 = vunpack.c.l.b16 %v3479
        %v3793 = vunpack.c.h.b16 %v3479
        %v3794 = vunpack.c.l.b16 %v3480
        %v3795 = vunpack.c.h.b16 %v3480
        %v3796 = vunpack.c.l.b16 %v3481
        %v3797 = vunpack.c.h.b16 %v3481
        %v3798 = vunpack.c.l.b16 %v3482
        %v3799 = vunpack.c.h.b16 %v3482
        %v3800 = vunpack.c.l.b16 %v3483
        %v3801 = vunpack.c.h.b16 %v3483
        %v3802 = vunpack.c.l.b16 %v3484
        %v3803 = vunpack.c.h.b16 %v3484
        %v3804 = vunpack.c.l.b16 %v3485
        %v3805 = vunpack.c.h.b16 %v3485
        %v3806 = vunpack.c.l.b16 %v3486
        %v3807 = vunpack.c.h.b16 %v3486
        %v3808 = vunpack.c.l.b16 %v3487
        %v3809 = vunpack.c.h.b16 %v3487
        %v3810 = vunpack.c.l.b16 %v3488
        %v3811 = vunpack.c.h.b16 %v3488
        %v3812 = vunpack.c.l.b16 %v3489
        %v3813 = vunpack.c.h.b16 %v3489
        %v3814 = vunpack.c.l.b16 %v3490
        %v3815 = vunpack.c.h.b16 %v3490
        %v3816 = vunpack.c.l.b16 %v3491
        %v3817 = vunpack.c.h.b16 %v3491
        %v3818 = vunpack.c.l.b16 %v3492
        %v3819 = vunpack.c.h.b16 %v3492
        %v3820 = vunpack.c.l.b16 %v3493
        %v3821 = vunpack.c.h.b16 %v3493
        %v3822 = vunpack.c.l.b16 %v3494
        %v3823 = vunpack.c.h.b16 %v3494
        %v3824 = vunpack.c.l.b16 %v3495
        %v3825 = vunpack.c.h.b16 %v3495
        %v3826 = vunpack.c.l.b16 %v3496
        %v3827 = vunpack.c.h.b16 %v3496
        %v3828 = vunpack.c.l.b16 %v3497
        %v3829 = vunpack.c.h.b16 %v3497
        %v3830 = vunpack.c.l.b16 %v3498
        %v3831 = vunpack.c.h.b16 %v3498
        %v3832 = vunpack.c.l.b16 %v3499
        %v3833 = vunpack.c.h.b16 %v3499
        %v3834 = vunpack.c.l.b16 %v3500
        %v3835 = vunpack.c.h.b16 %v3500
        %v3836 = vunpack.c.l.b16 %v3501
        %v3837 = vunpack.c.h.b16 %v3501
        %v3838 = vunpack.c.l.b16 %v3502
        %v3839 = vunpack.c.h.b16 %v3502
        %v3840 = vunpack.c.l.b16 %v3503
        %v3841 = vunpack.c.h.b16 %v3503
        %v3842 = vunpack.c.l.b16 %v3504
        %v3843 = vunpack.c.h.b16 %v3504
        %v3844 = vunpack.c.l.b16 %v3505
        %v3845 = vunpack.c.h.b16 %v3505
        %v3846 = vunpack.c.l.b16 %v3506
        %v3847 = vunpack.c.h.b16 %v3506
        %v3848 = vunpack.c.l.b16 %v3507
        %v3849 = vunpack.c.h.b16 %v3507
        %v3850 = vunpack.c.l.b16 %v3508
        %v3851 = vunpack.c.h.b16 %v3508
        %v3852 = vunpack.c.l.b16 %v3509
        %v3853 = vunpack.c.h.b16 %v3509
        %v3854 = vunpack.c.l.b16 %v3510
        %v3855 = vunpack.c.h.b16 %v3510
        %v3856 = vunpack.c.l.b16 %v3511
        %v3857 = vunpack.c.h.b16 %v3511
        %v3858 = vunpack.c.l.b16 %v3512
        %v3859 = vunpack.c.h.b16 %v3512
        %v3860 = vunpack.c.l.b16 %v3513
        %v3861 = vunpack.c.h.b16 %v3513
        %v3862 = vunpack.c.l.b16 %v3514
        %v3863 = vunpack.c.h.b16 %v3514
        %v3864 = vunpack.c.l.b16 %v3515
        %v3865 = vunpack.c.h.b16 %v3515
        %v3866 = vunpack.c.l.b16 %v3516
        %v3867 = vunpack.c.h.b16 %v3516
        %v3868 = vunpack.c.l.b16 %v3517
        %v3869 = vunpack.c.h.b16 %v3517
        %v3870 = vunpack.c.l.b16 %v3518
        %v3871 = vunpack.c.h.b16 %v3518
        %v3872 = vunpack.c.l.b16 %v3519
        %v3873 = vunpack.c.h.b16 %v3519
        %v3874 = vunpack.c.l.b16 %v3520
        %v3875 = vunpack.c.h.b16 %v3520
        %v3876 = vunpack.c.l.b16 %v3521
        %v3877 = vunpack.c.h.b16 %v3521
        %v3878 = vunpack.c.l.b16 %v3522
        %v3879 = vunpack.c.h.b16 %v3522
        %v3880 = vunpack.c.l.b16 %v3523
        %v3881 = vunpack.c.h.b16 %v3523
        %v3882 = vunpack.c.l.b16 %v3524
        %v3883 = vunpack.c.h.b16 %v3524
        %v3884 = vunpack.c.l.b16 %v3525
        %v3885 = vunpack.c.h.b16 %v3525
        %v3886 = vunpack.c.l.b16 %v3526
        %v3887 = vunpack.c.h.b16 %v3526
        %v3888 = vunpack.c.l.b16 %v3527
        %v3889 = vunpack.c.h.b16 %v3527
        %v3890 = vunpack.c.l.b16 %v3528
        %v3891 = vunpack.c.h.b16 %v3528
        %v3892 = vunpack.c.l.b16 %v3529
        %v3893 = vunpack.c.h.b16 %v3529
        %v3894 = vunpack.c.l.b16 %v3530
        %v3895 = vunpack.c.h.b16 %v3530
        %v3896 = vunpack.c.l.b16 %v3531
        %v3897 = vunpack.c.h.b16 %v3531
        %v3898 = vunpack.c.l.b16 %v3532
        %v3899 = vunpack.c.h.b16 %v3532
        %v3900 = vunpack.c.l.b16 %v3533
        %v3901 = vunpack.c.h.b16 %v3533
        %v3902 = vunpack.c.l.b16 %v3534
        %v3903 = vunpack.c.h.b16 %v3534
        %v3904 = vunpack.c.l.b16 %v3535
        %v3905 = vunpack.c.h.b16 %v3535
        %v3906 = vunpack.c.l.b16 %v3536
        %v3907 = vunpack.c.h.b16 %v3536
        %v3908 = vunpack.c.l.b16 %v3537
        %v3909 = vunpack.c.h.b16 %v3537
        %v3910 = vunpack.c.l.b16 %v3538
        %v3911 = vunpack.c.h.b16 %v3538
        %v3912 = vunpack.c.l.b16 %v3539
        %v3913 = vunpack.c.h.b16 %v3539
        %v3914 = vunpack.c.l.b16 %v3540
        %v3915 = vunpack.c.h.b16 %v3540
        %v3916 = vunpack.c.l.b16 %v3541
        %v3917 = vunpack.c.h.b16 %v3541
        %v3918 = vunpack.c.l.b16 %v3542
        %v3919 = vunpack.c.h.b16 %v3542
        %v3920 = vunpack.c.l.b16 %v3543
        %v3921 = vunpack.c.h.b16 %v3543
        %v3922 = vunpack.c.l.b16 %v3544
        %v3923 = vunpack.c.h.b16 %v3544
        %v3924 = vunpack.c.l.b16 %v3545
        %v3925 = vunpack.c.h.b16 %v3545
        %v3926 = vunpack.c.l.b16 %v3546
        %v3927 = vunpack.c.h.b16 %v3546
        %v3928 = vunpack.c.l.b16 %v3547
        %v3929 = vunpack.c.h.b16 %v3547
        %v3930 = vunpack.c.l.b16 %v3548
        %v3931 = vunpack.c.h.b16 %v3548
        %v3932 = vunpack.c.l.b16 %v3549
        %v3933 = vunpack.c.h.b16 %v3549
        %v3934 = vunpack.c.l.b16 %v3550
        %v3935 = vunpack.c.h.b16 %v3550
        %v3936 = vunpack.c.l.b16 %v3551
        %v3937 = vunpack.c.h.b16 %v3551
        %v3938 = vunpack.c.l.b16 %v3552
        %v3939 = vunpack.c.h.b16 %v3552
        %v3940 = vunpack.c.l.b16 %v3553
        %v3941 = vunpack.c.h.b16 %v3553
        %v3942 = vunpack.c.l.b16 %v3554
        %v3943 = vunpack.c.h.b16 %v3554
        %v3944 = vunpack.c.l.b16 %v3555
        %v3945 = vunpack.c.h.b16 %v3555
        %v3946 = vunpack.c.l.b16 %v3556
        %v3947 = vunpack.c.h.b16 %v3556
        %v3948 = vunpack.c.l.b16 %v3557
        %v3949 = vunpack.c.h.b16 %v3557
        %v3950 = vunpack.c.l.b16 %v3558
        %v3951 = vunpack.c.h.b16 %v3558
        %v3952 = vunpack.c.l.b16 %v3559
        %v3953 = vunpack.c.h.b16 %v3559
        %v3954 = vunpack.c.l.b16 %v3560
        %v3955 = vunpack.c.h.b16 %v3560
        %v3956 = vunpack.c.l.b16 %v3561
        %v3957 = vunpack.c.h.b16 %v3561
        %v3958 = vunpack.c.l.b16 %v3562
        %v3959 = vunpack.c.h.b16 %v3562
        %v3960 = vunpack.c.l.b16 %v3563
        %v3961 = vunpack.c.h.b16 %v3563
        %v3962 = vunpack.c.l.b16 %v3564
        %v3963 = vunpack.c.h.b16 %v3564
        %v3964 = vunpack.c.l.b16 %v3565
        %v3965 = vunpack.c.h.b16 %v3565
        %v3966 = vunpack.c.l.b16 %v3566
        %v3967 = vunpack.c.h.b16 %v3566
        %v3968 = vunpack.c.l.b16 %v3567
        %v3969 = vunpack.c.h.b16 %v3567
        %v3970 = vunpack.c.l.b16 %v3568
        %v3971 = vunpack.c.h.b16 %v3568
        %v3972 = vunpack.c.l.b16 %v3569
        %v3973 = vunpack.c.h.b16 %v3569
        %v3974 = vunpack.c.l.b16 %v3570
        %v3975 = vunpack.c.h.b16 %v3570
        %v3976 = vunpack.c.l.b16 %v3571
        %v3977 = vunpack.c.h.b16 %v3571
        %v3978 = vpack.c.b16 %v3726, %v3722
        %v3979 = vpack.c.b16 %v3727, %v3723
        %v3980 = vpack.c.b16 %v3728, %v3724
        %v3981 = vpack.c.b16 %v3729, %v3725
        %v3982 = vpack.c.b16 %v3734, %v3730
        %v3983 = vpack.c.b16 %v3735, %v3731
        %v3984 = vpack.c.b16 %v3736, %v3732
        %v3985 = vpack.c.b16 %v3737, %v3733
        %v3986 = vpack.c.b16 %v3742, %v3738
        %v3987 = vpack.c.b16 %v3743, %v3739
        %v3988 = vpack.c.b16 %v3744, %v3740
        %v3989 = vpack.c.b16 %v3745, %v3741
        %v3990 = vpack.c.b16 %v3750, %v3746
        %v3991 = vpack.c.b16 %v3751, %v3747
        %v3992 = vpack.c.b16 %v3752, %v3748
        %v3993 = vpack.c.b16 %v3753, %v3749
        %v3994 = vpack.c.b16 %v3758, %v3754
        %v3995 = vpack.c.b16 %v3759, %v3755
        %v3996 = vpack.c.b16 %v3760, %v3756
        %v3997 = vpack.c.b16 %v3761, %v3757
        %v3998 = vpack.c.b16 %v3766, %v3762
        %v3999 = vpack.c.b16 %v3767, %v3763
        %v4000 = vpack.c.b16 %v3768, %v3764
        %v4001 = vpack.c.b16 %v3769, %v3765
        %v4002 = vpack.c.b16 %v3774, %v3770
        %v4003 = vpack.c.b16 %v3775, %v3771
        %v4004 = vpack.c.b16 %v3776, %v3772
        %v4005 = vpack.c.b16 %v3777, %v3773
        %v4006 = vpack.c.b16 %v3782, %v3778
        %v4007 = vpack.c.b16 %v3783, %v3779
        %v4008 = vpack.c.b16 %v3784, %v3780
        %v4009 = vpack.c.b16 %v3785, %v3781
        %v4010 = vpack.c.b16 %v3790, %v3786
        %v4011 = vpack.c.b16 %v3791, %v3787
        %v4012 = vpack.c.b16 %v3792, %v3788
        %v4013 = vpack.c.b16 %v3793, %v3789
        %v4014 = vpack.c.b16 %v3798, %v3794
        %v4015 = vpack.c.b16 %v3799, %v3795
        %v4016 = vpack.c.b16 %v3800, %v3796
        %v4017 = vpack.c.b16 %v3801, %v3797
        %v4018 = vpack.c.b16 %v3806, %v3802
        %v4019 = vpack.c.b16 %v3807, %v3803
        %v4020 = vpack.c.b16 %v3808, %v3804
        %v4021 = vpack.c.b16 %v3809, %v3805
        %v4022 = vpack.c.b16 %v3814, %v3810
        %v4023 = vpack.c.b16 %v3815, %v3811
        %v4024 = vpack.c.b16 %v3816, %v3812
        %v4025 = vpack.c.b16 %v3817, %v3813
        %v4026 = vpack.c.b16 %v3822, %v3818
        %v4027 = vpack.c.b16 %v3823, %v3819
        %v4028 = vpack.c.b16 %v3824, %v3820
        %v4029 = vpack.c.b16 %v3825, %v3821
        %v4030 = vpack.c.b16 %v3830, %v3826
        %v4031 = vpack.c.b16 %v3831, %v3827
        %v4032 = vpack.c.b16 %v3832, %v3828
        %v4033 = vpack.c.b16 %v3833, %v3829
        %v4034 = vpack.c.b16 %v3838, %v3834
        %v4035 = vpack.c.b16 %v3839, %v3835
        %v4036 = vpack.c.b16 %v3840, %v3836
        %v4037 = vpack.c.b16 %v3841, %v3837
        %v4038 = vpack.c.b16 %v3846, %v3842
        %v4039 = vpack.c.b16 %v3847, %v3843
        %v4040 = vpack.c.b16 %v3848, %v3844
        %v4041 = vpack.c.b16 %v3849, %v3845
        %v4042 = vpack.c.b16 %v3854, %v3850
        %v4043 = vpack.c.b16 %v3855, %v3851
        %v4044 = vpack.c.b16 %v3856, %v3852
        %v4045 = vpack.c.b16 %v3857, %v3853
        %v4046 = vpack.c.b16 %v3862, %v3858
        %v4047 = vpack.c.b16 %v3863, %v3859
        %v4048 = vpack.c.b16 %v3864, %v3860
        %v4049 = vpack.c.b16 %v3865, %v3861
        %v4050 = vpack.c.b16 %v3870, %v3866
        %v4051 = vpack.c.b16 %v3871, %v3867
        %v4052 = vpack.c.b16 %v3872, %v3868
        %v4053 = vpack.c.b16 %v3873, %v3869
        %v4054 = vpack.c.b16 %v3878, %v3874
        %v4055 = vpack.c.b16 %v3879, %v3875
        %v4056 = vpack.c.b16 %v3880, %v3876
        %v4057 = vpack.c.b16 %v3881, %v3877
        %v4058 = vpack.c.b16 %v3886, %v3882
        %v4059 = vpack.c.b16 %v3887, %v3883
        %v4060 = vpack.c.b16 %v3888, %v3884
        %v4061 = vpack.c.b16 %v3889, %v3885
        %v4062 = vpack.c.b16 %v3894, %v3890
        %v4063 = vpack.c.b16 %v3895, %v3891
        %v4064 = vpack.c.b16 %v3896, %v3892
        %v4065 = vpack.c.b16 %v3897, %v3893
        %v4066 = vpack.c.b16 %v3902, %v3898
        %v4067 = vpack.c.b16 %v3903, %v3899
        %v4068 = vpack.c.b16 %v3904, %v3900
        %v4069 = vpack.c.b16 %v3905, %v3901
        %v4070 = vpack.c.b16 %v3910, %v3906
        %v4071 = vpack.c.b16 %v3911, %v3907
        %v4072 = vpack.c.b16 %v3912, %v3908
        %v4073 = vpack.c.b16 %v3913, %v3909
        %v4074 = vpack.c.b16 %v3918, %v3914
        %v4075 = vpack.c.b16 %v3919, %v3915
        %v4076 = vpack.c.b16 %v3920, %v3916
        %v4077 = vpack.c.b16 %v3921, %v3917
        %v4078 = vpack.c.b16 %v3926, %v3922
        %v4079 = vpack.c.b16 %v3927, %v3923
        %v4080 = vpack.c.b16 %v3928, %v3924
        %v4081 = vpack.c.b16 %v3929, %v3925
        %v4082 = vpack.c.b16 %v3934, %v3930
        %v4083 = vpack.c.b16 %v3935, %v3931
        %v4084 = vpack.c.b16 %v3936, %v3932
        %v4085 = vpack.c.b16 %v3937, %v3933
        %v4086 = vpack.c.b16 %v3942, %v3938
        %v4087 = vpack.c.b16 %v3943, %v3939
        %v4088 = vpack.c.b16 %v3944, %v3940
        %v4089 = vpack.c.b16 %v3945, %v3941
        %v4090 = vpack.c.b16 %v3950, %v3946
        %v4091 = vpack.c.b16 %v3951, %v3947
        %v4092 = vpack.c.b16 %v3952, %v3948
        %v4093 = vpack.c.b16 %v3953, %v3949
        %v4094 = vpack.c.b16 %v3958, %v3954
        %v4095 = vpack.c.b16 %v3959, %v3955
        %v4096 = vpack.c.b16 %v3960, %v3956
        %v4097 = vpack.c.b16 %v3961, %v3957
        %v4098 = vpack.c.b16 %v3966, %v3962
        %v4099 = vpack.c.b16 %v3967, %v3963
        %v4100 = vpack.c.b16 %v3968, %v3964
        %v4101 = vpack.c.b16 %v3969, %v3965
        %v4102 = vpack.c.b16 %v3974, %v3970
        %v4103 = vpack.c.b16 %v3975, %v3971
        %v4104 = vpack.c.b16 %v3976, %v3972
        %v4105 = vpack.c.b16 %v3977, %v3973
        %4234 = vmatprep.subr.bf16.mxu0 %v3979
        %4235 = vmatpush1.bf16.msra.mxu0 %v3978
        %4236 = vmatprep.subr.bf16.mxu0 %v3983
        %4237 = vmatpush1.bf16.msra.mxu0 %v3982
        %4238 = vmatprep.subr.bf16.mxu0 %v3987
        %4239 = vmatpush1.bf16.msra.mxu0 %v3986
        %4240 = vmatprep.subr.bf16.mxu0 %v3991
        %4241 = vmatpush1.bf16.msra.mxu0 %v3990
        %4242 = vmatprep.subr.bf16.mxu0 %v3995
        %4243 = vmatpush1.bf16.msra.mxu0 %v3994
        %4244 = vmatprep.subr.bf16.mxu0 %v3999
        %4245 = vmatpush1.bf16.msra.mxu0 %v3998
        %4246 = vmatprep.subr.bf16.mxu0 %v4003
        %4247 = vmatpush1.bf16.msra.mxu0 %v4002
        %4248 = vmatprep.subr.bf16.mxu0 %v4007
        %4249 = vmatpush1.bf16.msra.mxu0 %v4006
        %4250 = vmatprep.subr.bf16.mxu0 %v4011
        %4251 = vmatpush1.bf16.msra.mxu0 %v4010
        %4252 = vmatprep.subr.bf16.mxu0 %v4015
        %4253 = vmatpush1.bf16.msra.mxu0 %v4014
        %4254 = vmatprep.subr.bf16.mxu0 %v4019
        %4255 = vmatpush1.bf16.msra.mxu0 %v4018
        %4256 = vmatprep.subr.bf16.mxu0 %v4023
        %4257 = vmatpush1.bf16.msra.mxu0 %v4022
        %4258 = vmatprep.subr.bf16.mxu0 %v4027
        %4259 = vmatpush1.bf16.msra.mxu0 %v4026
        %4260 = vmatprep.subr.bf16.mxu0 %v4031
        %4261 = vmatpush1.bf16.msra.mxu0 %v4030
        %4262 = vmatprep.subr.bf16.mxu0 %v4035
        %4263 = vmatpush1.bf16.msra.mxu0 %v4034
        %4264 = vmatprep.subr.bf16.mxu0 %v4039
        %4265 = vmatpush1.bf16.msra.mxu0 %v4038
        %4266 = vmatprep.mubr.bf16.mxu0 %v3437
        %4267 = vmatmul.mubr.bf16.gmra.mrb[0].mxu0 %v3436
        %v4268 = vpop.f32.mrb[0].mxu0
        %v4269 = vadd.f32 %v3577, %v4268
        %v4270 = vpop.f32.mrb[0].mxu0
        %v4271 = vadd.f32 %v3581, %v4270
        %v4272 = vpop.f32.mrb[0].mxu0
        %v4273 = vadd.f32 %v3577, %v4272
        %v4274 = vpop.f32.mrb[0].mxu0
        %v4275 = vadd.f32 %v3581, %v4274
        %4276 = vmatprep.mubr.bf16.mxu0 %v3441
        %4277 = vmatmul.mubr.bf16.gmra.mrb[0].mxu0 %v3440
        %v4278 = vpop.f32.mrb[0].mxu0
        %v4279 = vadd.f32 %v3577, %v4278
        %v4280 = vpop.f32.mrb[0].mxu0
        %v4281 = vadd.f32 %v3581, %v4280
        %v4282 = vpop.f32.mrb[0].mxu0
        %v4283 = vadd.f32 %v3577, %v4282
        %v4284 = vpop.f32.mrb[0].mxu0
        %v4285 = vadd.f32 %v3581, %v4284
        %4286 = vdwg.mxu0
        %4287 = vmatprep.subr.bf16.mxu0 %v4043
        %4288 = vmatpush1.bf16.msra.mxu0 %v4042
        %4289 = vmatprep.subr.bf16.mxu0 %v4047
        %4290 = vmatpush1.bf16.msra.mxu0 %v4046
        %4291 = vmatprep.subr.bf16.mxu0 %v4051
        %4292 = vmatpush1.bf16.msra.mxu0 %v4050
        %4293 = vmatprep.subr.bf16.mxu0 %v4055
        %4294 = vmatpush1.bf16.msra.mxu0 %v4054
        %4295 = vmatprep.subr.bf16.mxu0 %v4059
        %4296 = vmatpush1.bf16.msra.mxu0 %v4058
        %4297 = vmatprep.subr.bf16.mxu0 %v4063
        %4298 = vmatpush1.bf16.msra.mxu0 %v4062
        %4299 = vmatprep.subr.bf16.mxu0 %v4067
        %4300 = vmatpush1.bf16.msra.mxu0 %v4066
        %4301 = vmatprep.subr.bf16.mxu0 %v4071
        %4302 = vmatpush1.bf16.msra.mxu0 %v4070
        %4303 = vmatprep.subr.bf16.mxu0 %v4075
        %4304 = vmatpush1.bf16.msra.mxu0 %v4074
        %4305 = vmatprep.subr.bf16.mxu0 %v4079
        %4306 = vmatpush1.bf16.msra.mxu0 %v4078
        %4307 = vmatprep.subr.bf16.mxu0 %v4083
        %4308 = vmatpush1.bf16.msra.mxu0 %v4082
        %4309 = vmatprep.subr.bf16.mxu0 %v4087
        %4310 = vmatpush1.bf16.msra.mxu0 %v4086
        %4311 = vmatprep.subr.bf16.mxu0 %v4091
        %4312 = vmatpush1.bf16.msra.mxu0 %v4090
        %4313 = vmatprep.subr.bf16.mxu0 %v4095
        %4314 = vmatpush1.bf16.msra.mxu0 %v4094
        %4315 = vmatprep.subr.bf16.mxu0 %v4099
        %4316 = vmatpush1.bf16.msra.mxu0 %v4098
        %4317 = vmatprep.subr.bf16.mxu0 %v4103
        %4318 = vmatpush1.bf16.msra.mxu0 %v4102
        %4319 = vmatprep.mubr.bf16.mxu0 %v3439
        %4320 = vmatmul.mubr.bf16.gmra.mrb[0].mxu0 %v3438
        %v4321 = vpop.f32.mrb[0].mxu0
        %v4322 = vadd.f32 %v4269, %v4321
        %v4323 = vpop.f32.mrb[0].mxu0
        %v4324 = vadd.f32 %v4271, %v4323
        %v4325 = vpop.f32.mrb[0].mxu0
        %v4326 = vadd.f32 %v4273, %v4325
        %v4327 = vpop.f32.mrb[0].mxu0
        %v4328 = vadd.f32 %v4275, %v4327
        %4329 = vmatprep.mubr.bf16.mxu0 %v3443
        %4330 = vmatmul.mubr.bf16.gmra.mrb[0].mxu0 %v3442
        %v4331 = vpop.f32.mrb[0].mxu0
        %v4332 = vadd.f32 %v4279, %v4331
        %v4333 = vpop.f32.mrb[0].mxu0
        %v4334 = vadd.f32 %v4281, %v4333
        %v4335 = vpop.f32.mrb[0].mxu0
        %v4336 = vadd.f32 %v4283, %v4335
        %v4337 = vpop.f32.mrb[0].mxu0
        %v4338 = vadd.f32 %v4285, %v4337
        %4339 = vdwg.mxu0
        %4340 = vmatprep.subr.bf16.mxu0 %v3981
        %4341 = vmatpush1.bf16.msra.mxu0 %v3980
        %4342 = vmatprep.subr.bf16.mxu0 %v3985
        %4343 = vmatpush1.bf16.msra.mxu0 %v3984
        %4344 = vmatprep.subr.bf16.mxu0 %v3989
        %4345 = vmatpush1.bf16.msra.mxu0 %v3988
        %4346 = vmatprep.subr.bf16.mxu0 %v3993
        %4347 = vmatpush1.bf16.msra.mxu0 %v3992
        %4348 = vmatprep.subr.bf16.mxu0 %v3997
        %4349 = vmatpush1.bf16.msra.mxu0 %v3996
        %4350 = vmatprep.subr.bf16.mxu0 %v4001
        %4351 = vmatpush1.bf16.msra.mxu0 %v4000
        %4352 = vmatprep.subr.bf16.mxu0 %v4005
        %4353 = vmatpush1.bf16.msra.mxu0 %v4004
        %4354 = vmatprep.subr.bf16.mxu0 %v4009
        %4355 = vmatpush1.bf16.msra.mxu0 %v4008
        %4356 = vmatprep.subr.bf16.mxu0 %v4013
        %4357 = vmatpush1.bf16.msra.mxu0 %v4012
        %4358 = vmatprep.subr.bf16.mxu0 %v4017
        %4359 = vmatpush1.bf16.msra.mxu0 %v4016
        %4360 = vmatprep.subr.bf16.mxu0 %v4021
        %4361 = vmatpush1.bf16.msra.mxu0 %v4020
        %4362 = vmatprep.subr.bf16.mxu0 %v4025
        %4363 = vmatpush1.bf16.msra.mxu0 %v4024
        %4364 = vmatprep.subr.bf16.mxu0 %v4029
        %4365 = vmatpush1.bf16.msra.mxu0 %v4028
        %4366 = vmatprep.subr.bf16.mxu0 %v4033
        %4367 = vmatpush1.bf16.msra.mxu0 %v4032
        %4368 = vmatprep.subr.bf16.mxu0 %v4037
        %4369 = vmatpush1.bf16.msra.mxu0 %v4036
        %4370 = vmatprep.subr.bf16.mxu0 %v4041
        %4371 = vmatpush1.bf16.msra.mxu0 %v4040
        %4372 = vmatprep.mubr.bf16.mxu0 %v3437
        %4373 = vmatmul.mubr.bf16.gmra.mrb[0].mxu0 %v3436
        %v4374 = vpop.f32.mrb[0].mxu0
        %v4375 = vadd.f32 %v3585, %v4374
        %v4376 = vpop.f32.mrb[0].mxu0
        %v4377 = vadd.f32 %v3589, %v4376
        %v4378 = vpop.f32.mrb[0].mxu0
        %v4379 = vadd.f32 %v3585, %v4378
        %v4380 = vpop.f32.mrb[0].mxu0
        %v4381 = vadd.f32 %v3589, %v4380
        %4382 = vmatprep.mubr.bf16.mxu0 %v3441
        %4383 = vmatmul.mubr.bf16.gmra.mrb[0].mxu0 %v3440
        %v4384 = vpop.f32.mrb[0].mxu0
        %v4385 = vadd.f32 %v3585, %v4384
        %v4386 = vpop.f32.mrb[0].mxu0
        %v4387 = vadd.f32 %v3589, %v4386
        %v4388 = vpop.f32.mrb[0].mxu0
        %v4389 = vadd.f32 %v3585, %v4388
        %v4390 = vpop.f32.mrb[0].mxu0
        %v4391 = vadd.f32 %v3589, %v4390
        %4392 = vdwg.mxu0
        %4393 = vmatprep.subr.bf16.mxu0 %v4045
        %4394 = vmatpush1.bf16.msra.mxu0 %v4044
        %4395 = vmatprep.subr.bf16.mxu0 %v4049
        %4396 = vmatpush1.bf16.msra.mxu0 %v4048
        %4397 = vmatprep.subr.bf16.mxu0 %v4053
        %4398 = vmatpush1.bf16.msra.mxu0 %v4052
        %4399 = vmatprep.subr.bf16.mxu0 %v4057
        %4400 = vmatpush1.bf16.msra.mxu0 %v4056
        %4401 = vmatprep.subr.bf16.mxu0 %v4061
        %4402 = vmatpush1.bf16.msra.mxu0 %v4060
        %4403 = vmatprep.subr.bf16.mxu0 %v4065
        %4404 = vmatpush1.bf16.msra.mxu0 %v4064
        %4405 = vmatprep.subr.bf16.mxu0 %v4069
        %4406 = vmatpush1.bf16.msra.mxu0 %v4068
        %4407 = vmatprep.subr.bf16.mxu0 %v4073
        %4408 = vmatpush1.bf16.msra.mxu0 %v4072
        %4409 = vmatprep.subr.bf16.mxu0 %v4077
        %4410 = vmatpush1.bf16.msra.mxu0 %v4076
        %4411 = vmatprep.subr.bf16.mxu0 %v4081
        %4412 = vmatpush1.bf16.msra.mxu0 %v4080
        %4413 = vmatprep.subr.bf16.mxu0 %v4085
        %4414 = vmatpush1.bf16.msra.mxu0 %v4084
        %4415 = vmatprep.subr.bf16.mxu0 %v4089
        %4416 = vmatpush1.bf16.msra.mxu0 %v4088
        %4417 = vmatprep.subr.bf16.mxu0 %v4093
        %4418 = vmatpush1.bf16.msra.mxu0 %v4092
        %4419 = vmatprep.subr.bf16.mxu0 %v4097
        %4420 = vmatpush1.bf16.msra.mxu0 %v4096
        %4421 = vmatprep.subr.bf16.mxu0 %v4101
        %4422 = vmatpush1.bf16.msra.mxu0 %v4100
        %4423 = vmatprep.subr.bf16.mxu0 %v4105
        %4424 = vmatpush1.bf16.msra.mxu0 %v4104
        %4425 = vmatprep.mubr.bf16.mxu0 %v3439
        %4426 = vmatmul.mubr.bf16.gmra.mrb[0].mxu0 %v3438
        %v4427 = vpop.f32.mrb[0].mxu0
        %v4428 = vadd.f32 %v4375, %v4427
        %v4429 = vpop.f32.mrb[0].mxu0
        %v4430 = vadd.f32 %v4377, %v4429
        %v4431 = vpop.f32.mrb[0].mxu0
        %v4432 = vadd.f32 %v4379, %v4431
        %v4433 = vpop.f32.mrb[0].mxu0
        %v4434 = vadd.f32 %v4381, %v4433
        %4435 = vmatprep.mubr.bf16.mxu0 %v3443
        %4436 = vmatmul.mubr.bf16.gmra.mrb[0].mxu0 %v3442
        %v4437 = vpop.f32.mrb[0].mxu0
        %v4438 = vadd.f32 %v4385, %v4437
        %v4439 = vpop.f32.mrb[0].mxu0
        %v4440 = vadd.f32 %v4387, %v4439
        %v4441 = vpop.f32.mrb[0].mxu0
        %v4442 = vadd.f32 %v4389, %v4441
        %v4443 = vpop.f32.mrb[0].mxu0
        %v4444 = vadd.f32 %v4391, %v4443
        %4445 = vdwg.mxu0
        %v4446 = vmax.f32 %v4322, 0.0
        %v4447 = vmax.f32 %v4324, 0.0
        %v4448 = vmax.f32 %v4428, 0.0
        %v4449 = vmax.f32 %v4430, 0.0
        %v4450 = vmax.f32 %v4326, 0.0
        %v4451 = vmax.f32 %v4328, 0.0
        %v4452 = vmax.f32 %v4432, 0.0
        %v4453 = vmax.f32 %v4434, 0.0
        %v4454 = vmax.f32 %v4332, 0.0
        %v4455 = vmax.f32 %v4334, 0.0
        %v4456 = vmax.f32 %v4438, 0.0
        %v4457 = vmax.f32 %v4440, 0.0
        %v4458 = vmax.f32 %v4336, 0.0
        %v4459 = vmax.f32 %v4338, 0.0
        %v4460 = vmax.f32 %v4442, 0.0
        %v4461 = vmax.f32 %v4444, 0.0
        %v4462 = vpack.c.bf16 %v4450, %v4446
        %v4463 = vpack.c.bf16 %v4451, %v4447
        %v4464 = vpack.c.bf16 %v4452, %v4448
        %v4465 = vpack.c.bf16 %v4453, %v4449
        %v4466 = vpack.c.bf16 %v4458, %v4454
        %v4467 = vpack.c.bf16 %v4459, %v4455
        %v4468 = vpack.c.bf16 %v4460, %v4456
        %v4469 = vpack.c.bf16 %v4461, %v4457
        %v4470 = vld [vmem:[#allocation4] sm:$0xff]
        %v4471 = vld [vmem:[#allocation4 + $0x8] sm:$0xff]
        %v4472 = vld [vmem:[#allocation4 + $0x10] sm:$0xff]
        %v4473 = vld [vmem:[#allocation4 + $0x18] sm:$0xff]
        %v4474 = vld [vmem:[#allocation4 + $0x20] sm:$0xff]
        %v4475 = vld [vmem:[#allocation4 + $0x28] sm:$0xff]
        %v4476 = vld [vmem:[#allocation4 + $0x30] sm:$0xff]
        %v4477 = vld [vmem:[#allocation4 + $0x38] sm:$0xff]
        %v4478 = vld [vmem:[#allocation4 + $0x40] sm:$0xff]
        %v4479 = vld [vmem:[#allocation4 + $0x48] sm:$0xff]
        %v4480 = vld [vmem:[#allocation4 + $0x50] sm:$0xff]
        %v4481 = vld [vmem:[#allocation4 + $0x58] sm:$0xff]
        %v4482 = vld [vmem:[#allocation4 + $0x60] sm:$0xff]
        %v4483 = vld [vmem:[#allocation4 + $0x68] sm:$0xff]
        %v4484 = vld [vmem:[#allocation4 + $0x70] sm:$0xff]
        %v4485 = vld [vmem:[#allocation4 + $0x78] sm:$0xff]
        %v4486 = vld [vmem:[#allocation4 + $0x80] sm:$0xff]
        %v4487 = vld [vmem:[#allocation4 + $0x88] sm:$0xff]
        %v4488 = vld [vmem:[#allocation4 + $0x90] sm:$0xff]
        %v4489 = vld [vmem:[#allocation4 + $0x98] sm:$0xff]
        %v4490 = vld [vmem:[#allocation4 + $0xa0] sm:$0xff]
        %v4491 = vld [vmem:[#allocation4 + $0xa8] sm:$0xff]
        %v4492 = vld [vmem:[#allocation4 + $0xb0] sm:$0xff]
        %v4493 = vld [vmem:[#allocation4 + $0xb8] sm:$0xff]
        %v4494 = vld [vmem:[#allocation4 + $0xc0] sm:$0xff]
        %v4495 = vld [vmem:[#allocation4 + $0xc8] sm:$0xff]
        %v4496 = vld [vmem:[#allocation4 + $0xd0] sm:$0xff]
        %v4497 = vld [vmem:[#allocation4 + $0xd8] sm:$0xff]
        %v4498 = vld [vmem:[#allocation4 + $0xe0] sm:$0xff]
        %v4499 = vld [vmem:[#allocation4 + $0xe8] sm:$0xff]
        %v4500 = vld [vmem:[#allocation4 + $0xf0] sm:$0xff]
        %v4501 = vld [vmem:[#allocation4 + $0xf8] sm:$0xff]
        %v4502 = vld [vmem:[#allocation4 + $0x100] sm:$0xff]
        %v4503 = vld [vmem:[#allocation4 + $0x108] sm:$0xff]
        %v4504 = vld [vmem:[#allocation4 + $0x110] sm:$0xff]
        %v4505 = vld [vmem:[#allocation4 + $0x118] sm:$0xff]
        %v4506 = vld [vmem:[#allocation4 + $0x120] sm:$0xff]
        %v4507 = vld [vmem:[#allocation4 + $0x128] sm:$0xff]
        %v4508 = vld [vmem:[#allocation4 + $0x130] sm:$0xff]
        %v4509 = vld [vmem:[#allocation4 + $0x138] sm:$0xff]
        %v4510 = vld [vmem:[#allocation4 + $0x140] sm:$0xff]
        %v4511 = vld [vmem:[#allocation4 + $0x148] sm:$0xff]
        %v4512 = vld [vmem:[#allocation4 + $0x150] sm:$0xff]
        %v4513 = vld [vmem:[#allocation4 + $0x158] sm:$0xff]
        %v4514 = vld [vmem:[#allocation4 + $0x160] sm:$0xff]
        %v4515 = vld [vmem:[#allocation4 + $0x168] sm:$0xff]
        %v4516 = vld [vmem:[#allocation4 + $0x170] sm:$0xff]
        %v4517 = vld [vmem:[#allocation4 + $0x178] sm:$0xff]
        %v4518 = vld [vmem:[#allocation4 + $0x180] sm:$0xff]
        %v4519 = vld [vmem:[#allocation4 + $0x188] sm:$0xff]
        %v4520 = vld [vmem:[#allocation4 + $0x190] sm:$0xff]
        %v4521 = vld [vmem:[#allocation4 + $0x198] sm:$0xff]
        %v4522 = vld [vmem:[#allocation4 + $0x1a0] sm:$0xff]
        %v4523 = vld [vmem:[#allocation4 + $0x1a8] sm:$0xff]
        %v4524 = vld [vmem:[#allocation4 + $0x1b0] sm:$0xff]
        %v4525 = vld [vmem:[#allocation4 + $0x1b8] sm:$0xff]
        %v4526 = vld [vmem:[#allocation4 + $0x1c0] sm:$0xff]
        %v4527 = vld [vmem:[#allocation4 + $0x1c8] sm:$0xff]
        %v4528 = vld [vmem:[#allocation4 + $0x1d0] sm:$0xff]
        %v4529 = vld [vmem:[#allocation4 + $0x1d8] sm:$0xff]
        %v4530 = vld [vmem:[#allocation4 + $0x1e0] sm:$0xff]
        %v4531 = vld [vmem:[#allocation4 + $0x1e8] sm:$0xff]
        %v4532 = vld [vmem:[#allocation4 + $0x1f0] sm:$0xff]
        %v4533 = vld [vmem:[#allocation4 + $0x1f8] sm:$0xff]
        %v4534 = vld [vmem:[#allocation4 + $0x200] sm:$0xff]
        %v4535 = vld [vmem:[#allocation4 + $0x208] sm:$0xff]
        %v4536 = vld [vmem:[#allocation4 + $0x210] sm:$0xff]
        %v4537 = vld [vmem:[#allocation4 + $0x218] sm:$0xff]
        %v4538 = vld [vmem:[#allocation4 + $0x220] sm:$0xff]
        %v4539 = vld [vmem:[#allocation4 + $0x228] sm:$0xff]
        %v4540 = vld [vmem:[#allocation4 + $0x230] sm:$0xff]
        %v4541 = vld [vmem:[#allocation4 + $0x238] sm:$0xff]
        %v4542 = vld [vmem:[#allocation4 + $0x240] sm:$0xff]
        %v4543 = vld [vmem:[#allocation4 + $0x248] sm:$0xff]
        %v4544 = vld [vmem:[#allocation4 + $0x250] sm:$0xff]
        %v4545 = vld [vmem:[#allocation4 + $0x258] sm:$0xff]
        %v4546 = vld [vmem:[#allocation4 + $0x260] sm:$0xff]
        %v4547 = vld [vmem:[#allocation4 + $0x268] sm:$0xff]
        %v4548 = vld [vmem:[#allocation4 + $0x270] sm:$0xff]
        %v4549 = vld [vmem:[#allocation4 + $0x278] sm:$0xff]
        %v4550 = vld [vmem:[#allocation4 + $0x280] sm:$0xff]
        %v4551 = vld [vmem:[#allocation4 + $0x288] sm:$0xff]
        %v4552 = vld [vmem:[#allocation4 + $0x290] sm:$0xff]
        %v4553 = vld [vmem:[#allocation4 + $0x298] sm:$0xff]
        %v4554 = vld [vmem:[#allocation4 + $0x2a0] sm:$0xff]
        %v4555 = vld [vmem:[#allocation4 + $0x2a8] sm:$0xff]
        %v4556 = vld [vmem:[#allocation4 + $0x2b0] sm:$0xff]
        %v4557 = vld [vmem:[#allocation4 + $0x2b8] sm:$0xff]
        %v4558 = vld [vmem:[#allocation4 + $0x2c0] sm:$0xff]
        %v4559 = vld [vmem:[#allocation4 + $0x2c8] sm:$0xff]
        %v4560 = vld [vmem:[#allocation4 + $0x2d0] sm:$0xff]
        %v4561 = vld [vmem:[#allocation4 + $0x2d8] sm:$0xff]
        %v4562 = vld [vmem:[#allocation4 + $0x2e0] sm:$0xff]
        %v4563 = vld [vmem:[#allocation4 + $0x2e8] sm:$0xff]
        %v4564 = vld [vmem:[#allocation4 + $0x2f0] sm:$0xff]
        %v4565 = vld [vmem:[#allocation4 + $0x2f8] sm:$0xff]
        %v4566 = vld [vmem:[#allocation4 + $0x300] sm:$0xff]
        %v4567 = vld [vmem:[#allocation4 + $0x308] sm:$0xff]
        %v4568 = vld [vmem:[#allocation4 + $0x310] sm:$0xff]
        %v4569 = vld [vmem:[#allocation4 + $0x318] sm:$0xff]
        %v4570 = vld [vmem:[#allocation4 + $0x320] sm:$0xff]
        %v4571 = vld [vmem:[#allocation4 + $0x328] sm:$0xff]
        %v4572 = vld [vmem:[#allocation4 + $0x330] sm:$0xff]
        %v4573 = vld [vmem:[#allocation4 + $0x338] sm:$0xff]
        %v4574 = vld [vmem:[#allocation4 + $0x340] sm:$0xff]
        %v4575 = vld [vmem:[#allocation4 + $0x348] sm:$0xff]
        %v4576 = vld [vmem:[#allocation4 + $0x350] sm:$0xff]
        %v4577 = vld [vmem:[#allocation4 + $0x358] sm:$0xff]
        %v4578 = vld [vmem:[#allocation4 + $0x360] sm:$0xff]
        %v4579 = vld [vmem:[#allocation4 + $0x368] sm:$0xff]
        %v4580 = vld [vmem:[#allocation4 + $0x370] sm:$0xff]
        %v4581 = vld [vmem:[#allocation4 + $0x378] sm:$0xff]
        %v4582 = vld [vmem:[#allocation4 + $0x380] sm:$0xff]
        %v4583 = vld [vmem:[#allocation4 + $0x388] sm:$0xff]
        %v4584 = vld [vmem:[#allocation4 + $0x390] sm:$0xff]
        %v4585 = vld [vmem:[#allocation4 + $0x398] sm:$0xff]
        %v4586 = vld [vmem:[#allocation4 + $0x3a0] sm:$0xff]
        %v4587 = vld [vmem:[#allocation4 + $0x3a8] sm:$0xff]
        %v4588 = vld [vmem:[#allocation4 + $0x3b0] sm:$0xff]
        %v4589 = vld [vmem:[#allocation4 + $0x3b8] sm:$0xff]
        %v4590 = vld [vmem:[#allocation4 + $0x3c0] sm:$0xff]
        %v4591 = vld [vmem:[#allocation4 + $0x3c8] sm:$0xff]
        %v4592 = vld [vmem:[#allocation4 + $0x3d0] sm:$0xff]
        %v4593 = vld [vmem:[#allocation4 + $0x3d8] sm:$0xff]
        %v4594 = vld [vmem:[#allocation4 + $0x3e0] sm:$0xff]
        %v4595 = vld [vmem:[#allocation4 + $0x3e8] sm:$0xff]
        %v4596 = vld [vmem:[#allocation4 + $0x3f0] sm:$0xff]
        %v4597 = vld [vmem:[#allocation4 + $0x3f8] sm:$0xff]
        %v4598 = vld [vmem:[%s15] sm:$0xf]
        %v4600 = vlaneseq
        %v4601 = vshrl.u32 %v4600, 7
        %v4602 = vsub.s32 0, %v4601
        %v4603 = vrot.slane %v4598, %v4602
        %v4604 = vlaneseq
        %v4605 = vshrl.u32 %v4604, 7
        %v4606 = vsub.s32 1, %v4605
        %v4607 = vrot.slane %v4598, %v4606
        %v4608 = vlaneseq
        %v4609 = vshrl.u32 %v4608, 7
        %v4610 = vsub.s32 2, %v4609
        %v4611 = vrot.slane %v4598, %v4610
        %v4612 = vlaneseq
        %v4613 = vshrl.u32 %v4612, 7
        %v4614 = vsub.s32 3, %v4613
        %v4615 = vrot.slane %v4598, %v4614
        %v4748 = vunpack.c.l.b16 %v4470
        %v4749 = vunpack.c.h.b16 %v4470
        %v4750 = vunpack.c.l.b16 %v4471
        %v4751 = vunpack.c.h.b16 %v4471
        %v4752 = vunpack.c.l.b16 %v4472
        %v4753 = vunpack.c.h.b16 %v4472
        %v4754 = vunpack.c.l.b16 %v4473
        %v4755 = vunpack.c.h.b16 %v4473
        %v4756 = vunpack.c.l.b16 %v4474
        %v4757 = vunpack.c.h.b16 %v4474
        %v4758 = vunpack.c.l.b16 %v4475
        %v4759 = vunpack.c.h.b16 %v4475
        %v4760 = vunpack.c.l.b16 %v4476
        %v4761 = vunpack.c.h.b16 %v4476
        %v4762 = vunpack.c.l.b16 %v4477
        %v4763 = vunpack.c.h.b16 %v4477
        %v4764 = vunpack.c.l.b16 %v4478
        %v4765 = vunpack.c.h.b16 %v4478
        %v4766 = vunpack.c.l.b16 %v4479
        %v4767 = vunpack.c.h.b16 %v4479
        %v4768 = vunpack.c.l.b16 %v4480
        %v4769 = vunpack.c.h.b16 %v4480
        %v4770 = vunpack.c.l.b16 %v4481
        %v4771 = vunpack.c.h.b16 %v4481
        %v4772 = vunpack.c.l.b16 %v4482
        %v4773 = vunpack.c.h.b16 %v4482
        %v4774 = vunpack.c.l.b16 %v4483
        %v4775 = vunpack.c.h.b16 %v4483
        %v4776 = vunpack.c.l.b16 %v4484
        %v4777 = vunpack.c.h.b16 %v4484
        %v4778 = vunpack.c.l.b16 %v4485
        %v4779 = vunpack.c.h.b16 %v4485
        %v4780 = vunpack.c.l.b16 %v4486
        %v4781 = vunpack.c.h.b16 %v4486
        %v4782 = vunpack.c.l.b16 %v4487
        %v4783 = vunpack.c.h.b16 %v4487
        %v4784 = vunpack.c.l.b16 %v4488
        %v4785 = vunpack.c.h.b16 %v4488
        %v4786 = vunpack.c.l.b16 %v4489
        %v4787 = vunpack.c.h.b16 %v4489
        %v4788 = vunpack.c.l.b16 %v4490
        %v4789 = vunpack.c.h.b16 %v4490
        %v4790 = vunpack.c.l.b16 %v4491
        %v4791 = vunpack.c.h.b16 %v4491
        %v4792 = vunpack.c.l.b16 %v4492
        %v4793 = vunpack.c.h.b16 %v4492
        %v4794 = vunpack.c.l.b16 %v4493
        %v4795 = vunpack.c.h.b16 %v4493
        %v4796 = vunpack.c.l.b16 %v4494
        %v4797 = vunpack.c.h.b16 %v4494
        %v4798 = vunpack.c.l.b16 %v4495
        %v4799 = vunpack.c.h.b16 %v4495
        %v4800 = vunpack.c.l.b16 %v4496
        %v4801 = vunpack.c.h.b16 %v4496
        %v4802 = vunpack.c.l.b16 %v4497
        %v4803 = vunpack.c.h.b16 %v4497
        %v4804 = vunpack.c.l.b16 %v4498
        %v4805 = vunpack.c.h.b16 %v4498
        %v4806 = vunpack.c.l.b16 %v4499
        %v4807 = vunpack.c.h.b16 %v4499
        %v4808 = vunpack.c.l.b16 %v4500
        %v4809 = vunpack.c.h.b16 %v4500
        %v4810 = vunpack.c.l.b16 %v4501
        %v4811 = vunpack.c.h.b16 %v4501
        %v4812 = vunpack.c.l.b16 %v4502
        %v4813 = vunpack.c.h.b16 %v4502
        %v4814 = vunpack.c.l.b16 %v4503
        %v4815 = vunpack.c.h.b16 %v4503
        %v4816 = vunpack.c.l.b16 %v4504
        %v4817 = vunpack.c.h.b16 %v4504
        %v4818 = vunpack.c.l.b16 %v4505
        %v4819 = vunpack.c.h.b16 %v4505
        %v4820 = vunpack.c.l.b16 %v4506
        %v4821 = vunpack.c.h.b16 %v4506
        %v4822 = vunpack.c.l.b16 %v4507
        %v4823 = vunpack.c.h.b16 %v4507
        %v4824 = vunpack.c.l.b16 %v4508
        %v4825 = vunpack.c.h.b16 %v4508
        %v4826 = vunpack.c.l.b16 %v4509
        %v4827 = vunpack.c.h.b16 %v4509
        %v4828 = vunpack.c.l.b16 %v4510
        %v4829 = vunpack.c.h.b16 %v4510
        %v4830 = vunpack.c.l.b16 %v4511
        %v4831 = vunpack.c.h.b16 %v4511
        %v4832 = vunpack.c.l.b16 %v4512
        %v4833 = vunpack.c.h.b16 %v4512
        %v4834 = vunpack.c.l.b16 %v4513
        %v4835 = vunpack.c.h.b16 %v4513
        %v4836 = vunpack.c.l.b16 %v4514
        %v4837 = vunpack.c.h.b16 %v4514
        %v4838 = vunpack.c.l.b16 %v4515
        %v4839 = vunpack.c.h.b16 %v4515
        %v4840 = vunpack.c.l.b16 %v4516
        %v4841 = vunpack.c.h.b16 %v4516
        %v4842 = vunpack.c.l.b16 %v4517
        %v4843 = vunpack.c.h.b16 %v4517
        %v4844 = vunpack.c.l.b16 %v4518
        %v4845 = vunpack.c.h.b16 %v4518
        %v4846 = vunpack.c.l.b16 %v4519
        %v4847 = vunpack.c.h.b16 %v4519
        %v4848 = vunpack.c.l.b16 %v4520
        %v4849 = vunpack.c.h.b16 %v4520
        %v4850 = vunpack.c.l.b16 %v4521
        %v4851 = vunpack.c.h.b16 %v4521
        %v4852 = vunpack.c.l.b16 %v4522
        %v4853 = vunpack.c.h.b16 %v4522
        %v4854 = vunpack.c.l.b16 %v4523
        %v4855 = vunpack.c.h.b16 %v4523
        %v4856 = vunpack.c.l.b16 %v4524
        %v4857 = vunpack.c.h.b16 %v4524
        %v4858 = vunpack.c.l.b16 %v4525
        %v4859 = vunpack.c.h.b16 %v4525
        %v4860 = vunpack.c.l.b16 %v4526
        %v4861 = vunpack.c.h.b16 %v4526
        %v4862 = vunpack.c.l.b16 %v4527
        %v4863 = vunpack.c.h.b16 %v4527
        %v4864 = vunpack.c.l.b16 %v4528
        %v4865 = vunpack.c.h.b16 %v4528
        %v4866 = vunpack.c.l.b16 %v4529
        %v4867 = vunpack.c.h.b16 %v4529
        %v4868 = vunpack.c.l.b16 %v4530
        %v4869 = vunpack.c.h.b16 %v4530
        %v4870 = vunpack.c.l.b16 %v4531
        %v4871 = vunpack.c.h.b16 %v4531
        %v4872 = vunpack.c.l.b16 %v4532
        %v4873 = vunpack.c.h.b16 %v4532
        %v4874 = vunpack.c.l.b16 %v4533
        %v4875 = vunpack.c.h.b16 %v4533
        %v4876 = vunpack.c.l.b16 %v4534
        %v4877 = vunpack.c.h.b16 %v4534
        %v4878 = vunpack.c.l.b16 %v4535
        %v4879 = vunpack.c.h.b16 %v4535
        %v4880 = vunpack.c.l.b16 %v4536
        %v4881 = vunpack.c.h.b16 %v4536
        %v4882 = vunpack.c.l.b16 %v4537
        %v4883 = vunpack.c.h.b16 %v4537
        %v4884 = vunpack.c.l.b16 %v4538
        %v4885 = vunpack.c.h.b16 %v4538
        %v4886 = vunpack.c.l.b16 %v4539
        %v4887 = vunpack.c.h.b16 %v4539
        %v4888 = vunpack.c.l.b16 %v4540
        %v4889 = vunpack.c.h.b16 %v4540
        %v4890 = vunpack.c.l.b16 %v4541
        %v4891 = vunpack.c.h.b16 %v4541
        %v4892 = vunpack.c.l.b16 %v4542
        %v4893 = vunpack.c.h.b16 %v4542
        %v4894 = vunpack.c.l.b16 %v4543
        %v4895 = vunpack.c.h.b16 %v4543
        %v4896 = vunpack.c.l.b16 %v4544
        %v4897 = vunpack.c.h.b16 %v4544
        %v4898 = vunpack.c.l.b16 %v4545
        %v4899 = vunpack.c.h.b16 %v4545
        %v4900 = vunpack.c.l.b16 %v4546
        %v4901 = vunpack.c.h.b16 %v4546
        %v4902 = vunpack.c.l.b16 %v4547
        %v4903 = vunpack.c.h.b16 %v4547
        %v4904 = vunpack.c.l.b16 %v4548
        %v4905 = vunpack.c.h.b16 %v4548
        %v4906 = vunpack.c.l.b16 %v4549
        %v4907 = vunpack.c.h.b16 %v4549
        %v4908 = vunpack.c.l.b16 %v4550
        %v4909 = vunpack.c.h.b16 %v4550
        %v4910 = vunpack.c.l.b16 %v4551
        %v4911 = vunpack.c.h.b16 %v4551
        %v4912 = vunpack.c.l.b16 %v4552
        %v4913 = vunpack.c.h.b16 %v4552
        %v4914 = vunpack.c.l.b16 %v4553
        %v4915 = vunpack.c.h.b16 %v4553
        %v4916 = vunpack.c.l.b16 %v4554
        %v4917 = vunpack.c.h.b16 %v4554
        %v4918 = vunpack.c.l.b16 %v4555
        %v4919 = vunpack.c.h.b16 %v4555
        %v4920 = vunpack.c.l.b16 %v4556
        %v4921 = vunpack.c.h.b16 %v4556
        %v4922 = vunpack.c.l.b16 %v4557
        %v4923 = vunpack.c.h.b16 %v4557
        %v4924 = vunpack.c.l.b16 %v4558
        %v4925 = vunpack.c.h.b16 %v4558
        %v4926 = vunpack.c.l.b16 %v4559
        %v4927 = vunpack.c.h.b16 %v4559
        %v4928 = vunpack.c.l.b16 %v4560
        %v4929 = vunpack.c.h.b16 %v4560
        %v4930 = vunpack.c.l.b16 %v4561
        %v4931 = vunpack.c.h.b16 %v4561
        %v4932 = vunpack.c.l.b16 %v4562
        %v4933 = vunpack.c.h.b16 %v4562
        %v4934 = vunpack.c.l.b16 %v4563
        %v4935 = vunpack.c.h.b16 %v4563
        %v4936 = vunpack.c.l.b16 %v4564
        %v4937 = vunpack.c.h.b16 %v4564
        %v4938 = vunpack.c.l.b16 %v4565
        %v4939 = vunpack.c.h.b16 %v4565
        %v4940 = vunpack.c.l.b16 %v4566
        %v4941 = vunpack.c.h.b16 %v4566
        %v4942 = vunpack.c.l.b16 %v4567
        %v4943 = vunpack.c.h.b16 %v4567
        %v4944 = vunpack.c.l.b16 %v4568
        %v4945 = vunpack.c.h.b16 %v4568
        %v4946 = vunpack.c.l.b16 %v4569
        %v4947 = vunpack.c.h.b16 %v4569
        %v4948 = vunpack.c.l.b16 %v4570
        %v4949 = vunpack.c.h.b16 %v4570
        %v4950 = vunpack.c.l.b16 %v4571
        %v4951 = vunpack.c.h.b16 %v4571
        %v4952 = vunpack.c.l.b16 %v4572
        %v4953 = vunpack.c.h.b16 %v4572
        %v4954 = vunpack.c.l.b16 %v4573
        %v4955 = vunpack.c.h.b16 %v4573
        %v4956 = vunpack.c.l.b16 %v4574
        %v4957 = vunpack.c.h.b16 %v4574
        %v4958 = vunpack.c.l.b16 %v4575
        %v4959 = vunpack.c.h.b16 %v4575
        %v4960 = vunpack.c.l.b16 %v4576
        %v4961 = vunpack.c.h.b16 %v4576
        %v4962 = vunpack.c.l.b16 %v4577
        %v4963 = vunpack.c.h.b16 %v4577
        %v4964 = vunpack.c.l.b16 %v4578
        %v4965 = vunpack.c.h.b16 %v4578
        %v4966 = vunpack.c.l.b16 %v4579
        %v4967 = vunpack.c.h.b16 %v4579
        %v4968 = vunpack.c.l.b16 %v4580
        %v4969 = vunpack.c.h.b16 %v4580
        %v4970 = vunpack.c.l.b16 %v4581
        %v4971 = vunpack.c.h.b16 %v4581
        %v4972 = vunpack.c.l.b16 %v4582
        %v4973 = vunpack.c.h.b16 %v4582
        %v4974 = vunpack.c.l.b16 %v4583
        %v4975 = vunpack.c.h.b16 %v4583
        %v4976 = vunpack.c.l.b16 %v4584
        %v4977 = vunpack.c.h.b16 %v4584
        %v4978 = vunpack.c.l.b16 %v4585
        %v4979 = vunpack.c.h.b16 %v4585
        %v4980 = vunpack.c.l.b16 %v4586
        %v4981 = vunpack.c.h.b16 %v4586
        %v4982 = vunpack.c.l.b16 %v4587
        %v4983 = vunpack.c.h.b16 %v4587
        %v4984 = vunpack.c.l.b16 %v4588
        %v4985 = vunpack.c.h.b16 %v4588
        %v4986 = vunpack.c.l.b16 %v4589
        %v4987 = vunpack.c.h.b16 %v4589
        %v4988 = vunpack.c.l.b16 %v4590
        %v4989 = vunpack.c.h.b16 %v4590
        %v4990 = vunpack.c.l.b16 %v4591
        %v4991 = vunpack.c.h.b16 %v4591
        %v4992 = vunpack.c.l.b16 %v4592
        %v4993 = vunpack.c.h.b16 %v4592
        %v4994 = vunpack.c.l.b16 %v4593
        %v4995 = vunpack.c.h.b16 %v4593
        %v4996 = vunpack.c.l.b16 %v4594
        %v4997 = vunpack.c.h.b16 %v4594
        %v4998 = vunpack.c.l.b16 %v4595
        %v4999 = vunpack.c.h.b16 %v4595
        %v5000 = vunpack.c.l.b16 %v4596
        %v5001 = vunpack.c.h.b16 %v4596
        %v5002 = vunpack.c.l.b16 %v4597
        %v5003 = vunpack.c.h.b16 %v4597
        %v5004 = vpack.c.b16 %v4752, %v4748
        %v5005 = vpack.c.b16 %v4753, %v4749
        %v5006 = vpack.c.b16 %v4754, %v4750
        %v5007 = vpack.c.b16 %v4755, %v4751
        %v5008 = vpack.c.b16 %v4760, %v4756
        %v5009 = vpack.c.b16 %v4761, %v4757
        %v5010 = vpack.c.b16 %v4762, %v4758
        %v5011 = vpack.c.b16 %v4763, %v4759
        %v5012 = vpack.c.b16 %v4768, %v4764
        %v5013 = vpack.c.b16 %v4769, %v4765
        %v5014 = vpack.c.b16 %v4770, %v4766
        %v5015 = vpack.c.b16 %v4771, %v4767
        %v5016 = vpack.c.b16 %v4776, %v4772
        %v5017 = vpack.c.b16 %v4777, %v4773
        %v5018 = vpack.c.b16 %v4778, %v4774
        %v5019 = vpack.c.b16 %v4779, %v4775
        %v5020 = vpack.c.b16 %v4784, %v4780
        %v5021 = vpack.c.b16 %v4785, %v4781
        %v5022 = vpack.c.b16 %v4786, %v4782
        %v5023 = vpack.c.b16 %v4787, %v4783
        %v5024 = vpack.c.b16 %v4792, %v4788
        %v5025 = vpack.c.b16 %v4793, %v4789
        %v5026 = vpack.c.b16 %v4794, %v4790
        %v5027 = vpack.c.b16 %v4795, %v4791
        %v5028 = vpack.c.b16 %v4800, %v4796
        %v5029 = vpack.c.b16 %v4801, %v4797
        %v5030 = vpack.c.b16 %v4802, %v4798
        %v5031 = vpack.c.b16 %v4803, %v4799
        %v5032 = vpack.c.b16 %v4808, %v4804
        %v5033 = vpack.c.b16 %v4809, %v4805
        %v5034 = vpack.c.b16 %v4810, %v4806
        %v5035 = vpack.c.b16 %v4811, %v4807
        %v5036 = vpack.c.b16 %v4816, %v4812
        %v5037 = vpack.c.b16 %v4817, %v4813
        %v5038 = vpack.c.b16 %v4818, %v4814
        %v5039 = vpack.c.b16 %v4819, %v4815
        %v5040 = vpack.c.b16 %v4824, %v4820
        %v5041 = vpack.c.b16 %v4825, %v4821
        %v5042 = vpack.c.b16 %v4826, %v4822
        %v5043 = vpack.c.b16 %v4827, %v4823
        %v5044 = vpack.c.b16 %v4832, %v4828
        %v5045 = vpack.c.b16 %v4833, %v4829
        %v5046 = vpack.c.b16 %v4834, %v4830
        %v5047 = vpack.c.b16 %v4835, %v4831
        %v5048 = vpack.c.b16 %v4840, %v4836
        %v5049 = vpack.c.b16 %v4841, %v4837
        %v5050 = vpack.c.b16 %v4842, %v4838
        %v5051 = vpack.c.b16 %v4843, %v4839
        %v5052 = vpack.c.b16 %v4848, %v4844
        %v5053 = vpack.c.b16 %v4849, %v4845
        %v5054 = vpack.c.b16 %v4850, %v4846
        %v5055 = vpack.c.b16 %v4851, %v4847
        %v5056 = vpack.c.b16 %v4856, %v4852
        %v5057 = vpack.c.b16 %v4857, %v4853
        %v5058 = vpack.c.b16 %v4858, %v4854
        %v5059 = vpack.c.b16 %v4859, %v4855
        %v5060 = vpack.c.b16 %v4864, %v4860
        %v5061 = vpack.c.b16 %v4865, %v4861
        %v5062 = vpack.c.b16 %v4866, %v4862
        %v5063 = vpack.c.b16 %v4867, %v4863
        %v5064 = vpack.c.b16 %v4872, %v4868
        %v5065 = vpack.c.b16 %v4873, %v4869
        %v5066 = vpack.c.b16 %v4874, %v4870
        %v5067 = vpack.c.b16 %v4875, %v4871
        %v5068 = vpack.c.b16 %v4880, %v4876
        %v5069 = vpack.c.b16 %v4881, %v4877
        %v5070 = vpack.c.b16 %v4882, %v4878
        %v5071 = vpack.c.b16 %v4883, %v4879
        %v5072 = vpack.c.b16 %v4888, %v4884
        %v5073 = vpack.c.b16 %v4889, %v4885
        %v5074 = vpack.c.b16 %v4890, %v4886
        %v5075 = vpack.c.b16 %v4891, %v4887
        %v5076 = vpack.c.b16 %v4896, %v4892
        %v5077 = vpack.c.b16 %v4897, %v4893
        %v5078 = vpack.c.b16 %v4898, %v4894
        %v5079 = vpack.c.b16 %v4899, %v4895
        %v5080 = vpack.c.b16 %v4904, %v4900
        %v5081 = vpack.c.b16 %v4905, %v4901
        %v5082 = vpack.c.b16 %v4906, %v4902
        %v5083 = vpack.c.b16 %v4907, %v4903
        %v5084 = vpack.c.b16 %v4912, %v4908
        %v5085 = vpack.c.b16 %v4913, %v4909
        %v5086 = vpack.c.b16 %v4914, %v4910
        %v5087 = vpack.c.b16 %v4915, %v4911
        %v5088 = vpack.c.b16 %v4920, %v4916
        %v5089 = vpack.c.b16 %v4921, %v4917
        %v5090 = vpack.c.b16 %v4922, %v4918
        %v5091 = vpack.c.b16 %v4923, %v4919
        %v5092 = vpack.c.b16 %v4928, %v4924
        %v5093 = vpack.c.b16 %v4929, %v4925
        %v5094 = vpack.c.b16 %v4930, %v4926
        %v5095 = vpack.c.b16 %v4931, %v4927
        %v5096 = vpack.c.b16 %v4936, %v4932
        %v5097 = vpack.c.b16 %v4937, %v4933
        %v5098 = vpack.c.b16 %v4938, %v4934
        %v5099 = vpack.c.b16 %v4939, %v4935
        %v5100 = vpack.c.b16 %v4944, %v4940
        %v5101 = vpack.c.b16 %v4945, %v4941
        %v5102 = vpack.c.b16 %v4946, %v4942
        %v5103 = vpack.c.b16 %v4947, %v4943
        %v5104 = vpack.c.b16 %v4952, %v4948
        %v5105 = vpack.c.b16 %v4953, %v4949
        %v5106 = vpack.c.b16 %v4954, %v4950
        %v5107 = vpack.c.b16 %v4955, %v4951
        %v5108 = vpack.c.b16 %v4960, %v4956
        %v5109 = vpack.c.b16 %v4961, %v4957
        %v5110 = vpack.c.b16 %v4962, %v4958
        %v5111 = vpack.c.b16 %v4963, %v4959
        %v5112 = vpack.c.b16 %v4968, %v4964
        %v5113 = vpack.c.b16 %v4969, %v4965
        %v5114 = vpack.c.b16 %v4970, %v4966
        %v5115 = vpack.c.b16 %v4971, %v4967
        %v5116 = vpack.c.b16 %v4976, %v4972
        %v5117 = vpack.c.b16 %v4977, %v4973
        %v5118 = vpack.c.b16 %v4978, %v4974
        %v5119 = vpack.c.b16 %v4979, %v4975
        %v5120 = vpack.c.b16 %v4984, %v4980
        %v5121 = vpack.c.b16 %v4985, %v4981
        %v5122 = vpack.c.b16 %v4986, %v4982
        %v5123 = vpack.c.b16 %v4987, %v4983
        %v5124 = vpack.c.b16 %v4992, %v4988
        %v5125 = vpack.c.b16 %v4993, %v4989
        %v5126 = vpack.c.b16 %v4994, %v4990
        %v5127 = vpack.c.b16 %v4995, %v4991
        %v5128 = vpack.c.b16 %v5000, %v4996
        %v5129 = vpack.c.b16 %v5001, %v4997
        %v5130 = vpack.c.b16 %v5002, %v4998
        %v5131 = vpack.c.b16 %v5003, %v4999
        %5260 = vmatprep.subr.bf16.mxu0 %v5005
        %5261 = vmatpush1.bf16.msra.mxu0 %v5004
        %5262 = vmatprep.subr.bf16.mxu0 %v5009
        %5263 = vmatpush1.bf16.msra.mxu0 %v5008
        %5264 = vmatprep.subr.bf16.mxu0 %v5013
        %5265 = vmatpush1.bf16.msra.mxu0 %v5012
        %5266 = vmatprep.subr.bf16.mxu0 %v5017
        %5267 = vmatpush1.bf16.msra.mxu0 %v5016
        %5268 = vmatprep.subr.bf16.mxu0 %v5021
        %5269 = vmatpush1.bf16.msra.mxu0 %v5020
        %5270 = vmatprep.subr.bf16.mxu0 %v5025
        %5271 = vmatpush1.bf16.msra.mxu0 %v5024
        %5272 = vmatprep.subr.bf16.mxu0 %v5029
        %5273 = vmatpush1.bf16.msra.mxu0 %v5028
        %5274 = vmatprep.subr.bf16.mxu0 %v5033
        %5275 = vmatpush1.bf16.msra.mxu0 %v5032
        %5276 = vmatprep.subr.bf16.mxu0 %v5037
        %5277 = vmatpush1.bf16.msra.mxu0 %v5036
        %5278 = vmatprep.subr.bf16.mxu0 %v5041
        %5279 = vmatpush1.bf16.msra.mxu0 %v5040
        %5280 = vmatprep.subr.bf16.mxu0 %v5045
        %5281 = vmatpush1.bf16.msra.mxu0 %v5044
        %5282 = vmatprep.subr.bf16.mxu0 %v5049
        %5283 = vmatpush1.bf16.msra.mxu0 %v5048
        %5284 = vmatprep.subr.bf16.mxu0 %v5053
        %5285 = vmatpush1.bf16.msra.mxu0 %v5052
        %5286 = vmatprep.subr.bf16.mxu0 %v5057
        %5287 = vmatpush1.bf16.msra.mxu0 %v5056
        %5288 = vmatprep.subr.bf16.mxu0 %v5061
        %5289 = vmatpush1.bf16.msra.mxu0 %v5060
        %5290 = vmatprep.subr.bf16.mxu0 %v5065
        %5291 = vmatpush1.bf16.msra.mxu0 %v5064
        %5292 = vmatprep.mubr.bf16.mxu0 %v4463
        %5293 = vmatmul.mubr.bf16.gmra.mrb[0].mxu0 %v4462
        %v5294 = vpop.f32.mrb[0].mxu0
        %v5295 = vadd.f32 %v4603, %v5294
        %v5296 = vpop.f32.mrb[0].mxu0
        %v5297 = vadd.f32 %v4607, %v5296
        %v5298 = vpop.f32.mrb[0].mxu0
        %v5299 = vadd.f32 %v4603, %v5298
        %v5300 = vpop.f32.mrb[0].mxu0
        %v5301 = vadd.f32 %v4607, %v5300
        %5302 = vmatprep.mubr.bf16.mxu0 %v4467
        %5303 = vmatmul.mubr.bf16.gmra.mrb[0].mxu0 %v4466
        %v5304 = vpop.f32.mrb[0].mxu0
        %v5305 = vadd.f32 %v4603, %v5304
        %v5306 = vpop.f32.mrb[0].mxu0
        %v5307 = vadd.f32 %v4607, %v5306
        %v5308 = vpop.f32.mrb[0].mxu0
        %v5309 = vadd.f32 %v4603, %v5308
        %v5310 = vpop.f32.mrb[0].mxu0
        %v5311 = vadd.f32 %v4607, %v5310
        %5312 = vdwg.mxu0
        %5313 = vmatprep.subr.bf16.mxu0 %v5069
        %5314 = vmatpush1.bf16.msra.mxu0 %v5068
        %5315 = vmatprep.subr.bf16.mxu0 %v5073
        %5316 = vmatpush1.bf16.msra.mxu0 %v5072
        %5317 = vmatprep.subr.bf16.mxu0 %v5077
        %5318 = vmatpush1.bf16.msra.mxu0 %v5076
        %5319 = vmatprep.subr.bf16.mxu0 %v5081
        %5320 = vmatpush1.bf16.msra.mxu0 %v5080
        %5321 = vmatprep.subr.bf16.mxu0 %v5085
        %5322 = vmatpush1.bf16.msra.mxu0 %v5084
        %5323 = vmatprep.subr.bf16.mxu0 %v5089
        %5324 = vmatpush1.bf16.msra.mxu0 %v5088
        %5325 = vmatprep.subr.bf16.mxu0 %v5093
        %5326 = vmatpush1.bf16.msra.mxu0 %v5092
        %5327 = vmatprep.subr.bf16.mxu0 %v5097
        %5328 = vmatpush1.bf16.msra.mxu0 %v5096
        %5329 = vmatprep.subr.bf16.mxu0 %v5101
        %5330 = vmatpush1.bf16.msra.mxu0 %v5100
        %5331 = vmatprep.subr.bf16.mxu0 %v5105
        %5332 = vmatpush1.bf16.msra.mxu0 %v5104
        %5333 = vmatprep.subr.bf16.mxu0 %v5109
        %5334 = vmatpush1.bf16.msra.mxu0 %v5108
        %5335 = vmatprep.subr.bf16.mxu0 %v5113
        %5336 = vmatpush1.bf16.msra.mxu0 %v5112
        %5337 = vmatprep.subr.bf16.mxu0 %v5117
        %5338 = vmatpush1.bf16.msra.mxu0 %v5116
        %5339 = vmatprep.subr.bf16.mxu0 %v5121
        %5340 = vmatpush1.bf16.msra.mxu0 %v5120
        %5341 = vmatprep.subr.bf16.mxu0 %v5125
        %5342 = vmatpush1.bf16.msra.mxu0 %v5124
        %5343 = vmatprep.subr.bf16.mxu0 %v5129
        %5344 = vmatpush1.bf16.msra.mxu0 %v5128
        %5345 = vmatprep.mubr.bf16.mxu0 %v4465
        %5346 = vmatmul.mubr.bf16.gmra.mrb[0].mxu0 %v4464
        %v5347 = vpop.f32.mrb[0].mxu0
        %v5348 = vadd.f32 %v5295, %v5347
        %v5349 = vpop.f32.mrb[0].mxu0
        %v5350 = vadd.f32 %v5297, %v5349
        %v5351 = vpop.f32.mrb[0].mxu0
        %v5352 = vadd.f32 %v5299, %v5351
        %v5353 = vpop.f32.mrb[0].mxu0
        %v5354 = vadd.f32 %v5301, %v5353
        %5355 = vmatprep.mubr.bf16.mxu0 %v4469
        %5356 = vmatmul.mubr.bf16.gmra.mrb[0].mxu0 %v4468
        %v5357 = vpop.f32.mrb[0].mxu0
        %v5358 = vadd.f32 %v5305, %v5357
        %v5359 = vpop.f32.mrb[0].mxu0
        %v5360 = vadd.f32 %v5307, %v5359
        %v5361 = vpop.f32.mrb[0].mxu0
        %v5362 = vadd.f32 %v5309, %v5361
        %v5363 = vpop.f32.mrb[0].mxu0
        %v5364 = vadd.f32 %v5311, %v5363
        %5365 = vdwg.mxu0
        %5366 = vmatprep.subr.bf16.mxu0 %v5007
        %5367 = vmatpush1.bf16.msra.mxu0 %v5006
        %5368 = vmatprep.subr.bf16.mxu0 %v5011
        %5369 = vmatpush1.bf16.msra.mxu0 %v5010
        %5370 = vmatprep.subr.bf16.mxu0 %v5015
        %5371 = vmatpush1.bf16.msra.mxu0 %v5014
        %5372 = vmatprep.subr.bf16.mxu0 %v5019
        %5373 = vmatpush1.bf16.msra.mxu0 %v5018
        %5374 = vmatprep.subr.bf16.mxu0 %v5023
        %5375 = vmatpush1.bf16.msra.mxu0 %v5022
        %5376 = vmatprep.subr.bf16.mxu0 %v5027
        %5377 = vmatpush1.bf16.msra.mxu0 %v5026
        %5378 = vmatprep.subr.bf16.mxu0 %v5031
        %5379 = vmatpush1.bf16.msra.mxu0 %v5030
        %5380 = vmatprep.subr.bf16.mxu0 %v5035
        %5381 = vmatpush1.bf16.msra.mxu0 %v5034
        %5382 = vmatprep.subr.bf16.mxu0 %v5039
        %5383 = vmatpush1.bf16.msra.mxu0 %v5038
        %5384 = vmatprep.subr.bf16.mxu0 %v5043
        %5385 = vmatpush1.bf16.msra.mxu0 %v5042
        %5386 = vmatprep.subr.bf16.mxu0 %v5047
        %5387 = vmatpush1.bf16.msra.mxu0 %v5046
        %5388 = vmatprep.subr.bf16.mxu0 %v5051
        %5389 = vmatpush1.bf16.msra.mxu0 %v5050
        %5390 = vmatprep.subr.bf16.mxu0 %v5055
        %5391 = vmatpush1.bf16.msra.mxu0 %v5054
        %5392 = vmatprep.subr.bf16.mxu0 %v5059
        %5393 = vmatpush1.bf16.msra.mxu0 %v5058
        %5394 = vmatprep.subr.bf16.mxu0 %v5063
        %5395 = vmatpush1.bf16.msra.mxu0 %v5062
        %5396 = vmatprep.subr.bf16.mxu0 %v5067
        %5397 = vmatpush1.bf16.msra.mxu0 %v5066
        %5398 = vmatprep.mubr.bf16.mxu0 %v4463
        %5399 = vmatmul.mubr.bf16.gmra.mrb[0].mxu0 %v4462
        %v5400 = vpop.f32.mrb[0].mxu0
        %v5401 = vadd.f32 %v4611, %v5400
        %v5402 = vpop.f32.mrb[0].mxu0
        %v5403 = vadd.f32 %v4615, %v5402
        %v5404 = vpop.f32.mrb[0].mxu0
        %v5405 = vadd.f32 %v4611, %v5404
        %v5406 = vpop.f32.mrb[0].mxu0
        %v5407 = vadd.f32 %v4615, %v5406
        %5408 = vmatprep.mubr.bf16.mxu0 %v4467
        %5409 = vmatmul.mubr.bf16.gmra.mrb[0].mxu0 %v4466
        %v5410 = vpop.f32.mrb[0].mxu0
        %v5411 = vadd.f32 %v4611, %v5410
        %v5412 = vpop.f32.mrb[0].mxu0
        %v5413 = vadd.f32 %v4615, %v5412
        %v5414 = vpop.f32.mrb[0].mxu0
        %v5415 = vadd.f32 %v4611, %v5414
        %v5416 = vpop.f32.mrb[0].mxu0
        %v5417 = vadd.f32 %v4615, %v5416
        %5418 = vdwg.mxu0
        %5419 = vmatprep.subr.bf16.mxu0 %v5071
        %5420 = vmatpush1.bf16.msra.mxu0 %v5070
        %5421 = vmatprep.subr.bf16.mxu0 %v5075
        %5422 = vmatpush1.bf16.msra.mxu0 %v5074
        %5423 = vmatprep.subr.bf16.mxu0 %v5079
        %5424 = vmatpush1.bf16.msra.mxu0 %v5078
        %5425 = vmatprep.subr.bf16.mxu0 %v5083
        %5426 = vmatpush1.bf16.msra.mxu0 %v5082
        %5427 = vmatprep.subr.bf16.mxu0 %v5087
        %5428 = vmatpush1.bf16.msra.mxu0 %v5086
        %5429 = vmatprep.subr.bf16.mxu0 %v5091
        %5430 = vmatpush1.bf16.msra.mxu0 %v5090
        %5431 = vmatprep.subr.bf16.mxu0 %v5095
        %5432 = vmatpush1.bf16.msra.mxu0 %v5094
        %5433 = vmatprep.subr.bf16.mxu0 %v5099
        %5434 = vmatpush1.bf16.msra.mxu0 %v5098
        %5435 = vmatprep.subr.bf16.mxu0 %v5103
        %5436 = vmatpush1.bf16.msra.mxu0 %v5102
        %5437 = vmatprep.subr.bf16.mxu0 %v5107
        %5438 = vmatpush1.bf16.msra.mxu0 %v5106
        %5439 = vmatprep.subr.bf16.mxu0 %v5111
        %5440 = vmatpush1.bf16.msra.mxu0 %v5110
        %5441 = vmatprep.subr.bf16.mxu0 %v5115
        %5442 = vmatpush1.bf16.msra.mxu0 %v5114
        %5443 = vmatprep.subr.bf16.mxu0 %v5119
        %5444 = vmatpush1.bf16.msra.mxu0 %v5118
        %5445 = vmatprep.subr.bf16.mxu0 %v5123
        %5446 = vmatpush1.bf16.msra.mxu0 %v5122
        %5447 = vmatprep.subr.bf16.mxu0 %v5127
        %5448 = vmatpush1.bf16.msra.mxu0 %v5126
        %5449 = vmatprep.subr.bf16.mxu0 %v5131
        %5450 = vmatpush1.bf16.msra.mxu0 %v5130
        %5451 = vmatprep.mubr.bf16.mxu0 %v4465
        %5452 = vmatmul.mubr.bf16.gmra.mrb[0].mxu0 %v4464
        %v5453 = vpop.f32.mrb[0].mxu0
        %v5454 = vadd.f32 %v5401, %v5453
        %v5455 = vpop.f32.mrb[0].mxu0
        %v5456 = vadd.f32 %v5403, %v5455
        %v5457 = vpop.f32.mrb[0].mxu0
        %v5458 = vadd.f32 %v5405, %v5457
        %v5459 = vpop.f32.mrb[0].mxu0
        %v5460 = vadd.f32 %v5407, %v5459
        %5461 = vmatprep.mubr.bf16.mxu0 %v4469
        %5462 = vmatmul.mubr.bf16.gmra.mrb[0].mxu0 %v4468
        %v5463 = vpop.f32.mrb[0].mxu0
        %v5464 = vadd.f32 %v5411, %v5463
        %v5465 = vpop.f32.mrb[0].mxu0
        %v5466 = vadd.f32 %v5413, %v5465
        %v5467 = vpop.f32.mrb[0].mxu0
        %v5468 = vadd.f32 %v5415, %v5467
        %v5469 = vpop.f32.mrb[0].mxu0
        %v5470 = vadd.f32 %v5417, %v5469
        %5471 = vdwg.mxu0
        %v5472 = vmax.f32 %v5348, 0.0
        %v5473 = vmax.f32 %v5350, 0.0
        %v5474 = vmax.f32 %v5454, 0.0
        %v5475 = vmax.f32 %v5456, 0.0
        %v5476 = vmax.f32 %v5352, 0.0
        %v5477 = vmax.f32 %v5354, 0.0
        %v5478 = vmax.f32 %v5458, 0.0
        %v5479 = vmax.f32 %v5460, 0.0
        %v5480 = vmax.f32 %v5358, 0.0
        %v5481 = vmax.f32 %v5360, 0.0
        %v5482 = vmax.f32 %v5464, 0.0
        %v5483 = vmax.f32 %v5466, 0.0
        %v5484 = vmax.f32 %v5362, 0.0
        %v5485 = vmax.f32 %v5364, 0.0
        %v5486 = vmax.f32 %v5468, 0.0
        %v5487 = vmax.f32 %v5470, 0.0
        %v5488 = vpack.c.bf16 %v5476, %v5472
        %v5489 = vpack.c.bf16 %v5477, %v5473
        %v5490 = vpack.c.bf16 %v5478, %v5474
        %v5491 = vpack.c.bf16 %v5479, %v5475
        %v5492 = vpack.c.bf16 %v5484, %v5480
        %v5493 = vpack.c.bf16 %v5485, %v5481
        %v5494 = vpack.c.bf16 %v5486, %v5482
        %v5495 = vpack.c.bf16 %v5487, %v5483
        %v5496 = vld [vmem:[#allocation6] sm:$0xff]
        %v5497 = vld [vmem:[#allocation6 + $0x8] sm:$0xff]
        %v5498 = vld [vmem:[#allocation6 + $0x10] sm:$0xff]
        %v5499 = vld [vmem:[#allocation6 + $0x18] sm:$0xff]
        %v5500 = vld [vmem:[#allocation6 + $0x20] sm:$0xff]
        %v5501 = vld [vmem:[#allocation6 + $0x28] sm:$0xff]
        %v5502 = vld [vmem:[#allocation6 + $0x30] sm:$0xff]
        %v5503 = vld [vmem:[#allocation6 + $0x38] sm:$0xff]
        %v5504 = vld [vmem:[#allocation6 + $0x40] sm:$0xff]
        %v5505 = vld [vmem:[#allocation6 + $0x48] sm:$0xff]
        %v5506 = vld [vmem:[#allocation6 + $0x50] sm:$0xff]
        %v5507 = vld [vmem:[#allocation6 + $0x58] sm:$0xff]
        %v5508 = vld [vmem:[#allocation6 + $0x60] sm:$0xff]
        %v5509 = vld [vmem:[#allocation6 + $0x68] sm:$0xff]
        %v5510 = vld [vmem:[#allocation6 + $0x70] sm:$0xff]
        %v5511 = vld [vmem:[#allocation6 + $0x78] sm:$0xff]
        %v5512 = vld [vmem:[#allocation6 + $0x80] sm:$0xff]
        %v5513 = vld [vmem:[#allocation6 + $0x88] sm:$0xff]
        %v5514 = vld [vmem:[#allocation6 + $0x90] sm:$0xff]
        %v5515 = vld [vmem:[#allocation6 + $0x98] sm:$0xff]
        %v5516 = vld [vmem:[#allocation6 + $0xa0] sm:$0xff]
        %v5517 = vld [vmem:[#allocation6 + $0xa8] sm:$0xff]
        %v5518 = vld [vmem:[#allocation6 + $0xb0] sm:$0xff]
        %v5519 = vld [vmem:[#allocation6 + $0xb8] sm:$0xff]
        %v5520 = vld [vmem:[#allocation6 + $0xc0] sm:$0xff]
        %v5521 = vld [vmem:[#allocation6 + $0xc8] sm:$0xff]
        %v5522 = vld [vmem:[#allocation6 + $0xd0] sm:$0xff]
        %v5523 = vld [vmem:[#allocation6 + $0xd8] sm:$0xff]
        %v5524 = vld [vmem:[#allocation6 + $0xe0] sm:$0xff]
        %v5525 = vld [vmem:[#allocation6 + $0xe8] sm:$0xff]
        %v5526 = vld [vmem:[#allocation6 + $0xf0] sm:$0xff]
        %v5527 = vld [vmem:[#allocation6 + $0xf8] sm:$0xff]
        %v5528 = vld [vmem:[#allocation6 + $0x100] sm:$0xff]
        %v5529 = vld [vmem:[#allocation6 + $0x108] sm:$0xff]
        %v5530 = vld [vmem:[#allocation6 + $0x110] sm:$0xff]
        %v5531 = vld [vmem:[#allocation6 + $0x118] sm:$0xff]
        %v5532 = vld [vmem:[#allocation6 + $0x120] sm:$0xff]
        %v5533 = vld [vmem:[#allocation6 + $0x128] sm:$0xff]
        %v5534 = vld [vmem:[#allocation6 + $0x130] sm:$0xff]
        %v5535 = vld [vmem:[#allocation6 + $0x138] sm:$0xff]
        %v5536 = vld [vmem:[#allocation6 + $0x140] sm:$0xff]
        %v5537 = vld [vmem:[#allocation6 + $0x148] sm:$0xff]
        %v5538 = vld [vmem:[#allocation6 + $0x150] sm:$0xff]
        %v5539 = vld [vmem:[#allocation6 + $0x158] sm:$0xff]
        %v5540 = vld [vmem:[#allocation6 + $0x160] sm:$0xff]
        %v5541 = vld [vmem:[#allocation6 + $0x168] sm:$0xff]
        %v5542 = vld [vmem:[#allocation6 + $0x170] sm:$0xff]
        %v5543 = vld [vmem:[#allocation6 + $0x178] sm:$0xff]
        %v5544 = vld [vmem:[#allocation6 + $0x180] sm:$0xff]
        %v5545 = vld [vmem:[#allocation6 + $0x188] sm:$0xff]
        %v5546 = vld [vmem:[#allocation6 + $0x190] sm:$0xff]
        %v5547 = vld [vmem:[#allocation6 + $0x198] sm:$0xff]
        %v5548 = vld [vmem:[#allocation6 + $0x1a0] sm:$0xff]
        %v5549 = vld [vmem:[#allocation6 + $0x1a8] sm:$0xff]
        %v5550 = vld [vmem:[#allocation6 + $0x1b0] sm:$0xff]
        %v5551 = vld [vmem:[#allocation6 + $0x1b8] sm:$0xff]
        %v5552 = vld [vmem:[#allocation6 + $0x1c0] sm:$0xff]
        %v5553 = vld [vmem:[#allocation6 + $0x1c8] sm:$0xff]
        %v5554 = vld [vmem:[#allocation6 + $0x1d0] sm:$0xff]
        %v5555 = vld [vmem:[#allocation6 + $0x1d8] sm:$0xff]
        %v5556 = vld [vmem:[#allocation6 + $0x1e0] sm:$0xff]
        %v5557 = vld [vmem:[#allocation6 + $0x1e8] sm:$0xff]
        %v5558 = vld [vmem:[#allocation6 + $0x1f0] sm:$0xff]
        %v5559 = vld [vmem:[#allocation6 + $0x1f8] sm:$0xff]
        %v5560 = vld [vmem:[#allocation6 + $0x200] sm:$0xff]
        %v5561 = vld [vmem:[#allocation6 + $0x208] sm:$0xff]
        %v5562 = vld [vmem:[#allocation6 + $0x210] sm:$0xff]
        %v5563 = vld [vmem:[#allocation6 + $0x218] sm:$0xff]
        %v5564 = vld [vmem:[#allocation6 + $0x220] sm:$0xff]
        %v5565 = vld [vmem:[#allocation6 + $0x228] sm:$0xff]
        %v5566 = vld [vmem:[#allocation6 + $0x230] sm:$0xff]
        %v5567 = vld [vmem:[#allocation6 + $0x238] sm:$0xff]
        %v5568 = vld [vmem:[#allocation6 + $0x240] sm:$0xff]
        %v5569 = vld [vmem:[#allocation6 + $0x248] sm:$0xff]
        %v5570 = vld [vmem:[#allocation6 + $0x250] sm:$0xff]
        %v5571 = vld [vmem:[#allocation6 + $0x258] sm:$0xff]
        %v5572 = vld [vmem:[#allocation6 + $0x260] sm:$0xff]
        %v5573 = vld [vmem:[#allocation6 + $0x268] sm:$0xff]
        %v5574 = vld [vmem:[#allocation6 + $0x270] sm:$0xff]
        %v5575 = vld [vmem:[#allocation6 + $0x278] sm:$0xff]
        %v5576 = vld [vmem:[#allocation6 + $0x280] sm:$0xff]
        %v5577 = vld [vmem:[#allocation6 + $0x288] sm:$0xff]
        %v5578 = vld [vmem:[#allocation6 + $0x290] sm:$0xff]
        %v5579 = vld [vmem:[#allocation6 + $0x298] sm:$0xff]
        %v5580 = vld [vmem:[#allocation6 + $0x2a0] sm:$0xff]
        %v5581 = vld [vmem:[#allocation6 + $0x2a8] sm:$0xff]
        %v5582 = vld [vmem:[#allocation6 + $0x2b0] sm:$0xff]
        %v5583 = vld [vmem:[#allocation6 + $0x2b8] sm:$0xff]
        %v5584 = vld [vmem:[#allocation6 + $0x2c0] sm:$0xff]
        %v5585 = vld [vmem:[#allocation6 + $0x2c8] sm:$0xff]
        %v5586 = vld [vmem:[#allocation6 + $0x2d0] sm:$0xff]
        %v5587 = vld [vmem:[#allocation6 + $0x2d8] sm:$0xff]
        %v5588 = vld [vmem:[#allocation6 + $0x2e0] sm:$0xff]
        %v5589 = vld [vmem:[#allocation6 + $0x2e8] sm:$0xff]
        %v5590 = vld [vmem:[#allocation6 + $0x2f0] sm:$0xff]
        %v5591 = vld [vmem:[#allocation6 + $0x2f8] sm:$0xff]
        %v5592 = vld [vmem:[#allocation6 + $0x300] sm:$0xff]
        %v5593 = vld [vmem:[#allocation6 + $0x308] sm:$0xff]
        %v5594 = vld [vmem:[#allocation6 + $0x310] sm:$0xff]
        %v5595 = vld [vmem:[#allocation6 + $0x318] sm:$0xff]
        %v5596 = vld [vmem:[#allocation6 + $0x320] sm:$0xff]
        %v5597 = vld [vmem:[#allocation6 + $0x328] sm:$0xff]
        %v5598 = vld [vmem:[#allocation6 + $0x330] sm:$0xff]
        %v5599 = vld [vmem:[#allocation6 + $0x338] sm:$0xff]
        %v5600 = vld [vmem:[#allocation6 + $0x340] sm:$0xff]
        %v5601 = vld [vmem:[#allocation6 + $0x348] sm:$0xff]
        %v5602 = vld [vmem:[#allocation6 + $0x350] sm:$0xff]
        %v5603 = vld [vmem:[#allocation6 + $0x358] sm:$0xff]
        %v5604 = vld [vmem:[#allocation6 + $0x360] sm:$0xff]
        %v5605 = vld [vmem:[#allocation6 + $0x368] sm:$0xff]
        %v5606 = vld [vmem:[#allocation6 + $0x370] sm:$0xff]
        %v5607 = vld [vmem:[#allocation6 + $0x378] sm:$0xff]
        %v5608 = vld [vmem:[#allocation6 + $0x380] sm:$0xff]
        %v5609 = vld [vmem:[#allocation6 + $0x388] sm:$0xff]
        %v5610 = vld [vmem:[#allocation6 + $0x390] sm:$0xff]
        %v5611 = vld [vmem:[#allocation6 + $0x398] sm:$0xff]
        %v5612 = vld [vmem:[#allocation6 + $0x3a0] sm:$0xff]
        %v5613 = vld [vmem:[#allocation6 + $0x3a8] sm:$0xff]
        %v5614 = vld [vmem:[#allocation6 + $0x3b0] sm:$0xff]
        %v5615 = vld [vmem:[#allocation6 + $0x3b8] sm:$0xff]
        %v5616 = vld [vmem:[#allocation6 + $0x3c0] sm:$0xff]
        %v5617 = vld [vmem:[#allocation6 + $0x3c8] sm:$0xff]
        %v5618 = vld [vmem:[#allocation6 + $0x3d0] sm:$0xff]
        %v5619 = vld [vmem:[#allocation6 + $0x3d8] sm:$0xff]
        %v5620 = vld [vmem:[#allocation6 + $0x3e0] sm:$0xff]
        %v5621 = vld [vmem:[#allocation6 + $0x3e8] sm:$0xff]
        %v5622 = vld [vmem:[#allocation6 + $0x3f0] sm:$0xff]
        %v5623 = vld [vmem:[#allocation6 + $0x3f8] sm:$0xff]
        %v5624 = vld [vmem:[%s17] sm:$0xf]
        %v5626 = vlaneseq
        %v5627 = vshrl.u32 %v5626, 7
        %v5628 = vsub.s32 0, %v5627
        %v5629 = vrot.slane %v5624, %v5628
        %v5630 = vlaneseq
        %v5631 = vshrl.u32 %v5630, 7
        %v5632 = vsub.s32 1, %v5631
        %v5633 = vrot.slane %v5624, %v5632
        %v5634 = vlaneseq
        %v5635 = vshrl.u32 %v5634, 7
        %v5636 = vsub.s32 2, %v5635
        %v5637 = vrot.slane %v5624, %v5636
        %v5638 = vlaneseq
        %v5639 = vshrl.u32 %v5638, 7
        %v5640 = vsub.s32 3, %v5639
        %v5641 = vrot.slane %v5624, %v5640
        %v5774 = vunpack.c.l.b16 %v5496
        %v5775 = vunpack.c.h.b16 %v5496
        %v5776 = vunpack.c.l.b16 %v5497
        %v5777 = vunpack.c.h.b16 %v5497
        %v5778 = vunpack.c.l.b16 %v5498
        %v5779 = vunpack.c.h.b16 %v5498
        %v5780 = vunpack.c.l.b16 %v5499
        %v5781 = vunpack.c.h.b16 %v5499
        %v5782 = vunpack.c.l.b16 %v5500
        %v5783 = vunpack.c.h.b16 %v5500
        %v5784 = vunpack.c.l.b16 %v5501
        %v5785 = vunpack.c.h.b16 %v5501
        %v5786 = vunpack.c.l.b16 %v5502
        %v5787 = vunpack.c.h.b16 %v5502
        %v5788 = vunpack.c.l.b16 %v5503
        %v5789 = vunpack.c.h.b16 %v5503
        %v5790 = vunpack.c.l.b16 %v5504
        %v5791 = vunpack.c.h.b16 %v5504
        %v5792 = vunpack.c.l.b16 %v5505
        %v5793 = vunpack.c.h.b16 %v5505
        %v5794 = vunpack.c.l.b16 %v5506
        %v5795 = vunpack.c.h.b16 %v5506
        %v5796 = vunpack.c.l.b16 %v5507
        %v5797 = vunpack.c.h.b16 %v5507
        %v5798 = vunpack.c.l.b16 %v5508
        %v5799 = vunpack.c.h.b16 %v5508
        %v5800 = vunpack.c.l.b16 %v5509
        %v5801 = vunpack.c.h.b16 %v5509
        %v5802 = vunpack.c.l.b16 %v5510
        %v5803 = vunpack.c.h.b16 %v5510
        %v5804 = vunpack.c.l.b16 %v5511
        %v5805 = vunpack.c.h.b16 %v5511
        %v5806 = vunpack.c.l.b16 %v5512
        %v5807 = vunpack.c.h.b16 %v5512
        %v5808 = vunpack.c.l.b16 %v5513
        %v5809 = vunpack.c.h.b16 %v5513
        %v5810 = vunpack.c.l.b16 %v5514
        %v5811 = vunpack.c.h.b16 %v5514
        %v5812 = vunpack.c.l.b16 %v5515
        %v5813 = vunpack.c.h.b16 %v5515
        %v5814 = vunpack.c.l.b16 %v5516
        %v5815 = vunpack.c.h.b16 %v5516
        %v5816 = vunpack.c.l.b16 %v5517
        %v5817 = vunpack.c.h.b16 %v5517
        %v5818 = vunpack.c.l.b16 %v5518
        %v5819 = vunpack.c.h.b16 %v5518
        %v5820 = vunpack.c.l.b16 %v5519
        %v5821 = vunpack.c.h.b16 %v5519
        %v5822 = vunpack.c.l.b16 %v5520
        %v5823 = vunpack.c.h.b16 %v5520
        %v5824 = vunpack.c.l.b16 %v5521
        %v5825 = vunpack.c.h.b16 %v5521
        %v5826 = vunpack.c.l.b16 %v5522
        %v5827 = vunpack.c.h.b16 %v5522
        %v5828 = vunpack.c.l.b16 %v5523
        %v5829 = vunpack.c.h.b16 %v5523
        %v5830 = vunpack.c.l.b16 %v5524
        %v5831 = vunpack.c.h.b16 %v5524
        %v5832 = vunpack.c.l.b16 %v5525
        %v5833 = vunpack.c.h.b16 %v5525
        %v5834 = vunpack.c.l.b16 %v5526
        %v5835 = vunpack.c.h.b16 %v5526
        %v5836 = vunpack.c.l.b16 %v5527
        %v5837 = vunpack.c.h.b16 %v5527
        %v5838 = vunpack.c.l.b16 %v5528
        %v5839 = vunpack.c.h.b16 %v5528
        %v5840 = vunpack.c.l.b16 %v5529
        %v5841 = vunpack.c.h.b16 %v5529
        %v5842 = vunpack.c.l.b16 %v5530
        %v5843 = vunpack.c.h.b16 %v5530
        %v5844 = vunpack.c.l.b16 %v5531
        %v5845 = vunpack.c.h.b16 %v5531
        %v5846 = vunpack.c.l.b16 %v5532
        %v5847 = vunpack.c.h.b16 %v5532
        %v5848 = vunpack.c.l.b16 %v5533
        %v5849 = vunpack.c.h.b16 %v5533
        %v5850 = vunpack.c.l.b16 %v5534
        %v5851 = vunpack.c.h.b16 %v5534
        %v5852 = vunpack.c.l.b16 %v5535
        %v5853 = vunpack.c.h.b16 %v5535
        %v5854 = vunpack.c.l.b16 %v5536
        %v5855 = vunpack.c.h.b16 %v5536
        %v5856 = vunpack.c.l.b16 %v5537
        %v5857 = vunpack.c.h.b16 %v5537
        %v5858 = vunpack.c.l.b16 %v5538
        %v5859 = vunpack.c.h.b16 %v5538
        %v5860 = vunpack.c.l.b16 %v5539
        %v5861 = vunpack.c.h.b16 %v5539
        %v5862 = vunpack.c.l.b16 %v5540
        %v5863 = vunpack.c.h.b16 %v5540
        %v5864 = vunpack.c.l.b16 %v5541
        %v5865 = vunpack.c.h.b16 %v5541
        %v5866 = vunpack.c.l.b16 %v5542
        %v5867 = vunpack.c.h.b16 %v5542
        %v5868 = vunpack.c.l.b16 %v5543
        %v5869 = vunpack.c.h.b16 %v5543
        %v5870 = vunpack.c.l.b16 %v5544
        %v5871 = vunpack.c.h.b16 %v5544
        %v5872 = vunpack.c.l.b16 %v5545
        %v5873 = vunpack.c.h.b16 %v5545
        %v5874 = vunpack.c.l.b16 %v5546
        %v5875 = vunpack.c.h.b16 %v5546
        %v5876 = vunpack.c.l.b16 %v5547
        %v5877 = vunpack.c.h.b16 %v5547
        %v5878 = vunpack.c.l.b16 %v5548
        %v5879 = vunpack.c.h.b16 %v5548
        %v5880 = vunpack.c.l.b16 %v5549
        %v5881 = vunpack.c.h.b16 %v5549
        %v5882 = vunpack.c.l.b16 %v5550
        %v5883 = vunpack.c.h.b16 %v5550
        %v5884 = vunpack.c.l.b16 %v5551
        %v5885 = vunpack.c.h.b16 %v5551
        %v5886 = vunpack.c.l.b16 %v5552
        %v5887 = vunpack.c.h.b16 %v5552
        %v5888 = vunpack.c.l.b16 %v5553
        %v5889 = vunpack.c.h.b16 %v5553
        %v5890 = vunpack.c.l.b16 %v5554
        %v5891 = vunpack.c.h.b16 %v5554
        %v5892 = vunpack.c.l.b16 %v5555
        %v5893 = vunpack.c.h.b16 %v5555
        %v5894 = vunpack.c.l.b16 %v5556
        %v5895 = vunpack.c.h.b16 %v5556
        %v5896 = vunpack.c.l.b16 %v5557
        %v5897 = vunpack.c.h.b16 %v5557
        %v5898 = vunpack.c.l.b16 %v5558
        %v5899 = vunpack.c.h.b16 %v5558
        %v5900 = vunpack.c.l.b16 %v5559
        %v5901 = vunpack.c.h.b16 %v5559
        %v5902 = vunpack.c.l.b16 %v5560
        %v5903 = vunpack.c.h.b16 %v5560
        %v5904 = vunpack.c.l.b16 %v5561
        %v5905 = vunpack.c.h.b16 %v5561
        %v5906 = vunpack.c.l.b16 %v5562
        %v5907 = vunpack.c.h.b16 %v5562
        %v5908 = vunpack.c.l.b16 %v5563
        %v5909 = vunpack.c.h.b16 %v5563
        %v5910 = vunpack.c.l.b16 %v5564
        %v5911 = vunpack.c.h.b16 %v5564
        %v5912 = vunpack.c.l.b16 %v5565
        %v5913 = vunpack.c.h.b16 %v5565
        %v5914 = vunpack.c.l.b16 %v5566
        %v5915 = vunpack.c.h.b16 %v5566
        %v5916 = vunpack.c.l.b16 %v5567
        %v5917 = vunpack.c.h.b16 %v5567
        %v5918 = vunpack.c.l.b16 %v5568
        %v5919 = vunpack.c.h.b16 %v5568
        %v5920 = vunpack.c.l.b16 %v5569
        %v5921 = vunpack.c.h.b16 %v5569
        %v5922 = vunpack.c.l.b16 %v5570
        %v5923 = vunpack.c.h.b16 %v5570
        %v5924 = vunpack.c.l.b16 %v5571
        %v5925 = vunpack.c.h.b16 %v5571
        %v5926 = vunpack.c.l.b16 %v5572
        %v5927 = vunpack.c.h.b16 %v5572
        %v5928 = vunpack.c.l.b16 %v5573
        %v5929 = vunpack.c.h.b16 %v5573
        %v5930 = vunpack.c.l.b16 %v5574
        %v5931 = vunpack.c.h.b16 %v5574
        %v5932 = vunpack.c.l.b16 %v5575
        %v5933 = vunpack.c.h.b16 %v5575
        %v5934 = vunpack.c.l.b16 %v5576
        %v5935 = vunpack.c.h.b16 %v5576
        %v5936 = vunpack.c.l.b16 %v5577
        %v5937 = vunpack.c.h.b16 %v5577
        %v5938 = vunpack.c.l.b16 %v5578
        %v5939 = vunpack.c.h.b16 %v5578
        %v5940 = vunpack.c.l.b16 %v5579
        %v5941 = vunpack.c.h.b16 %v5579
        %v5942 = vunpack.c.l.b16 %v5580
        %v5943 = vunpack.c.h.b16 %v5580
        %v5944 = vunpack.c.l.b16 %v5581
        %v5945 = vunpack.c.h.b16 %v5581
        %v5946 = vunpack.c.l.b16 %v5582
        %v5947 = vunpack.c.h.b16 %v5582
        %v5948 = vunpack.c.l.b16 %v5583
        %v5949 = vunpack.c.h.b16 %v5583
        %v5950 = vunpack.c.l.b16 %v5584
        %v5951 = vunpack.c.h.b16 %v5584
        %v5952 = vunpack.c.l.b16 %v5585
        %v5953 = vunpack.c.h.b16 %v5585
        %v5954 = vunpack.c.l.b16 %v5586
        %v5955 = vunpack.c.h.b16 %v5586
        %v5956 = vunpack.c.l.b16 %v5587
        %v5957 = vunpack.c.h.b16 %v5587
        %v5958 = vunpack.c.l.b16 %v5588
        %v5959 = vunpack.c.h.b16 %v5588
        %v5960 = vunpack.c.l.b16 %v5589
        %v5961 = vunpack.c.h.b16 %v5589
        %v5962 = vunpack.c.l.b16 %v5590
        %v5963 = vunpack.c.h.b16 %v5590
        %v5964 = vunpack.c.l.b16 %v5591
        %v5965 = vunpack.c.h.b16 %v5591
        %v5966 = vunpack.c.l.b16 %v5592
        %v5967 = vunpack.c.h.b16 %v5592
        %v5968 = vunpack.c.l.b16 %v5593
        %v5969 = vunpack.c.h.b16 %v5593
        %v5970 = vunpack.c.l.b16 %v5594
        %v5971 = vunpack.c.h.b16 %v5594
        %v5972 = vunpack.c.l.b16 %v5595
        %v5973 = vunpack.c.h.b16 %v5595
        %v5974 = vunpack.c.l.b16 %v5596
        %v5975 = vunpack.c.h.b16 %v5596
        %v5976 = vunpack.c.l.b16 %v5597
        %v5977 = vunpack.c.h.b16 %v5597
        %v5978 = vunpack.c.l.b16 %v5598
        %v5979 = vunpack.c.h.b16 %v5598
        %v5980 = vunpack.c.l.b16 %v5599
        %v5981 = vunpack.c.h.b16 %v5599
        %v5982 = vunpack.c.l.b16 %v5600
        %v5983 = vunpack.c.h.b16 %v5600
        %v5984 = vunpack.c.l.b16 %v5601
        %v5985 = vunpack.c.h.b16 %v5601
        %v5986 = vunpack.c.l.b16 %v5602
        %v5987 = vunpack.c.h.b16 %v5602
        %v5988 = vunpack.c.l.b16 %v5603
        %v5989 = vunpack.c.h.b16 %v5603
        %v5990 = vunpack.c.l.b16 %v5604
        %v5991 = vunpack.c.h.b16 %v5604
        %v5992 = vunpack.c.l.b16 %v5605
        %v5993 = vunpack.c.h.b16 %v5605
        %v5994 = vunpack.c.l.b16 %v5606
        %v5995 = vunpack.c.h.b16 %v5606
        %v5996 = vunpack.c.l.b16 %v5607
        %v5997 = vunpack.c.h.b16 %v5607
        %v5998 = vunpack.c.l.b16 %v5608
        %v5999 = vunpack.c.h.b16 %v5608
        %v6000 = vunpack.c.l.b16 %v5609
        %v6001 = vunpack.c.h.b16 %v5609
        %v6002 = vunpack.c.l.b16 %v5610
        %v6003 = vunpack.c.h.b16 %v5610
        %v6004 = vunpack.c.l.b16 %v5611
        %v6005 = vunpack.c.h.b16 %v5611
        %v6006 = vunpack.c.l.b16 %v5612
        %v6007 = vunpack.c.h.b16 %v5612
        %v6008 = vunpack.c.l.b16 %v5613
        %v6009 = vunpack.c.h.b16 %v5613
        %v6010 = vunpack.c.l.b16 %v5614
        %v6011 = vunpack.c.h.b16 %v5614
        %v6012 = vunpack.c.l.b16 %v5615
        %v6013 = vunpack.c.h.b16 %v5615
        %v6014 = vunpack.c.l.b16 %v5616
        %v6015 = vunpack.c.h.b16 %v5616
        %v6016 = vunpack.c.l.b16 %v5617
        %v6017 = vunpack.c.h.b16 %v5617
        %v6018 = vunpack.c.l.b16 %v5618
        %v6019 = vunpack.c.h.b16 %v5618
        %v6020 = vunpack.c.l.b16 %v5619
        %v6021 = vunpack.c.h.b16 %v5619
        %v6022 = vunpack.c.l.b16 %v5620
        %v6023 = vunpack.c.h.b16 %v5620
        %v6024 = vunpack.c.l.b16 %v5621
        %v6025 = vunpack.c.h.b16 %v5621
        %v6026 = vunpack.c.l.b16 %v5622
        %v6027 = vunpack.c.h.b16 %v5622
        %v6028 = vunpack.c.l.b16 %v5623
        %v6029 = vunpack.c.h.b16 %v5623
        %v6030 = vpack.c.b16 %v5778, %v5774
        %v6031 = vpack.c.b16 %v5779, %v5775
        %v6032 = vpack.c.b16 %v5780, %v5776
        %v6033 = vpack.c.b16 %v5781, %v5777
        %v6034 = vpack.c.b16 %v5786, %v5782
        %v6035 = vpack.c.b16 %v5787, %v5783
        %v6036 = vpack.c.b16 %v5788, %v5784
        %v6037 = vpack.c.b16 %v5789, %v5785
        %v6038 = vpack.c.b16 %v5794, %v5790
        %v6039 = vpack.c.b16 %v5795, %v5791
        %v6040 = vpack.c.b16 %v5796, %v5792
        %v6041 = vpack.c.b16 %v5797, %v5793
        %v6042 = vpack.c.b16 %v5802, %v5798
        %v6043 = vpack.c.b16 %v5803, %v5799
        %v6044 = vpack.c.b16 %v5804, %v5800
        %v6045 = vpack.c.b16 %v5805, %v5801
        %v6046 = vpack.c.b16 %v5810, %v5806
        %v6047 = vpack.c.b16 %v5811, %v5807
        %v6048 = vpack.c.b16 %v5812, %v5808
        %v6049 = vpack.c.b16 %v5813, %v5809
        %v6050 = vpack.c.b16 %v5818, %v5814
        %v6051 = vpack.c.b16 %v5819, %v5815
        %v6052 = vpack.c.b16 %v5820, %v5816
        %v6053 = vpack.c.b16 %v5821, %v5817
        %v6054 = vpack.c.b16 %v5826, %v5822
        %v6055 = vpack.c.b16 %v5827, %v5823
        %v6056 = vpack.c.b16 %v5828, %v5824
        %v6057 = vpack.c.b16 %v5829, %v5825
        %v6058 = vpack.c.b16 %v5834, %v5830
        %v6059 = vpack.c.b16 %v5835, %v5831
        %v6060 = vpack.c.b16 %v5836, %v5832
        %v6061 = vpack.c.b16 %v5837, %v5833
        %v6062 = vpack.c.b16 %v5842, %v5838
        %v6063 = vpack.c.b16 %v5843, %v5839
        %v6064 = vpack.c.b16 %v5844, %v5840
        %v6065 = vpack.c.b16 %v5845, %v5841
        %v6066 = vpack.c.b16 %v5850, %v5846
        %v6067 = vpack.c.b16 %v5851, %v5847
        %v6068 = vpack.c.b16 %v5852, %v5848
        %v6069 = vpack.c.b16 %v5853, %v5849
        %v6070 = vpack.c.b16 %v5858, %v5854
        %v6071 = vpack.c.b16 %v5859, %v5855
        %v6072 = vpack.c.b16 %v5860, %v5856
        %v6073 = vpack.c.b16 %v5861, %v5857
        %v6074 = vpack.c.b16 %v5866, %v5862
        %v6075 = vpack.c.b16 %v5867, %v5863
        %v6076 = vpack.c.b16 %v5868, %v5864
        %v6077 = vpack.c.b16 %v5869, %v5865
        %v6078 = vpack.c.b16 %v5874, %v5870
        %v6079 = vpack.c.b16 %v5875, %v5871
        %v6080 = vpack.c.b16 %v5876, %v5872
        %v6081 = vpack.c.b16 %v5877, %v5873
        %v6082 = vpack.c.b16 %v5882, %v5878
        %v6083 = vpack.c.b16 %v5883, %v5879
        %v6084 = vpack.c.b16 %v5884, %v5880
        %v6085 = vpack.c.b16 %v5885, %v5881
        %v6086 = vpack.c.b16 %v5890, %v5886
        %v6087 = vpack.c.b16 %v5891, %v5887
        %v6088 = vpack.c.b16 %v5892, %v5888
        %v6089 = vpack.c.b16 %v5893, %v5889
        %v6090 = vpack.c.b16 %v5898, %v5894
        %v6091 = vpack.c.b16 %v5899, %v5895
        %v6092 = vpack.c.b16 %v5900, %v5896
        %v6093 = vpack.c.b16 %v5901, %v5897
        %v6094 = vpack.c.b16 %v5906, %v5902
        %v6095 = vpack.c.b16 %v5907, %v5903
        %v6096 = vpack.c.b16 %v5908, %v5904
        %v6097 = vpack.c.b16 %v5909, %v5905
        %v6098 = vpack.c.b16 %v5914, %v5910
        %v6099 = vpack.c.b16 %v5915, %v5911
        %v6100 = vpack.c.b16 %v5916, %v5912
        %v6101 = vpack.c.b16 %v5917, %v5913
        %v6102 = vpack.c.b16 %v5922, %v5918
        %v6103 = vpack.c.b16 %v5923, %v5919
        %v6104 = vpack.c.b16 %v5924, %v5920
        %v6105 = vpack.c.b16 %v5925, %v5921
        %v6106 = vpack.c.b16 %v5930, %v5926
        %v6107 = vpack.c.b16 %v5931, %v5927
        %v6108 = vpack.c.b16 %v5932, %v5928
        %v6109 = vpack.c.b16 %v5933, %v5929
        %v6110 = vpack.c.b16 %v5938, %v5934
        %v6111 = vpack.c.b16 %v5939, %v5935
        %v6112 = vpack.c.b16 %v5940, %v5936
        %v6113 = vpack.c.b16 %v5941, %v5937
        %v6114 = vpack.c.b16 %v5946, %v5942
        %v6115 = vpack.c.b16 %v5947, %v5943
        %v6116 = vpack.c.b16 %v5948, %v5944
        %v6117 = vpack.c.b16 %v5949, %v5945
        %v6118 = vpack.c.b16 %v5954, %v5950
        %v6119 = vpack.c.b16 %v5955, %v5951
        %v6120 = vpack.c.b16 %v5956, %v5952
        %v6121 = vpack.c.b16 %v5957, %v5953
        %v6122 = vpack.c.b16 %v5962, %v5958
        %v6123 = vpack.c.b16 %v5963, %v5959
        %v6124 = vpack.c.b16 %v5964, %v5960
        %v6125 = vpack.c.b16 %v5965, %v5961
        %v6126 = vpack.c.b16 %v5970, %v5966
        %v6127 = vpack.c.b16 %v5971, %v5967
        %v6128 = vpack.c.b16 %v5972, %v5968
        %v6129 = vpack.c.b16 %v5973, %v5969
        %v6130 = vpack.c.b16 %v5978, %v5974
        %v6131 = vpack.c.b16 %v5979, %v5975
        %v6132 = vpack.c.b16 %v5980, %v5976
        %v6133 = vpack.c.b16 %v5981, %v5977
        %v6134 = vpack.c.b16 %v5986, %v5982
        %v6135 = vpack.c.b16 %v5987, %v5983
        %v6136 = vpack.c.b16 %v5988, %v5984
        %v6137 = vpack.c.b16 %v5989, %v5985
        %v6138 = vpack.c.b16 %v5994, %v5990
        %v6139 = vpack.c.b16 %v5995, %v5991
        %v6140 = vpack.c.b16 %v5996, %v5992
        %v6141 = vpack.c.b16 %v5997, %v5993
        %v6142 = vpack.c.b16 %v6002, %v5998
        %v6143 = vpack.c.b16 %v6003, %v5999
        %v6144 = vpack.c.b16 %v6004, %v6000
        %v6145 = vpack.c.b16 %v6005, %v6001
        %v6146 = vpack.c.b16 %v6010, %v6006
        %v6147 = vpack.c.b16 %v6011, %v6007
        %v6148 = vpack.c.b16 %v6012, %v6008
        %v6149 = vpack.c.b16 %v6013, %v6009
        %v6150 = vpack.c.b16 %v6018, %v6014
        %v6151 = vpack.c.b16 %v6019, %v6015
        %v6152 = vpack.c.b16 %v6020, %v6016
        %v6153 = vpack.c.b16 %v6021, %v6017
        %v6154 = vpack.c.b16 %v6026, %v6022
        %v6155 = vpack.c.b16 %v6027, %v6023
        %v6156 = vpack.c.b16 %v6028, %v6024
        %v6157 = vpack.c.b16 %v6029, %v6025
        %6286 = vmatprep.subr.bf16.mxu0 %v6031
        %6287 = vmatpush1.bf16.msra.mxu0 %v6030
        %6288 = vmatprep.subr.bf16.mxu0 %v6035
        %6289 = vmatpush1.bf16.msra.mxu0 %v6034
        %6290 = vmatprep.subr.bf16.mxu0 %v6039
        %6291 = vmatpush1.bf16.msra.mxu0 %v6038
        %6292 = vmatprep.subr.bf16.mxu0 %v6043
        %6293 = vmatpush1.bf16.msra.mxu0 %v6042
        %6294 = vmatprep.subr.bf16.mxu0 %v6047
        %6295 = vmatpush1.bf16.msra.mxu0 %v6046
        %6296 = vmatprep.subr.bf16.mxu0 %v6051
        %6297 = vmatpush1.bf16.msra.mxu0 %v6050
        %6298 = vmatprep.subr.bf16.mxu0 %v6055
        %6299 = vmatpush1.bf16.msra.mxu0 %v6054
        %6300 = vmatprep.subr.bf16.mxu0 %v6059
        %6301 = vmatpush1.bf16.msra.mxu0 %v6058
        %6302 = vmatprep.subr.bf16.mxu0 %v6063
        %6303 = vmatpush1.bf16.msra.mxu0 %v6062
        %6304 = vmatprep.subr.bf16.mxu0 %v6067
        %6305 = vmatpush1.bf16.msra.mxu0 %v6066
        %6306 = vmatprep.subr.bf16.mxu0 %v6071
        %6307 = vmatpush1.bf16.msra.mxu0 %v6070
        %6308 = vmatprep.subr.bf16.mxu0 %v6075
        %6309 = vmatpush1.bf16.msra.mxu0 %v6074
        %6310 = vmatprep.subr.bf16.mxu0 %v6079
        %6311 = vmatpush1.bf16.msra.mxu0 %v6078
        %6312 = vmatprep.subr.bf16.mxu0 %v6083
        %6313 = vmatpush1.bf16.msra.mxu0 %v6082
        %6314 = vmatprep.subr.bf16.mxu0 %v6087
        %6315 = vmatpush1.bf16.msra.mxu0 %v6086
        %6316 = vmatprep.subr.bf16.mxu0 %v6091
        %6317 = vmatpush1.bf16.msra.mxu0 %v6090
        %6318 = vmatprep.mubr.bf16.mxu0 %v5489
        %6319 = vmatmul.mubr.bf16.gmra.mrb[0].mxu0 %v5488
        %v6320 = vpop.f32.mrb[0].mxu0
        %v6321 = vadd.f32 %v5629, %v6320
        %v6322 = vpop.f32.mrb[0].mxu0
        %v6323 = vadd.f32 %v5633, %v6322
        %v6324 = vpop.f32.mrb[0].mxu0
        %v6325 = vadd.f32 %v5629, %v6324
        %v6326 = vpop.f32.mrb[0].mxu0
        %v6327 = vadd.f32 %v5633, %v6326
        %6328 = vmatprep.mubr.bf16.mxu0 %v5493
        %6329 = vmatmul.mubr.bf16.gmra.mrb[0].mxu0 %v5492
        %v6330 = vpop.f32.mrb[0].mxu0
        %v6331 = vadd.f32 %v5629, %v6330
        %v6332 = vpop.f32.mrb[0].mxu0
        %v6333 = vadd.f32 %v5633, %v6332
        %v6334 = vpop.f32.mrb[0].mxu0
        %v6335 = vadd.f32 %v5629, %v6334
        %v6336 = vpop.f32.mrb[0].mxu0
        %v6337 = vadd.f32 %v5633, %v6336
        %6338 = vdwg.mxu0
        %6339 = vmatprep.subr.bf16.mxu0 %v6095
        %6340 = vmatpush1.bf16.msra.mxu0 %v6094
        %6341 = vmatprep.subr.bf16.mxu0 %v6099
        %6342 = vmatpush1.bf16.msra.mxu0 %v6098
        %6343 = vmatprep.subr.bf16.mxu0 %v6103
        %6344 = vmatpush1.bf16.msra.mxu0 %v6102
        %6345 = vmatprep.subr.bf16.mxu0 %v6107
        %6346 = vmatpush1.bf16.msra.mxu0 %v6106
        %6347 = vmatprep.subr.bf16.mxu0 %v6111
        %6348 = vmatpush1.bf16.msra.mxu0 %v6110
        %6349 = vmatprep.subr.bf16.mxu0 %v6115
        %6350 = vmatpush1.bf16.msra.mxu0 %v6114
        %6351 = vmatprep.subr.bf16.mxu0 %v6119
        %6352 = vmatpush1.bf16.msra.mxu0 %v6118
        %6353 = vmatprep.subr.bf16.mxu0 %v6123
        %6354 = vmatpush1.bf16.msra.mxu0 %v6122
        %6355 = vmatprep.subr.bf16.mxu0 %v6127
        %6356 = vmatpush1.bf16.msra.mxu0 %v6126
        %6357 = vmatprep.subr.bf16.mxu0 %v6131
        %6358 = vmatpush1.bf16.msra.mxu0 %v6130
        %6359 = vmatprep.subr.bf16.mxu0 %v6135
        %6360 = vmatpush1.bf16.msra.mxu0 %v6134
        %6361 = vmatprep.subr.bf16.mxu0 %v6139
        %6362 = vmatpush1.bf16.msra.mxu0 %v6138
        %6363 = vmatprep.subr.bf16.mxu0 %v6143
        %6364 = vmatpush1.bf16.msra.mxu0 %v6142
        %6365 = vmatprep.subr.bf16.mxu0 %v6147
        %6366 = vmatpush1.bf16.msra.mxu0 %v6146
        %6367 = vmatprep.subr.bf16.mxu0 %v6151
        %6368 = vmatpush1.bf16.msra.mxu0 %v6150
        %6369 = vmatprep.subr.bf16.mxu0 %v6155
        %6370 = vmatpush1.bf16.msra.mxu0 %v6154
        %6371 = vmatprep.mubr.bf16.mxu0 %v5491
        %6372 = vmatmul.mubr.bf16.gmra.mrb[0].mxu0 %v5490
        %v6373 = vpop.f32.mrb[0].mxu0
        %v6374 = vadd.f32 %v6321, %v6373
        %v6375 = vpop.f32.mrb[0].mxu0
        %v6376 = vadd.f32 %v6323, %v6375
        %v6377 = vpop.f32.mrb[0].mxu0
        %v6378 = vadd.f32 %v6325, %v6377
        %v6379 = vpop.f32.mrb[0].mxu0
        %v6380 = vadd.f32 %v6327, %v6379
        %6381 = vmatprep.mubr.bf16.mxu0 %v5495
        %6382 = vmatmul.mubr.bf16.gmra.mrb[0].mxu0 %v5494
        %v6383 = vpop.f32.mrb[0].mxu0
        %v6384 = vadd.f32 %v6331, %v6383
        %v6385 = vpop.f32.mrb[0].mxu0
        %v6386 = vadd.f32 %v6333, %v6385
        %v6387 = vpop.f32.mrb[0].mxu0
        %v6388 = vadd.f32 %v6335, %v6387
        %v6389 = vpop.f32.mrb[0].mxu0
        %v6390 = vadd.f32 %v6337, %v6389
        %6391 = vdwg.mxu0
        %6392 = vmatprep.subr.bf16.mxu0 %v6033
        %6393 = vmatpush1.bf16.msra.mxu0 %v6032
        %6394 = vmatprep.subr.bf16.mxu0 %v6037
        %6395 = vmatpush1.bf16.msra.mxu0 %v6036
        %6396 = vmatprep.subr.bf16.mxu0 %v6041
        %6397 = vmatpush1.bf16.msra.mxu0 %v6040
        %6398 = vmatprep.subr.bf16.mxu0 %v6045
        %6399 = vmatpush1.bf16.msra.mxu0 %v6044
        %6400 = vmatprep.subr.bf16.mxu0 %v6049
        %6401 = vmatpush1.bf16.msra.mxu0 %v6048
        %6402 = vmatprep.subr.bf16.mxu0 %v6053
        %6403 = vmatpush1.bf16.msra.mxu0 %v6052
        %6404 = vmatprep.subr.bf16.mxu0 %v6057
        %6405 = vmatpush1.bf16.msra.mxu0 %v6056
        %6406 = vmatprep.subr.bf16.mxu0 %v6061
        %6407 = vmatpush1.bf16.msra.mxu0 %v6060
        %6408 = vmatprep.subr.bf16.mxu0 %v6065
        %6409 = vmatpush1.bf16.msra.mxu0 %v6064
        %6410 = vmatprep.subr.bf16.mxu0 %v6069
        %6411 = vmatpush1.bf16.msra.mxu0 %v6068
        %6412 = vmatprep.subr.bf16.mxu0 %v6073
        %6413 = vmatpush1.bf16.msra.mxu0 %v6072
        %6414 = vmatprep.subr.bf16.mxu0 %v6077
        %6415 = vmatpush1.bf16.msra.mxu0 %v6076
        %6416 = vmatprep.subr.bf16.mxu0 %v6081
        %6417 = vmatpush1.bf16.msra.mxu0 %v6080
        %6418 = vmatprep.subr.bf16.mxu0 %v6085
        %6419 = vmatpush1.bf16.msra.mxu0 %v6084
        %6420 = vmatprep.subr.bf16.mxu0 %v6089
        %6421 = vmatpush1.bf16.msra.mxu0 %v6088
        %6422 = vmatprep.subr.bf16.mxu0 %v6093
        %6423 = vmatpush1.bf16.msra.mxu0 %v6092
        %6424 = vmatprep.mubr.bf16.mxu0 %v5489
        %6425 = vmatmul.mubr.bf16.gmra.mrb[0].mxu0 %v5488
        %v6426 = vpop.f32.mrb[0].mxu0
        %v6427 = vadd.f32 %v5637, %v6426
        %v6428 = vpop.f32.mrb[0].mxu0
        %v6429 = vadd.f32 %v5641, %v6428
        %v6430 = vpop.f32.mrb[0].mxu0
        %v6431 = vadd.f32 %v5637, %v6430
        %v6432 = vpop.f32.mrb[0].mxu0
        %v6433 = vadd.f32 %v5641, %v6432
        %6434 = vmatprep.mubr.bf16.mxu0 %v5493
        %6435 = vmatmul.mubr.bf16.gmra.mrb[0].mxu0 %v5492
        %v6436 = vpop.f32.mrb[0].mxu0
        %v6437 = vadd.f32 %v5637, %v6436
        %v6438 = vpop.f32.mrb[0].mxu0
        %v6439 = vadd.f32 %v5641, %v6438
        %v6440 = vpop.f32.mrb[0].mxu0
        %v6441 = vadd.f32 %v5637, %v6440
        %v6442 = vpop.f32.mrb[0].mxu0
        %v6443 = vadd.f32 %v5641, %v6442
        %6444 = vdwg.mxu0
        %6445 = vmatprep.subr.bf16.mxu0 %v6097
        %6446 = vmatpush1.bf16.msra.mxu0 %v6096
        %6447 = vmatprep.subr.bf16.mxu0 %v6101
        %6448 = vmatpush1.bf16.msra.mxu0 %v6100
        %6449 = vmatprep.subr.bf16.mxu0 %v6105
        %6450 = vmatpush1.bf16.msra.mxu0 %v6104
        %6451 = vmatprep.subr.bf16.mxu0 %v6109
        %6452 = vmatpush1.bf16.msra.mxu0 %v6108
        %6453 = vmatprep.subr.bf16.mxu0 %v6113
        %6454 = vmatpush1.bf16.msra.mxu0 %v6112
        %6455 = vmatprep.subr.bf16.mxu0 %v6117
        %6456 = vmatpush1.bf16.msra.mxu0 %v6116
        %6457 = vmatprep.subr.bf16.mxu0 %v6121
        %6458 = vmatpush1.bf16.msra.mxu0 %v6120
        %6459 = vmatprep.subr.bf16.mxu0 %v6125
        %6460 = vmatpush1.bf16.msra.mxu0 %v6124
        %6461 = vmatprep.subr.bf16.mxu0 %v6129
        %6462 = vmatpush1.bf16.msra.mxu0 %v6128
        %6463 = vmatprep.subr.bf16.mxu0 %v6133
        %6464 = vmatpush1.bf16.msra.mxu0 %v6132
        %6465 = vmatprep.subr.bf16.mxu0 %v6137
        %6466 = vmatpush1.bf16.msra.mxu0 %v6136
        %6467 = vmatprep.subr.bf16.mxu0 %v6141
        %6468 = vmatpush1.bf16.msra.mxu0 %v6140
        %6469 = vmatprep.subr.bf16.mxu0 %v6145
        %6470 = vmatpush1.bf16.msra.mxu0 %v6144
        %6471 = vmatprep.subr.bf16.mxu0 %v6149
        %6472 = vmatpush1.bf16.msra.mxu0 %v6148
        %6473 = vmatprep.subr.bf16.mxu0 %v6153
        %6474 = vmatpush1.bf16.msra.mxu0 %v6152
        %6475 = vmatprep.subr.bf16.mxu0 %v6157
        %6476 = vmatpush1.bf16.msra.mxu0 %v6156
        %6477 = vmatprep.mubr.bf16.mxu0 %v5491
        %6478 = vmatmul.mubr.bf16.gmra.mrb[0].mxu0 %v5490
        %v6479 = vpop.f32.mrb[0].mxu0
        %v6480 = vadd.f32 %v6427, %v6479
        %v6481 = vpop.f32.mrb[0].mxu0
        %v6482 = vadd.f32 %v6429, %v6481
        %v6483 = vpop.f32.mrb[0].mxu0
        %v6484 = vadd.f32 %v6431, %v6483
        %v6485 = vpop.f32.mrb[0].mxu0
        %v6486 = vadd.f32 %v6433, %v6485
        %6487 = vmatprep.mubr.bf16.mxu0 %v5495
        %6488 = vmatmul.mubr.bf16.gmra.mrb[0].mxu0 %v5494
        %v6489 = vpop.f32.mrb[0].mxu0
        %v6490 = vadd.f32 %v6437, %v6489
        %v6491 = vpop.f32.mrb[0].mxu0
        %v6492 = vadd.f32 %v6439, %v6491
        %v6493 = vpop.f32.mrb[0].mxu0
        %v6494 = vadd.f32 %v6441, %v6493
        %v6495 = vpop.f32.mrb[0].mxu0
        %v6496 = vadd.f32 %v6443, %v6495
        %6497 = vdwg.mxu0
        %v6498 = vmax.f32 %v6374, 0.0
        %v6499 = vmax.f32 %v6376, 0.0
        %v6500 = vmax.f32 %v6480, 0.0
        %v6501 = vmax.f32 %v6482, 0.0
        %v6502 = vmax.f32 %v6378, 0.0
        %v6503 = vmax.f32 %v6380, 0.0
        %v6504 = vmax.f32 %v6484, 0.0
        %v6505 = vmax.f32 %v6486, 0.0
        %v6506 = vmax.f32 %v6384, 0.0
        %v6507 = vmax.f32 %v6386, 0.0
        %v6508 = vmax.f32 %v6490, 0.0
        %v6509 = vmax.f32 %v6492, 0.0
        %v6510 = vmax.f32 %v6388, 0.0
        %v6511 = vmax.f32 %v6390, 0.0
        %v6512 = vmax.f32 %v6494, 0.0
        %v6513 = vmax.f32 %v6496, 0.0
        %v6514 = vpack.c.bf16 %v6502, %v6498
        %v6515 = vpack.c.bf16 %v6503, %v6499
        %v6516 = vpack.c.bf16 %v6504, %v6500
        %v6517 = vpack.c.bf16 %v6505, %v6501
        %v6518 = vpack.c.bf16 %v6510, %v6506
        %v6519 = vpack.c.bf16 %v6511, %v6507
        %v6520 = vpack.c.bf16 %v6512, %v6508
        %v6521 = vpack.c.bf16 %v6513, %v6509
        %v6522 = vld [vmem:[%s18] sm:$0xf]
        %v6523 = vld [vmem:[%s18 + $0x4] sm:$0xf]
        %v6524 = vld [vmem:[%s18 + $0x8] sm:$0xf]
        %v6525 = vld [vmem:[%s18 + $0xc] sm:$0xf]
        %v6526 = vld [vmem:[%s18 + $0x10] sm:$0xf]
        %v6527 = vld [vmem:[%s18 + $0x14] sm:$0xf]
        %v6528 = vld [vmem:[%s18 + $0x18] sm:$0xf]
        %v6529 = vld [vmem:[%s18 + $0x1c] sm:$0xf]
        %v6530 = vld [vmem:[%s18 + $0x20] sm:$0xf]
        %v6531 = vld [vmem:[%s18 + $0x24] sm:$0xf]
        %v6532 = vld [vmem:[%s18 + $0x28] sm:$0xf]
        %v6533 = vld [vmem:[%s18 + $0x2c] sm:$0xf]
        %v6534 = vld [vmem:[%s18 + $0x30] sm:$0xf]
        %v6535 = vld [vmem:[%s18 + $0x34] sm:$0xf]
        %v6536 = vld [vmem:[%s18 + $0x38] sm:$0xf]
        %v6537 = vld [vmem:[%s18 + $0x3c] sm:$0xf]
        %v6538 = vld [vmem:[%s18 + $0x40] sm:$0xf]
        %v6539 = vld [vmem:[%s18 + $0x44] sm:$0xf]
        %v6540 = vld [vmem:[%s18 + $0x48] sm:$0xf]
        %v6541 = vld [vmem:[%s18 + $0x4c] sm:$0xf]
        %v6542 = vld [vmem:[%s18 + $0x50] sm:$0xf]
        %v6543 = vld [vmem:[%s18 + $0x54] sm:$0xf]
        %v6544 = vld [vmem:[%s18 + $0x58] sm:$0xf]
        %v6545 = vld [vmem:[%s18 + $0x5c] sm:$0xf]
        %v6546 = vld [vmem:[%s18 + $0x60] sm:$0xf]
        %v6547 = vld [vmem:[%s18 + $0x64] sm:$0xf]
        %v6548 = vld [vmem:[%s18 + $0x68] sm:$0xf]
        %v6549 = vld [vmem:[%s18 + $0x6c] sm:$0xf]
        %v6550 = vld [vmem:[%s18 + $0x70] sm:$0xf]
        %v6551 = vld [vmem:[%s18 + $0x74] sm:$0xf]
        %v6552 = vld [vmem:[%s18 + $0x78] sm:$0xf]
        %v6553 = vld [vmem:[%s18 + $0x7c] sm:$0xf]
        %v6554 = vld [vmem:[%s18 + $0x80] sm:$0xf]
        %v6555 = vld [vmem:[%s18 + $0x84] sm:$0xf]
        %v6556 = vld [vmem:[%s18 + $0x88] sm:$0xf]
        %v6557 = vld [vmem:[%s18 + $0x8c] sm:$0xf]
        %v6558 = vld [vmem:[%s18 + $0x90] sm:$0xf]
        %v6559 = vld [vmem:[%s18 + $0x94] sm:$0xf]
        %v6560 = vld [vmem:[%s18 + $0x98] sm:$0xf]
        %v6561 = vld [vmem:[%s18 + $0x9c] sm:$0xf]
        %v6562 = vld [vmem:[%s18 + $0xa0] sm:$0xf]
        %v6563 = vld [vmem:[%s18 + $0xa4] sm:$0xf]
        %v6564 = vld [vmem:[%s18 + $0xa8] sm:$0xf]
        %v6565 = vld [vmem:[%s18 + $0xac] sm:$0xf]
        %v6566 = vld [vmem:[%s18 + $0xb0] sm:$0xf]
        %v6567 = vld [vmem:[%s18 + $0xb4] sm:$0xf]
        %v6568 = vld [vmem:[%s18 + $0xb8] sm:$0xf]
        %v6569 = vld [vmem:[%s18 + $0xbc] sm:$0xf]
        %v6570 = vld [vmem:[%s18 + $0xc0] sm:$0xf]
        %v6571 = vld [vmem:[%s18 + $0xc4] sm:$0xf]
        %v6572 = vld [vmem:[%s18 + $0xc8] sm:$0xf]
        %v6573 = vld [vmem:[%s18 + $0xcc] sm:$0xf]
        %v6574 = vld [vmem:[%s18 + $0xd0] sm:$0xf]
        %v6575 = vld [vmem:[%s18 + $0xd4] sm:$0xf]
        %v6576 = vld [vmem:[%s18 + $0xd8] sm:$0xf]
        %v6577 = vld [vmem:[%s18 + $0xdc] sm:$0xf]
        %v6578 = vld [vmem:[%s18 + $0xe0] sm:$0xf]
        %v6579 = vld [vmem:[%s18 + $0xe4] sm:$0xf]
        %v6580 = vld [vmem:[%s18 + $0xe8] sm:$0xf]
        %v6581 = vld [vmem:[%s18 + $0xec] sm:$0xf]
        %v6582 = vld [vmem:[%s18 + $0xf0] sm:$0xf]
        %v6583 = vld [vmem:[%s18 + $0xf4] sm:$0xf]
        %v6584 = vld [vmem:[%s18 + $0xf8] sm:$0xf]
        %v6585 = vld [vmem:[%s18 + $0xfc] sm:$0xf]
        %v6586 = vld [vmem:[%s19] sm:$0x1]
        %v6588 = vlaneseq
        %v6589 = vshrl.u32 %v6588, 7
        %v6590 = vsub.s32 0, %v6589
        %v6591 = vrot.slane %v6586, %v6590
        %v6657 = vunpack.c.l.b16 %v6522
        %v6658 = vunpack.c.l.b16 %v6523
        %v6659 = vunpack.c.l.b16 %v6524
        %v6660 = vunpack.c.l.b16 %v6525
        %v6661 = vunpack.c.l.b16 %v6526
        %v6662 = vunpack.c.l.b16 %v6527
        %v6663 = vunpack.c.l.b16 %v6528
        %v6664 = vunpack.c.l.b16 %v6529
        %v6665 = vunpack.c.l.b16 %v6530
        %v6666 = vunpack.c.l.b16 %v6531
        %v6667 = vunpack.c.l.b16 %v6532
        %v6668 = vunpack.c.l.b16 %v6533
        %v6669 = vunpack.c.l.b16 %v6534
        %v6670 = vunpack.c.l.b16 %v6535
        %v6671 = vunpack.c.l.b16 %v6536
        %v6672 = vunpack.c.l.b16 %v6537
        %v6673 = vunpack.c.l.b16 %v6538
        %v6674 = vunpack.c.l.b16 %v6539
        %v6675 = vunpack.c.l.b16 %v6540
        %v6676 = vunpack.c.l.b16 %v6541
        %v6677 = vunpack.c.l.b16 %v6542
        %v6678 = vunpack.c.l.b16 %v6543
        %v6679 = vunpack.c.l.b16 %v6544
        %v6680 = vunpack.c.l.b16 %v6545
        %v6681 = vunpack.c.l.b16 %v6546
        %v6682 = vunpack.c.l.b16 %v6547
        %v6683 = vunpack.c.l.b16 %v6548
        %v6684 = vunpack.c.l.b16 %v6549
        %v6685 = vunpack.c.l.b16 %v6550
        %v6686 = vunpack.c.l.b16 %v6551
        %v6687 = vunpack.c.l.b16 %v6552
        %v6688 = vunpack.c.l.b16 %v6553
        %v6689 = vunpack.c.l.b16 %v6554
        %v6690 = vunpack.c.l.b16 %v6555
        %v6691 = vunpack.c.l.b16 %v6556
        %v6692 = vunpack.c.l.b16 %v6557
        %v6693 = vunpack.c.l.b16 %v6558
        %v6694 = vunpack.c.l.b16 %v6559
        %v6695 = vunpack.c.l.b16 %v6560
        %v6696 = vunpack.c.l.b16 %v6561
        %v6697 = vunpack.c.l.b16 %v6562
        %v6698 = vunpack.c.l.b16 %v6563
        %v6699 = vunpack.c.l.b16 %v6564
        %v6700 = vunpack.c.l.b16 %v6565
        %v6701 = vunpack.c.l.b16 %v6566
        %v6702 = vunpack.c.l.b16 %v6567
        %v6703 = vunpack.c.l.b16 %v6568
        %v6704 = vunpack.c.l.b16 %v6569
        %v6705 = vunpack.c.l.b16 %v6570
        %v6706 = vunpack.c.l.b16 %v6571
        %v6707 = vunpack.c.l.b16 %v6572
        %v6708 = vunpack.c.l.b16 %v6573
        %v6709 = vunpack.c.l.b16 %v6574
        %v6710 = vunpack.c.l.b16 %v6575
        %v6711 = vunpack.c.l.b16 %v6576
        %v6712 = vunpack.c.l.b16 %v6577
        %v6713 = vunpack.c.l.b16 %v6578
        %v6714 = vunpack.c.l.b16 %v6579
        %v6715 = vunpack.c.l.b16 %v6580
        %v6716 = vunpack.c.l.b16 %v6581
        %v6717 = vunpack.c.l.b16 %v6582
        %v6718 = vunpack.c.l.b16 %v6583
        %v6719 = vunpack.c.l.b16 %v6584
        %v6720 = vunpack.c.l.b16 %v6585
        %v6721 = vpack.c.b16 %v6658, %v6657
        %v6722 = vpack.c.b16 %v6660, %v6659
        %v6723 = vpack.c.b16 %v6662, %v6661
        %v6724 = vpack.c.b16 %v6664, %v6663
        %v6725 = vpack.c.b16 %v6666, %v6665
        %v6726 = vpack.c.b16 %v6668, %v6667
        %v6727 = vpack.c.b16 %v6670, %v6669
        %v6728 = vpack.c.b16 %v6672, %v6671
        %v6729 = vpack.c.b16 %v6674, %v6673
        %v6730 = vpack.c.b16 %v6676, %v6675
        %v6731 = vpack.c.b16 %v6678, %v6677
        %v6732 = vpack.c.b16 %v6680, %v6679
        %v6733 = vpack.c.b16 %v6682, %v6681
        %v6734 = vpack.c.b16 %v6684, %v6683
        %v6735 = vpack.c.b16 %v6686, %v6685
        %v6736 = vpack.c.b16 %v6688, %v6687
        %v6737 = vpack.c.b16 %v6690, %v6689
        %v6738 = vpack.c.b16 %v6692, %v6691
        %v6739 = vpack.c.b16 %v6694, %v6693
        %v6740 = vpack.c.b16 %v6696, %v6695
        %v6741 = vpack.c.b16 %v6698, %v6697
        %v6742 = vpack.c.b16 %v6700, %v6699
        %v6743 = vpack.c.b16 %v6702, %v6701
        %v6744 = vpack.c.b16 %v6704, %v6703
        %v6745 = vpack.c.b16 %v6706, %v6705
        %v6746 = vpack.c.b16 %v6708, %v6707
        %v6747 = vpack.c.b16 %v6710, %v6709
        %v6748 = vpack.c.b16 %v6712, %v6711
        %v6749 = vpack.c.b16 %v6714, %v6713
        %v6750 = vpack.c.b16 %v6716, %v6715
        %v6751 = vpack.c.b16 %v6718, %v6717
        %v6752 = vpack.c.b16 %v6720, %v6719
        %6785 = vmatprep.subr.bf16.mxu0 0
        %6786 = vmatpush1.bf16.msra.mxu0 %v6721
        %6787 = vmatprep.subr.bf16.mxu0 0
        %6788 = vmatpush1.bf16.msra.mxu0 %v6722
        %6789 = vmatprep.subr.bf16.mxu0 0
        %6790 = vmatpush1.bf16.msra.mxu0 %v6723
        %6791 = vmatprep.subr.bf16.mxu0 0
        %6792 = vmatpush1.bf16.msra.mxu0 %v6724
        %6793 = vmatprep.subr.bf16.mxu0 0
        %6794 = vmatpush1.bf16.msra.mxu0 %v6725
        %6795 = vmatprep.subr.bf16.mxu0 0
        %6796 = vmatpush1.bf16.msra.mxu0 %v6726
        %6797 = vmatprep.subr.bf16.mxu0 0
        %6798 = vmatpush1.bf16.msra.mxu0 %v6727
        %6799 = vmatprep.subr.bf16.mxu0 0
        %6800 = vmatpush1.bf16.msra.mxu0 %v6728
        %6801 = vmatprep.subr.bf16.mxu0 0
        %6802 = vmatpush1.bf16.msra.mxu0 %v6729
        %6803 = vmatprep.subr.bf16.mxu0 0
        %6804 = vmatpush1.bf16.msra.mxu0 %v6730
        %6805 = vmatprep.subr.bf16.mxu0 0
        %6806 = vmatpush1.bf16.msra.mxu0 %v6731
        %6807 = vmatprep.subr.bf16.mxu0 0
        %6808 = vmatpush1.bf16.msra.mxu0 %v6732
        %6809 = vmatprep.subr.bf16.mxu0 0
        %6810 = vmatpush1.bf16.msra.mxu0 %v6733
        %6811 = vmatprep.subr.bf16.mxu0 0
        %6812 = vmatpush1.bf16.msra.mxu0 %v6734
        %6813 = vmatprep.subr.bf16.mxu0 0
        %6814 = vmatpush1.bf16.msra.mxu0 %v6735
        %6815 = vmatprep.subr.bf16.mxu0 0
        %6816 = vmatpush1.bf16.msra.mxu0 %v6736
        %6817 = vmatprep.mubr.bf16.mxu0 %v6515
        %6818 = vmatmul.mubr.bf16.gmra.mrb[0].mxu0 %v6514
        %v6819 = vpop.f32.mrb[0].mxu0
        %v6820 = vadd.f32 %v6591, %v6819
        %v6821 = vpop.f32.mrb[0].mxu0
        %v6822 = vpop.f32.mrb[0].mxu0
        %v6823 = vadd.f32 %v6591, %v6822
        %v6824 = vpop.f32.mrb[0].mxu0
        %6825 = vmatprep.mubr.bf16.mxu0 %v6519
        %6826 = vmatmul.mubr.bf16.gmra.mrb[0].mxu0 %v6518
        %v6827 = vpop.f32.mrb[0].mxu0
        %v6828 = vadd.f32 %v6591, %v6827
        %v6829 = vpop.f32.mrb[0].mxu0
        %v6830 = vpop.f32.mrb[0].mxu0
        %v6831 = vadd.f32 %v6591, %v6830
        %v6832 = vpop.f32.mrb[0].mxu0
        %6833 = vdwg.mxu0
        %6834 = vmatprep.subr.bf16.mxu0 0
        %6835 = vmatpush1.bf16.msra.mxu0 %v6737
        %6836 = vmatprep.subr.bf16.mxu0 0
        %6837 = vmatpush1.bf16.msra.mxu0 %v6738
        %6838 = vmatprep.subr.bf16.mxu0 0
        %6839 = vmatpush1.bf16.msra.mxu0 %v6739
        %6840 = vmatprep.subr.bf16.mxu0 0
        %6841 = vmatpush1.bf16.msra.mxu0 %v6740
        %6842 = vmatprep.subr.bf16.mxu0 0
        %6843 = vmatpush1.bf16.msra.mxu0 %v6741
        %6844 = vmatprep.subr.bf16.mxu0 0
        %6845 = vmatpush1.bf16.msra.mxu0 %v6742
        %6846 = vmatprep.subr.bf16.mxu0 0
        %6847 = vmatpush1.bf16.msra.mxu0 %v6743
        %6848 = vmatprep.subr.bf16.mxu0 0
        %6849 = vmatpush1.bf16.msra.mxu0 %v6744
        %6850 = vmatprep.subr.bf16.mxu0 0
        %6851 = vmatpush1.bf16.msra.mxu0 %v6745
        %6852 = vmatprep.subr.bf16.mxu0 0
        %6853 = vmatpush1.bf16.msra.mxu0 %v6746
        %6854 = vmatprep.subr.bf16.mxu0 0
        %6855 = vmatpush1.bf16.msra.mxu0 %v6747
        %6856 = vmatprep.subr.bf16.mxu0 0
        %6857 = vmatpush1.bf16.msra.mxu0 %v6748
        %6858 = vmatprep.subr.bf16.mxu0 0
        %6859 = vmatpush1.bf16.msra.mxu0 %v6749
        %6860 = vmatprep.subr.bf16.mxu0 0
        %6861 = vmatpush1.bf16.msra.mxu0 %v6750
        %6862 = vmatprep.subr.bf16.mxu0 0
        %6863 = vmatpush1.bf16.msra.mxu0 %v6751
        %6864 = vmatprep.subr.bf16.mxu0 0
        %6865 = vmatpush1.bf16.msra.mxu0 %v6752
        %6866 = vmatprep.mubr.bf16.mxu0 %v6517
        %6867 = vmatmul.mubr.bf16.gmra.mrb[0].mxu0 %v6516
        %v6868 = vpop.f32.mrb[0].mxu0
        %v6869 = vadd.f32 %v6820, %v6868
        %v6870 = vpop.f32.mrb[0].mxu0
        %v6871 = vpop.f32.mrb[0].mxu0
        %v6872 = vadd.f32 %v6823, %v6871
        %v6873 = vpop.f32.mrb[0].mxu0
        %6874 = vmatprep.mubr.bf16.mxu0 %v6521
        %6875 = vmatmul.mubr.bf16.gmra.mrb[0].mxu0 %v6520
        %v6876 = vpop.f32.mrb[0].mxu0
        %v6877 = vadd.f32 %v6828, %v6876
        %v6878 = vpop.f32.mrb[0].mxu0
        %v6879 = vpop.f32.mrb[0].mxu0
        %v6880 = vadd.f32 %v6831, %v6879
        %v6881 = vpop.f32.mrb[0].mxu0
        %6882 = vdwg.mxu0
        %6887 = vrot.lane.b32.xlu0 %v1958, 126
        %v6888 = vpop.permute.xlu0 %6887
        %6889 = vrot.lane.b32.xlu0 %v1963, 126
        %v6890 = vpop.permute.xlu0 %6889
        %6891 = vrot.lane.b32.xlu0 %v1968, 126
        %v6892 = vpop.permute.xlu0 %6891
        %6893 = vrot.lane.b32.xlu0 %v1973, 126
        %v6894 = vpop.permute.xlu0 %6893
        %v6899 = vmul.f32 %v6869, %v6888
        %v6900 = vmul.f32 %v6872, %v6890
        %v6901 = vmul.f32 %v6877, %v6892
        %v6902 = vmul.f32 %v6880, %v6894
        %v6903 = vsel %vm2972, %v6899, 0.0
        %6904 = vadd.xlane.f32.xlu0 %v6903
        %v6905 = vpop.xlane.xlu0 %6904
        %v6906 = vsel %vm2972, %v6900, 0.0
        %6907 = vadd.xlane.f32.xlu0 %v6906
        %v6908 = vpop.xlane.xlu0 %6907
        %v6909 = vsel %vm2972, %v6901, 0.0
        %6910 = vadd.xlane.f32.xlu0 %v6909
        %v6911 = vpop.xlane.xlu0 %6910
        %v6912 = vsel %vm2972, %v6902, 0.0
        %6913 = vadd.xlane.f32.xlu0 %v6912
        %v6914 = vpop.xlane.xlu0 %6913
        %6915 = vrot.lane.b32.xlu0 %v1958, 7
        %v6916 = vpop.permute.xlu0 %6915
        %6917 = vrot.lane.b32.xlu0 %v1963, 7
        %v6918 = vpop.permute.xlu0 %6917
        %6919 = vrot.lane.b32.xlu0 %v1968, 7
        %v6920 = vpop.permute.xlu0 %6919
        %6921 = vrot.lane.b32.xlu0 %v1973, 7
        %v6922 = vpop.permute.xlu0 %6921
        %v6927 = vmul.f32 %v6869, %v6916
        %v6928 = vmul.f32 %v6872, %v6918
        %v6929 = vmul.f32 %v6877, %v6920
        %v6930 = vmul.f32 %v6880, %v6922
        %6935 = vrot.lane.b32.xlu0 %v6927, 119
        %v6936 = vpop.permute.xlu0 %6935
        %6937 = vrot.lane.b32.xlu0 %v6928, 119
        %v6938 = vpop.permute.xlu0 %6937
        %6939 = vrot.lane.b32.xlu0 %v6929, 119
        %v6940 = vpop.permute.xlu0 %6939
        %6941 = vrot.lane.b32.xlu0 %v6930, 119
        %v6942 = vpop.permute.xlu0 %6941
        %v6947 = vsel %vm2972, %v6936, 0.0
        %6948 = vadd.xlane.f32.xlu0 %v6947
        %v6949 = vpop.xlane.xlu0 %6948
        %v6950 = vsel %vm2972, %v6938, 0.0
        %6951 = vadd.xlane.f32.xlu0 %v6950
        %v6952 = vpop.xlane.xlu0 %6951
        %v6953 = vsel %vm2972, %v6940, 0.0
        %6954 = vadd.xlane.f32.xlu0 %v6953
        %v6955 = vpop.xlane.xlu0 %6954
        %v6956 = vsel %vm2972, %v6942, 0.0
        %6957 = vadd.xlane.f32.xlu0 %v6956
        %v6958 = vpop.xlane.xlu0 %6957
        %6959 = vrot.lane.b32.xlu0 %v1958, 16
        %v6960 = vpop.permute.xlu0 %6959
        %6961 = vrot.lane.b32.xlu0 %v1963, 16
        %v6962 = vpop.permute.xlu0 %6961
        %6963 = vrot.lane.b32.xlu0 %v1968, 16
        %v6964 = vpop.permute.xlu0 %6963
        %6965 = vrot.lane.b32.xlu0 %v1973, 16
        %v6966 = vpop.permute.xlu0 %6965
        %v6971 = vmul.f32 %v6869, %v6960
        %v6972 = vmul.f32 %v6872, %v6962
        %v6973 = vmul.f32 %v6877, %v6964
        %v6974 = vmul.f32 %v6880, %v6966
        %6979 = vrot.lane.b32.xlu0 %v6971, 110
        %v6980 = vpop.permute.xlu0 %6979
        %6981 = vrot.lane.b32.xlu0 %v6972, 110
        %v6982 = vpop.permute.xlu0 %6981
        %6983 = vrot.lane.b32.xlu0 %v6973, 110
        %v6984 = vpop.permute.xlu0 %6983
        %6985 = vrot.lane.b32.xlu0 %v6974, 110
        %v6986 = vpop.permute.xlu0 %6985
        %v6991 = vsel %vm2972, %v6980, 0.0
        %6992 = vadd.xlane.f32.xlu0 %v6991
        %v6993 = vpop.xlane.xlu0 %6992
        %v6994 = vsel %vm2972, %v6982, 0.0
        %6995 = vadd.xlane.f32.xlu0 %v6994
        %v6996 = vpop.xlane.xlu0 %6995
        %v6997 = vsel %vm2972, %v6984, 0.0
        %6998 = vadd.xlane.f32.xlu0 %v6997
        %v6999 = vpop.xlane.xlu0 %6998
        %v7000 = vsel %vm2972, %v6986, 0.0
        %7001 = vadd.xlane.f32.xlu0 %v7000
        %v7002 = vpop.xlane.xlu0 %7001
        %v7003 = vsel %vm2299, %v6905, %v6949
        %v7004 = vsel %vm2299, %v6908, %v6952
        %v7005 = vsel %vm2299, %v6911, %v6955
        %v7006 = vsel %vm2299, %v6914, %v6958
        %v7007 = vsel %vm2304, %v7003, %v6993
        %v7008 = vsel %vm2304, %v7004, %v6996
        %v7009 = vsel %vm2304, %v7005, %v6999
        %v7010 = vsel %vm2304, %v7006, %v7002
        %7015 = vrot.lane.b32.xlu0 %v3179, 14
        %v7016 = vpop.permute.xlu0 %7015
        %7017 = vrot.lane.b32.xlu0 %v3180, 14
        %v7018 = vpop.permute.xlu0 %7017
        %7019 = vrot.lane.b32.xlu0 %v3181, 14
        %v7020 = vpop.permute.xlu0 %7019
        %7021 = vrot.lane.b32.xlu0 %v3182, 14
        %v7022 = vpop.permute.xlu0 %7021
        %v7027 = vmul.f32 %v2394, %v7016
        %v7028 = vmul.f32 %v2396, %v7018
        %v7029 = vmul.f32 %v2398, %v7020
        %v7030 = vmul.f32 %v2400, %v7022
        %v7031 = vsub.f32 0.0, %v7007
        %v7032 = vsub.f32 0.0, %v7008
        %v7033 = vsub.f32 0.0, %v7009
        %v7034 = vsub.f32 0.0, %v7010
        %v7035 = vmul.f32 %v7031, 1.442695
        %v7036 = vpow.pop %v7035
        %v7037 = vmul.f32 %v7032, 1.442695
        %v7038 = vpow.pop %v7037
        %v7039 = vmul.f32 %v7033, 1.442695
        %v7040 = vpow.pop %v7039
        %v7041 = vmul.f32 %v7034, 1.442695
        %v7042 = vpow.pop %v7041
        %v7043 = vadd.f32 %v7036, 1.0
        %v7044 = vadd.f32 %v7038, 1.0
        %v7045 = vadd.f32 %v7040, 1.0
        %v7046 = vadd.f32 %v7042, 1.0
        %v7047 = vrcp.pop %v7043
        %v7048 = vmul.f32 1.0, %v7047
        %v7049 = vrcp.pop %v7044
        %v7050 = vmul.f32 1.0, %v7049
        %v7051 = vrcp.pop %v7045
        %v7052 = vmul.f32 1.0, %v7051
        %v7053 = vrcp.pop %v7046
        %v7054 = vmul.f32 1.0, %v7053
        %7059 = vrot.lane.b32.xlu0 %v7048, 14
        %v7060 = vpop.permute.xlu0 %7059
        %7061 = vrot.lane.b32.xlu0 %v7050, 14
        %v7062 = vpop.permute.xlu0 %7061
        %7063 = vrot.lane.b32.xlu0 %v7052, 14
        %v7064 = vpop.permute.xlu0 %7063
        %7065 = vrot.lane.b32.xlu0 %v7054, 14
        %v7066 = vpop.permute.xlu0 %7065
        %v7071 = vmul.f32 %v7027, %v7060
        %v7072 = vmul.f32 %v7028, %v7062
        %v7073 = vmul.f32 %v7029, %v7064
        %v7074 = vmul.f32 %v7030, %v7066
        %7079 = vrot.lane.b32.xlu0 %v7071, 125
        %v7080 = vpop.permute.xlu0 %7079
        %7081 = vrot.lane.b32.xlu0 %v7072, 125
        %v7082 = vpop.permute.xlu0 %7081
        %7083 = vrot.lane.b32.xlu0 %v7073, 125
        %v7084 = vpop.permute.xlu0 %7083
        %7085 = vrot.lane.b32.xlu0 %v7074, 125
        %v7086 = vpop.permute.xlu0 %7085
        %v7091 = vadd.f32 %v3199, %v7080
        %v7092 = vadd.f32 %v3200, %v7082
        %v7093 = vadd.f32 %v3201, %v7084
        %v7094 = vadd.f32 %v3202, %v7086
        %7099 = vrot.lane.b32.xlu0 %v7091, 117
        %v7100 = vpop.permute.xlu0 %7099
        %7101 = vrot.lane.b32.xlu0 %v7092, 117
        %v7102 = vpop.permute.xlu0 %7101
        %7103 = vrot.lane.b32.xlu0 %v7093, 117
        %v7104 = vpop.permute.xlu0 %7103
        %7105 = vrot.lane.b32.xlu0 %v7094, 117
        %v7106 = vpop.permute.xlu0 %7105
        %7115 = vrot.lane.b32.xlu0 %v2394, 120
        %v7116 = vpop.permute.xlu0 %7115
        %7117 = vrot.lane.b32.xlu0 %v2396, 120
        %v7118 = vpop.permute.xlu0 %7117
        %7119 = vrot.lane.b32.xlu0 %v2398, 120
        %v7120 = vpop.permute.xlu0 %7119
        %7121 = vrot.lane.b32.xlu0 %v2400, 120
        %v7122 = vpop.permute.xlu0 %7121
        %7131 = vrot.lane.b32.xlu0 %v3199, 123
        %v7132 = vpop.permute.xlu0 %7131
        %7133 = vrot.lane.b32.xlu0 %v3200, 123
        %v7134 = vpop.permute.xlu0 %7133
        %7135 = vrot.lane.b32.xlu0 %v3201, 123
        %v7136 = vpop.permute.xlu0 %7135
        %7137 = vrot.lane.b32.xlu0 %v3202, 123
        %v7138 = vpop.permute.xlu0 %7137
        %7143 = vrot.lane.b32.xlu0 %v7071, 123
        %v7144 = vpop.permute.xlu0 %7143
        %7145 = vrot.lane.b32.xlu0 %v7072, 123
        %v7146 = vpop.permute.xlu0 %7145
        %7147 = vrot.lane.b32.xlu0 %v7073, 123
        %v7148 = vpop.permute.xlu0 %7147
        %7149 = vrot.lane.b32.xlu0 %v7074, 123
        %v7150 = vpop.permute.xlu0 %7149
        %v7155 = vsel %vm806, %v7100, %v7116
        %v7156 = vsel %vm806, %v7102, %v7118
        %v7157 = vsel %vm806, %v7104, %v7120
        %v7158 = vsel %vm806, %v7106, %v7122
        %v7159 = vsel %vm2631, %v7155, %v7132
        %v7160 = vsel %vm2631, %v7156, %v7134
        %v7161 = vsel %vm2631, %v7157, %v7136
        %v7162 = vsel %vm2631, %v7158, %v7138
        %v7163 = vsel %vm2972, %v7159, %v7144
        %v7164 = vsel %vm2972, %v7160, %v7146
        %v7165 = vsel %vm2972, %v7161, %v7148
        %v7166 = vsel %vm2972, %v7162, %v7150
        %v7167 = vld [vmem:[%s22] sm:$0xff]
        %v7168 = vld [vmem:[%s22 + $0x8] sm:$0xf]
        %vm7169 = vcmask 97280
        %v7171 = vsel %vm7169, %v7163, 0
        %v7174 = vsel %vm7169, %v7164, 0
        %v7177 = vsel %vm7169, %v7165, 0
        %v7180 = vsel %vm7169, %v7166, 0
        %v7183 = vsel %vm3301, %v7168, 0
        %7185 = vmatprep.subr.mxu0 0.0
        %7186 = vmatpush1.msra.mxu0 %v7167
        %7187 = vmatprep.subr.mxu0 0.0
        %7188 = vmatpush1.msra.mxu0 %v7183
        %7189 = vmatprep.subr.mxu0 0.0
        %7190 = vmatpush1.msra.mxu0 0.0
        %7191 = vmatprep.subr.mxu0 0.0
        %7192 = vmatpush1.msra.mxu0 0.0
        %7193 = vmatprep.subr.mxu0 0.0
        %7194 = vmatpush1.msra.mxu0 0.0
        %7195 = vmatprep.subr.mxu0 0.0
        %7196 = vmatpush1.msra.mxu0 0.0
        %7197 = vmatprep.subr.mxu0 0.0
        %7198 = vmatpush1.msra.mxu0 0.0
        %7199 = vmatprep.subr.mxu0 0.0
        %7200 = vmatpush1.msra.mxu0 0.0
        %7201 = vmatprep.subr.mxu0 0.0
        %7202 = vmatpush1.msra.mxu0 0.0
        %7203 = vmatprep.subr.mxu0 0.0
        %7204 = vmatpush1.msra.mxu0 0.0
        %7205 = vmatprep.subr.mxu0 0.0
        %7206 = vmatpush1.msra.mxu0 0.0
        %7207 = vmatprep.subr.mxu0 0.0
        %7208 = vmatpush1.msra.mxu0 0.0
        %7209 = vmatprep.subr.mxu0 0.0
        %7210 = vmatpush1.msra.mxu0 0.0
        %7211 = vmatprep.subr.mxu0 0.0
        %7212 = vmatpush1.msra.mxu0 0.0
        %7213 = vmatprep.subr.mxu0 0.0
        %7214 = vmatpush1.msra.mxu0 0.0
        %7215 = vmatprep.subr.mxu0 0.0
        %7216 = vmatpush1.msra.mxu0 0.0
        %7217 = vmatprep.subr.mxu0 0.0
        %7218 = vmatpush1.msra.mxu0 0.0
        %7219 = vmatprep.subr.mxu0 0.0
        %7220 = vmatpush1.msra.mxu0 0.0
        %7221 = vmatprep.subr.mxu0 0.0
        %7222 = vmatpush1.msra.mxu0 0.0
        %7223 = vmatprep.subr.mxu0 0.0
        %7224 = vmatpush1.msra.mxu0 0.0
        %7225 = vmatprep.subr.mxu0 0.0
        %7226 = vmatpush1.msra.mxu0 0.0
        %7227 = vmatprep.subr.mxu0 0.0
        %7228 = vmatpush1.msra.mxu0 0.0
        %7229 = vmatprep.subr.mxu0 0.0
        %7230 = vmatpush1.msra.mxu0 0.0
        %7231 = vmatprep.subr.mxu0 0.0
        %7232 = vmatpush1.msra.mxu0 0.0
        %7233 = vmatprep.subr.mxu0 0.0
        %7234 = vmatpush1.msra.mxu0 0.0
        %7235 = vmatprep.subr.mxu0 0.0
        %7236 = vmatpush1.msra.mxu0 0.0
        %7237 = vmatprep.subr.mxu0 0.0
        %7238 = vmatpush1.msra.mxu0 0.0
        %7239 = vmatprep.subr.mxu0 0.0
        %7240 = vmatpush1.msra.mxu0 0.0
        %7241 = vmatprep.subr.mxu0 0.0
        %7242 = vmatpush1.msra.mxu0 0.0
        %7243 = vmatprep.subr.mxu0 0.0
        %7244 = vmatpush1.msra.mxu0 0.0
        %7245 = vmatprep.subr.mxu0 0.0
        %7246 = vmatpush1.msra.mxu0 0.0
        %7247 = vmatprep.subr.mxu0 0.0
        %7248 = vmatpush1.msra.mxu0 0.0
        %7249 = vmatprep.mubr.f32.mxu0 0.0
        %7250 = vmatmul.mubr.f32.gmra.mrb[0].mxu0 %v7171
        %v7251 = vpop.f32.mrb[0].mxu0
        %v7252 = vadd.f32 0.0, %v7251
        %v7253 = vpop.f32.mrb[0].mxu0
        %7254 = vmatprep.mubr.f32.mxu0 0.0
        %7255 = vmatmul.mubr.f32.gmra.mrb[0].mxu0 %v7174
        %v7256 = vpop.f32.mrb[0].mxu0
        %v7257 = vadd.f32 0.0, %v7256
        %v7258 = vpop.f32.mrb[0].mxu0
        %7259 = vmatprep.mubr.f32.mxu0 0.0
        %7260 = vmatmul.mubr.f32.gmra.mrb[0].mxu0 %v7177
        %v7261 = vpop.f32.mrb[0].mxu0
        %v7262 = vadd.f32 0.0, %v7261
        %v7263 = vpop.f32.mrb[0].mxu0
        %7264 = vmatprep.mubr.f32.mxu0 0.0
        %7265 = vmatmul.mubr.f32.gmra.mrb[0].mxu0 %v7180
        %v7266 = vpop.f32.mrb[0].mxu0
        %v7267 = vadd.f32 0.0, %v7266
        %v7268 = vpop.f32.mrb[0].mxu0
        %7269 = vdwg.mxu0
        %v7270 = vmax.f32 %v7252, 0.0
        %v7271 = vmax.f32 %v7257, 0.0
        %v7272 = vmax.f32 %v7262, 0.0
        %v7273 = vmax.f32 %v7267, 0.0
        %v7274 = vmin.f32 %v7270, 1.0
        %v7275 = vmin.f32 %v7271, 1.0
        %v7276 = vmin.f32 %v7272, 1.0
        %v7277 = vmin.f32 %v7273, 1.0
        %7282 = vrot.lane.b32.xlu0 %v2305, 1
        %v7283 = vpop.permute.xlu0 %7282
        %7284 = vrot.lane.b32.xlu0 %v2306, 1
        %v7285 = vpop.permute.xlu0 %7284
        %7286 = vrot.lane.b32.xlu0 %v2307, 1
        %v7287 = vpop.permute.xlu0 %7286
        %7288 = vrot.lane.b32.xlu0 %v2308, 1
        %v7289 = vpop.permute.xlu0 %7288
        %7298 = vrot.lane.b32.xlu0 %v7274, 4
        %v7299 = vpop.permute.xlu0 %7298
        %7300 = vrot.lane.b32.xlu0 %v7275, 4
        %v7301 = vpop.permute.xlu0 %7300
        %7302 = vrot.lane.b32.xlu0 %v7276, 4
        %v7303 = vpop.permute.xlu0 %7302
        %7304 = vrot.lane.b32.xlu0 %v7277, 4
        %v7305 = vpop.permute.xlu0 %7304
        %7310 = vrot.lane.b32.xlu0 %v3179, 16
        %v7311 = vpop.permute.xlu0 %7310
        %7312 = vrot.lane.b32.xlu0 %v3180, 16
        %v7313 = vpop.permute.xlu0 %7312
        %7314 = vrot.lane.b32.xlu0 %v3181, 16
        %v7315 = vpop.permute.xlu0 %7314
        %7316 = vrot.lane.b32.xlu0 %v3182, 16
        %v7317 = vpop.permute.xlu0 %7316
        %7322 = vrot.lane.b32.xlu0 %v3073, 19
        %v7323 = vpop.permute.xlu0 %7322
        %7324 = vrot.lane.b32.xlu0 %v3074, 19
        %v7325 = vpop.permute.xlu0 %7324
        %7326 = vrot.lane.b32.xlu0 %v3075, 19
        %v7327 = vpop.permute.xlu0 %7326
        %7328 = vrot.lane.b32.xlu0 %v3076, 19
        %v7329 = vpop.permute.xlu0 %7328
        %v7334 = vsel %vm2299, %v1958, %v7283
        %v7335 = vsel %vm2299, %v1963, %v7285
        %v7336 = vsel %vm2299, %v1968, %v7287
        %v7337 = vsel %vm2299, %v1973, %v7289
        %v7338 = vsel %vm2621, %v7334, %v7299
        %v7339 = vsel %vm2621, %v7335, %v7301
        %v7340 = vsel %vm2621, %v7336, %v7303
        %v7341 = vsel %vm2621, %v7337, %v7305
        %vm7342 = vcmask 130048
        %v7343 = vsel %vm7342, %v7338, %v7311
        %v7344 = vsel %vm7342, %v7339, %v7313
        %v7345 = vsel %vm7342, %v7340, %v7315
        %v7346 = vsel %vm7342, %v7341, %v7317
        %vm7347 = vcmask 154624
        %v7348 = vsel %vm7347, %v7343, %v7323
        %v7349 = vsel %vm7347, %v7344, %v7325
        %v7350 = vsel %vm7347, %v7345, %v7327
        %v7351 = vsel %vm7347, %v7346, %v7329
        %vm7352 = vcmask 179200
        %7353 = vst.msk [vmem:[%s778] sm:$0xff] %vm7352, %v7348
        %7354 = vst.msk [vmem:[%s778 + $0x8] sm:$0xff] %vm7352, %v7349
        %7355 = vst.msk [vmem:[%s778 + $0x10] sm:$0xff] %vm7352, %v7350
        %7356 = vst.msk [vmem:[%s778 + $0x18] sm:$0xff] %vm7352, %v7351
        %s7357 = smul.u32 4, %s36
        %p7358 = scmp.lt.s32.totalorder %s7357, 7
        %s7359 = scalar_select %p7358, %s7357, 7
        %s7360 = smul.addr %s7359, 8
        %s7361 = scalar_lea.vmem %s23, %s7360
        // Predicated region
        $region125: #{tpu_custom_call.1} parent=111 // pred_check
          %p7362 = pneg %p547
        $region126: #{tpu_custom_call.1} parent=111 // pred_check_branch
          %7364 = sbr.rel (%p7362) target = $region128
        $region127: #{tpu_custom_call.1} parent=111 // pred_region
          %s7365 = smul.u32 4, %s36
        $region128: #{tpu_custom_call.1} parent=111 // pred_fallthru
          _
      $region112: #{tpu_custom_call.1} parent=5 // pred_fallthru
        _
      %p7366 = scmp.le.s32.totalorder 2, %s31
      // Predicated region
      $region129: #{tpu_custom_call.1} parent=5 // pred_check
        %p7367 = pneg %p7366
      $region130: #{tpu_custom_call.1} parent=5 // pred_check_branch
        %7369 = sbr.rel (%p7367) target = $region132
      $region131: #{tpu_custom_call.1} parent=5 // pred_region
        %s7370 = ssub.s32 %s31, 2
        // Predicated region
        $region133: #{tpu_custom_call.1} parent=131 // pred_check
          %p7371 = pneg %p553
        $region134: #{tpu_custom_call.1} parent=131 // pred_check_branch
          %7373 = sbr.rel (%p7371) target = $region136
        $region135: #{tpu_custom_call.1} parent=131 // pred_region
          %s7374 = smul.u32 4, %s37
          %p7375 = scmp.lt.s32.totalorder %s7374, 7
          %s7376 = scalar_select %p7375, %s7374, 7
          %s7377 = smul.addr %s7376, 8
          %s7378 = scalar_lea.vmem %s23, %s7377
        $region136: #{tpu_custom_call.1} parent=131 // pred_fallthru
          _
      $region132: #{tpu_custom_call.1} parent=5 // pred_fallthru
        _
    $region6: #{tpu_custom_call.1} parent=1 // loop_footer
      %s35 = sadd.s32 1, %s31
    $region7: #{tpu_custom_call.1} parent=1 // loop_footer_branch
      %30 = sbr.rel target = $region3
    $region8: #{tpu_custom_call.1} parent=1 // loop_exit
      _
    %7379 = vsyncpa [#allocation3], 1
    %s7380 = scalar_lea.sflag [#allocation3], 1
    %7381 = vsyncpa %s7380, 1
    %7382 = vsyncpa [#allocation5], 1

</llo_original>
